<compile_context>
chip_gen: v5e
topology: v5e:2x2
jax: 0.10.0
libtpu: 0.0.40
codegen_flags: <defaults>
</compile_context>

<pallas_src>
import functools
import math

import jax
import jax.numpy as jnp
from jax import lax
from jax.experimental import pallas as pl
from jax.experimental.pallas import tpu as pltpu

# ----------------------------- configuration (small) -----------------------------
NUM_CLASSES = 3            # -> n_class = 4 (incl. background)
N_CLASS = NUM_CLASSES + 1
FEAT_STRIDE = 16
ANCHOR_SCALES = (8, 16, 32)
RATIOS = (0.5, 1.0, 2.0)
N_ANCHOR = len(ANCHOR_SCALES) * len(RATIOS)   # 9
ROI_SIZE = 7
N_POST_NMS = 16            # proposals kept (scaled down from 300)
N_PRE_NMS = 64             # top-K before NMS (scaled down from 6000/3000)
NMS_THRESH = 0.7
MIN_SIZE = 16.0

# scaled-down channel plan (VGG16 would be 64/128/256/512/512, classifier 4096)
C_IN = 3
C1, C2, C3, C4, C5 = 16, 32, 32, 64, 64
RPN_MID = 64
FC_DIM = 256

TM_MAX = 512   # M tile for large im2col matmuls
TK_MAX = 2048  # K tile threshold (above this, K grid axis + f32 accumulator)


def _round_up(x, m):
    return ((x + m - 1) // m) * m


# ----------------------------- Pallas fused matmul+bias(+ReLU) kernel -----------------------------
def _mm_bias_act_kernel(a_ref, b_ref, bias_ref, o_ref, acc_ref, *, relu):
    k = pl.program_id(1)

    @pl.when(k == 0)
    def _():
        acc_ref[...] = jnp.zeros_like(acc_ref)

    acc_ref[...] += jnp.dot(a_ref[...], b_ref[...], preferred_element_type=jnp.float32)

    @pl.when(k == pl.num_programs(1) - 1)
    def _():
        out = acc_ref[...] + bias_ref[...]
        if relu:
            out = jnp.maximum(out, 0.0)
        o_ref[...] = out.astype(o_ref.dtype)


def _k_tiling(kp):
    """Given a (possibly pre-padded) K, return (tk, nk) with tk*nk == kp."""
    if kp <= TK_MAX:
        return kp, 1
    nk = -(-kp // TK_MAX)
    tk = kp // nk
    assert tk * nk == kp and tk % 128 == 0, (kp, tk, nk)
    return tk, nk


def matmul_bias(a, b_packed, bias_packed, relu=False, out_dtype=jnp.float32):
    """a: (M, Ka) float; b_packed: (Kp, N) bf16 pre-packed (Kp >= Ka, zero rows beyond Ka);
    bias_packed: (1, N) f32. Returns (M, N) of out_dtype. bf16 MXU feed, f32 accumulation."""
    M, Ka = a.shape
    Kp, N = b_packed.shape
    assert Ka <= Kp
    a = a.astype(jnp.bfloat16)
    if Ka < Kp:                                    # only triggers for K-tiled layers (fc6)
        a = jnp.pad(a, ((0, 0), (0, Kp - Ka)))

    tk, nk = _k_tiling(Kp)

    tm = TM_MAX if M > TM_MAX else _round_up(M, 16)   # bf16 sublane packing -> multiple of 16
    Mp = _round_up(M, tm)
    if Mp != M:
        a = jnp.pad(a, ((0, Mp - M), (0, 0)))          # zero rows -> bias+ReLU of zeros, sliced off

    out = pl.pallas_call(
        functools.partial(_mm_bias_act_kernel, relu=relu),
        out_shape=jax.ShapeDtypeStruct((Mp, N), out_dtype),
        grid_spec=pltpu.PrefetchScalarGridSpec(
            num_scalar_prefetch=0,
            grid=(Mp // tm, nk),
            in_specs=[
                pl.BlockSpec((tm, tk), lambda i, k: (i, k)),
                pl.BlockSpec((tk, N), lambda i, k: (k, 0)),
                pl.BlockSpec((1, N), lambda i, k: (0, 0)),
            ],
            out_specs=pl.BlockSpec((tm, N), lambda i, k: (i, 0)),
            scratch_shapes=[pltpu.VMEM((tm, N), jnp.float32)],
        ),
        compiler_params=pltpu.CompilerParams(
            dimension_semantics=("parallel", "arbitrary")),
    )(a, b_packed, bias_packed)
    return out[:M] if Mp != M else out


# ----------------------------- conv / pool glue (im2col -> Pallas matmul) -----------------------------
def conv3x3(x, w2, b2, relu=True, out_dtype=jnp.bfloat16):
    """x: (N,H,W,C) NHWC; w2: (9*C, Cout) bf16 pre-packed; b2: (1, Cout) f32."""
    N, H, W, C = x.shape
    xb = x.astype(jnp.bfloat16)
    xp = jnp.pad(xb, ((0, 0), (1, 1), (1, 1), (0, 0)))
    cols = [xp[:, i:i + H, j:j + W, :] for i in range(3) for j in range(3)]
    col = jnp.concatenate(cols, axis=-1).reshape(N * H * W, 9 * C)
    out = matmul_bias(col, w2, b2, relu=relu, out_dtype=out_dtype)
    return out.reshape(N, H, W, -1)


def conv1x1(x, w2, b2, relu=False, out_dtype=jnp.float32):
    N, H, W, C = x.shape
    out = matmul_bias(x.reshape(N * H * W, C), w2, b2, relu=relu, out_dtype=out_dtype)
    return out.reshape(N, H, W, -1)


def maxpool2(x):
    N, H, W, C = x.shape
    return x.reshape(N, H // 2, 2, W // 2, 2, C).max(axis=(2, 4))


# ----------------------------- anchors / proposals (plain-JAX glue) -----------------------------
def generate_anchor_base(base_size=16, ratios=RATIOS, scales=ANCHOR_SCALES):
    ab = []
    for r in ratios:
        for s in scales:
            h = base_size * s * math.sqrt(r)
            w = base_size * s * math.sqrt(1.0 / r)
            ab.append([-w / 2.0, -h / 2.0, w / 2.0, h / 2.0])   # x1, y1, x2, y2
    return jnp.asarray(ab, jnp.float32)


def enumerate_shifted_anchor(anchor_base, feat_stride, h, w):
    shift_x = jnp.arange(0, w * feat_stride, feat_stride, dtype=jnp.float32)
    shift_y = jnp.arange(0, h * feat_stride, feat_stride, dtype=jnp.float32)
    sx, sy = jnp.meshgrid(shift_x, shift_y)
    shift = jnp.stack([sx.ravel(), sy.ravel(), sx.ravel(), sy.ravel()], axis=1)
    anchor = anchor_base[None, :, :] + shift[:, None, :]
    return anchor.reshape(-1, 4)


def loc2bbox(anchor, loc):
    w = anchor[:, 2] - anchor[:, 0]
    h = anchor[:, 3] - anchor[:, 1]
    cx = anchor[:, 0] + 0.5 * w
    cy = anchor[:, 1] + 0.5 * h
    dx, dy, dw, dh = loc[:, 0], loc[:, 1], loc[:, 2], loc[:, 3]
    ncx = dx * w + cx
    ncy = dy * h + cy
    nw = jnp.exp(dw) * w
    nh = jnp.exp(dh) * h
    return jnp.stack([ncx - 0.5 * nw, ncy - 0.5 * nh, ncx + 0.5 * nw, ncy + 0.5 * nh], axis=1)


def proposal_layer(loc, fg_score, anchor, img_size, scale=1.0):
    """Fixed-shape ProposalCreator: decode, clip, min-size filter, top-K pre-NMS, greedy NMS."""
    roi = loc2bbox(anchor, loc)
    roi = roi.at[:, 0].set(jnp.clip(roi[:, 0], 0.0, img_size[1]))
    roi = roi.at[:, 2].set(jnp.clip(roi[:, 2], 0.0, img_size[1]))
    roi = roi.at[:, 1].set(jnp.clip(roi[:, 1], 0.0, img_size[0]))
    roi = roi.at[:, 3].set(jnp.clip(roi[:, 3], 0.0, img_size[0]))

    min_sz = MIN_SIZE * scale
    ws = roi[:, 2] - roi[:, 0]
    hs = roi[:, 3] - roi[:, 1]
    valid = (ws >= min_sz) & (hs >= min_sz)
    score = jnp.where(valid, fg_score, -jnp.inf)

    # top-K pre-NMS cut bounds the O(N^2) NMS loop (matches original n_pre_nms behavior)
    k = min(N_PRE_NMS, score.shape[0])
    score_s, order = lax.top_k(score, k)
    roi_s = roi[order]

    areas = (roi_s[:, 2] - roi_s[:, 0]) * (roi_s[:, 3] - roi_s[:, 1])
    idx = jnp.arange(k)

    def body(i, suppressed):
        keep_i = jnp.logical_not(suppressed[i]) & (score_s[i] > -jnp.inf)
        box = roi_s[i]
        xx1 = jnp.maximum(box[0], roi_s[:, 0])
        yy1 = jnp.maximum(box[1], roi_s[:, 1])
        xx2 = jnp.minimum(box[2], roi_s[:, 2])
        yy2 = jnp.minimum(box[3], roi_s[:, 3])
        inter = jnp.maximum(xx2 - xx1, 0.0) * jnp.maximum(yy2 - yy1, 0.0)
        area_i = (box[2] - box[0]) * (box[3] - box[1])
        iou = inter / (area_i + areas - inter + 1e-9)
        sup_new = keep_i & (iou > NMS_THRESH) & (idx > i)
        return suppressed | sup_new

    suppressed = lax.fori_loop(0, k, body, jnp.zeros((k,), jnp.bool_))
    keep = jnp.logical_not(suppressed) & (score_s > -jnp.inf)
    # TODO(synk): original pads by repeating kept indices when fewer than n_post survive;
    # fixed-shape selection falls back to the highest-scoring suppressed boxes instead.
    key = jnp.where(keep, idx, k + idx)
    pick = jnp.argsort(key)[:N_POST_NMS]
    return roi_s[pick]


# ----------------------------- RoI max pooling (separable two-stage masked max) -----------------------------
def roi_pool(feat, rois, roi_size=ROI_SIZE, spatial_scale=1.0):
    """feat: (H, W, C), rois: (R, 4) in feature-map coords -> (R, roi_size, roi_size, C)."""
    H, W, C = feat.shape
    feat = feat.astype(jnp.float32)
    x1 = jnp.round(rois[:, 0] * spatial_scale)
    y1 = jnp.round(rois[:, 1] * spatial_scale)
    x2 = jnp.round(rois[:, 2] * spatial_scale)
    y2 = jnp.round(rois[:, 3] * spatial_scale)
    roi_w = jnp.maximum(x2 - x1 + 1.0, 1.0)
    roi_h = jnp.maximum(y2 - y1 + 1.0, 1.0)
    bin_w = roi_w / roi_size
    bin_h = roi_h / roi_size

    p = jnp.arange(roi_size, dtype=jnp.float32)
    hstart = jnp.clip(jnp.floor(p[None, :] * bin_h[:, None]) + y1[:, None], 0, H)   # (R, P)
    hend = jnp.clip(jnp.ceil((p[None, :] + 1.0) * bin_h[:, None]) + y1[:, None], 0, H)
    wstart = jnp.clip(jnp.floor(p[None, :] * bin_w[:, None]) + x1[:, None], 0, W)
    wend = jnp.clip(jnp.ceil((p[None, :] + 1.0) * bin_w[:, None]) + x1[:, None], 0, W)

    hh = jnp.arange(H, dtype=jnp.float32)
    ww = jnp.arange(W, dtype=jnp.float32)
    hmask = (hh[None, None, :] >= hstart[:, :, None]) & (hh[None, None, :] < hend[:, :, None])  # (R,P,H)
    wmask = (ww[None, None, :] >= wstart[:, :, None]) & (ww[None, None, :] < wend[:, :, None])  # (R,P,W)

    neg = jnp.float32(-jnp.inf)
    # stage 1: pool over W within each w-bin -> (R, Pw, H, C)
    t = jnp.where(wmask[:, :, None, :, None], feat[None, None, :, :, :], neg).max(axis=3)
    # stage 2: pool over H within each h-bin -> (R, Ph, Pw, C)
    out = jnp.where(hmask[:, :, None, :, None], t[:, None, :, :, :], neg).max(axis=3)

    empty = (~hmask.any(axis=2))[:, :, None] | (~wmask.any(axis=2))[:, None, :]     # (R,Ph,Pw)
    return jnp.where(empty[..., None], 0.0, out)


# ----------------------------- parameter init (PyTorch layouts) -----------------------------
def init_params(key):
    def nrm(k, shape, std=0.1):
        return std * jax.random.normal(k, shape, jnp.float32)

    ks = jax.random.split(key, 24)
    p = {}
    # extractor (VGG-like, 4 max-pools -> feat_stride 16)
    p["c1_w"], p["c1_b"] = nrm(ks[0], (C1, C_IN, 3, 3)), jnp.zeros((C1,), jnp.float32)
    p["c2_w"], p["c2_b"] = nrm(ks[1], (C2, C1, 3, 3)), jnp.zeros((C2,), jnp.float32)
    p["c3_w"], p["c3_b"] = nrm(ks[2], (C3, C2, 3, 3)), jnp.zeros((C3,), jnp.float32)
    p["c4_w"], p["c4_b"] = nrm(ks[3], (C4, C3, 3, 3)), jnp.zeros((C4,), jnp.float32)
    p["c5_w"], p["c5_b"] = nrm(ks[4], (C5, C4, 3, 3)), jnp.zeros((C5,), jnp.float32)
    # RPN
    p["rpn_conv_w"], p["rpn_conv_b"] = nrm(ks[5], (RPN_MID, C5, 3, 3)), jnp.zeros((RPN_MID,), jnp.float32)
    p["rpn_score_w"], p["rpn_score_b"] = nrm(ks[6], (N_ANCHOR * 2, RPN_MID, 1, 1)), jnp.zeros((N_ANCHOR * 2,), jnp.float32)
    p["rpn_loc_w"], p["rpn_loc_b"] = nrm(ks[7], (N_ANCHOR * 4, RPN_MID, 1, 1)), jnp.zeros((N_ANCHOR * 4,), jnp.float32)
    # head (classifier = 2 FC layers), weights stored (in, out)
    p["fc6_w"], p["fc6_b"] = nrm(ks[8], (C5 * ROI_SIZE * ROI_SIZE, FC_DIM), 0.01), jnp.zeros((FC_DIM,), jnp.float32)
    p["fc7_w"], p["fc7_b"] = nrm(ks[9], (FC_DIM, FC_DIM), 0.01), jnp.zeros((FC_DIM,), jnp.float32)
    p["cls_loc_w"], p["cls_loc_b"] = nrm(ks[10], (FC_DIM, N_CLASS * 4), 0.001), jnp.zeros((N_CLASS * 4,), jnp.float32)
    p["score_w"], p["score_b"] = nrm(ks[11], (FC_DIM, N_CLASS), 0.01), jnp.zeros((N_CLASS,), jnp.float32)
    return p


# ----------------------------- one-time weight packing (matmul layout, bf16, merged heads) --------
def _pad_weight_k(w2):
    k = w2.shape[0]
    if k <= TK_MAX:
        return w2
    nk = -(-k // TK_MAX)
    tk = _round_up(-(-k // nk), 128)
    kp = tk * nk
    if kp != k:
        w2 = jnp.pad(w2, ((0, kp - k), (0, 0)))
    return w2


def _pack_conv3x3(w, b):
    cout, cin = w.shape[0], w.shape[1]
    w2 = jnp.transpose(w, (2, 3, 1, 0)).reshape(9 * cin, cout)   # (kh, kw, Cin) row order
    return _pad_weight_k(w2).astype(jnp.bfloat16), b.reshape(1, -1).astype(jnp.float32)


def _pack_conv1x1(w, b):
    cout, cin = w.shape[0], w.shape[1]
    w2 = w.reshape(cout, cin).T
    return _pad_weight_k(w2).astype(jnp.bfloat16), b.reshape(1, -1).astype(jnp.float32)


def _pack_fc(w, b):
    return _pad_weight_k(w).astype(jnp.bfloat16), b.reshape(1, -1).astype(jnp.float32)


def pack_params(p):
    q = {}
    q["c1"] = _pack_conv3x3(p["c1_w"], p["c1_b"])
    q["c2"] = _pack_conv3x3(p["c2_w"], p["c2_b"])
    q["c3"] = _pack_conv3x3(p["c3_w"], p["c3_b"])
    q["c4"] = _pack_conv3x3(p["c4_w"], p["c4_b"])
    q["c5"] = _pack_conv3x3(p["c5_w"], p["c5_b"])
    q["rpn_conv"] = _pack_conv3x3(p["rpn_conv_w"], p["rpn_conv_b"])
    # merged RPN head: score (2A) ++ loc (4A) output channels -> one 1x1 conv
    rpn_w = jnp.concatenate([p["rpn_score_w"], p["rpn_loc_w"]], axis=0)
    rpn_b = jnp.concatenate([p["rpn_score_b"], p["rpn_loc_b"]], axis=0)
    q["rpn_head"] = _pack_conv1x1(rpn_w, rpn_b)
    # fc6: fold the NCHW-flatten permutation of pooled features (c,ph,pw) -> (ph,pw,c) into rows
    fc6_w = (p["fc6_w"].reshape(C5, ROI_SIZE, ROI_SIZE, FC_DIM)
             .transpose(1, 2, 0, 3).reshape(ROI_SIZE * ROI_SIZE * C5, FC_DIM))
    q["fc6"] = _pack_fc(fc6_w, p["fc6_b"])
    q["fc7"] = _pack_fc(p["fc7_w"], p["fc7_b"])
    # merged head: cls_loc (N_CLASS*4) ++ score (N_CLASS) -> one FC
    head_w = jnp.concatenate([p["cls_loc_w"], p["score_w"]], axis=1)
    head_b = jnp.concatenate([p["cls_loc_b"], p["score_b"]], axis=0)
    q["head"] = _pack_fc(head_w, head_b)
    return q


# ----------------------------- FasterRCNN forward (mode='forward') -----------------------------
def faster_rcnn_forward(packed, x_nchw, scale=1.0):
    n, c, H, W = x_nchw.shape
    assert n == 1, "scaled-down version runs batch=1 (matches the per-image proposal loop)"
    img_size = (H, W)
    x = jnp.transpose(x_nchw, (0, 2, 3, 1)).astype(jnp.bfloat16)   # NHWC, bf16 MXU feed

    # ---- extractor ----
    x = conv3x3(x, *packed["c1"]); x = maxpool2(x)
    x = conv3x3(x, *packed["c2"]); x = maxpool2(x)
    x = conv3x3(x, *packed["c3"]); x = maxpool2(x)
    x = conv3x3(x, *packed["c4"]); x = maxpool2(x)
    base_feature = conv3x3(x, *packed["c5"])                        # (1, H/16, W/16, C5) bf16
    fh, fw = base_feature.shape[1], base_feature.shape[2]

    # ---- RPN (merged score+loc head) ----
    h = conv3x3(base_feature, *packed["rpn_conv"], relu=True)
    rpn_out = conv1x1(h, *packed["rpn_head"], relu=False, out_dtype=jnp.float32)   # (1,fh,fw,6A)
    rpn_scores = rpn_out[..., : N_ANCHOR * 2].reshape(1, -1, 2)
    rpn_locs = rpn_out[..., N_ANCHOR * 2:].reshape(1, -1, 4)
    rpn_fg_scores = jax.nn.softmax(rpn_scores, axis=-1)[:, :, 1]

    anchor = enumerate_shifted_anchor(generate_anchor_base(), FEAT_STRIDE, fh, fw)
    rois_b = proposal_layer(rpn_locs[0], rpn_fg_scores[0], anchor, img_size, scale)   # (R, 4)
    rois = rois_b[None, :, :]                                                         # (1, R, 4)
    roi_indices = jnp.zeros((1, N_POST_NMS), jnp.float32)

    # ---- head (VGG16RoIHead) ----
    r = rois.reshape(-1, 4)
    rois_fm = jnp.stack(
        [r[:, 0] / img_size[1] * fw, r[:, 1] / img_size[0] * fh,
         r[:, 2] / img_size[1] * fw, r[:, 3] / img_size[0] * fh], axis=1)
    pool = roi_pool(base_feature[0], rois_fm, ROI_SIZE, spatial_scale=1.0)            # (R,7,7,C5)
    a = pool.reshape(r.shape[0], -1)               # (ph,pw,c) flatten; permutation folded into fc6_w
    fc6 = matmul_bias(a, *packed["fc6"], relu=True, out_dtype=jnp.bfloat16)
    fc7 = matmul_bias(fc6, *packed["fc7"], relu=True, out_dtype=jnp.bfloat16)
    head = matmul_bias(fc7, *packed["head"], relu=False, out_dtype=jnp.float32)       # (R, 5*N_CLASS)

    roi_cls_locs = head[:, : N_CLASS * 4].reshape(1, -1, N_CLASS * 4)
    roi_scores = head[:, N_CLASS * 4:].reshape(1, -1, N_CLASS)
    return roi_cls_locs, roi_scores, rois, roi_indices


if __name__ == "__main__":
    key = jax.random.PRNGKey(0)
    pkey, xkey = jax.random.split(key)
    params = init_params(pkey)
    packed = pack_params(params)        # one-time: bf16, matmul layout, merged heads, K pre-pad
    x = jax.random.normal(xkey, (1, C_IN, 64, 64), jnp.float32)   # NCHW input -> 4x4 feature map

    fwd = jax.jit(functools.partial(faster_rcnn_forward, scale=1.0))
    roi_cls_locs, roi_scores, rois, roi_indices = fwd(packed, x)
    jax.block_until_ready((roi_cls_locs, roi_scores, rois, roi_indices))

    assert roi_cls_locs.shape == (1, N_POST_NMS, N_CLASS * 4)
    assert roi_scores.shape == (1, N_POST_NMS, N_CLASS)
    assert rois.shape == (1, N_POST_NMS, 4)
    assert roi_indices.shape == (1, N_POST_NMS)
    print("KERNEL_OK")
</pallas_src>

<mosaic_0001>
module attributes {stable_mosaic.version = 11 : i64} {
  func.func @_mm_bias_act_kernel(%arg0: i32, %arg1: i32, %arg2: memref<512x27xbf16, #tpu.memory_space<vmem>>, %arg3: memref<27x16xbf16, #tpu.memory_space<vmem>>, %arg4: memref<1x16xf32, #tpu.memory_space<vmem>>, %arg5: memref<512x16xbf16, #tpu.memory_space<vmem>>, %arg6: memref<512x16xf32, #tpu.memory_space<vmem>>) attributes {dimension_semantics = [#tpu.dimension_semantics<parallel>, #tpu.dimension_semantics<arbitrary>], iteration_bounds = array<i64: 8, 1>, scalar_prefetch = 0 : i64, scratch_operands = 1 : i64, tpu.core_type = #tpu.core_type<tc>, window_params = [{transform_indices = @transform_0, window_bounds = array<i64: 512, 27>}, {transform_indices = @transform_1, window_bounds = array<i64: 27, 16>}, {pipeline_mode = #tpu.pipeline_mode<synchronous>, transform_indices = @transform_2, window_bounds = array<i64: 1, 16>}, {transform_indices = @transform_3, window_bounds = array<i64: 512, 16>}]} {
    %c0_i32 = arith.constant 0 : i32
    %0 = arith.cmpi eq, %arg1, %c0_i32 : i32
    %1 = arith.extui %0 : i1 to i32
    %c0_i32_0 = arith.constant 0 : i32
    %2 = arith.cmpi ne, %1, %c0_i32_0 : i32
    scf.if %2 {
      %cst_10 = arith.constant 0.000000e+00 : f32
      %12 = vector.broadcast %cst_10 : f32 to vector<512x16xf32>
      %c0_11 = arith.constant 0 : index
      %c0_12 = arith.constant 0 : index
      %13 = vector.load %arg6[%c0_11, %c0_12] : memref<512x16xf32, #tpu.memory_space<vmem>>, vector<512x16xf32>
      tpu.vector_store %arg6[%c0_11, %c0_12], %12 {strides = array<i32>} : memref<512x16xf32, #tpu.memory_space<vmem>>, vector<512x16xf32>,
    } else {
    }
    %c0 = arith.constant 0 : index
    %c0_1 = arith.constant 0 : index
    %3 = vector.load %arg6[%c0, %c0_1] : memref<512x16xf32, #tpu.memory_space<vmem>>, vector<512x16xf32>
    %c0_2 = arith.constant 0 : index
    %c0_3 = arith.constant 0 : index
    %4 = vector.load %arg2[%c0_2, %c0_3] : memref<512x27xbf16, #tpu.memory_space<vmem>>, vector<512x27xbf16>
    %c0_4 = arith.constant 0 : index
    %c0_5 = arith.constant 0 : index
    %5 = vector.load %arg3[%c0_4, %c0_5] : memref<27x16xbf16, #tpu.memory_space<vmem>>, vector<27x16xbf16>
    %cst = arith.constant dense<0.000000e+00> : vector<512x16xf32>
    %6 = tpu.matmul %4, %5, %cst {dimension_numbers = #tpu.dot_dimension_numbers<[1], [0], [0], [1], [0, 0, 1, 1], [], []>} : vector<512x27xbf16>, vector<27x16xbf16>, vector<512x16xf32> -> vector<512x16xf32>
    %7 = arith.addf %3, %6 : vector<512x16xf32>
    %c0_6 = arith.constant 0 : index
    %c0_7 = arith.constant 0 : index
    %8 = vector.load %arg6[%c0_6, %c0_7] : memref<512x16xf32, #tpu.memory_space<vmem>>, vector<512x16xf32>
    tpu.vector_store %arg6[%c0_6, %c0_7], %7 {strides = array<i32>} : memref<512x16xf32, #tpu.memory_space<vmem>>, vector<512x16xf32>,
    %c0_i32_8 = arith.constant 0 : i32
    %9 = arith.cmpi eq, %arg1, %c0_i32_8 : i32
    %10 = arith.extui %9 : i1 to i32
    %c0_i32_9 = arith.constant 0 : i32
    %11 = arith.cmpi ne, %10, %c0_i32_9 : i32
    scf.if %11 {
      %c0_10 = arith.constant 0 : index
      %c0_11 = arith.constant 0 : index
      %12 = vector.load %arg6[%c0_10, %c0_11] : memref<512x16xf32, #tpu.memory_space<vmem>>, vector<512x16xf32>
      %c0_12 = arith.constant 0 : index
      %c0_13 = arith.constant 0 : index
      %13 = vector.load %arg4[%c0_12, %c0_13] : memref<1x16xf32, #tpu.memory_space<vmem>>, vector<1x16xf32>
      %14 = vector.broadcast %13 : vector<1x16xf32> to vector<512x16xf32>
      %15 = arith.addf %12, %14 : vector<512x16xf32>
      %cst_14 = arith.constant 0.000000e+00 : f32
      %16 = vector.broadcast %cst_14 : f32 to vector<512x16xf32>
      %17 = arith.maximumf %15, %16 : vector<512x16xf32>
      %18 = arith.truncf %17 : vector<512x16xf32> to vector<512x16xbf16>
      %c0_15 = arith.constant 0 : index
      %c0_16 = arith.constant 0 : index
      %19 = vector.load %arg5[%c0_15, %c0_16] : memref<512x16xbf16, #tpu.memory_space<vmem>>, vector<512x16xbf16>
      tpu.vector_store %arg5[%c0_15, %c0_16], %18 {strides = array<i32>} : memref<512x16xbf16, #tpu.memory_space<vmem>>, vector<512x16xbf16>,
    } else {
    }
    return
  }
  func.func @transform_0(%arg0: i32, %arg1: i32) -> (i32, i32) {
    %c0_i32 = arith.constant 0 : i32
    return %arg0, %arg1 : i32, i32
  }
  func.func @transform_1(%arg0: i32, %arg1: i32) -> (i32, i32) {
    %c0_i32 = arith.constant 0 : i32
    %c0_i32_0 = arith.constant 0 : i32
    return %arg1, %c0_i32 : i32, i32
  }
  func.func @transform_2(%arg0: i32, %arg1: i32) -> (i32, i32) {
    %c0_i32 = arith.constant 0 : i32
    %c0_i32_0 = arith.constant 0 : i32
    %c0_i32_1 = arith.constant 0 : i32
    return %c0_i32, %c0_i32_0 : i32, i32
  }
  func.func @transform_3(%arg0: i32, %arg1: i32) -> (i32, i32) {
    %c0_i32 = arith.constant 0 : i32
    %c0_i32_0 = arith.constant 0 : i32
    return %arg0, %c0_i32 : i32, i32
  }
}

module attributes {stable_mosaic.version = 11 : i64} {
  func.func @_mm_bias_act_kernel(%arg0: i32, %arg1: i32, %arg2: memref<512x144xbf16, #tpu.memory_space<vmem>>, %arg3: memref<144x32xbf16, #tpu.memory_space<vmem>>, %arg4: memref<1x32xf32, #tpu.memory_space<vmem>>, %arg5: memref<512x32xbf16, #tpu.memory_space<vmem>>, %arg6: memref<512x32xf32, #tpu.memory_space<vmem>>) attributes {dimension_semantics = [#tpu.dimension_semantics<parallel>, #tpu.dimension_semantics<arbitrary>], iteration_bounds = array<i64: 2, 1>, scalar_prefetch = 0 : i64, scratch_operands = 1 : i64, tpu.core_type = #tpu.core_type<tc>, window_params = [{transform_indices = @transform_0, window_bounds = array<i64: 512, 144>}, {transform_indices = @transform_1, window_bounds = array<i64: 144, 32>}, {pipeline_mode = #tpu.pipeline_mode<synchronous>, transform_indices = @transform_2, window_bounds = array<i64: 1, 32>}, {transform_indices = @transform_3, window_bounds = array<i64: 512, 32>}]} {
    %c0_i32 = arith.constant 0 : i32
    %0 = arith.cmpi eq, %arg1, %c0_i32 : i32
    %1 = arith.extui %0 : i1 to i32
    %c0_i32_0 = arith.constant 0 : i32
    %2 = arith.cmpi ne, %1, %c0_i32_0 : i32
    scf.if %2 {
      %cst_10 = arith.constant 0.000000e+00 : f32
      %12 = vector.broadcast %cst_10 : f32 to vector<512x32xf32>
      %c0_11 = arith.constant 0 : index
      %c0_12 = arith.constant 0 : index
      %13 = vector.load %arg6[%c0_11, %c0_12] : memref<512x32xf32, #tpu.memory_space<vmem>>, vector<512x32xf32>
      tpu.vector_store %arg6[%c0_11, %c0_12], %12 {strides = array<i32>} : memref<512x32xf32, #tpu.memory_space<vmem>>, vector<512x32xf32>,
    } else {
    }
    %c0 = arith.constant 0 : index
    %c0_1 = arith.constant 0 : index
    %3 = vector.load %arg6[%c0, %c0_1] : memref<512x32xf32, #tpu.memory_space<vmem>>, vector<512x32xf32>
    %c0_2 = arith.constant 0 : index
    %c0_3 = arith.constant 0 : index
    %4 = vector.load %arg2[%c0_2, %c0_3] : memref<512x144xbf16, #tpu.memory_space<vmem>>, vector<512x144xbf16>
    %c0_4 = arith.constant 0 : index
    %c0_5 = arith.constant 0 : index
    %5 = vector.load %arg3[%c0_4, %c0_5] : memref<144x32xbf16, #tpu.memory_space<vmem>>, vector<144x32xbf16>
    %cst = arith.constant dense<0.000000e+00> : vector<512x32xf32>
    %6 = tpu.matmul %4, %5, %cst {dimension_numbers = #tpu.dot_dimension_numbers<[1], [0], [0], [1], [0, 0, 1, 1], [], []>} : vector<512x144xbf16>, vector<144x32xbf16>, vector<512x32xf32> -> vector<512x32xf32>
    %7 = arith.addf %3, %6 : vector<512x32xf32>
    %c0_6 = arith.constant 0 : index
    %c0_7 = arith.constant 0 : index
    %8 = vector.load %arg6[%c0_6, %c0_7] : memref<512x32xf32, #tpu.memory_space<vmem>>, vector<512x32xf32>
    tpu.vector_store %arg6[%c0_6, %c0_7], %7 {strides = array<i32>} : memref<512x32xf32, #tpu.memory_space<vmem>>, vector<512x32xf32>,
    %c0_i32_8 = arith.constant 0 : i32
    %9 = arith.cmpi eq, %arg1, %c0_i32_8 : i32
    %10 = arith.extui %9 : i1 to i32
    %c0_i32_9 = arith.constant 0 : i32
    %11 = arith.cmpi ne, %10, %c0_i32_9 : i32
    scf.if %11 {
      %c0_10 = arith.constant 0 : index
      %c0_11 = arith.constant 0 : index
      %12 = vector.load %arg6[%c0_10, %c0_11] : memref<512x32xf32, #tpu.memory_space<vmem>>, vector<512x32xf32>
      %c0_12 = arith.constant 0 : index
      %c0_13 = arith.constant 0 : index
      %13 = vector.load %arg4[%c0_12, %c0_13] : memref<1x32xf32, #tpu.memory_space<vmem>>, vector<1x32xf32>
      %14 = vector.broadcast %13 : vector<1x32xf32> to vector<512x32xf32>
      %15 = arith.addf %12, %14 : vector<512x32xf32>
      %cst_14 = arith.constant 0.000000e+00 : f32
      %16 = vector.broadcast %cst_14 : f32 to vector<512x32xf32>
      %17 = arith.maximumf %15, %16 : vector<512x32xf32>
      %18 = arith.truncf %17 : vector<512x32xf32> to vector<512x32xbf16>
      %c0_15 = arith.constant 0 : index
      %c0_16 = arith.constant 0 : index
      %19 = vector.load %arg5[%c0_15, %c0_16] : memref<512x32xbf16, #tpu.memory_space<vmem>>, vector<512x32xbf16>
      tpu.vector_store %arg5[%c0_15, %c0_16], %18 {strides = array<i32>} : memref<512x32xbf16, #tpu.memory_space<vmem>>, vector<512x32xbf16>,
    } else {
    }
    return
  }
  func.func @transform_0(%arg0: i32, %arg1: i32) -> (i32, i32) {
    %c0_i32 = arith.constant 0 : i32
    return %arg0, %arg1 : i32, i32
  }
  func.func @transform_1(%arg0: i32, %arg1: i32) -> (i32, i32) {
    %c0_i32 = arith.constant 0 : i32
    %c0_i32_0 = arith.constant 0 : i32
    return %arg1, %c0_i32 : i32, i32
  }
  func.func @transform_2(%arg0: i32, %arg1: i32) -> (i32, i32) {
    %c0_i32 = arith.constant 0 : i32
    %c0_i32_0 = arith.constant 0 : i32
    %c0_i32_1 = arith.constant 0 : i32
    return %c0_i32, %c0_i32_0 : i32, i32
  }
  func.func @transform_3(%arg0: i32, %arg1: i32) -> (i32, i32) {
    %c0_i32 = arith.constant 0 : i32
    %c0_i32_0 = arith.constant 0 : i32
    return %arg0, %c0_i32 : i32, i32
  }
}

module attributes {stable_mosaic.version = 11 : i64} {
  func.func @_mm_bias_act_kernel(%arg0: i32, %arg1: i32, %arg2: memref<256x288xbf16, #tpu.memory_space<vmem>>, %arg3: memref<288x32xbf16, #tpu.memory_space<vmem>>, %arg4: memref<1x32xf32, #tpu.memory_space<vmem>>, %arg5: memref<256x32xbf16, #tpu.memory_space<vmem>>, %arg6: memref<256x32xf32, #tpu.memory_space<vmem>>) attributes {dimension_semantics = [#tpu.dimension_semantics<parallel>, #tpu.dimension_semantics<arbitrary>], iteration_bounds = array<i64: 1, 1>, scalar_prefetch = 0 : i64, scratch_operands = 1 : i64, tpu.core_type = #tpu.core_type<tc>, window_params = [{transform_indices = @transform_0, window_bounds = array<i64: 256, 288>}, {transform_indices = @transform_1, window_bounds = array<i64: 288, 32>}, {pipeline_mode = #tpu.pipeline_mode<synchronous>, transform_indices = @transform_2, window_bounds = array<i64: 1, 32>}, {transform_indices = @transform_3, window_bounds = array<i64: 256, 32>}]} {
    %c0_i32 = arith.constant 0 : i32
    %0 = arith.cmpi eq, %arg1, %c0_i32 : i32
    %1 = arith.extui %0 : i1 to i32
    %c0_i32_0 = arith.constant 0 : i32
    %2 = arith.cmpi ne, %1, %c0_i32_0 : i32
    scf.if %2 {
      %cst_10 = arith.constant 0.000000e+00 : f32
      %12 = vector.broadcast %cst_10 : f32 to vector<256x32xf32>
      %c0_11 = arith.constant 0 : index
      %c0_12 = arith.constant 0 : index
      %13 = vector.load %arg6[%c0_11, %c0_12] : memref<256x32xf32, #tpu.memory_space<vmem>>, vector<256x32xf32>
      tpu.vector_store %arg6[%c0_11, %c0_12], %12 {strides = array<i32>} : memref<256x32xf32, #tpu.memory_space<vmem>>, vector<256x32xf32>,
    } else {
    }
    %c0 = arith.constant 0 : index
    %c0_1 = arith.constant 0 : index
    %3 = vector.load %arg6[%c0, %c0_1] : memref<256x32xf32, #tpu.memory_space<vmem>>, vector<256x32xf32>
    %c0_2 = arith.constant 0 : index
    %c0_3 = arith.constant 0 : index
    %4 = vector.load %arg2[%c0_2, %c0_3] : memref<256x288xbf16, #tpu.memory_space<vmem>>, vector<256x288xbf16>
    %c0_4 = arith.constant 0 : index
    %c0_5 = arith.constant 0 : index
    %5 = vector.load %arg3[%c0_4, %c0_5] : memref<288x32xbf16, #tpu.memory_space<vmem>>, vector<288x32xbf16>
    %cst = arith.constant dense<0.000000e+00> : vector<256x32xf32>
    %6 = tpu.matmul %4, %5, %cst {dimension_numbers = #tpu.dot_dimension_numbers<[1], [0], [0], [1], [0, 0, 1, 1], [], []>} : vector<256x288xbf16>, vector<288x32xbf16>, vector<256x32xf32> -> vector<256x32xf32>
    %7 = arith.addf %3, %6 : vector<256x32xf32>
    %c0_6 = arith.constant 0 : index
    %c0_7 = arith.constant 0 : index
    %8 = vector.load %arg6[%c0_6, %c0_7] : memref<256x32xf32, #tpu.memory_space<vmem>>, vector<256x32xf32>
    tpu.vector_store %arg6[%c0_6, %c0_7], %7 {strides = array<i32>} : memref<256x32xf32, #tpu.memory_space<vmem>>, vector<256x32xf32>,
    %c0_i32_8 = arith.constant 0 : i32
    %9 = arith.cmpi eq, %arg1, %c0_i32_8 : i32
    %10 = arith.extui %9 : i1 to i32
    %c0_i32_9 = arith.constant 0 : i32
    %11 = arith.cmpi ne, %10, %c0_i32_9 : i32
    scf.if %11 {
      %c0_10 = arith.constant 0 : index
      %c0_11 = arith.constant 0 : index
      %12 = vector.load %arg6[%c0_10, %c0_11] : memref<256x32xf32, #tpu.memory_space<vmem>>, vector<256x32xf32>
      %c0_12 = arith.constant 0 : index
      %c0_13 = arith.constant 0 : index
      %13 = vector.load %arg4[%c0_12, %c0_13] : memref<1x32xf32, #tpu.memory_space<vmem>>, vector<1x32xf32>
      %14 = vector.broadcast %13 : vector<1x32xf32> to vector<256x32xf32>
      %15 = arith.addf %12, %14 : vector<256x32xf32>
      %cst_14 = arith.constant 0.000000e+00 : f32
      %16 = vector.broadcast %cst_14 : f32 to vector<256x32xf32>
      %17 = arith.maximumf %15, %16 : vector<256x32xf32>
      %18 = arith.truncf %17 : vector<256x32xf32> to vector<256x32xbf16>
      %c0_15 = arith.constant 0 : index
      %c0_16 = arith.constant 0 : index
      %19 = vector.load %arg5[%c0_15, %c0_16] : memref<256x32xbf16, #tpu.memory_space<vmem>>, vector<256x32xbf16>
      tpu.vector_store %arg5[%c0_15, %c0_16], %18 {strides = array<i32>} : memref<256x32xbf16, #tpu.memory_space<vmem>>, vector<256x32xbf16>,
    } else {
    }
    return
  }
  func.func @transform_0(%arg0: i32, %arg1: i32) -> (i32, i32) {
    %c0_i32 = arith.constant 0 : i32
    return %arg0, %arg1 : i32, i32
  }
  func.func @transform_1(%arg0: i32, %arg1: i32) -> (i32, i32) {
    %c0_i32 = arith.constant 0 : i32
    %c0_i32_0 = arith.constant 0 : i32
    return %arg1, %c0_i32 : i32, i32
  }
  func.func @transform_2(%arg0: i32, %arg1: i32) -> (i32, i32) {
    %c0_i32 = arith.constant 0 : i32
    %c0_i32_0 = arith.constant 0 : i32
    %c0_i32_1 = arith.constant 0 : i32
    return %c0_i32, %c0_i32_0 : i32, i32
  }
  func.func @transform_3(%arg0: i32, %arg1: i32) -> (i32, i32) {
    %c0_i32 = arith.constant 0 : i32
    %c0_i32_0 = arith.constant 0 : i32
    return %arg0, %c0_i32 : i32, i32
  }
}

module attributes {stable_mosaic.version = 11 : i64} {
  func.func @_mm_bias_act_kernel(%arg0: i32, %arg1: i32, %arg2: memref<64x288xbf16, #tpu.memory_space<vmem>>, %arg3: memref<288x64xbf16, #tpu.memory_space<vmem>>, %arg4: memref<1x64xf32, #tpu.memory_space<vmem>>, %arg5: memref<64x64xbf16, #tpu.memory_space<vmem>>, %arg6: memref<64x64xf32, #tpu.memory_space<vmem>>) attributes {dimension_semantics = [#tpu.dimension_semantics<parallel>, #tpu.dimension_semantics<arbitrary>], iteration_bounds = array<i64: 1, 1>, scalar_prefetch = 0 : i64, scratch_operands = 1 : i64, tpu.core_type = #tpu.core_type<tc>, window_params = [{transform_indices = @transform_0, window_bounds = array<i64: 64, 288>}, {transform_indices = @transform_1, window_bounds = array<i64: 288, 64>}, {pipeline_mode = #tpu.pipeline_mode<synchronous>, transform_indices = @transform_2, window_bounds = array<i64: 1, 64>}, {transform_indices = @transform_3, window_bounds = array<i64: 64, 64>}]} {
    %c0_i32 = arith.constant 0 : i32
    %0 = arith.cmpi eq, %arg1, %c0_i32 : i32
    %1 = arith.extui %0 : i1 to i32
    %c0_i32_0 = arith.constant 0 : i32
    %2 = arith.cmpi ne, %1, %c0_i32_0 : i32
    scf.if %2 {
      %cst_10 = arith.constant 0.000000e+00 : f32
      %12 = vector.broadcast %cst_10 : f32 to vector<64x64xf32>
      %c0_11 = arith.constant 0 : index
      %c0_12 = arith.constant 0 : index
      %13 = vector.load %arg6[%c0_11, %c0_12] : memref<64x64xf32, #tpu.memory_space<vmem>>, vector<64x64xf32>
      tpu.vector_store %arg6[%c0_11, %c0_12], %12 {strides = array<i32>} : memref<64x64xf32, #tpu.memory_space<vmem>>, vector<64x64xf32>,
    } else {
    }
    %c0 = arith.constant 0 : index
    %c0_1 = arith.constant 0 : index
    %3 = vector.load %arg6[%c0, %c0_1] : memref<64x64xf32, #tpu.memory_space<vmem>>, vector<64x64xf32>
    %c0_2 = arith.constant 0 : index
    %c0_3 = arith.constant 0 : index
    %4 = vector.load %arg2[%c0_2, %c0_3] : memref<64x288xbf16, #tpu.memory_space<vmem>>, vector<64x288xbf16>
    %c0_4 = arith.constant 0 : index
    %c0_5 = arith.constant 0 : index
    %5 = vector.load %arg3[%c0_4, %c0_5] : memref<288x64xbf16, #tpu.memory_space<vmem>>, vector<288x64xbf16>
    %cst = arith.constant dense<0.000000e+00> : vector<64x64xf32>
    %6 = tpu.matmul %4, %5, %cst {dimension_numbers = #tpu.dot_dimension_numbers<[1], [0], [0], [1], [0, 0, 1, 1], [], []>} : vector<64x288xbf16>, vector<288x64xbf16>, vector<64x64xf32> -> vector<64x64xf32>
    %7 = arith.addf %3, %6 : vector<64x64xf32>
    %c0_6 = arith.constant 0 : index
    %c0_7 = arith.constant 0 : index
    %8 = vector.load %arg6[%c0_6, %c0_7] : memref<64x64xf32, #tpu.memory_space<vmem>>, vector<64x64xf32>
    tpu.vector_store %arg6[%c0_6, %c0_7], %7 {strides = array<i32>} : memref<64x64xf32, #tpu.memory_space<vmem>>, vector<64x64xf32>,
    %c0_i32_8 = arith.constant 0 : i32
    %9 = arith.cmpi eq, %arg1, %c0_i32_8 : i32
    %10 = arith.extui %9 : i1 to i32
    %c0_i32_9 = arith.constant 0 : i32
    %11 = arith.cmpi ne, %10, %c0_i32_9 : i32
    scf.if %11 {
      %c0_10 = arith.constant 0 : index
      %c0_11 = arith.constant 0 : index
      %12 = vector.load %arg6[%c0_10, %c0_11] : memref<64x64xf32, #tpu.memory_space<vmem>>, vector<64x64xf32>
      %c0_12 = arith.constant 0 : index
      %c0_13 = arith.constant 0 : index
      %13 = vector.load %arg4[%c0_12, %c0_13] : memref<1x64xf32, #tpu.memory_space<vmem>>, vector<1x64xf32>
      %14 = vector.broadcast %13 : vector<1x64xf32> to vector<64x64xf32>
      %15 = arith.addf %12, %14 : vector<64x64xf32>
      %cst_14 = arith.constant 0.000000e+00 : f32
      %16 = vector.broadcast %cst_14 : f32 to vector<64x64xf32>
      %17 = arith.maximumf %15, %16 : vector<64x64xf32>
      %18 = arith.truncf %17 : vector<64x64xf32> to vector<64x64xbf16>
      %c0_15 = arith.constant 0 : index
      %c0_16 = arith.constant 0 : index
      %19 = vector.load %arg5[%c0_15, %c0_16] : memref<64x64xbf16, #tpu.memory_space<vmem>>, vector<64x64xbf16>
      tpu.vector_store %arg5[%c0_15, %c0_16], %18 {strides = array<i32>} : memref<64x64xbf16, #tpu.memory_space<vmem>>, vector<64x64xbf16>,
    } else {
    }
    return
  }
  func.func @transform_0(%arg0: i32, %arg1: i32) -> (i32, i32) {
    %c0_i32 = arith.constant 0 : i32
    return %arg0, %arg1 : i32, i32
  }
  func.func @transform_1(%arg0: i32, %arg1: i32) -> (i32, i32) {
    %c0_i32 = arith.constant 0 : i32
    %c0_i32_0 = arith.constant 0 : i32
    return %arg1, %c0_i32 : i32, i32
  }
  func.func @transform_2(%arg0: i32, %arg1: i32) -> (i32, i32) {
    %c0_i32 = arith.constant 0 : i32
    %c0_i32_0 = arith.constant 0 : i32
    %c0_i32_1 = arith.constant 0 : i32
    return %c0_i32, %c0_i32_0 : i32, i32
  }
  func.func @transform_3(%arg0: i32, %arg1: i32) -> (i32, i32) {
    %c0_i32 = arith.constant 0 : i32
    %c0_i32_0 = arith.constant 0 : i32
    return %arg0, %c0_i32 : i32, i32
  }
}

module attributes {stable_mosaic.version = 11 : i64} {
  func.func @_mm_bias_act_kernel(%arg0: i32, %arg1: i32, %arg2: memref<16x64xbf16, #tpu.memory_space<vmem>>, %arg3: memref<64x54xbf16, #tpu.memory_space<vmem>>, %arg4: memref<1x54xf32, #tpu.memory_space<vmem>>, %arg5: memref<16x54xf32, #tpu.memory_space<vmem>>, %arg6: memref<16x54xf32, #tpu.memory_space<vmem>>) attributes {dimension_semantics = [#tpu.dimension_semantics<parallel>, #tpu.dimension_semantics<arbitrary>], iteration_bounds = array<i64: 1, 1>, scalar_prefetch = 0 : i64, scratch_operands = 1 : i64, tpu.core_type = #tpu.core_type<tc>, window_params = [{transform_indices = @transform_0, window_bounds = array<i64: 16, 64>}, {transform_indices = @transform_1, window_bounds = array<i64: 64, 54>}, {pipeline_mode = #tpu.pipeline_mode<synchronous>, transform_indices = @transform_2, window_bounds = array<i64: 1, 54>}, {transform_indices = @transform_3, window_bounds = array<i64: 16, 54>}]} {
    %c0_i32 = arith.constant 0 : i32
    %0 = arith.cmpi eq, %arg1, %c0_i32 : i32
    %1 = arith.extui %0 : i1 to i32
    %c0_i32_0 = arith.constant 0 : i32
    %2 = arith.cmpi ne, %1, %c0_i32_0 : i32
    scf.if %2 {
      %cst_10 = arith.constant 0.000000e+00 : f32
      %12 = vector.broadcast %cst_10 : f32 to vector<16x54xf32>
      %c0_11 = arith.constant 0 : index
      %c0_12 = arith.constant 0 : index
      %13 = vector.load %arg6[%c0_11, %c0_12] : memref<16x54xf32, #tpu.memory_space<vmem>>, vector<16x54xf32>
      tpu.vector_store %arg6[%c0_11, %c0_12], %12 {strides = array<i32>} : memref<16x54xf32, #tpu.memory_space<vmem>>, vector<16x54xf32>,
    } else {
    }
    %c0 = arith.constant 0 : index
    %c0_1 = arith.constant 0 : index
    %3 = vector.load %arg6[%c0, %c0_1] : memref<16x54xf32, #tpu.memory_space<vmem>>, vector<16x54xf32>
    %c0_2 = arith.constant 0 : index
    %c0_3 = arith.constant 0 : index
    %4 = vector.load %arg2[%c0_2, %c0_3] : memref<16x64xbf16, #tpu.memory_space<vmem>>, vector<16x64xbf16>
    %c0_4 = arith.constant 0 : index
    %c0_5 = arith.constant 0 : index
    %5 = vector.load %arg3[%c0_4, %c0_5] : memref<64x54xbf16, #tpu.memory_space<vmem>>, vector<64x54xbf16>
    %cst = arith.constant dense<0.000000e+00> : vector<16x54xf32>
    %6 = tpu.matmul %4, %5, %cst {dimension_numbers = #tpu.dot_dimension_numbers<[1], [0], [0], [1], [0, 0, 1, 1], [], []>} : vector<16x64xbf16>, vector<64x54xbf16>, vector<16x54xf32> -> vector<16x54xf32>
    %7 = arith.addf %3, %6 : vector<16x54xf32>
    %c0_6 = arith.constant 0 : index
    %c0_7 = arith.constant 0 : index
    %8 = vector.load %arg6[%c0_6, %c0_7] : memref<16x54xf32, #tpu.memory_space<vmem>>, vector<16x54xf32>
    tpu.vector_store %arg6[%c0_6, %c0_7], %7 {strides = array<i32>} : memref<16x54xf32, #tpu.memory_space<vmem>>, vector<16x54xf32>,
    %c0_i32_8 = arith.constant 0 : i32
    %9 = arith.cmpi eq, %arg1, %c0_i32_8 : i32
    %10 = arith.extui %9 : i1 to i32
    %c0_i32_9 = arith.constant 0 : i32
    %11 = arith.cmpi ne, %10, %c0_i32_9 : i32
    scf.if %11 {
      %c0_10 = arith.constant 0 : index
      %c0_11 = arith.constant 0 : index
      %12 = vector.load %arg6[%c0_10, %c0_11] : memref<16x54xf32, #tpu.memory_space<vmem>>, vector<16x54xf32>
      %c0_12 = arith.constant 0 : index
      %c0_13 = arith.constant 0 : index
      %13 = vector.load %arg4[%c0_12, %c0_13] : memref<1x54xf32, #tpu.memory_space<vmem>>, vector<1x54xf32>
      %14 = vector.broadcast %13 : vector<1x54xf32> to vector<16x54xf32>
      %15 = arith.addf %12, %14 : vector<16x54xf32>
      %c0_14 = arith.constant 0 : index
      %c0_15 = arith.constant 0 : index
      %16 = vector.load %arg5[%c0_14, %c0_15] : memref<16x54xf32, #tpu.memory_space<vmem>>, vector<16x54xf32>
      tpu.vector_store %arg5[%c0_14, %c0_15], %15 {strides = array<i32>} : memref<16x54xf32, #tpu.memory_space<vmem>>, vector<16x54xf32>,
    } else {
    }
    return
  }
  func.func @transform_0(%arg0: i32, %arg1: i32) -> (i32, i32) {
    %c0_i32 = arith.constant 0 : i32
    return %arg0, %arg1 : i32, i32
  }
  func.func @transform_1(%arg0: i32, %arg1: i32) -> (i32, i32) {
    %c0_i32 = arith.constant 0 : i32
    %c0_i32_0 = arith.constant 0 : i32
    return %arg1, %c0_i32 : i32, i32
  }
  func.func @transform_2(%arg0: i32, %arg1: i32) -> (i32, i32) {
    %c0_i32 = arith.constant 0 : i32
    %c0_i32_0 = arith.constant 0 : i32
    %c0_i32_1 = arith.constant 0 : i32
    return %c0_i32, %c0_i32_0 : i32, i32
  }
  func.func @transform_3(%arg0: i32, %arg1: i32) -> (i32, i32) {
    %c0_i32 = arith.constant 0 : i32
    %c0_i32_0 = arith.constant 0 : i32
    return %arg0, %c0_i32 : i32, i32
  }
}

module attributes {stable_mosaic.version = 11 : i64} {
  func.func @_mm_bias_act_kernel(%arg0: i32, %arg1: i32, %arg2: memref<16x576xbf16, #tpu.memory_space<vmem>>, %arg3: memref<576x64xbf16, #tpu.memory_space<vmem>>, %arg4: memref<1x64xf32, #tpu.memory_space<vmem>>, %arg5: memref<16x64xbf16, #tpu.memory_space<vmem>>, %arg6: memref<16x64xf32, #tpu.memory_space<vmem>>) attributes {dimension_semantics = [#tpu.dimension_semantics<parallel>, #tpu.dimension_semantics<arbitrary>], iteration_bounds = array<i64: 1, 1>, scalar_prefetch = 0 : i64, scratch_operands = 1 : i64, tpu.core_type = #tpu.core_type<tc>, window_params = [{transform_indices = @transform_0, window_bounds = array<i64: 16, 576>}, {transform_indices = @transform_1, window_bounds = array<i64: 576, 64>}, {pipeline_mode = #tpu.pipeline_mode<synchronous>, transform_indices = @transform_2, window_bounds = array<i64: 1, 64>}, {transform_indices = @transform_3, window_bounds = array<i64: 16, 64>}]} {
    %c0_i32 = arith.constant 0 : i32
    %0 = arith.cmpi eq, %arg1, %c0_i32 : i32
    %1 = arith.extui %0 : i1 to i32
    %c0_i32_0 = arith.constant 0 : i32
    %2 = arith.cmpi ne, %1, %c0_i32_0 : i32
    scf.if %2 {
      %cst_10 = arith.constant 0.000000e+00 : f32
      %12 = vector.broadcast %cst_10 : f32 to vector<16x64xf32>
      %c0_11 = arith.constant 0 : index
      %c0_12 = arith.constant 0 : index
      %13 = vector.load %arg6[%c0_11, %c0_12] : memref<16x64xf32, #tpu.memory_space<vmem>>, vector<16x64xf32>
      tpu.vector_store %arg6[%c0_11, %c0_12], %12 {strides = array<i32>} : memref<16x64xf32, #tpu.memory_space<vmem>>, vector<16x64xf32>,
    } else {
    }
    %c0 = arith.constant 0 : index
    %c0_1 = arith.constant 0 : index
    %3 = vector.load %arg6[%c0, %c0_1] : memref<16x64xf32, #tpu.memory_space<vmem>>, vector<16x64xf32>
    %c0_2 = arith.constant 0 : index
    %c0_3 = arith.constant 0 : index
    %4 = vector.load %arg2[%c0_2, %c0_3] : memref<16x576xbf16, #tpu.memory_space<vmem>>, vector<16x576xbf16>
    %c0_4 = arith.constant 0 : index
    %c0_5 = arith.constant 0 : index
    %5 = vector.load %arg3[%c0_4, %c0_5] : memref<576x64xbf16, #tpu.memory_space<vmem>>, vector<576x64xbf16>
    %cst = arith.constant dense<0.000000e+00> : vector<16x64xf32>
    %6 = tpu.matmul %4, %5, %cst {dimension_numbers = #tpu.dot_dimension_numbers<[1], [0], [0], [1], [0, 0, 1, 1], [], []>} : vector<16x576xbf16>, vector<576x64xbf16>, vector<16x64xf32> -> vector<16x64xf32>
    %7 = arith.addf %3, %6 : vector<16x64xf32>
    %c0_6 = arith.constant 0 : index
    %c0_7 = arith.constant 0 : index
    %8 = vector.load %arg6[%c0_6, %c0_7] : memref<16x64xf32, #tpu.memory_space<vmem>>, vector<16x64xf32>
    tpu.vector_store %arg6[%c0_6, %c0_7], %7 {strides = array<i32>} : memref<16x64xf32, #tpu.memory_space<vmem>>, vector<16x64xf32>,
    %c0_i32_8 = arith.constant 0 : i32
    %9 = arith.cmpi eq, %arg1, %c0_i32_8 : i32
    %10 = arith.extui %9 : i1 to i32
    %c0_i32_9 = arith.constant 0 : i32
    %11 = arith.cmpi ne, %10, %c0_i32_9 : i32
    scf.if %11 {
      %c0_10 = arith.constant 0 : index
      %c0_11 = arith.constant 0 : index
      %12 = vector.load %arg6[%c0_10, %c0_11] : memref<16x64xf32, #tpu.memory_space<vmem>>, vector<16x64xf32>
      %c0_12 = arith.constant 0 : index
      %c0_13 = arith.constant 0 : index
      %13 = vector.load %arg4[%c0_12, %c0_13] : memref<1x64xf32, #tpu.memory_space<vmem>>, vector<1x64xf32>
      %14 = vector.broadcast %13 : vector<1x64xf32> to vector<16x64xf32>
      %15 = arith.addf %12, %14 : vector<16x64xf32>
      %cst_14 = arith.constant 0.000000e+00 : f32
      %16 = vector.broadcast %cst_14 : f32 to vector<16x64xf32>
      %17 = arith.maximumf %15, %16 : vector<16x64xf32>
      %18 = arith.truncf %17 : vector<16x64xf32> to vector<16x64xbf16>
      %c0_15 = arith.constant 0 : index
      %c0_16 = arith.constant 0 : index
      %19 = vector.load %arg5[%c0_15, %c0_16] : memref<16x64xbf16, #tpu.memory_space<vmem>>, vector<16x64xbf16>
      tpu.vector_store %arg5[%c0_15, %c0_16], %18 {strides = array<i32>} : memref<16x64xbf16, #tpu.memory_space<vmem>>, vector<16x64xbf16>,
    } else {
    }
    return
  }
  func.func @transform_0(%arg0: i32, %arg1: i32) -> (i32, i32) {
    %c0_i32 = arith.constant 0 : i32
    return %arg0, %arg1 : i32, i32
  }
  func.func @transform_1(%arg0: i32, %arg1: i32) -> (i32, i32) {
    %c0_i32 = arith.constant 0 : i32
    %c0_i32_0 = arith.constant 0 : i32
    return %arg1, %c0_i32 : i32, i32
  }
  func.func @transform_2(%arg0: i32, %arg1: i32) -> (i32, i32) {
    %c0_i32 = arith.constant 0 : i32
    %c0_i32_0 = arith.constant 0 : i32
    %c0_i32_1 = arith.constant 0 : i32
    return %c0_i32, %c0_i32_0 : i32, i32
  }
  func.func @transform_3(%arg0: i32, %arg1: i32) -> (i32, i32) {
    %c0_i32 = arith.constant 0 : i32
    %c0_i32_0 = arith.constant 0 : i32
    return %arg0, %c0_i32 : i32, i32
  }
}

module attributes {stable_mosaic.version = 11 : i64} {
  func.func @_mm_bias_act_kernel(%arg0: i32, %arg1: i32, %arg2: memref<16x1664xbf16, #tpu.memory_space<vmem>>, %arg3: memref<1664x256xbf16, #tpu.memory_space<vmem>>, %arg4: memref<1x256xf32, #tpu.memory_space<vmem>>, %arg5: memref<16x256xbf16, #tpu.memory_space<vmem>>, %arg6: memref<16x256xf32, #tpu.memory_space<vmem>>) attributes {dimension_semantics = [#tpu.dimension_semantics<parallel>, #tpu.dimension_semantics<arbitrary>], iteration_bounds = array<i64: 1, 2>, scalar_prefetch = 0 : i64, scratch_operands = 1 : i64, tpu.core_type = #tpu.core_type<tc>, window_params = [{transform_indices = @transform_0, window_bounds = array<i64: 16, 1664>}, {transform_indices = @transform_1, window_bounds = array<i64: 1664, 256>}, {pipeline_mode = #tpu.pipeline_mode<synchronous>, transform_indices = @transform_2, window_bounds = array<i64: 1, 256>}, {transform_indices = @transform_3, window_bounds = array<i64: 16, 256>}]} {
    %c0_i32 = arith.constant 0 : i32
    %0 = arith.cmpi eq, %arg1, %c0_i32 : i32
    %1 = arith.extui %0 : i1 to i32
    %c0_i32_0 = arith.constant 0 : i32
    %2 = arith.cmpi ne, %1, %c0_i32_0 : i32
    scf.if %2 {
      %cst_9 = arith.constant 0.000000e+00 : f32
      %12 = vector.broadcast %cst_9 : f32 to vector<16x256xf32>
      %c0_10 = arith.constant 0 : index
      %c0_11 = arith.constant 0 : index
      %13 = vector.load %arg6[%c0_10, %c0_11] : memref<16x256xf32, #tpu.memory_space<vmem>>, vector<16x256xf32>
      tpu.vector_store %arg6[%c0_10, %c0_11], %12 {strides = array<i32>} : memref<16x256xf32, #tpu.memory_space<vmem>>, vector<16x256xf32>,
    } else {
    }
    %c0 = arith.constant 0 : index
    %c0_1 = arith.constant 0 : index
    %3 = vector.load %arg6[%c0, %c0_1] : memref<16x256xf32, #tpu.memory_space<vmem>>, vector<16x256xf32>
    %c0_2 = arith.constant 0 : index
    %c0_3 = arith.constant 0 : index
    %4 = vector.load %arg2[%c0_2, %c0_3] : memref<16x1664xbf16, #tpu.memory_space<vmem>>, vector<16x1664xbf16>
    %c0_4 = arith.constant 0 : index
    %c0_5 = arith.constant 0 : index
    %5 = vector.load %arg3[%c0_4, %c0_5] : memref<1664x256xbf16, #tpu.memory_space<vmem>>, vector<1664x256xbf16>
    %cst = arith.constant dense<0.000000e+00> : vector<16x256xf32>
    %6 = tpu.matmul %4, %5, %cst {dimension_numbers = #tpu.dot_dimension_numbers<[1], [0], [0], [1], [0, 0, 1, 1], [], []>} : vector<16x1664xbf16>, vector<1664x256xbf16>, vector<16x256xf32> -> vector<16x256xf32>
    %7 = arith.addf %3, %6 : vector<16x256xf32>
    %c0_6 = arith.constant 0 : index
    %c0_7 = arith.constant 0 : index
    %8 = vector.load %arg6[%c0_6, %c0_7] : memref<16x256xf32, #tpu.memory_space<vmem>>, vector<16x256xf32>
    tpu.vector_store %arg6[%c0_6, %c0_7], %7 {strides = array<i32>} : memref<16x256xf32, #tpu.memory_space<vmem>>, vector<16x256xf32>,
    %c1_i32 = arith.constant 1 : i32
    %9 = arith.cmpi eq, %arg1, %c1_i32 : i32
    %10 = arith.extui %9 : i1 to i32
    %c0_i32_8 = arith.constant 0 : i32
    %11 = arith.cmpi ne, %10, %c0_i32_8 : i32
    scf.if %11 {
      %c0_9 = arith.constant 0 : index
      %c0_10 = arith.constant 0 : index
      %12 = vector.load %arg6[%c0_9, %c0_10] : memref<16x256xf32, #tpu.memory_space<vmem>>, vector<16x256xf32>
      %c0_11 = arith.constant 0 : index
      %c0_12 = arith.constant 0 : index
      %13 = vector.load %arg4[%c0_11, %c0_12] : memref<1x256xf32, #tpu.memory_space<vmem>>, vector<1x256xf32>
      %14 = vector.broadcast %13 : vector<1x256xf32> to vector<16x256xf32>
      %15 = arith.addf %12, %14 : vector<16x256xf32>
      %cst_13 = arith.constant 0.000000e+00 : f32
      %16 = vector.broadcast %cst_13 : f32 to vector<16x256xf32>
      %17 = arith.maximumf %15, %16 : vector<16x256xf32>
      %18 = arith.truncf %17 : vector<16x256xf32> to vector<16x256xbf16>
      %c0_14 = arith.constant 0 : index
      %c0_15 = arith.constant 0 : index
      %19 = vector.load %arg5[%c0_14, %c0_15] : memref<16x256xbf16, #tpu.memory_space<vmem>>, vector<16x256xbf16>
      tpu.vector_store %arg5[%c0_14, %c0_15], %18 {strides = array<i32>} : memref<16x256xbf16, #tpu.memory_space<vmem>>, vector<16x256xbf16>,
    } else {
    }
    return
  }
  func.func @transform_0(%arg0: i32, %arg1: i32) -> (i32, i32) {
    %c0_i32 = arith.constant 0 : i32
    return %arg0, %arg1 : i32, i32
  }
  func.func @transform_1(%arg0: i32, %arg1: i32) -> (i32, i32) {
    %c0_i32 = arith.constant 0 : i32
    %c0_i32_0 = arith.constant 0 : i32
    return %arg1, %c0_i32 : i32, i32
  }
  func.func @transform_2(%arg0: i32, %arg1: i32) -> (i32, i32) {
    %c0_i32 = arith.constant 0 : i32
    %c0_i32_0 = arith.constant 0 : i32
    %c0_i32_1 = arith.constant 0 : i32
    return %c0_i32, %c0_i32_0 : i32, i32
  }
  func.func @transform_3(%arg0: i32, %arg1: i32) -> (i32, i32) {
    %c0_i32 = arith.constant 0 : i32
    %c0_i32_0 = arith.constant 0 : i32
    return %arg0, %c0_i32 : i32, i32
  }
}

module attributes {stable_mosaic.version = 11 : i64} {
  func.func @_mm_bias_act_kernel(%arg0: i32, %arg1: i32, %arg2: memref<16x256xbf16, #tpu.memory_space<vmem>>, %arg3: memref<256x256xbf16, #tpu.memory_space<vmem>>, %arg4: memref<1x256xf32, #tpu.memory_space<vmem>>, %arg5: memref<16x256xbf16, #tpu.memory_space<vmem>>, %arg6: memref<16x256xf32, #tpu.memory_space<vmem>>) attributes {dimension_semantics = [#tpu.dimension_semantics<parallel>, #tpu.dimension_semantics<arbitrary>], iteration_bounds = array<i64: 1, 1>, scalar_prefetch = 0 : i64, scratch_operands = 1 : i64, tpu.core_type = #tpu.core_type<tc>, window_params = [{transform_indices = @transform_0, window_bounds = array<i64: 16, 256>}, {transform_indices = @transform_1, window_bounds = array<i64: 256, 256>}, {pipeline_mode = #tpu.pipeline_mode<synchronous>, transform_indices = @transform_2, window_bounds = array<i64: 1, 256>}, {transform_indices = @transform_3, window_bounds = array<i64: 16, 256>}]} {
    %c0_i32 = arith.constant 0 : i32
    %0 = arith.cmpi eq, %arg1, %c0_i32 : i32
    %1 = arith.extui %0 : i1 to i32
    %c0_i32_0 = arith.constant 0 : i32
    %2 = arith.cmpi ne, %1, %c0_i32_0 : i32
    scf.if %2 {
      %cst_10 = arith.constant 0.000000e+00 : f32
      %12 = vector.broadcast %cst_10 : f32 to vector<16x256xf32>
      %c0_11 = arith.constant 0 : index
      %c0_12 = arith.constant 0 : index
      %13 = vector.load %arg6[%c0_11, %c0_12] : memref<16x256xf32, #tpu.memory_space<vmem>>, vector<16x256xf32>
      tpu.vector_store %arg6[%c0_11, %c0_12], %12 {strides = array<i32>} : memref<16x256xf32, #tpu.memory_space<vmem>>, vector<16x256xf32>,
    } else {
    }
    %c0 = arith.constant 0 : index
    %c0_1 = arith.constant 0 : index
    %3 = vector.load %arg6[%c0, %c0_1] : memref<16x256xf32, #tpu.memory_space<vmem>>, vector<16x256xf32>
    %c0_2 = arith.constant 0 : index
    %c0_3 = arith.constant 0 : index
    %4 = vector.load %arg2[%c0_2, %c0_3] : memref<16x256xbf16, #tpu.memory_space<vmem>>, vector<16x256xbf16>
    %c0_4 = arith.constant 0 : index
    %c0_5 = arith.constant 0 : index
    %5 = vector.load %arg3[%c0_4, %c0_5] : memref<256x256xbf16, #tpu.memory_space<vmem>>, vector<256x256xbf16>
    %cst = arith.constant dense<0.000000e+00> : vector<16x256xf32>
    %6 = tpu.matmul %4, %5, %cst {dimension_numbers = #tpu.dot_dimension_numbers<[1], [0], [0], [1], [0, 0, 1, 1], [], []>} : vector<16x256xbf16>, vector<256x256xbf16>, vector<16x256xf32> -> vector<16x256xf32>
    %7 = arith.addf %3, %6 : vector<16x256xf32>
    %c0_6 = arith.constant 0 : index
    %c0_7 = arith.constant 0 : index
    %8 = vector.load %arg6[%c0_6, %c0_7] : memref<16x256xf32, #tpu.memory_space<vmem>>, vector<16x256xf32>
    tpu.vector_store %arg6[%c0_6, %c0_7], %7 {strides = array<i32>} : memref<16x256xf32, #tpu.memory_space<vmem>>, vector<16x256xf32>,
    %c0_i32_8 = arith.constant 0 : i32
    %9 = arith.cmpi eq, %arg1, %c0_i32_8 : i32
    %10 = arith.extui %9 : i1 to i32
    %c0_i32_9 = arith.constant 0 : i32
    %11 = arith.cmpi ne, %10, %c0_i32_9 : i32
    scf.if %11 {
      %c0_10 = arith.constant 0 : index
      %c0_11 = arith.constant 0 : index
      %12 = vector.load %arg6[%c0_10, %c0_11] : memref<16x256xf32, #tpu.memory_space<vmem>>, vector<16x256xf32>
      %c0_12 = arith.constant 0 : index
      %c0_13 = arith.constant 0 : index
      %13 = vector.load %arg4[%c0_12, %c0_13] : memref<1x256xf32, #tpu.memory_space<vmem>>, vector<1x256xf32>
      %14 = vector.broadcast %13 : vector<1x256xf32> to vector<16x256xf32>
      %15 = arith.addf %12, %14 : vector<16x256xf32>
      %cst_14 = arith.constant 0.000000e+00 : f32
      %16 = vector.broadcast %cst_14 : f32 to vector<16x256xf32>
      %17 = arith.maximumf %15, %16 : vector<16x256xf32>
      %18 = arith.truncf %17 : vector<16x256xf32> to vector<16x256xbf16>
      %c0_15 = arith.constant 0 : index
      %c0_16 = arith.constant 0 : index
      %19 = vector.load %arg5[%c0_15, %c0_16] : memref<16x256xbf16, #tpu.memory_space<vmem>>, vector<16x256xbf16>
      tpu.vector_store %arg5[%c0_15, %c0_16], %18 {strides = array<i32>} : memref<16x256xbf16, #tpu.memory_space<vmem>>, vector<16x256xbf16>,
    } else {
    }
    return
  }
  func.func @transform_0(%arg0: i32, %arg1: i32) -> (i32, i32) {
    %c0_i32 = arith.constant 0 : i32
    return %arg0, %arg1 : i32, i32
  }
  func.func @transform_1(%arg0: i32, %arg1: i32) -> (i32, i32) {
    %c0_i32 = arith.constant 0 : i32
    %c0_i32_0 = arith.constant 0 : i32
    return %arg1, %c0_i32 : i32, i32
  }
  func.func @transform_2(%arg0: i32, %arg1: i32) -> (i32, i32) {
    %c0_i32 = arith.constant 0 : i32
    %c0_i32_0 = arith.constant 0 : i32
    %c0_i32_1 = arith.constant 0 : i32
    return %c0_i32, %c0_i32_0 : i32, i32
  }
  func.func @transform_3(%arg0: i32, %arg1: i32) -> (i32, i32) {
    %c0_i32 = arith.constant 0 : i32
    %c0_i32_0 = arith.constant 0 : i32
    return %arg0, %c0_i32 : i32, i32
  }
}

module attributes {stable_mosaic.version = 11 : i64} {
  func.func @_mm_bias_act_kernel(%arg0: i32, %arg1: i32, %arg2: memref<16x256xbf16, #tpu.memory_space<vmem>>, %arg3: memref<256x20xbf16, #tpu.memory_space<vmem>>, %arg4: memref<1x20xf32, #tpu.memory_space<vmem>>, %arg5: memref<16x20xf32, #tpu.memory_space<vmem>>, %arg6: memref<16x20xf32, #tpu.memory_space<vmem>>) attributes {dimension_semantics = [#tpu.dimension_semantics<parallel>, #tpu.dimension_semantics<arbitrary>], iteration_bounds = array<i64: 1, 1>, scalar_prefetch = 0 : i64, scratch_operands = 1 : i64, tpu.core_type = #tpu.core_type<tc>, window_params = [{transform_indices = @transform_0, window_bounds = array<i64: 16, 256>}, {transform_indices = @transform_1, window_bounds = array<i64: 256, 20>}, {pipeline_mode = #tpu.pipeline_mode<synchronous>, transform_indices = @transform_2, window_bounds = array<i64: 1, 20>}, {transform_indices = @transform_3, window_bounds = array<i64: 16, 20>}]} {
    %c0_i32 = arith.constant 0 : i32
    %0 = arith.cmpi eq, %arg1, %c0_i32 : i32
    %1 = arith.extui %0 : i1 to i32
    %c0_i32_0 = arith.constant 0 : i32
    %2 = arith.cmpi ne, %1, %c0_i32_0 : i32
    scf.if %2 {
      %cst_10 = arith.constant 0.000000e+00 : f32
      %12 = vector.broadcast %cst_10 : f32 to vector<16x20xf32>
      %c0_11 = arith.constant 0 : index
      %c0_12 = arith.constant 0 : index
      %13 = vector.load %arg6[%c0_11, %c0_12] : memref<16x20xf32, #tpu.memory_space<vmem>>, vector<16x20xf32>
      tpu.vector_store %arg6[%c0_11, %c0_12], %12 {strides = array<i32>} : memref<16x20xf32, #tpu.memory_space<vmem>>, vector<16x20xf32>,
    } else {
    }
    %c0 = arith.constant 0 : index
    %c0_1 = arith.constant 0 : index
    %3 = vector.load %arg6[%c0, %c0_1] : memref<16x20xf32, #tpu.memory_space<vmem>>, vector<16x20xf32>
    %c0_2 = arith.constant 0 : index
    %c0_3 = arith.constant 0 : index
    %4 = vector.load %arg2[%c0_2, %c0_3] : memref<16x256xbf16, #tpu.memory_space<vmem>>, vector<16x256xbf16>
    %c0_4 = arith.constant 0 : index
    %c0_5 = arith.constant 0 : index
    %5 = vector.load %arg3[%c0_4, %c0_5] : memref<256x20xbf16, #tpu.memory_space<vmem>>, vector<256x20xbf16>
    %cst = arith.constant dense<0.000000e+00> : vector<16x20xf32>
    %6 = tpu.matmul %4, %5, %cst {dimension_numbers = #tpu.dot_dimension_numbers<[1], [0], [0], [1], [0, 0, 1, 1], [], []>} : vector<16x256xbf16>, vector<256x20xbf16>, vector<16x20xf32> -> vector<16x20xf32>
    %7 = arith.addf %3, %6 : vector<16x20xf32>
    %c0_6 = arith.constant 0 : index
    %c0_7 = arith.constant 0 : index
    %8 = vector.load %arg6[%c0_6, %c0_7] : memref<16x20xf32, #tpu.memory_space<vmem>>, vector<16x20xf32>
    tpu.vector_store %arg6[%c0_6, %c0_7], %7 {strides = array<i32>} : memref<16x20xf32, #tpu.memory_space<vmem>>, vector<16x20xf32>,
    %c0_i32_8 = arith.constant 0 : i32
    %9 = arith.cmpi eq, %arg1, %c0_i32_8 : i32
    %10 = arith.extui %9 : i1 to i32
    %c0_i32_9 = arith.constant 0 : i32
    %11 = arith.cmpi ne, %10, %c0_i32_9 : i32
    scf.if %11 {
      %c0_10 = arith.constant 0 : index
      %c0_11 = arith.constant 0 : index
      %12 = vector.load %arg6[%c0_10, %c0_11] : memref<16x20xf32, #tpu.memory_space<vmem>>, vector<16x20xf32>
      %c0_12 = arith.constant 0 : index
      %c0_13 = arith.constant 0 : index
      %13 = vector.load %arg4[%c0_12, %c0_13] : memref<1x20xf32, #tpu.memory_space<vmem>>, vector<1x20xf32>
      %14 = vector.broadcast %13 : vector<1x20xf32> to vector<16x20xf32>
      %15 = arith.addf %12, %14 : vector<16x20xf32>
      %c0_14 = arith.constant 0 : index
      %c0_15 = arith.constant 0 : index
      %16 = vector.load %arg5[%c0_14, %c0_15] : memref<16x20xf32, #tpu.memory_space<vmem>>, vector<16x20xf32>
      tpu.vector_store %arg5[%c0_14, %c0_15], %15 {strides = array<i32>} : memref<16x20xf32, #tpu.memory_space<vmem>>, vector<16x20xf32>,
    } else {
    }
    return
  }
  func.func @transform_0(%arg0: i32, %arg1: i32) -> (i32, i32) {
    %c0_i32 = arith.constant 0 : i32
    return %arg0, %arg1 : i32, i32
  }
  func.func @transform_1(%arg0: i32, %arg1: i32) -> (i32, i32) {
    %c0_i32 = arith.constant 0 : i32
    %c0_i32_0 = arith.constant 0 : i32
    return %arg1, %c0_i32 : i32, i32
  }
  func.func @transform_2(%arg0: i32, %arg1: i32) -> (i32, i32) {
    %c0_i32 = arith.constant 0 : i32
    %c0_i32_0 = arith.constant 0 : i32
    %c0_i32_1 = arith.constant 0 : i32
    return %c0_i32, %c0_i32_0 : i32, i32
  }
  func.func @transform_3(%arg0: i32, %arg1: i32) -> (i32, i32) {
    %c0_i32 = arith.constant 0 : i32
    %c0_i32_0 = arith.constant 0 : i32
    return %arg0, %c0_i32 : i32, i32
  }
}

</mosaic_0001>

<llo_original>
// kernel: faster_rcnn_forward.10
$region0: #{faster_rcnn_forward.10}
  #allocation0 [shape = 'u32[]', space=smem, size = 0x4, offset = 0x4, fixed_abs, tag = 'smem constant byte address 0x4 - core index']
  #allocation1 [shape = 'u32[72,128]{1,0:T(1,128)}', space=vmem, size = 0x9000, scoped, tag = 'internal scratch']
  #allocation2 [shape = 'f32[512,16]{1,0:T(8,128)}', space=vmem, size = 0x40000, scoped, tag = 'scratch operand']
  %s0 = inlined_call_operand.vmem [shape: bf16[4096,27], index: 0, kind: input, shape index: {}]
  %s1 = inlined_call_operand.vmem [shape: bf16[27,16], index: 1, kind: input, shape index: {}]
  %s2 = inlined_call_operand.vmem [shape: f32[1,16], index: 2, kind: input, shape index: {}]
  %s3 = inlined_call_operand.vmem [shape: bf16[4096,16], index: 3, kind: output, shape index: {}]
  %s4 = sld [smem:[#allocation0]]
  $region53: #{faster_rcnn_forward.10} parent=0
    _
  %s6 = ssub.s32 1, %s4
  %s7 = scalar_select 0, %s6, %s4
  loop: start=0, step=1, limit=10
  $region2: #{faster_rcnn_forward.10} parent=0 // loop_pre_header
    _
  $region3: #{faster_rcnn_forward.10} parent=0 // loop_header
    %s9 = sphi 0, %s13
    %p10 = scmp.ge.s32.totalorder %s9, 10
    %s16 = sphi 0, %s28
    %s17 = sphi 0, %s24
    %s18 = sphi 0, %s16
    %s19 = sphi 0, %s17
    %s20 = sphi 0, %s18
    %s21 = sphi 0, %s19
    %s33 = sphi 0, %s35
    %s36 = sphi 0, %s33
    %s37 = sphi 0, %s36
    %s53 = sphi 0, %s37
    %s59 = sphi 0, %s61
    %s62 = sphi 0, %s59
    %s63 = sphi 0, %s62
    %s79 = sphi 0, %s63
    %s83 = sphi 0, %s83
    %s85 = sphi 0, %s83
    %s86 = sphi 0, %s85
    %s100 = sphi 0, %s86
    %s106 = sphi 0, %s108
    %s109 = sphi 0, %s106
    %s110 = sphi 0, %s109
    %s126 = sphi 0, %s110
  $region4: #{faster_rcnn_forward.10} parent=0 // loop_header_branch
    %12 = sbr.rel (%p10) target = $region8
  $region5: #{faster_rcnn_forward.10} parent=0 // loop_body
    %s14 = ssub.s32 %s9, 1
    %s15 = ssub.s32 %s9, 2
    %s22 = sadd.s32 1, %s17
    %p23 = scmp.ge.s32.totalorder %s22, 1
    %s24 = scalar_select %p23, 0, %s22
    %s25 = sadd.s32 1, %s16
    %s26 = scalar_select %p23, %s25, %s16
    %p27 = scmp.ge.s32.totalorder %s26, 8
    %s28 = scalar_select %p27, 0, %s26
    %s29 = ssub.s32 %s16, %s28
    %s30 = ssub.s32 %s17, %s24
    %s31 = sor.u32 %s29, %s30
    %p32 = scmp.eq.s32.totalorder %s31, 0
    %s34 = sadd.s32 %s33, 1
    %s35 = scalar_select %p32, %s33, %s34
    %p38 = pneg %p32
    %p39 = scmp.eq.s32.totalorder %s9, 7
    %p40 = por %p38, %p39
    %p41 = scmp.ne.s32.totalorder %s33, %s36
    %p42 = scmp.eq.s32.totalorder %s9, 0
    %p43 = por %p41, %p42
    %p44 = scmp.ne.s32.totalorder %s33, %s36
    %p45 = scmp.eq.s32.totalorder %s14, 7
    %p46 = por %p44, %p45
    %p47 = scmp.ne.s32.totalorder %s36, %s37
    %p48 = scmp.eq.s32.totalorder %s14, 0
    %p49 = por %p47, %p48
    %p50 = scmp.ne.s32.totalorder %s36, %s37
    %p51 = scmp.eq.s32.totalorder %s15, 7
    %p52 = por %p50, %p51
    %p54 = scmp.ne.s32.totalorder %s37, %s53
    %p55 = scmp.eq.s32.totalorder %s15, 0
    %p56 = por %p54, %p55
    %s57 = ssub.s32 %s17, %s24
    %p58 = scmp.eq.s32.totalorder %s57, 0
    %s60 = sadd.s32 %s59, 1
    %s61 = scalar_select %p58, %s59, %s60
    %p64 = pneg %p58
    %p65 = scmp.eq.s32.totalorder %s9, 7
    %p66 = por %p64, %p65
    %p67 = scmp.ne.s32.totalorder %s59, %s62
    %p68 = scmp.eq.s32.totalorder %s9, 0
    %p69 = por %p67, %p68
    %p70 = scmp.ne.s32.totalorder %s59, %s62
    %p71 = scmp.eq.s32.totalorder %s14, 7
    %p72 = por %p70, %p71
    %p73 = scmp.ne.s32.totalorder %s62, %s63
    %p74 = scmp.eq.s32.totalorder %s14, 0
    %p75 = por %p73, %p74
    %p76 = scmp.ne.s32.totalorder %s62, %s63
    %p77 = scmp.eq.s32.totalorder %s15, 7
    %p78 = por %p76, %p77
    %p80 = scmp.ne.s32.totalorder %s63, %s79
    %p81 = scmp.eq.s32.totalorder %s15, 0
    %p82 = por %p80, %p81
    %s84 = sadd.s32 %s83, 1
    %p87 = scmp.eq.s32.totalorder %s9, 7
    %p88 = scmp.ne.s32.totalorder %s83, %s85
    %p89 = scmp.eq.s32.totalorder %s9, 0
    %p90 = por %p88, %p89
    %p91 = scmp.ne.s32.totalorder %s83, %s85
    %p92 = scmp.eq.s32.totalorder %s14, 7
    %p93 = por %p91, %p92
    %p94 = scmp.ne.s32.totalorder %s85, %s86
    %p95 = scmp.eq.s32.totalorder %s14, 0
    %p96 = por %p94, %p95
    %p97 = scmp.ne.s32.totalorder %s85, %s86
    %p98 = scmp.eq.s32.totalorder %s15, 7
    %p99 = por %p97, %p98
    %p101 = scmp.ne.s32.totalorder %s86, %s100
    %p102 = scmp.eq.s32.totalorder %s15, 0
    %p103 = por %p101, %p102
    %s104 = ssub.s32 %s16, %s28
    %p105 = scmp.eq.s32.totalorder %s104, 0
    %s107 = sadd.s32 %s106, 1
    %s108 = scalar_select %p105, %s106, %s107
    %p111 = pneg %p105
    %p112 = scmp.eq.s32.totalorder %s9, 7
    %p113 = por %p111, %p112
    %p114 = scmp.ne.s32.totalorder %s106, %s109
    %p115 = scmp.eq.s32.totalorder %s9, 0
    %p116 = por %p114, %p115
    %p117 = scmp.ne.s32.totalorder %s106, %s109
    %p118 = scmp.eq.s32.totalorder %s14, 7
    %p119 = por %p117, %p118
    %p120 = scmp.ne.s32.totalorder %s109, %s110
    %p121 = scmp.eq.s32.totalorder %s14, 0
    %p122 = por %p120, %p121
    %p123 = scmp.ne.s32.totalorder %s109, %s110
    %p124 = scmp.eq.s32.totalorder %s15, 7
    %p125 = por %p123, %p124
    %p127 = scmp.ne.s32.totalorder %s110, %s126
    %p128 = scmp.eq.s32.totalorder %s15, 0
    %p129 = por %p127, %p128
    %p130 = scmp.le.s32.totalorder 1, %s9
    %p131 = scmp.lt.s32.totalorder %s9, 9
    %p132 = pnand %p130, %p131
    %p133 = pneg %p132
    // Predicated region
    $region9: #{faster_rcnn_forward.10} parent=5 // pred_check
      _
    $region10: #{faster_rcnn_forward.10} parent=5 // pred_check_branch
      %135 = sbr.rel (%p132) target = $region12
    $region11: #{faster_rcnn_forward.10} parent=5 // pred_region
      %s136 = ssub.s32 %s9, 1
      // Predicated region
      $region13: #{faster_rcnn_forward.10} parent=11 // pred_check
        %p137 = pneg %p75
      $region14: #{faster_rcnn_forward.10} parent=11 // pred_check_branch
        %139 = sbr.rel (%p137) target = $region16
      $region15: #{faster_rcnn_forward.10} parent=11 // pred_region
        %s140 = smul.u32 4, %s19
        %p141 = scmp.lt.s32.totalorder %s140, 3
        %s142 = scalar_select %p141, %s140, 3
        %s143 = smul.addr %s142, 4
        %s144 = scalar_lea.vmem %s1, %s143
        %s145 = smul.u32 4, %s19
      $region16: #{faster_rcnn_forward.10} parent=11 // pred_fallthru
        _
      // Predicated region
      $region17: #{faster_rcnn_forward.10} parent=11 // pred_check
        %p146 = pneg %p96
      $region18: #{faster_rcnn_forward.10} parent=11 // pred_check_branch
        %148 = sbr.rel (%p146) target = $region20
      $region19: #{faster_rcnn_forward.10} parent=11 // pred_region
        _
      $region20: #{faster_rcnn_forward.10} parent=11 // pred_fallthru
        _
    $region12: #{faster_rcnn_forward.10} parent=5 // pred_fallthru
      _
    %p149 = scmp.lt.s32.totalorder %s9, 8
    // Predicated region
    $region21: #{faster_rcnn_forward.10} parent=5 // pred_check
      %p150 = pneg %p149
    $region22: #{faster_rcnn_forward.10} parent=5 // pred_check_branch
      %152 = sbr.rel (%p150) target = $region24
    $region23: #{faster_rcnn_forward.10} parent=5 // pred_region
      // Predicated region
      $region25: #{faster_rcnn_forward.10} parent=23 // pred_check
        %p153 = pneg %p43
      $region26: #{faster_rcnn_forward.10} parent=23 // pred_check_branch
        %155 = sbr.rel (%p153) target = $region28
      $region27: #{faster_rcnn_forward.10} parent=23 // pred_region
        %s156 = smul.u32 64, %s16
        %p157 = scmp.lt.s32.totalorder %s156, 511
        %s158 = scalar_select %p157, %s156, 511
        %p159 = scmp.lt.s32.totalorder %s17, 0
        %s160 = scalar_select %p159, %s17, 0
        %s161 = sadd.s32 %s160, %s158
        %s162 = smul.addr %s161, 4
        %s163 = scalar_lea.vmem %s0, %s162
        %s164 = smul.u32 64, %s16
      $region28: #{faster_rcnn_forward.10} parent=23 // pred_fallthru
        _
    $region24: #{faster_rcnn_forward.10} parent=5 // pred_fallthru
      _
    %p165 = scmp.le.s32.totalorder 1, %s9
    %p166 = scmp.lt.s32.totalorder %s9, 9
    %p167 = pnand %p165, %p166
    %p168 = pneg %p167
    // Predicated region
    $region29: #{faster_rcnn_forward.10} parent=5 // pred_check
      _
    $region30: #{faster_rcnn_forward.10} parent=5 // pred_check_branch
      %170 = sbr.rel (%p167) target = $region32
    $region31: #{faster_rcnn_forward.10} parent=5 // pred_region
      %s171 = ssub.s32 %s9, 1
      %s172 = smul.u32 64, %s18
      %p173 = scmp.lt.s32.totalorder %s172, 511
      %s174 = scalar_select %p173, %s172, 511
      %p175 = scmp.lt.s32.totalorder %s19, 0
      %s176 = scalar_select %p175, %s19, 0
      %s177 = sadd.s32 %s176, %s174
      %s178 = smul.addr %s177, 4
      %s179 = scalar_lea.vmem %s0, %s178
      %p180 = pneg %p49
      %p181 = pneg %p46
      %s182 = smul.u32 4, %s19
      %p183 = scmp.lt.s32.totalorder %s182, 3
      %s184 = scalar_select %p183, %s182, 3
      %s185 = smul.addr %s184, 4
      %s186 = scalar_lea.vmem %s1, %s185
      %p187 = pneg %p75
      %p188 = pneg %p72
      %p189 = pneg %p96
      %p190 = pneg %p93
      %p191 = pneg %p122
      %p192 = pneg %p119
      %s193 = smul.u32 64, %s18
      %p194 = scmp.lt.s32.totalorder %s193, 511
      %s195 = scalar_select %p194, %s193, 511
      %s196 = smul.addr %s195, 4
      %s197 = scalar_lea.vmem %s3, %s196
      %s198 = smul.u32 64, %s18
      %p199 = scmp.lt.s32.totalorder %s198, 511
      %s200 = scalar_select %p199, %s198, 511
      %p201 = scmp.lt.s32.totalorder %s19, 0
      %s202 = scalar_select %p201, %s19, 0
      %s203 = sadd.s32 %s202, %s200
      %s204 = smul.addr %s203, 4
      %s205 = scalar_lea.vmem %s0, %s204
      %s206 = smul.u32 64, %s18
      %s207 = smul.u32 4, %s19
      %p208 = scmp.lt.s32.totalorder %s207, 3
      %s209 = scalar_select %p208, %s207, 3
      %s210 = smul.addr %s209, 4
      %s211 = scalar_lea.vmem %s1, %s210
      %s212 = smul.u32 4, %s19
      %s213 = smul.u32 64, %s18
      %p214 = scmp.lt.s32.totalorder %s213, 511
      %s215 = scalar_select %p214, %s213, 511
      %s216 = smul.addr %s215, 4
      %s217 = scalar_lea.vmem %s3, %s216
      %s218 = smul.u32 64, %s18
      %p220 = scmp.eq.s32.totalorder %s19, 0
      // Predicated region
      $region33: #{faster_rcnn_forward.10} parent=31 // pred_check
        %p221 = pneg %p220
      $region34: #{faster_rcnn_forward.10} parent=31 // pred_check_branch
        %223 = sbr.rel (%p221) target = $region36
      $region35: #{faster_rcnn_forward.10} parent=31 // pred_region
        %vm224 = vcmask 130048
        %225 = vst.msk [vmem:[#allocation2] sm:$0xff] %vm224, 0.0
        %226 = vst.msk [vmem:[#allocation2 + $0x8] sm:$0xff] %vm224, 0.0
        %227 = vst.msk [vmem:[#allocation2 + $0x10] sm:$0xff] %vm224, 0.0
        %228 = vst.msk [vmem:[#allocation2 + $0x18] sm:$0xff] %vm224, 0.0
        %229 = vst.msk [vmem:[#allocation2 + $0x20] sm:$0xff] %vm224, 0.0
        %230 = vst.msk [vmem:[#allocation2 + $0x28] sm:$0xff] %vm224, 0.0
        %231 = vst.msk [vmem:[#allocation2 + $0x30] sm:$0xff] %vm224, 0.0
        %232 = vst.msk [vmem:[#allocation2 + $0x38] sm:$0xff] %vm224, 0.0
        %233 = vst.msk [vmem:[#allocation2 + $0x40] sm:$0xff] %vm224, 0.0
        %234 = vst.msk [vmem:[#allocation2 + $0x48] sm:$0xff] %vm224, 0.0
        %235 = vst.msk [vmem:[#allocation2 + $0x50] sm:$0xff] %vm224, 0.0
        %236 = vst.msk [vmem:[#allocation2 + $0x58] sm:$0xff] %vm224, 0.0
        %237 = vst.msk [vmem:[#allocation2 + $0x60] sm:$0xff] %vm224, 0.0
        %238 = vst.msk [vmem:[#allocation2 + $0x68] sm:$0xff] %vm224, 0.0
        %239 = vst.msk [vmem:[#allocation2 + $0x70] sm:$0xff] %vm224, 0.0
        %240 = vst.msk [vmem:[#allocation2 + $0x78] sm:$0xff] %vm224, 0.0
        %241 = vst.msk [vmem:[#allocation2 + $0x80] sm:$0xff] %vm224, 0.0
        %242 = vst.msk [vmem:[#allocation2 + $0x88] sm:$0xff] %vm224, 0.0
        %243 = vst.msk [vmem:[#allocation2 + $0x90] sm:$0xff] %vm224, 0.0
        %244 = vst.msk [vmem:[#allocation2 + $0x98] sm:$0xff] %vm224, 0.0
        %245 = vst.msk [vmem:[#allocation2 + $0xa0] sm:$0xff] %vm224, 0.0
        %246 = vst.msk [vmem:[#allocation2 + $0xa8] sm:$0xff] %vm224, 0.0
        %247 = vst.msk [vmem:[#allocation2 + $0xb0] sm:$0xff] %vm224, 0.0
        %248 = vst.msk [vmem:[#allocation2 + $0xb8] sm:$0xff] %vm224, 0.0
        %249 = vst.msk [vmem:[#allocation2 + $0xc0] sm:$0xff] %vm224, 0.0
        %250 = vst.msk [vmem:[#allocation2 + $0xc8] sm:$0xff] %vm224, 0.0
        %251 = vst.msk [vmem:[#allocation2 + $0xd0] sm:$0xff] %vm224, 0.0
        %252 = vst.msk [vmem:[#allocation2 + $0xd8] sm:$0xff] %vm224, 0.0
        %253 = vst.msk [vmem:[#allocation2 + $0xe0] sm:$0xff] %vm224, 0.0
        %254 = vst.msk [vmem:[#allocation2 + $0xe8] sm:$0xff] %vm224, 0.0
        %255 = vst.msk [vmem:[#allocation2 + $0xf0] sm:$0xff] %vm224, 0.0
        %256 = vst.msk [vmem:[#allocation2 + $0xf8] sm:$0xff] %vm224, 0.0
        %257 = vst.msk [vmem:[#allocation2 + $0x100] sm:$0xff] %vm224, 0.0
        %258 = vst.msk [vmem:[#allocation2 + $0x108] sm:$0xff] %vm224, 0.0
        %259 = vst.msk [vmem:[#allocation2 + $0x110] sm:$0xff] %vm224, 0.0
        %260 = vst.msk [vmem:[#allocation2 + $0x118] sm:$0xff] %vm224, 0.0
        %261 = vst.msk [vmem:[#allocation2 + $0x120] sm:$0xff] %vm224, 0.0
        %262 = vst.msk [vmem:[#allocation2 + $0x128] sm:$0xff] %vm224, 0.0
        %263 = vst.msk [vmem:[#allocation2 + $0x130] sm:$0xff] %vm224, 0.0
        %264 = vst.msk [vmem:[#allocation2 + $0x138] sm:$0xff] %vm224, 0.0
        %265 = vst.msk [vmem:[#allocation2 + $0x140] sm:$0xff] %vm224, 0.0
        %266 = vst.msk [vmem:[#allocation2 + $0x148] sm:$0xff] %vm224, 0.0
        %267 = vst.msk [vmem:[#allocation2 + $0x150] sm:$0xff] %vm224, 0.0
        %268 = vst.msk [vmem:[#allocation2 + $0x158] sm:$0xff] %vm224, 0.0
        %269 = vst.msk [vmem:[#allocation2 + $0x160] sm:$0xff] %vm224, 0.0
        %270 = vst.msk [vmem:[#allocation2 + $0x168] sm:$0xff] %vm224, 0.0
        %271 = vst.msk [vmem:[#allocation2 + $0x170] sm:$0xff] %vm224, 0.0
        %272 = vst.msk [vmem:[#allocation2 + $0x178] sm:$0xff] %vm224, 0.0
        %273 = vst.msk [vmem:[#allocation2 + $0x180] sm:$0xff] %vm224, 0.0
        %274 = vst.msk [vmem:[#allocation2 + $0x188] sm:$0xff] %vm224, 0.0
        %275 = vst.msk [vmem:[#allocation2 + $0x190] sm:$0xff] %vm224, 0.0
        %276 = vst.msk [vmem:[#allocation2 + $0x198] sm:$0xff] %vm224, 0.0
        %277 = vst.msk [vmem:[#allocation2 + $0x1a0] sm:$0xff] %vm224, 0.0
        %278 = vst.msk [vmem:[#allocation2 + $0x1a8] sm:$0xff] %vm224, 0.0
        %279 = vst.msk [vmem:[#allocation2 + $0x1b0] sm:$0xff] %vm224, 0.0
        %280 = vst.msk [vmem:[#allocation2 + $0x1b8] sm:$0xff] %vm224, 0.0
        %281 = vst.msk [vmem:[#allocation2 + $0x1c0] sm:$0xff] %vm224, 0.0
        %282 = vst.msk [vmem:[#allocation2 + $0x1c8] sm:$0xff] %vm224, 0.0
        %283 = vst.msk [vmem:[#allocation2 + $0x1d0] sm:$0xff] %vm224, 0.0
        %284 = vst.msk [vmem:[#allocation2 + $0x1d8] sm:$0xff] %vm224, 0.0
        %285 = vst.msk [vmem:[#allocation2 + $0x1e0] sm:$0xff] %vm224, 0.0
        %286 = vst.msk [vmem:[#allocation2 + $0x1e8] sm:$0xff] %vm224, 0.0
        %287 = vst.msk [vmem:[#allocation2 + $0x1f0] sm:$0xff] %vm224, 0.0
        %288 = vst.msk [vmem:[#allocation2 + $0x1f8] sm:$0xff] %vm224, 0.0
      $region36: #{faster_rcnn_forward.10} parent=31 // pred_fallthru
        _
      %v289 = vld [vmem:[#allocation2] sm:$0xff]
      %v290 = vld [vmem:[#allocation2 + $0x8] sm:$0xff]
      %v291 = vld [vmem:[#allocation2 + $0x10] sm:$0xff]
      %v292 = vld [vmem:[#allocation2 + $0x18] sm:$0xff]
      %v293 = vld [vmem:[#allocation2 + $0x20] sm:$0xff]
      %v294 = vld [vmem:[#allocation2 + $0x28] sm:$0xff]
      %v295 = vld [vmem:[#allocation2 + $0x30] sm:$0xff]
      %v296 = vld [vmem:[#allocation2 + $0x38] sm:$0xff]
      %v297 = vld [vmem:[#allocation2 + $0x40] sm:$0xff]
      %v298 = vld [vmem:[#allocation2 + $0x48] sm:$0xff]
      %v299 = vld [vmem:[#allocation2 + $0x50] sm:$0xff]
      %v300 = vld [vmem:[#allocation2 + $0x58] sm:$0xff]
      %v301 = vld [vmem:[#allocation2 + $0x60] sm:$0xff]
      %v302 = vld [vmem:[#allocation2 + $0x68] sm:$0xff]
      %v303 = vld [vmem:[#allocation2 + $0x70] sm:$0xff]
      %v304 = vld [vmem:[#allocation2 + $0x78] sm:$0xff]
      %v305 = vld [vmem:[#allocation2 + $0x80] sm:$0xff]
      %v306 = vld [vmem:[#allocation2 + $0x88] sm:$0xff]
      %v307 = vld [vmem:[#allocation2 + $0x90] sm:$0xff]
      %v308 = vld [vmem:[#allocation2 + $0x98] sm:$0xff]
      %v309 = vld [vmem:[#allocation2 + $0xa0] sm:$0xff]
      %v310 = vld [vmem:[#allocation2 + $0xa8] sm:$0xff]
      %v311 = vld [vmem:[#allocation2 + $0xb0] sm:$0xff]
      %v312 = vld [vmem:[#allocation2 + $0xb8] sm:$0xff]
      %v313 = vld [vmem:[#allocation2 + $0xc0] sm:$0xff]
      %v314 = vld [vmem:[#allocation2 + $0xc8] sm:$0xff]
      %v315 = vld [vmem:[#allocation2 + $0xd0] sm:$0xff]
      %v316 = vld [vmem:[#allocation2 + $0xd8] sm:$0xff]
      %v317 = vld [vmem:[#allocation2 + $0xe0] sm:$0xff]
      %v318 = vld [vmem:[#allocation2 + $0xe8] sm:$0xff]
      %v319 = vld [vmem:[#allocation2 + $0xf0] sm:$0xff]
      %v320 = vld [vmem:[#allocation2 + $0xf8] sm:$0xff]
      %v321 = vld [vmem:[#allocation2 + $0x100] sm:$0xff]
      %v322 = vld [vmem:[#allocation2 + $0x108] sm:$0xff]
      %v323 = vld [vmem:[#allocation2 + $0x110] sm:$0xff]
      %v324 = vld [vmem:[#allocation2 + $0x118] sm:$0xff]
      %v325 = vld [vmem:[#allocation2 + $0x120] sm:$0xff]
      %v326 = vld [vmem:[#allocation2 + $0x128] sm:$0xff]
      %v327 = vld [vmem:[#allocation2 + $0x130] sm:$0xff]
      %v328 = vld [vmem:[#allocation2 + $0x138] sm:$0xff]
      %v329 = vld [vmem:[#allocation2 + $0x140] sm:$0xff]
      %v330 = vld [vmem:[#allocation2 + $0x148] sm:$0xff]
      %v331 = vld [vmem:[#allocation2 + $0x150] sm:$0xff]
      %v332 = vld [vmem:[#allocation2 + $0x158] sm:$0xff]
      %v333 = vld [vmem:[#allocation2 + $0x160] sm:$0xff]
      %v334 = vld [vmem:[#allocation2 + $0x168] sm:$0xff]
      %v335 = vld [vmem:[#allocation2 + $0x170] sm:$0xff]
      %v336 = vld [vmem:[#allocation2 + $0x178] sm:$0xff]
      %v337 = vld [vmem:[#allocation2 + $0x180] sm:$0xff]
      %v338 = vld [vmem:[#allocation2 + $0x188] sm:$0xff]
      %v339 = vld [vmem:[#allocation2 + $0x190] sm:$0xff]
      %v340 = vld [vmem:[#allocation2 + $0x198] sm:$0xff]
      %v341 = vld [vmem:[#allocation2 + $0x1a0] sm:$0xff]
      %v342 = vld [vmem:[#allocation2 + $0x1a8] sm:$0xff]
      %v343 = vld [vmem:[#allocation2 + $0x1b0] sm:$0xff]
      %v344 = vld [vmem:[#allocation2 + $0x1b8] sm:$0xff]
      %v345 = vld [vmem:[#allocation2 + $0x1c0] sm:$0xff]
      %v346 = vld [vmem:[#allocation2 + $0x1c8] sm:$0xff]
      %v347 = vld [vmem:[#allocation2 + $0x1d0] sm:$0xff]
      %v348 = vld [vmem:[#allocation2 + $0x1d8] sm:$0xff]
      %v349 = vld [vmem:[#allocation2 + $0x1e0] sm:$0xff]
      %v350 = vld [vmem:[#allocation2 + $0x1e8] sm:$0xff]
      %v351 = vld [vmem:[#allocation2 + $0x1f0] sm:$0xff]
      %v352 = vld [vmem:[#allocation2 + $0x1f8] sm:$0xff]
      %v353 = vld [vmem:[%s205] sm:$0xf]
      %v354 = vld [vmem:[%s205 + $0x4] sm:$0xf]
      %v355 = vld [vmem:[%s205 + $0x8] sm:$0xf]
      %v356 = vld [vmem:[%s205 + $0xc] sm:$0xf]
      %v357 = vld [vmem:[%s205 + $0x10] sm:$0xf]
      %v358 = vld [vmem:[%s205 + $0x14] sm:$0xf]
      %v359 = vld [vmem:[%s205 + $0x18] sm:$0xf]
      %v360 = vld [vmem:[%s205 + $0x1c] sm:$0xf]
      %v361 = vld [vmem:[%s205 + $0x20] sm:$0xf]
      %v362 = vld [vmem:[%s205 + $0x24] sm:$0xf]
      %v363 = vld [vmem:[%s205 + $0x28] sm:$0xf]
      %v364 = vld [vmem:[%s205 + $0x2c] sm:$0xf]
      %v365 = vld [vmem:[%s205 + $0x30] sm:$0xf]
      %v366 = vld [vmem:[%s205 + $0x34] sm:$0xf]
      %v367 = vld [vmem:[%s205 + $0x38] sm:$0xf]
      %v368 = vld [vmem:[%s205 + $0x3c] sm:$0xf]
      %v369 = vld [vmem:[%s205 + $0x40] sm:$0xf]
      %v370 = vld [vmem:[%s205 + $0x44] sm:$0xf]
      %v371 = vld [vmem:[%s205 + $0x48] sm:$0xf]
      %v372 = vld [vmem:[%s205 + $0x4c] sm:$0xf]
      %v373 = vld [vmem:[%s205 + $0x50] sm:$0xf]
      %v374 = vld [vmem:[%s205 + $0x54] sm:$0xf]
      %v375 = vld [vmem:[%s205 + $0x58] sm:$0xf]
      %v376 = vld [vmem:[%s205 + $0x5c] sm:$0xf]
      %v377 = vld [vmem:[%s205 + $0x60] sm:$0xf]
      %v378 = vld [vmem:[%s205 + $0x64] sm:$0xf]
      %v379 = vld [vmem:[%s205 + $0x68] sm:$0xf]
      %v380 = vld [vmem:[%s205 + $0x6c] sm:$0xf]
      %v381 = vld [vmem:[%s205 + $0x70] sm:$0xf]
      %v382 = vld [vmem:[%s205 + $0x74] sm:$0xf]
      %v383 = vld [vmem:[%s205 + $0x78] sm:$0xf]
      %v384 = vld [vmem:[%s205 + $0x7c] sm:$0xf]
      %v385 = vld [vmem:[%s205 + $0x80] sm:$0xf]
      %v386 = vld [vmem:[%s205 + $0x84] sm:$0xf]
      %v387 = vld [vmem:[%s205 + $0x88] sm:$0xf]
      %v388 = vld [vmem:[%s205 + $0x8c] sm:$0xf]
      %v389 = vld [vmem:[%s205 + $0x90] sm:$0xf]
      %v390 = vld [vmem:[%s205 + $0x94] sm:$0xf]
      %v391 = vld [vmem:[%s205 + $0x98] sm:$0xf]
      %v392 = vld [vmem:[%s205 + $0x9c] sm:$0xf]
      %v393 = vld [vmem:[%s205 + $0xa0] sm:$0xf]
      %v394 = vld [vmem:[%s205 + $0xa4] sm:$0xf]
      %v395 = vld [vmem:[%s205 + $0xa8] sm:$0xf]
      %v396 = vld [vmem:[%s205 + $0xac] sm:$0xf]
      %v397 = vld [vmem:[%s205 + $0xb0] sm:$0xf]
      %v398 = vld [vmem:[%s205 + $0xb4] sm:$0xf]
      %v399 = vld [vmem:[%s205 + $0xb8] sm:$0xf]
      %v400 = vld [vmem:[%s205 + $0xbc] sm:$0xf]
      %v401 = vld [vmem:[%s205 + $0xc0] sm:$0xf]
      %v402 = vld [vmem:[%s205 + $0xc4] sm:$0xf]
      %v403 = vld [vmem:[%s205 + $0xc8] sm:$0xf]
      %v404 = vld [vmem:[%s205 + $0xcc] sm:$0xf]
      %v405 = vld [vmem:[%s205 + $0xd0] sm:$0xf]
      %v406 = vld [vmem:[%s205 + $0xd4] sm:$0xf]
      %v407 = vld [vmem:[%s205 + $0xd8] sm:$0xf]
      %v408 = vld [vmem:[%s205 + $0xdc] sm:$0xf]
      %v409 = vld [vmem:[%s205 + $0xe0] sm:$0xf]
      %v410 = vld [vmem:[%s205 + $0xe4] sm:$0xf]
      %v411 = vld [vmem:[%s205 + $0xe8] sm:$0xf]
      %v412 = vld [vmem:[%s205 + $0xec] sm:$0xf]
      %v413 = vld [vmem:[%s205 + $0xf0] sm:$0xf]
      %v414 = vld [vmem:[%s205 + $0xf4] sm:$0xf]
      %v415 = vld [vmem:[%s205 + $0xf8] sm:$0xf]
      %v416 = vld [vmem:[%s205 + $0xfc] sm:$0xf]
      %v417 = vld [vmem:[%s211] sm:$0xf]
      %v418 = vld [vmem:[%s211 + $0x4] sm:$0xf]
      %v419 = vld [vmem:[%s211 + $0x8] sm:$0xf]
      %v420 = vld [vmem:[%s211 + $0xc] sm:$0x3]
      %v485 = vunpack.c.l.b16 %v353
      %v486 = vunpack.c.l.b16 %v354
      %v487 = vunpack.c.l.b16 %v355
      %v488 = vunpack.c.l.b16 %v356
      %v489 = vunpack.c.l.b16 %v357
      %v490 = vunpack.c.l.b16 %v358
      %v491 = vunpack.c.l.b16 %v359
      %v492 = vunpack.c.l.b16 %v360
      %v493 = vunpack.c.l.b16 %v361
      %v494 = vunpack.c.l.b16 %v362
      %v495 = vunpack.c.l.b16 %v363
      %v496 = vunpack.c.l.b16 %v364
      %v497 = vunpack.c.l.b16 %v365
      %v498 = vunpack.c.l.b16 %v366
      %v499 = vunpack.c.l.b16 %v367
      %v500 = vunpack.c.l.b16 %v368
      %v501 = vunpack.c.l.b16 %v369
      %v502 = vunpack.c.l.b16 %v370
      %v503 = vunpack.c.l.b16 %v371
      %v504 = vunpack.c.l.b16 %v372
      %v505 = vunpack.c.l.b16 %v373
      %v506 = vunpack.c.l.b16 %v374
      %v507 = vunpack.c.l.b16 %v375
      %v508 = vunpack.c.l.b16 %v376
      %v509 = vunpack.c.l.b16 %v377
      %v510 = vunpack.c.l.b16 %v378
      %v511 = vunpack.c.l.b16 %v379
      %v512 = vunpack.c.l.b16 %v380
      %v513 = vunpack.c.l.b16 %v381
      %v514 = vunpack.c.l.b16 %v382
      %v515 = vunpack.c.l.b16 %v383
      %v516 = vunpack.c.l.b16 %v384
      %v517 = vunpack.c.l.b16 %v385
      %v518 = vunpack.c.l.b16 %v386
      %v519 = vunpack.c.l.b16 %v387
      %v520 = vunpack.c.l.b16 %v388
      %v521 = vunpack.c.l.b16 %v389
      %v522 = vunpack.c.l.b16 %v390
      %v523 = vunpack.c.l.b16 %v391
      %v524 = vunpack.c.l.b16 %v392
      %v525 = vunpack.c.l.b16 %v393
      %v526 = vunpack.c.l.b16 %v394
      %v527 = vunpack.c.l.b16 %v395
      %v528 = vunpack.c.l.b16 %v396
      %v529 = vunpack.c.l.b16 %v397
      %v530 = vunpack.c.l.b16 %v398
      %v531 = vunpack.c.l.b16 %v399
      %v532 = vunpack.c.l.b16 %v400
      %v533 = vunpack.c.l.b16 %v401
      %v534 = vunpack.c.l.b16 %v402
      %v535 = vunpack.c.l.b16 %v403
      %v536 = vunpack.c.l.b16 %v404
      %v537 = vunpack.c.l.b16 %v405
      %v538 = vunpack.c.l.b16 %v406
      %v539 = vunpack.c.l.b16 %v407
      %v540 = vunpack.c.l.b16 %v408
      %v541 = vunpack.c.l.b16 %v409
      %v542 = vunpack.c.l.b16 %v410
      %v543 = vunpack.c.l.b16 %v411
      %v544 = vunpack.c.l.b16 %v412
      %v545 = vunpack.c.l.b16 %v413
      %v546 = vunpack.c.l.b16 %v414
      %v547 = vunpack.c.l.b16 %v415
      %v548 = vunpack.c.l.b16 %v416
      %v549 = vpack.c.b16 %v486, %v485
      %v550 = vpack.c.b16 %v488, %v487
      %v551 = vpack.c.b16 %v490, %v489
      %v552 = vpack.c.b16 %v492, %v491
      %v553 = vpack.c.b16 %v494, %v493
      %v554 = vpack.c.b16 %v496, %v495
      %v555 = vpack.c.b16 %v498, %v497
      %v556 = vpack.c.b16 %v500, %v499
      %v557 = vpack.c.b16 %v502, %v501
      %v558 = vpack.c.b16 %v504, %v503
      %v559 = vpack.c.b16 %v506, %v505
      %v560 = vpack.c.b16 %v508, %v507
      %v561 = vpack.c.b16 %v510, %v509
      %v562 = vpack.c.b16 %v512, %v511
      %v563 = vpack.c.b16 %v514, %v513
      %v564 = vpack.c.b16 %v516, %v515
      %v565 = vpack.c.b16 %v518, %v517
      %v566 = vpack.c.b16 %v520, %v519
      %v567 = vpack.c.b16 %v522, %v521
      %v568 = vpack.c.b16 %v524, %v523
      %v569 = vpack.c.b16 %v526, %v525
      %v570 = vpack.c.b16 %v528, %v527
      %v571 = vpack.c.b16 %v530, %v529
      %v572 = vpack.c.b16 %v532, %v531
      %v573 = vpack.c.b16 %v534, %v533
      %v574 = vpack.c.b16 %v536, %v535
      %v575 = vpack.c.b16 %v538, %v537
      %v576 = vpack.c.b16 %v540, %v539
      %v577 = vpack.c.b16 %v542, %v541
      %v578 = vpack.c.b16 %v544, %v543
      %v579 = vpack.c.b16 %v546, %v545
      %v580 = vpack.c.b16 %v548, %v547
      %v585 = vunpack.c.l.b16 %v417
      %v586 = vunpack.c.l.b16 %v418
      %v587 = vunpack.c.l.b16 %v419
      %v588 = vunpack.c.l.b16 %v420
      %v589 = vpack.c.b16 %v586, %v585
      %v590 = vpack.c.b16 %v588, %v587
      %vm592 = vcmask 220160
      %v594 = vsel %vm592, %v549, 0
      %v597 = vsel %vm592, %v550, 0
      %v600 = vsel %vm592, %v551, 0
      %v603 = vsel %vm592, %v552, 0
      %v606 = vsel %vm592, %v553, 0
      %v609 = vsel %vm592, %v554, 0
      %v612 = vsel %vm592, %v555, 0
      %v615 = vsel %vm592, %v556, 0
      %v618 = vsel %vm592, %v557, 0
      %v621 = vsel %vm592, %v558, 0
      %v624 = vsel %vm592, %v559, 0
      %v627 = vsel %vm592, %v560, 0
      %v630 = vsel %vm592, %v561, 0
      %v633 = vsel %vm592, %v562, 0
      %v636 = vsel %vm592, %v563, 0
      %v639 = vsel %vm592, %v564, 0
      %v642 = vsel %vm592, %v565, 0
      %v645 = vsel %vm592, %v566, 0
      %v648 = vsel %vm592, %v567, 0
      %v651 = vsel %vm592, %v568, 0
      %v654 = vsel %vm592, %v569, 0
      %v657 = vsel %vm592, %v570, 0
      %v660 = vsel %vm592, %v571, 0
      %v663 = vsel %vm592, %v572, 0
      %v666 = vsel %vm592, %v573, 0
      %v669 = vsel %vm592, %v574, 0
      %v672 = vsel %vm592, %v575, 0
      %v675 = vsel %vm592, %v576, 0
      %v678 = vsel %vm592, %v577, 0
      %v681 = vsel %vm592, %v578, 0
      %v684 = vsel %vm592, %v579, 0
      %v687 = vsel %vm592, %v580, 0
      %vm689 = vcmask 1044480
      %vm690 = vcmask 1045504
      %v691 = vsel %vm689, 4294967295, 65535
      %v692 = vsel %vm690, %v691, 0
      %v694 = vand.u32 %v590, %v692
      %696 = vmatpush.bf16.msra.mxu0 0
      %697 = vmatpush.bf16.msra.mxu0 0
      %698 = vmatpush.bf16.msra.mxu0 0
      %699 = vmatpush.bf16.msra.mxu0 0
      %700 = vmatpush.bf16.msra.mxu0 0
      %701 = vmatpush.bf16.msra.mxu0 0
      %702 = vmatpush.bf16.msra.mxu0 %v694
      %703 = vmatpush.bf16.msra.mxu0 %v589
      %704 = vmatmul.bf16.gmra.mxu0 %v594
      %v705 = vpop.f32.mrf.mxu0
      %v706 = vadd.f32 0.0, %v705
      %v707 = vpop.f32.mrf.mxu0
      %v708 = vadd.f32 0.0, %v707
      %709 = vmatmul.bf16.gmra.mxu0 %v597
      %v710 = vpop.f32.mrf.mxu0
      %v711 = vadd.f32 0.0, %v710
      %v712 = vpop.f32.mrf.mxu0
      %v713 = vadd.f32 0.0, %v712
      %714 = vmatmul.bf16.gmra.mxu0 %v600
      %v715 = vpop.f32.mrf.mxu0
      %v716 = vadd.f32 0.0, %v715
      %v717 = vpop.f32.mrf.mxu0
      %v718 = vadd.f32 0.0, %v717
      %719 = vmatmul.bf16.gmra.mxu0 %v603
      %v720 = vpop.f32.mrf.mxu0
      %v721 = vadd.f32 0.0, %v720
      %v722 = vpop.f32.mrf.mxu0
      %v723 = vadd.f32 0.0, %v722
      %724 = vmatmul.bf16.gmra.mxu0 %v606
      %v725 = vpop.f32.mrf.mxu0
      %v726 = vadd.f32 0.0, %v725
      %v727 = vpop.f32.mrf.mxu0
      %v728 = vadd.f32 0.0, %v727
      %729 = vmatmul.bf16.gmra.mxu0 %v609
      %v730 = vpop.f32.mrf.mxu0
      %v731 = vadd.f32 0.0, %v730
      %v732 = vpop.f32.mrf.mxu0
      %v733 = vadd.f32 0.0, %v732
      %734 = vmatmul.bf16.gmra.mxu0 %v612
      %v735 = vpop.f32.mrf.mxu0
      %v736 = vadd.f32 0.0, %v735
      %v737 = vpop.f32.mrf.mxu0
      %v738 = vadd.f32 0.0, %v737
      %739 = vmatmul.bf16.gmra.mxu0 %v615
      %v740 = vpop.f32.mrf.mxu0
      %v741 = vadd.f32 0.0, %v740
      %v742 = vpop.f32.mrf.mxu0
      %v743 = vadd.f32 0.0, %v742
      %744 = vmatmul.bf16.gmra.mxu0 %v618
      %v745 = vpop.f32.mrf.mxu0
      %v746 = vadd.f32 0.0, %v745
      %v747 = vpop.f32.mrf.mxu0
      %v748 = vadd.f32 0.0, %v747
      %749 = vmatmul.bf16.gmra.mxu0 %v621
      %v750 = vpop.f32.mrf.mxu0
      %v751 = vadd.f32 0.0, %v750
      %v752 = vpop.f32.mrf.mxu0
      %v753 = vadd.f32 0.0, %v752
      %754 = vmatmul.bf16.gmra.mxu0 %v624
      %v755 = vpop.f32.mrf.mxu0
      %v756 = vadd.f32 0.0, %v755
      %v757 = vpop.f32.mrf.mxu0
      %v758 = vadd.f32 0.0, %v757
      %759 = vmatmul.bf16.gmra.mxu0 %v627
      %v760 = vpop.f32.mrf.mxu0
      %v761 = vadd.f32 0.0, %v760
      %v762 = vpop.f32.mrf.mxu0
      %v763 = vadd.f32 0.0, %v762
      %764 = vmatmul.bf16.gmra.mxu0 %v630
      %v765 = vpop.f32.mrf.mxu0
      %v766 = vadd.f32 0.0, %v765
      %v767 = vpop.f32.mrf.mxu0
      %v768 = vadd.f32 0.0, %v767
      %769 = vmatmul.bf16.gmra.mxu0 %v633
      %v770 = vpop.f32.mrf.mxu0
      %v771 = vadd.f32 0.0, %v770
      %v772 = vpop.f32.mrf.mxu0
      %v773 = vadd.f32 0.0, %v772
      %774 = vmatmul.bf16.gmra.mxu0 %v636
      %v775 = vpop.f32.mrf.mxu0
      %v776 = vadd.f32 0.0, %v775
      %v777 = vpop.f32.mrf.mxu0
      %v778 = vadd.f32 0.0, %v777
      %779 = vmatmul.bf16.gmra.mxu0 %v639
      %v780 = vpop.f32.mrf.mxu0
      %v781 = vadd.f32 0.0, %v780
      %v782 = vpop.f32.mrf.mxu0
      %v783 = vadd.f32 0.0, %v782
      %784 = vmatmul.bf16.gmra.mxu0 %v642
      %v785 = vpop.f32.mrf.mxu0
      %v786 = vadd.f32 0.0, %v785
      %v787 = vpop.f32.mrf.mxu0
      %v788 = vadd.f32 0.0, %v787
      %789 = vmatmul.bf16.gmra.mxu0 %v645
      %v790 = vpop.f32.mrf.mxu0
      %v791 = vadd.f32 0.0, %v790
      %v792 = vpop.f32.mrf.mxu0
      %v793 = vadd.f32 0.0, %v792
      %794 = vmatmul.bf16.gmra.mxu0 %v648
      %v795 = vpop.f32.mrf.mxu0
      %v796 = vadd.f32 0.0, %v795
      %v797 = vpop.f32.mrf.mxu0
      %v798 = vadd.f32 0.0, %v797
      %799 = vmatmul.bf16.gmra.mxu0 %v651
      %v800 = vpop.f32.mrf.mxu0
      %v801 = vadd.f32 0.0, %v800
      %v802 = vpop.f32.mrf.mxu0
      %v803 = vadd.f32 0.0, %v802
      %804 = vmatmul.bf16.gmra.mxu0 %v654
      %v805 = vpop.f32.mrf.mxu0
      %v806 = vadd.f32 0.0, %v805
      %v807 = vpop.f32.mrf.mxu0
      %v808 = vadd.f32 0.0, %v807
      %809 = vmatmul.bf16.gmra.mxu0 %v657
      %v810 = vpop.f32.mrf.mxu0
      %v811 = vadd.f32 0.0, %v810
      %v812 = vpop.f32.mrf.mxu0
      %v813 = vadd.f32 0.0, %v812
      %814 = vmatmul.bf16.gmra.mxu0 %v660
      %v815 = vpop.f32.mrf.mxu0
      %v816 = vadd.f32 0.0, %v815
      %v817 = vpop.f32.mrf.mxu0
      %v818 = vadd.f32 0.0, %v817
      %819 = vmatmul.bf16.gmra.mxu0 %v663
      %v820 = vpop.f32.mrf.mxu0
      %v821 = vadd.f32 0.0, %v820
      %v822 = vpop.f32.mrf.mxu0
      %v823 = vadd.f32 0.0, %v822
      %824 = vmatmul.bf16.gmra.mxu0 %v666
      %v825 = vpop.f32.mrf.mxu0
      %v826 = vadd.f32 0.0, %v825
      %v827 = vpop.f32.mrf.mxu0
      %v828 = vadd.f32 0.0, %v827
      %829 = vmatmul.bf16.gmra.mxu0 %v669
      %v830 = vpop.f32.mrf.mxu0
      %v831 = vadd.f32 0.0, %v830
      %v832 = vpop.f32.mrf.mxu0
      %v833 = vadd.f32 0.0, %v832
      %834 = vmatmul.bf16.gmra.mxu0 %v672
      %v835 = vpop.f32.mrf.mxu0
      %v836 = vadd.f32 0.0, %v835
      %v837 = vpop.f32.mrf.mxu0
      %v838 = vadd.f32 0.0, %v837
      %839 = vmatmul.bf16.gmra.mxu0 %v675
      %v840 = vpop.f32.mrf.mxu0
      %v841 = vadd.f32 0.0, %v840
      %v842 = vpop.f32.mrf.mxu0
      %v843 = vadd.f32 0.0, %v842
      %844 = vmatmul.bf16.gmra.mxu0 %v678
      %v845 = vpop.f32.mrf.mxu0
      %v846 = vadd.f32 0.0, %v845
      %v847 = vpop.f32.mrf.mxu0
      %v848 = vadd.f32 0.0, %v847
      %849 = vmatmul.bf16.gmra.mxu0 %v681
      %v850 = vpop.f32.mrf.mxu0
      %v851 = vadd.f32 0.0, %v850
      %v852 = vpop.f32.mrf.mxu0
      %v853 = vadd.f32 0.0, %v852
      %854 = vmatmul.bf16.gmra.mxu0 %v684
      %v855 = vpop.f32.mrf.mxu0
      %v856 = vadd.f32 0.0, %v855
      %v857 = vpop.f32.mrf.mxu0
      %v858 = vadd.f32 0.0, %v857
      %859 = vmatmul.bf16.gmra.mxu0 %v687
      %v860 = vpop.f32.mrf.mxu0
      %v861 = vadd.f32 0.0, %v860
      %v862 = vpop.f32.mrf.mxu0
      %v863 = vadd.f32 0.0, %v862
      %864 = vdwg.mxu0
      %v865 = vadd.f32 %v289, %v706
      %v866 = vadd.f32 %v290, %v708
      %v867 = vadd.f32 %v291, %v711
      %v868 = vadd.f32 %v292, %v713
      %v869 = vadd.f32 %v293, %v716
      %v870 = vadd.f32 %v294, %v718
      %v871 = vadd.f32 %v295, %v721
      %v872 = vadd.f32 %v296, %v723
      %v873 = vadd.f32 %v297, %v726
      %v874 = vadd.f32 %v298, %v728
      %v875 = vadd.f32 %v299, %v731
      %v876 = vadd.f32 %v300, %v733
      %v877 = vadd.f32 %v301, %v736
      %v878 = vadd.f32 %v302, %v738
      %v879 = vadd.f32 %v303, %v741
      %v880 = vadd.f32 %v304, %v743
      %v881 = vadd.f32 %v305, %v746
      %v882 = vadd.f32 %v306, %v748
      %v883 = vadd.f32 %v307, %v751
      %v884 = vadd.f32 %v308, %v753
      %v885 = vadd.f32 %v309, %v756
      %v886 = vadd.f32 %v310, %v758
      %v887 = vadd.f32 %v311, %v761
      %v888 = vadd.f32 %v312, %v763
      %v889 = vadd.f32 %v313, %v766
      %v890 = vadd.f32 %v314, %v768
      %v891 = vadd.f32 %v315, %v771
      %v892 = vadd.f32 %v316, %v773
      %v893 = vadd.f32 %v317, %v776
      %v894 = vadd.f32 %v318, %v778
      %v895 = vadd.f32 %v319, %v781
      %v896 = vadd.f32 %v320, %v783
      %v897 = vadd.f32 %v321, %v786
      %v898 = vadd.f32 %v322, %v788
      %v899 = vadd.f32 %v323, %v791
      %v900 = vadd.f32 %v324, %v793
      %v901 = vadd.f32 %v325, %v796
      %v902 = vadd.f32 %v326, %v798
      %v903 = vadd.f32 %v327, %v801
      %v904 = vadd.f32 %v328, %v803
      %v905 = vadd.f32 %v329, %v806
      %v906 = vadd.f32 %v330, %v808
      %v907 = vadd.f32 %v331, %v811
      %v908 = vadd.f32 %v332, %v813
      %v909 = vadd.f32 %v333, %v816
      %v910 = vadd.f32 %v334, %v818
      %v911 = vadd.f32 %v335, %v821
      %v912 = vadd.f32 %v336, %v823
      %v913 = vadd.f32 %v337, %v826
      %v914 = vadd.f32 %v338, %v828
      %v915 = vadd.f32 %v339, %v831
      %v916 = vadd.f32 %v340, %v833
      %v917 = vadd.f32 %v341, %v836
      %v918 = vadd.f32 %v342, %v838
      %v919 = vadd.f32 %v343, %v841
      %v920 = vadd.f32 %v344, %v843
      %v921 = vadd.f32 %v345, %v846
      %v922 = vadd.f32 %v346, %v848
      %v923 = vadd.f32 %v347, %v851
      %v924 = vadd.f32 %v348, %v853
      %v925 = vadd.f32 %v349, %v856
      %v926 = vadd.f32 %v350, %v858
      %v927 = vadd.f32 %v351, %v861
      %v928 = vadd.f32 %v352, %v863
      %vm929 = vcmask 130048
      %930 = vst.msk [vmem:[#allocation2] sm:$0xff] %vm929, %v865
      %931 = vst.msk [vmem:[#allocation2 + $0x8] sm:$0xff] %vm929, %v866
      %932 = vst.msk [vmem:[#allocation2 + $0x10] sm:$0xff] %vm929, %v867
      %933 = vst.msk [vmem:[#allocation2 + $0x18] sm:$0xff] %vm929, %v868
      %934 = vst.msk [vmem:[#allocation2 + $0x20] sm:$0xff] %vm929, %v869
      %935 = vst.msk [vmem:[#allocation2 + $0x28] sm:$0xff] %vm929, %v870
      %936 = vst.msk [vmem:[#allocation2 + $0x30] sm:$0xff] %vm929, %v871
      %937 = vst.msk [vmem:[#allocation2 + $0x38] sm:$0xff] %vm929, %v872
      %938 = vst.msk [vmem:[#allocation2 + $0x40] sm:$0xff] %vm929, %v873
      %939 = vst.msk [vmem:[#allocation2 + $0x48] sm:$0xff] %vm929, %v874
      %940 = vst.msk [vmem:[#allocation2 + $0x50] sm:$0xff] %vm929, %v875
      %941 = vst.msk [vmem:[#allocation2 + $0x58] sm:$0xff] %vm929, %v876
      %942 = vst.msk [vmem:[#allocation2 + $0x60] sm:$0xff] %vm929, %v877
      %943 = vst.msk [vmem:[#allocation2 + $0x68] sm:$0xff] %vm929, %v878
      %944 = vst.msk [vmem:[#allocation2 + $0x70] sm:$0xff] %vm929, %v879
      %945 = vst.msk [vmem:[#allocation2 + $0x78] sm:$0xff] %vm929, %v880
      %946 = vst.msk [vmem:[#allocation2 + $0x80] sm:$0xff] %vm929, %v881
      %947 = vst.msk [vmem:[#allocation2 + $0x88] sm:$0xff] %vm929, %v882
      %948 = vst.msk [vmem:[#allocation2 + $0x90] sm:$0xff] %vm929, %v883
      %949 = vst.msk [vmem:[#allocation2 + $0x98] sm:$0xff] %vm929, %v884
      %950 = vst.msk [vmem:[#allocation2 + $0xa0] sm:$0xff] %vm929, %v885
      %951 = vst.msk [vmem:[#allocation2 + $0xa8] sm:$0xff] %vm929, %v886
      %952 = vst.msk [vmem:[#allocation2 + $0xb0] sm:$0xff] %vm929, %v887
      %953 = vst.msk [vmem:[#allocation2 + $0xb8] sm:$0xff] %vm929, %v888
      %954 = vst.msk [vmem:[#allocation2 + $0xc0] sm:$0xff] %vm929, %v889
      %955 = vst.msk [vmem:[#allocation2 + $0xc8] sm:$0xff] %vm929, %v890
      %956 = vst.msk [vmem:[#allocation2 + $0xd0] sm:$0xff] %vm929, %v891
      %957 = vst.msk [vmem:[#allocation2 + $0xd8] sm:$0xff] %vm929, %v892
      %958 = vst.msk [vmem:[#allocation2 + $0xe0] sm:$0xff] %vm929, %v893
      %959 = vst.msk [vmem:[#allocation2 + $0xe8] sm:$0xff] %vm929, %v894
      %960 = vst.msk [vmem:[#allocation2 + $0xf0] sm:$0xff] %vm929, %v895
      %961 = vst.msk [vmem:[#allocation2 + $0xf8] sm:$0xff] %vm929, %v896
      %962 = vst.msk [vmem:[#allocation2 + $0x100] sm:$0xff] %vm929, %v897
      %963 = vst.msk [vmem:[#allocation2 + $0x108] sm:$0xff] %vm929, %v898
      %964 = vst.msk [vmem:[#allocation2 + $0x110] sm:$0xff] %vm929, %v899
      %965 = vst.msk [vmem:[#allocation2 + $0x118] sm:$0xff] %vm929, %v900
      %966 = vst.msk [vmem:[#allocation2 + $0x120] sm:$0xff] %vm929, %v901
      %967 = vst.msk [vmem:[#allocation2 + $0x128] sm:$0xff] %vm929, %v902
      %968 = vst.msk [vmem:[#allocation2 + $0x130] sm:$0xff] %vm929, %v903
      %969 = vst.msk [vmem:[#allocation2 + $0x138] sm:$0xff] %vm929, %v904
      %970 = vst.msk [vmem:[#allocation2 + $0x140] sm:$0xff] %vm929, %v905
      %971 = vst.msk [vmem:[#allocation2 + $0x148] sm:$0xff] %vm929, %v906
      %972 = vst.msk [vmem:[#allocation2 + $0x150] sm:$0xff] %vm929, %v907
      %973 = vst.msk [vmem:[#allocation2 + $0x158] sm:$0xff] %vm929, %v908
      %974 = vst.msk [vmem:[#allocation2 + $0x160] sm:$0xff] %vm929, %v909
      %975 = vst.msk [vmem:[#allocation2 + $0x168] sm:$0xff] %vm929, %v910
      %976 = vst.msk [vmem:[#allocation2 + $0x170] sm:$0xff] %vm929, %v911
      %977 = vst.msk [vmem:[#allocation2 + $0x178] sm:$0xff] %vm929, %v912
      %978 = vst.msk [vmem:[#allocation2 + $0x180] sm:$0xff] %vm929, %v913
      %979 = vst.msk [vmem:[#allocation2 + $0x188] sm:$0xff] %vm929, %v914
      %980 = vst.msk [vmem:[#allocation2 + $0x190] sm:$0xff] %vm929, %v915
      %981 = vst.msk [vmem:[#allocation2 + $0x198] sm:$0xff] %vm929, %v916
      %982 = vst.msk [vmem:[#allocation2 + $0x1a0] sm:$0xff] %vm929, %v917
      %983 = vst.msk [vmem:[#allocation2 + $0x1a8] sm:$0xff] %vm929, %v918
      %984 = vst.msk [vmem:[#allocation2 + $0x1b0] sm:$0xff] %vm929, %v919
      %985 = vst.msk [vmem:[#allocation2 + $0x1b8] sm:$0xff] %vm929, %v920
      %986 = vst.msk [vmem:[#allocation2 + $0x1c0] sm:$0xff] %vm929, %v921
      %987 = vst.msk [vmem:[#allocation2 + $0x1c8] sm:$0xff] %vm929, %v922
      %988 = vst.msk [vmem:[#allocation2 + $0x1d0] sm:$0xff] %vm929, %v923
      %989 = vst.msk [vmem:[#allocation2 + $0x1d8] sm:$0xff] %vm929, %v924
      %990 = vst.msk [vmem:[#allocation2 + $0x1e0] sm:$0xff] %vm929, %v925
      %991 = vst.msk [vmem:[#allocation2 + $0x1e8] sm:$0xff] %vm929, %v926
      %992 = vst.msk [vmem:[#allocation2 + $0x1f0] sm:$0xff] %vm929, %v927
      %993 = vst.msk [vmem:[#allocation2 + $0x1f8] sm:$0xff] %vm929, %v928
      // Predicated region
      $region37: #{faster_rcnn_forward.10} parent=31 // pred_check
        %p994 = pneg %p220
      $region38: #{faster_rcnn_forward.10} parent=31 // pred_check_branch
        %996 = sbr.rel (%p994) target = $region40
      $region39: #{faster_rcnn_forward.10} parent=31 // pred_region
        %v997 = vld [vmem:[#allocation2] sm:$0xff]
        %v998 = vld [vmem:[#allocation2 + $0x8] sm:$0xff]
        %v999 = vld [vmem:[#allocation2 + $0x10] sm:$0xff]
        %v1000 = vld [vmem:[#allocation2 + $0x18] sm:$0xff]
        %v1001 = vld [vmem:[#allocation2 + $0x20] sm:$0xff]
        %v1002 = vld [vmem:[#allocation2 + $0x28] sm:$0xff]
        %v1003 = vld [vmem:[#allocation2 + $0x30] sm:$0xff]
        %v1004 = vld [vmem:[#allocation2 + $0x38] sm:$0xff]
        %v1005 = vld [vmem:[#allocation2 + $0x40] sm:$0xff]
        %v1006 = vld [vmem:[#allocation2 + $0x48] sm:$0xff]
        %v1007 = vld [vmem:[#allocation2 + $0x50] sm:$0xff]
        %v1008 = vld [vmem:[#allocation2 + $0x58] sm:$0xff]
        %v1009 = vld [vmem:[#allocation2 + $0x60] sm:$0xff]
        %v1010 = vld [vmem:[#allocation2 + $0x68] sm:$0xff]
        %v1011 = vld [vmem:[#allocation2 + $0x70] sm:$0xff]
        %v1012 = vld [vmem:[#allocation2 + $0x78] sm:$0xff]
        %v1013 = vld [vmem:[#allocation2 + $0x80] sm:$0xff]
        %v1014 = vld [vmem:[#allocation2 + $0x88] sm:$0xff]
        %v1015 = vld [vmem:[#allocation2 + $0x90] sm:$0xff]
        %v1016 = vld [vmem:[#allocation2 + $0x98] sm:$0xff]
        %v1017 = vld [vmem:[#allocation2 + $0xa0] sm:$0xff]
        %v1018 = vld [vmem:[#allocation2 + $0xa8] sm:$0xff]
        %v1019 = vld [vmem:[#allocation2 + $0xb0] sm:$0xff]
        %v1020 = vld [vmem:[#allocation2 + $0xb8] sm:$0xff]
        %v1021 = vld [vmem:[#allocation2 + $0xc0] sm:$0xff]
        %v1022 = vld [vmem:[#allocation2 + $0xc8] sm:$0xff]
        %v1023 = vld [vmem:[#allocation2 + $0xd0] sm:$0xff]
        %v1024 = vld [vmem:[#allocation2 + $0xd8] sm:$0xff]
        %v1025 = vld [vmem:[#allocation2 + $0xe0] sm:$0xff]
        %v1026 = vld [vmem:[#allocation2 + $0xe8] sm:$0xff]
        %v1027 = vld [vmem:[#allocation2 + $0xf0] sm:$0xff]
        %v1028 = vld [vmem:[#allocation2 + $0xf8] sm:$0xff]
        %v1029 = vld [vmem:[#allocation2 + $0x100] sm:$0xff]
        %v1030 = vld [vmem:[#allocation2 + $0x108] sm:$0xff]
        %v1031 = vld [vmem:[#allocation2 + $0x110] sm:$0xff]
        %v1032 = vld [vmem:[#allocation2 + $0x118] sm:$0xff]
        %v1033 = vld [vmem:[#allocation2 + $0x120] sm:$0xff]
        %v1034 = vld [vmem:[#allocation2 + $0x128] sm:$0xff]
        %v1035 = vld [vmem:[#allocation2 + $0x130] sm:$0xff]
        %v1036 = vld [vmem:[#allocation2 + $0x138] sm:$0xff]
        %v1037 = vld [vmem:[#allocation2 + $0x140] sm:$0xff]
        %v1038 = vld [vmem:[#allocation2 + $0x148] sm:$0xff]
        %v1039 = vld [vmem:[#allocation2 + $0x150] sm:$0xff]
        %v1040 = vld [vmem:[#allocation2 + $0x158] sm:$0xff]
        %v1041 = vld [vmem:[#allocation2 + $0x160] sm:$0xff]
        %v1042 = vld [vmem:[#allocation2 + $0x168] sm:$0xff]
        %v1043 = vld [vmem:[#allocation2 + $0x170] sm:$0xff]
        %v1044 = vld [vmem:[#allocation2 + $0x178] sm:$0xff]
        %v1045 = vld [vmem:[#allocation2 + $0x180] sm:$0xff]
        %v1046 = vld [vmem:[#allocation2 + $0x188] sm:$0xff]
        %v1047 = vld [vmem:[#allocation2 + $0x190] sm:$0xff]
        %v1048 = vld [vmem:[#allocation2 + $0x198] sm:$0xff]
        %v1049 = vld [vmem:[#allocation2 + $0x1a0] sm:$0xff]
        %v1050 = vld [vmem:[#allocation2 + $0x1a8] sm:$0xff]
        %v1051 = vld [vmem:[#allocation2 + $0x1b0] sm:$0xff]
        %v1052 = vld [vmem:[#allocation2 + $0x1b8] sm:$0xff]
        %v1053 = vld [vmem:[#allocation2 + $0x1c0] sm:$0xff]
        %v1054 = vld [vmem:[#allocation2 + $0x1c8] sm:$0xff]
        %v1055 = vld [vmem:[#allocation2 + $0x1d0] sm:$0xff]
        %v1056 = vld [vmem:[#allocation2 + $0x1d8] sm:$0xff]
        %v1057 = vld [vmem:[#allocation2 + $0x1e0] sm:$0xff]
        %v1058 = vld [vmem:[#allocation2 + $0x1e8] sm:$0xff]
        %v1059 = vld [vmem:[#allocation2 + $0x1f0] sm:$0xff]
        %v1060 = vld [vmem:[#allocation2 + $0x1f8] sm:$0xff]
        %v1061 = vld [vmem:[%s2] sm:$0x1]
        %v1063 = vperm.slane %v1061, 0
        %v1065 = vadd.f32 %v997, %v1063
        %v1066 = vadd.f32 %v998, %v1063
        %v1067 = vadd.f32 %v999, %v1063
        %v1068 = vadd.f32 %v1000, %v1063
        %v1069 = vadd.f32 %v1001, %v1063
        %v1070 = vadd.f32 %v1002, %v1063
        %v1071 = vadd.f32 %v1003, %v1063
        %v1072 = vadd.f32 %v1004, %v1063
        %v1073 = vadd.f32 %v1005, %v1063
        %v1074 = vadd.f32 %v1006, %v1063
        %v1075 = vadd.f32 %v1007, %v1063
        %v1076 = vadd.f32 %v1008, %v1063
        %v1077 = vadd.f32 %v1009, %v1063
        %v1078 = vadd.f32 %v1010, %v1063
        %v1079 = vadd.f32 %v1011, %v1063
        %v1080 = vadd.f32 %v1012, %v1063
        %v1081 = vadd.f32 %v1013, %v1063
        %v1082 = vadd.f32 %v1014, %v1063
        %v1083 = vadd.f32 %v1015, %v1063
        %v1084 = vadd.f32 %v1016, %v1063
        %v1085 = vadd.f32 %v1017, %v1063
        %v1086 = vadd.f32 %v1018, %v1063
        %v1087 = vadd.f32 %v1019, %v1063
        %v1088 = vadd.f32 %v1020, %v1063
        %v1089 = vadd.f32 %v1021, %v1063
        %v1090 = vadd.f32 %v1022, %v1063
        %v1091 = vadd.f32 %v1023, %v1063
        %v1092 = vadd.f32 %v1024, %v1063
        %v1093 = vadd.f32 %v1025, %v1063
        %v1094 = vadd.f32 %v1026, %v1063
        %v1095 = vadd.f32 %v1027, %v1063
        %v1096 = vadd.f32 %v1028, %v1063
        %v1097 = vadd.f32 %v1029, %v1063
        %v1098 = vadd.f32 %v1030, %v1063
        %v1099 = vadd.f32 %v1031, %v1063
        %v1100 = vadd.f32 %v1032, %v1063
        %v1101 = vadd.f32 %v1033, %v1063
        %v1102 = vadd.f32 %v1034, %v1063
        %v1103 = vadd.f32 %v1035, %v1063
        %v1104 = vadd.f32 %v1036, %v1063
        %v1105 = vadd.f32 %v1037, %v1063
        %v1106 = vadd.f32 %v1038, %v1063
        %v1107 = vadd.f32 %v1039, %v1063
        %v1108 = vadd.f32 %v1040, %v1063
        %v1109 = vadd.f32 %v1041, %v1063
        %v1110 = vadd.f32 %v1042, %v1063
        %v1111 = vadd.f32 %v1043, %v1063
        %v1112 = vadd.f32 %v1044, %v1063
        %v1113 = vadd.f32 %v1045, %v1063
        %v1114 = vadd.f32 %v1046, %v1063
        %v1115 = vadd.f32 %v1047, %v1063
        %v1116 = vadd.f32 %v1048, %v1063
        %v1117 = vadd.f32 %v1049, %v1063
        %v1118 = vadd.f32 %v1050, %v1063
        %v1119 = vadd.f32 %v1051, %v1063
        %v1120 = vadd.f32 %v1052, %v1063
        %v1121 = vadd.f32 %v1053, %v1063
        %v1122 = vadd.f32 %v1054, %v1063
        %v1123 = vadd.f32 %v1055, %v1063
        %v1124 = vadd.f32 %v1056, %v1063
        %v1125 = vadd.f32 %v1057, %v1063
        %v1126 = vadd.f32 %v1058, %v1063
        %v1127 = vadd.f32 %v1059, %v1063
        %v1128 = vadd.f32 %v1060, %v1063
        %v1129 = vmax.f32 %v1065, 0.0
        %v1130 = vmax.f32 %v1066, 0.0
        %v1131 = vmax.f32 %v1067, 0.0
        %v1132 = vmax.f32 %v1068, 0.0
        %v1133 = vmax.f32 %v1069, 0.0
        %v1134 = vmax.f32 %v1070, 0.0
        %v1135 = vmax.f32 %v1071, 0.0
        %v1136 = vmax.f32 %v1072, 0.0
        %v1137 = vmax.f32 %v1073, 0.0
        %v1138 = vmax.f32 %v1074, 0.0
        %v1139 = vmax.f32 %v1075, 0.0
        %v1140 = vmax.f32 %v1076, 0.0
        %v1141 = vmax.f32 %v1077, 0.0
        %v1142 = vmax.f32 %v1078, 0.0
        %v1143 = vmax.f32 %v1079, 0.0
        %v1144 = vmax.f32 %v1080, 0.0
        %v1145 = vmax.f32 %v1081, 0.0
        %v1146 = vmax.f32 %v1082, 0.0
        %v1147 = vmax.f32 %v1083, 0.0
        %v1148 = vmax.f32 %v1084, 0.0
        %v1149 = vmax.f32 %v1085, 0.0
        %v1150 = vmax.f32 %v1086, 0.0
        %v1151 = vmax.f32 %v1087, 0.0
        %v1152 = vmax.f32 %v1088, 0.0
        %v1153 = vmax.f32 %v1089, 0.0
        %v1154 = vmax.f32 %v1090, 0.0
        %v1155 = vmax.f32 %v1091, 0.0
        %v1156 = vmax.f32 %v1092, 0.0
        %v1157 = vmax.f32 %v1093, 0.0
        %v1158 = vmax.f32 %v1094, 0.0
        %v1159 = vmax.f32 %v1095, 0.0
        %v1160 = vmax.f32 %v1096, 0.0
        %v1161 = vmax.f32 %v1097, 0.0
        %v1162 = vmax.f32 %v1098, 0.0
        %v1163 = vmax.f32 %v1099, 0.0
        %v1164 = vmax.f32 %v1100, 0.0
        %v1165 = vmax.f32 %v1101, 0.0
        %v1166 = vmax.f32 %v1102, 0.0
        %v1167 = vmax.f32 %v1103, 0.0
        %v1168 = vmax.f32 %v1104, 0.0
        %v1169 = vmax.f32 %v1105, 0.0
        %v1170 = vmax.f32 %v1106, 0.0
        %v1171 = vmax.f32 %v1107, 0.0
        %v1172 = vmax.f32 %v1108, 0.0
        %v1173 = vmax.f32 %v1109, 0.0
        %v1174 = vmax.f32 %v1110, 0.0
        %v1175 = vmax.f32 %v1111, 0.0
        %v1176 = vmax.f32 %v1112, 0.0
        %v1177 = vmax.f32 %v1113, 0.0
        %v1178 = vmax.f32 %v1114, 0.0
        %v1179 = vmax.f32 %v1115, 0.0
        %v1180 = vmax.f32 %v1116, 0.0
        %v1181 = vmax.f32 %v1117, 0.0
        %v1182 = vmax.f32 %v1118, 0.0
        %v1183 = vmax.f32 %v1119, 0.0
        %v1184 = vmax.f32 %v1120, 0.0
        %v1185 = vmax.f32 %v1121, 0.0
        %v1186 = vmax.f32 %v1122, 0.0
        %v1187 = vmax.f32 %v1123, 0.0
        %v1188 = vmax.f32 %v1124, 0.0
        %v1189 = vmax.f32 %v1125, 0.0
        %v1190 = vmax.f32 %v1126, 0.0
        %v1191 = vmax.f32 %v1127, 0.0
        %v1192 = vmax.f32 %v1128, 0.0
        %v1193 = vpack.c.bf16 %v1129, %v1129
        %v1194 = vpack.c.bf16 %v1130, %v1130
        %v1195 = vpack.c.bf16 %v1131, %v1131
        %v1196 = vpack.c.bf16 %v1132, %v1132
        %v1197 = vpack.c.bf16 %v1133, %v1133
        %v1198 = vpack.c.bf16 %v1134, %v1134
        %v1199 = vpack.c.bf16 %v1135, %v1135
        %v1200 = vpack.c.bf16 %v1136, %v1136
        %v1201 = vpack.c.bf16 %v1137, %v1137
        %v1202 = vpack.c.bf16 %v1138, %v1138
        %v1203 = vpack.c.bf16 %v1139, %v1139
        %v1204 = vpack.c.bf16 %v1140, %v1140
        %v1205 = vpack.c.bf16 %v1141, %v1141
        %v1206 = vpack.c.bf16 %v1142, %v1142
        %v1207 = vpack.c.bf16 %v1143, %v1143
        %v1208 = vpack.c.bf16 %v1144, %v1144
        %v1209 = vpack.c.bf16 %v1145, %v1145
        %v1210 = vpack.c.bf16 %v1146, %v1146
        %v1211 = vpack.c.bf16 %v1147, %v1147
        %v1212 = vpack.c.bf16 %v1148, %v1148
        %v1213 = vpack.c.bf16 %v1149, %v1149
        %v1214 = vpack.c.bf16 %v1150, %v1150
        %v1215 = vpack.c.bf16 %v1151, %v1151
        %v1216 = vpack.c.bf16 %v1152, %v1152
        %v1217 = vpack.c.bf16 %v1153, %v1153
        %v1218 = vpack.c.bf16 %v1154, %v1154
        %v1219 = vpack.c.bf16 %v1155, %v1155
        %v1220 = vpack.c.bf16 %v1156, %v1156
        %v1221 = vpack.c.bf16 %v1157, %v1157
        %v1222 = vpack.c.bf16 %v1158, %v1158
        %v1223 = vpack.c.bf16 %v1159, %v1159
        %v1224 = vpack.c.bf16 %v1160, %v1160
        %v1225 = vpack.c.bf16 %v1161, %v1161
        %v1226 = vpack.c.bf16 %v1162, %v1162
        %v1227 = vpack.c.bf16 %v1163, %v1163
        %v1228 = vpack.c.bf16 %v1164, %v1164
        %v1229 = vpack.c.bf16 %v1165, %v1165
        %v1230 = vpack.c.bf16 %v1166, %v1166
        %v1231 = vpack.c.bf16 %v1167, %v1167
        %v1232 = vpack.c.bf16 %v1168, %v1168
        %v1233 = vpack.c.bf16 %v1169, %v1169
        %v1234 = vpack.c.bf16 %v1170, %v1170
        %v1235 = vpack.c.bf16 %v1171, %v1171
        %v1236 = vpack.c.bf16 %v1172, %v1172
        %v1237 = vpack.c.bf16 %v1173, %v1173
        %v1238 = vpack.c.bf16 %v1174, %v1174
        %v1239 = vpack.c.bf16 %v1175, %v1175
        %v1240 = vpack.c.bf16 %v1176, %v1176
        %v1241 = vpack.c.bf16 %v1177, %v1177
        %v1242 = vpack.c.bf16 %v1178, %v1178
        %v1243 = vpack.c.bf16 %v1179, %v1179
        %v1244 = vpack.c.bf16 %v1180, %v1180
        %v1245 = vpack.c.bf16 %v1181, %v1181
        %v1246 = vpack.c.bf16 %v1182, %v1182
        %v1247 = vpack.c.bf16 %v1183, %v1183
        %v1248 = vpack.c.bf16 %v1184, %v1184
        %v1249 = vpack.c.bf16 %v1185, %v1185
        %v1250 = vpack.c.bf16 %v1186, %v1186
        %v1251 = vpack.c.bf16 %v1187, %v1187
        %v1252 = vpack.c.bf16 %v1188, %v1188
        %v1253 = vpack.c.bf16 %v1189, %v1189
        %v1254 = vpack.c.bf16 %v1190, %v1190
        %v1255 = vpack.c.bf16 %v1191, %v1191
        %v1256 = vpack.c.bf16 %v1192, %v1192
        %vm1257 = vcmask 125952
        %1258 = vst.msk [vmem:[%s217] sm:$0xf] %vm1257, %v1193
        %1259 = vst.msk [vmem:[%s217 + $0x4] sm:$0xf] %vm1257, %v1194
        %1260 = vst.msk [vmem:[%s217 + $0x8] sm:$0xf] %vm1257, %v1195
        %1261 = vst.msk [vmem:[%s217 + $0xc] sm:$0xf] %vm1257, %v1196
        %1262 = vst.msk [vmem:[%s217 + $0x10] sm:$0xf] %vm1257, %v1197
        %1263 = vst.msk [vmem:[%s217 + $0x14] sm:$0xf] %vm1257, %v1198
        %1264 = vst.msk [vmem:[%s217 + $0x18] sm:$0xf] %vm1257, %v1199
        %1265 = vst.msk [vmem:[%s217 + $0x1c] sm:$0xf] %vm1257, %v1200
        %1266 = vst.msk [vmem:[%s217 + $0x20] sm:$0xf] %vm1257, %v1201
        %1267 = vst.msk [vmem:[%s217 + $0x24] sm:$0xf] %vm1257, %v1202
        %1268 = vst.msk [vmem:[%s217 + $0x28] sm:$0xf] %vm1257, %v1203
        %1269 = vst.msk [vmem:[%s217 + $0x2c] sm:$0xf] %vm1257, %v1204
        %1270 = vst.msk [vmem:[%s217 + $0x30] sm:$0xf] %vm1257, %v1205
        %1271 = vst.msk [vmem:[%s217 + $0x34] sm:$0xf] %vm1257, %v1206
        %1272 = vst.msk [vmem:[%s217 + $0x38] sm:$0xf] %vm1257, %v1207
        %1273 = vst.msk [vmem:[%s217 + $0x3c] sm:$0xf] %vm1257, %v1208
        %1274 = vst.msk [vmem:[%s217 + $0x40] sm:$0xf] %vm1257, %v1209
        %1275 = vst.msk [vmem:[%s217 + $0x44] sm:$0xf] %vm1257, %v1210
        %1276 = vst.msk [vmem:[%s217 + $0x48] sm:$0xf] %vm1257, %v1211
        %1277 = vst.msk [vmem:[%s217 + $0x4c] sm:$0xf] %vm1257, %v1212
        %1278 = vst.msk [vmem:[%s217 + $0x50] sm:$0xf] %vm1257, %v1213
        %1279 = vst.msk [vmem:[%s217 + $0x54] sm:$0xf] %vm1257, %v1214
        %1280 = vst.msk [vmem:[%s217 + $0x58] sm:$0xf] %vm1257, %v1215
        %1281 = vst.msk [vmem:[%s217 + $0x5c] sm:$0xf] %vm1257, %v1216
        %1282 = vst.msk [vmem:[%s217 + $0x60] sm:$0xf] %vm1257, %v1217
        %1283 = vst.msk [vmem:[%s217 + $0x64] sm:$0xf] %vm1257, %v1218
        %1284 = vst.msk [vmem:[%s217 + $0x68] sm:$0xf] %vm1257, %v1219
        %1285 = vst.msk [vmem:[%s217 + $0x6c] sm:$0xf] %vm1257, %v1220
        %1286 = vst.msk [vmem:[%s217 + $0x70] sm:$0xf] %vm1257, %v1221
        %1287 = vst.msk [vmem:[%s217 + $0x74] sm:$0xf] %vm1257, %v1222
        %1288 = vst.msk [vmem:[%s217 + $0x78] sm:$0xf] %vm1257, %v1223
        %1289 = vst.msk [vmem:[%s217 + $0x7c] sm:$0xf] %vm1257, %v1224
        %1290 = vst.msk [vmem:[%s217 + $0x80] sm:$0xf] %vm1257, %v1225
        %1291 = vst.msk [vmem:[%s217 + $0x84] sm:$0xf] %vm1257, %v1226
        %1292 = vst.msk [vmem:[%s217 + $0x88] sm:$0xf] %vm1257, %v1227
        %1293 = vst.msk [vmem:[%s217 + $0x8c] sm:$0xf] %vm1257, %v1228
        %1294 = vst.msk [vmem:[%s217 + $0x90] sm:$0xf] %vm1257, %v1229
        %1295 = vst.msk [vmem:[%s217 + $0x94] sm:$0xf] %vm1257, %v1230
        %1296 = vst.msk [vmem:[%s217 + $0x98] sm:$0xf] %vm1257, %v1231
        %1297 = vst.msk [vmem:[%s217 + $0x9c] sm:$0xf] %vm1257, %v1232
        %1298 = vst.msk [vmem:[%s217 + $0xa0] sm:$0xf] %vm1257, %v1233
        %1299 = vst.msk [vmem:[%s217 + $0xa4] sm:$0xf] %vm1257, %v1234
        %1300 = vst.msk [vmem:[%s217 + $0xa8] sm:$0xf] %vm1257, %v1235
        %1301 = vst.msk [vmem:[%s217 + $0xac] sm:$0xf] %vm1257, %v1236
        %1302 = vst.msk [vmem:[%s217 + $0xb0] sm:$0xf] %vm1257, %v1237
        %1303 = vst.msk [vmem:[%s217 + $0xb4] sm:$0xf] %vm1257, %v1238
        %1304 = vst.msk [vmem:[%s217 + $0xb8] sm:$0xf] %vm1257, %v1239
        %1305 = vst.msk [vmem:[%s217 + $0xbc] sm:$0xf] %vm1257, %v1240
        %1306 = vst.msk [vmem:[%s217 + $0xc0] sm:$0xf] %vm1257, %v1241
        %1307 = vst.msk [vmem:[%s217 + $0xc4] sm:$0xf] %vm1257, %v1242
        %1308 = vst.msk [vmem:[%s217 + $0xc8] sm:$0xf] %vm1257, %v1243
        %1309 = vst.msk [vmem:[%s217 + $0xcc] sm:$0xf] %vm1257, %v1244
        %1310 = vst.msk [vmem:[%s217 + $0xd0] sm:$0xf] %vm1257, %v1245
        %1311 = vst.msk [vmem:[%s217 + $0xd4] sm:$0xf] %vm1257, %v1246
        %1312 = vst.msk [vmem:[%s217 + $0xd8] sm:$0xf] %vm1257, %v1247
        %1313 = vst.msk [vmem:[%s217 + $0xdc] sm:$0xf] %vm1257, %v1248
        %1314 = vst.msk [vmem:[%s217 + $0xe0] sm:$0xf] %vm1257, %v1249
        %1315 = vst.msk [vmem:[%s217 + $0xe4] sm:$0xf] %vm1257, %v1250
        %1316 = vst.msk [vmem:[%s217 + $0xe8] sm:$0xf] %vm1257, %v1251
        %1317 = vst.msk [vmem:[%s217 + $0xec] sm:$0xf] %vm1257, %v1252
        %1318 = vst.msk [vmem:[%s217 + $0xf0] sm:$0xf] %vm1257, %v1253
        %1319 = vst.msk [vmem:[%s217 + $0xf4] sm:$0xf] %vm1257, %v1254
        %1320 = vst.msk [vmem:[%s217 + $0xf8] sm:$0xf] %vm1257, %v1255
        %1321 = vst.msk [vmem:[%s217 + $0xfc] sm:$0xf] %vm1257, %v1256
      $region40: #{faster_rcnn_forward.10} parent=31 // pred_fallthru
        _
      %s1322 = smul.u32 64, %s18
      %p1323 = scmp.lt.s32.totalorder %s1322, 511
      %s1324 = scalar_select %p1323, %s1322, 511
      %s1325 = smul.addr %s1324, 4
      %s1326 = scalar_lea.vmem %s3, %s1325
      // Predicated region
      $region41: #{faster_rcnn_forward.10} parent=31 // pred_check
        %p1327 = pneg %p119
      $region42: #{faster_rcnn_forward.10} parent=31 // pred_check_branch
        %1329 = sbr.rel (%p1327) target = $region44
      $region43: #{faster_rcnn_forward.10} parent=31 // pred_region
        %s1330 = smul.u32 64, %s18
      $region44: #{faster_rcnn_forward.10} parent=31 // pred_fallthru
        _
    $region32: #{faster_rcnn_forward.10} parent=5 // pred_fallthru
      _
    %p1331 = scmp.le.s32.totalorder 2, %s9
    // Predicated region
    $region45: #{faster_rcnn_forward.10} parent=5 // pred_check
      %p1332 = pneg %p1331
    $region46: #{faster_rcnn_forward.10} parent=5 // pred_check_branch
      %1334 = sbr.rel (%p1332) target = $region48
    $region47: #{faster_rcnn_forward.10} parent=5 // pred_region
      %s1335 = ssub.s32 %s9, 2
      // Predicated region
      $region49: #{faster_rcnn_forward.10} parent=47 // pred_check
        %p1336 = pneg %p125
      $region50: #{faster_rcnn_forward.10} parent=47 // pred_check_branch
        %1338 = sbr.rel (%p1336) target = $region52
      $region51: #{faster_rcnn_forward.10} parent=47 // pred_region
        %s1339 = smul.u32 64, %s20
        %p1340 = scmp.lt.s32.totalorder %s1339, 511
        %s1341 = scalar_select %p1340, %s1339, 511
        %s1342 = smul.addr %s1341, 4
        %s1343 = scalar_lea.vmem %s3, %s1342
      $region52: #{faster_rcnn_forward.10} parent=47 // pred_fallthru
        _
    $region48: #{faster_rcnn_forward.10} parent=5 // pred_fallthru
      _
  $region6: #{faster_rcnn_forward.10} parent=0 // loop_footer
    %s13 = sadd.s32 1, %s9
  $region7: #{faster_rcnn_forward.10} parent=0 // loop_footer_branch
    %8 = sbr.rel target = $region3
  $region8: #{faster_rcnn_forward.10} parent=0 // loop_exit
    _

// kernel: faster_rcnn_forward.11
$region0: #{faster_rcnn_forward.11}
  #allocation0 [shape = 'u32[]', space=smem, size = 0x4, offset = 0x4, fixed_abs, tag = 'smem constant byte address 0x4 - core index']
  #allocation1 [shape = 'u32[72,128]{1,0:T(1,128)}', space=vmem, size = 0x9000, scoped, tag = 'internal scratch']
  #allocation2 [shape = 'f32[512,32]{1,0:T(8,128)}', space=vmem, size = 0x40000, scoped, tag = 'scratch operand']
  %s0 = inlined_call_operand.vmem [shape: bf16[1024,144], index: 0, kind: input, shape index: {}]
  %s1 = inlined_call_operand.vmem [shape: bf16[144,32], index: 1, kind: input, shape index: {}]
  %s2 = inlined_call_operand.vmem [shape: f32[1,32], index: 2, kind: input, shape index: {}]
  %s3 = inlined_call_operand.vmem [shape: bf16[1024,32], index: 3, kind: output, shape index: {}]
  %s4 = sld [smem:[#allocation0]]
  $region53: #{faster_rcnn_forward.11} parent=0
    _
  %s6 = ssub.s32 1, %s4
  %s7 = scalar_select 0, %s6, %s4
  loop: start=0, step=1, limit=4
  $region2: #{faster_rcnn_forward.11} parent=0 // loop_pre_header
    _
  $region3: #{faster_rcnn_forward.11} parent=0 // loop_header
    %s9 = sphi 0, %s13
    %p10 = scmp.ge.s32.totalorder %s9, 4
    %s16 = sphi 0, %s28
    %s17 = sphi 0, %s24
    %s18 = sphi 0, %s16
    %s19 = sphi 0, %s17
    %s20 = sphi 0, %s18
    %s21 = sphi 0, %s19
    %s33 = sphi 0, %s35
    %s36 = sphi 0, %s33
    %s37 = sphi 0, %s36
    %s53 = sphi 0, %s37
    %s59 = sphi 0, %s61
    %s62 = sphi 0, %s59
    %s63 = sphi 0, %s62
    %s79 = sphi 0, %s63
    %s83 = sphi 0, %s83
    %s85 = sphi 0, %s83
    %s86 = sphi 0, %s85
    %s100 = sphi 0, %s86
    %s106 = sphi 0, %s108
    %s109 = sphi 0, %s106
    %s110 = sphi 0, %s109
    %s126 = sphi 0, %s110
  $region4: #{faster_rcnn_forward.11} parent=0 // loop_header_branch
    %12 = sbr.rel (%p10) target = $region8
  $region5: #{faster_rcnn_forward.11} parent=0 // loop_body
    %s14 = ssub.s32 %s9, 1
    %s15 = ssub.s32 %s9, 2
    %s22 = sadd.s32 1, %s17
    %p23 = scmp.ge.s32.totalorder %s22, 1
    %s24 = scalar_select %p23, 0, %s22
    %s25 = sadd.s32 1, %s16
    %s26 = scalar_select %p23, %s25, %s16
    %p27 = scmp.ge.s32.totalorder %s26, 2
    %s28 = scalar_select %p27, 0, %s26
    %s29 = ssub.s32 %s16, %s28
    %s30 = ssub.s32 %s17, %s24
    %s31 = sor.u32 %s29, %s30
    %p32 = scmp.eq.s32.totalorder %s31, 0
    %s34 = sadd.s32 %s33, 1
    %s35 = scalar_select %p32, %s33, %s34
    %p38 = pneg %p32
    %p39 = scmp.eq.s32.totalorder %s9, 1
    %p40 = por %p38, %p39
    %p41 = scmp.ne.s32.totalorder %s33, %s36
    %p42 = scmp.eq.s32.totalorder %s9, 0
    %p43 = por %p41, %p42
    %p44 = scmp.ne.s32.totalorder %s33, %s36
    %p45 = scmp.eq.s32.totalorder %s14, 1
    %p46 = por %p44, %p45
    %p47 = scmp.ne.s32.totalorder %s36, %s37
    %p48 = scmp.eq.s32.totalorder %s14, 0
    %p49 = por %p47, %p48
    %p50 = scmp.ne.s32.totalorder %s36, %s37
    %p51 = scmp.eq.s32.totalorder %s15, 1
    %p52 = por %p50, %p51
    %p54 = scmp.ne.s32.totalorder %s37, %s53
    %p55 = scmp.eq.s32.totalorder %s15, 0
    %p56 = por %p54, %p55
    %s57 = ssub.s32 %s17, %s24
    %p58 = scmp.eq.s32.totalorder %s57, 0
    %s60 = sadd.s32 %s59, 1
    %s61 = scalar_select %p58, %s59, %s60
    %p64 = pneg %p58
    %p65 = scmp.eq.s32.totalorder %s9, 1
    %p66 = por %p64, %p65
    %p67 = scmp.ne.s32.totalorder %s59, %s62
    %p68 = scmp.eq.s32.totalorder %s9, 0
    %p69 = por %p67, %p68
    %p70 = scmp.ne.s32.totalorder %s59, %s62
    %p71 = scmp.eq.s32.totalorder %s14, 1
    %p72 = por %p70, %p71
    %p73 = scmp.ne.s32.totalorder %s62, %s63
    %p74 = scmp.eq.s32.totalorder %s14, 0
    %p75 = por %p73, %p74
    %p76 = scmp.ne.s32.totalorder %s62, %s63
    %p77 = scmp.eq.s32.totalorder %s15, 1
    %p78 = por %p76, %p77
    %p80 = scmp.ne.s32.totalorder %s63, %s79
    %p81 = scmp.eq.s32.totalorder %s15, 0
    %p82 = por %p80, %p81
    %s84 = sadd.s32 %s83, 1
    %p87 = scmp.eq.s32.totalorder %s9, 1
    %p88 = scmp.ne.s32.totalorder %s83, %s85
    %p89 = scmp.eq.s32.totalorder %s9, 0
    %p90 = por %p88, %p89
    %p91 = scmp.ne.s32.totalorder %s83, %s85
    %p92 = scmp.eq.s32.totalorder %s14, 1
    %p93 = por %p91, %p92
    %p94 = scmp.ne.s32.totalorder %s85, %s86
    %p95 = scmp.eq.s32.totalorder %s14, 0
    %p96 = por %p94, %p95
    %p97 = scmp.ne.s32.totalorder %s85, %s86
    %p98 = scmp.eq.s32.totalorder %s15, 1
    %p99 = por %p97, %p98
    %p101 = scmp.ne.s32.totalorder %s86, %s100
    %p102 = scmp.eq.s32.totalorder %s15, 0
    %p103 = por %p101, %p102
    %s104 = ssub.s32 %s16, %s28
    %p105 = scmp.eq.s32.totalorder %s104, 0
    %s107 = sadd.s32 %s106, 1
    %s108 = scalar_select %p105, %s106, %s107
    %p111 = pneg %p105
    %p112 = scmp.eq.s32.totalorder %s9, 1
    %p113 = por %p111, %p112
    %p114 = scmp.ne.s32.totalorder %s106, %s109
    %p115 = scmp.eq.s32.totalorder %s9, 0
    %p116 = por %p114, %p115
    %p117 = scmp.ne.s32.totalorder %s106, %s109
    %p118 = scmp.eq.s32.totalorder %s14, 1
    %p119 = por %p117, %p118
    %p120 = scmp.ne.s32.totalorder %s109, %s110
    %p121 = scmp.eq.s32.totalorder %s14, 0
    %p122 = por %p120, %p121
    %p123 = scmp.ne.s32.totalorder %s109, %s110
    %p124 = scmp.eq.s32.totalorder %s15, 1
    %p125 = por %p123, %p124
    %p127 = scmp.ne.s32.totalorder %s110, %s126
    %p128 = scmp.eq.s32.totalorder %s15, 0
    %p129 = por %p127, %p128
    %p130 = scmp.le.s32.totalorder 1, %s9
    %p131 = scmp.lt.s32.totalorder %s9, 3
    %p132 = pnand %p130, %p131
    %p133 = pneg %p132
    // Predicated region
    $region9: #{faster_rcnn_forward.11} parent=5 // pred_check
      _
    $region10: #{faster_rcnn_forward.11} parent=5 // pred_check_branch
      %135 = sbr.rel (%p132) target = $region12
    $region11: #{faster_rcnn_forward.11} parent=5 // pred_region
      %s136 = ssub.s32 %s9, 1
      // Predicated region
      $region13: #{faster_rcnn_forward.11} parent=11 // pred_check
        %p137 = pneg %p75
      $region14: #{faster_rcnn_forward.11} parent=11 // pred_check_branch
        %139 = sbr.rel (%p137) target = $region16
      $region15: #{faster_rcnn_forward.11} parent=11 // pred_region
        %s140 = smul.u32 18, %s19
        %p141 = scmp.lt.s32.totalorder %s140, 17
        %s142 = scalar_select %p141, %s140, 17
        %s143 = smul.addr %s142, 4
        %s144 = scalar_lea.vmem %s1, %s143
        %s145 = smul.u32 18, %s19
      $region16: #{faster_rcnn_forward.11} parent=11 // pred_fallthru
        _
      // Predicated region
      $region17: #{faster_rcnn_forward.11} parent=11 // pred_check
        %p146 = pneg %p96
      $region18: #{faster_rcnn_forward.11} parent=11 // pred_check_branch
        %148 = sbr.rel (%p146) target = $region20
      $region19: #{faster_rcnn_forward.11} parent=11 // pred_region
        _
      $region20: #{faster_rcnn_forward.11} parent=11 // pred_fallthru
        _
    $region12: #{faster_rcnn_forward.11} parent=5 // pred_fallthru
      _
    %p149 = scmp.lt.s32.totalorder %s9, 2
    // Predicated region
    $region21: #{faster_rcnn_forward.11} parent=5 // pred_check
      %p150 = pneg %p149
    $region22: #{faster_rcnn_forward.11} parent=5 // pred_check_branch
      %152 = sbr.rel (%p150) target = $region24
    $region23: #{faster_rcnn_forward.11} parent=5 // pred_region
      // Predicated region
      $region25: #{faster_rcnn_forward.11} parent=23 // pred_check
        %p153 = pneg %p43
      $region26: #{faster_rcnn_forward.11} parent=23 // pred_check_branch
        %155 = sbr.rel (%p153) target = $region28
      $region27: #{faster_rcnn_forward.11} parent=23 // pred_region
        %s156 = smul.u32 64, %s16
        %s157 = smul.u32 2, %s17
        %p158 = scmp.lt.s32.totalorder %s156, 127
        %s159 = scalar_select %p158, %s156, 127
        %p160 = scmp.lt.s32.totalorder %s157, 1
        %s161 = scalar_select %p160, %s157, 1
        %s162 = smul.addr %s159, 2
        %s163 = sadd.s32 %s161, %s162
        %s164 = smul.addr %s163, 4
        %s165 = scalar_lea.vmem %s0, %s164
        %s166 = smul.u32 64, %s16
        %s167 = smul.u32 2, %s17
      $region28: #{faster_rcnn_forward.11} parent=23 // pred_fallthru
        _
    $region24: #{faster_rcnn_forward.11} parent=5 // pred_fallthru
      _
    %p168 = scmp.le.s32.totalorder 1, %s9
    %p169 = scmp.lt.s32.totalorder %s9, 3
    %p170 = pnand %p168, %p169
    %p171 = pneg %p170
    // Predicated region
    $region29: #{faster_rcnn_forward.11} parent=5 // pred_check
      _
    $region30: #{faster_rcnn_forward.11} parent=5 // pred_check_branch
      %173 = sbr.rel (%p170) target = $region32
    $region31: #{faster_rcnn_forward.11} parent=5 // pred_region
      %s174 = ssub.s32 %s9, 1
      %s175 = smul.u32 64, %s18
      %s176 = smul.u32 2, %s19
      %p177 = scmp.lt.s32.totalorder %s175, 127
      %s178 = scalar_select %p177, %s175, 127
      %p179 = scmp.lt.s32.totalorder %s176, 1
      %s180 = scalar_select %p179, %s176, 1
      %s181 = smul.addr %s178, 2
      %s182 = sadd.s32 %s180, %s181
      %s183 = smul.addr %s182, 4
      %s184 = scalar_lea.vmem %s0, %s183
      %p185 = pneg %p49
      %p186 = pneg %p46
      %s187 = smul.u32 18, %s19
      %p188 = scmp.lt.s32.totalorder %s187, 17
      %s189 = scalar_select %p188, %s187, 17
      %s190 = smul.addr %s189, 4
      %s191 = scalar_lea.vmem %s1, %s190
      %p192 = pneg %p75
      %p193 = pneg %p72
      %p194 = pneg %p96
      %p195 = pneg %p93
      %p196 = pneg %p122
      %p197 = pneg %p119
      %s198 = smul.u32 64, %s18
      %p199 = scmp.lt.s32.totalorder %s198, 127
      %s200 = scalar_select %p199, %s198, 127
      %s201 = smul.addr %s200, 4
      %s202 = scalar_lea.vmem %s3, %s201
      %s203 = smul.u32 64, %s18
      %s204 = smul.u32 2, %s19
      %p205 = scmp.lt.s32.totalorder %s203, 127
      %s206 = scalar_select %p205, %s203, 127
      %p207 = scmp.lt.s32.totalorder %s204, 1
      %s208 = scalar_select %p207, %s204, 1
      %s209 = smul.addr %s206, 2
      %s210 = sadd.s32 %s208, %s209
      %s211 = smul.addr %s210, 4
      %s212 = scalar_lea.vmem %s0, %s211
      %s213 = smul.u32 64, %s18
      %s214 = smul.u32 2, %s19
      %s215 = smul.u32 18, %s19
      %p216 = scmp.lt.s32.totalorder %s215, 17
      %s217 = scalar_select %p216, %s215, 17
      %s218 = smul.addr %s217, 4
      %s219 = scalar_lea.vmem %s1, %s218
      %s220 = smul.u32 18, %s19
      %s221 = smul.u32 64, %s18
      %p222 = scmp.lt.s32.totalorder %s221, 127
      %s223 = scalar_select %p222, %s221, 127
      %s224 = smul.addr %s223, 4
      %s225 = scalar_lea.vmem %s3, %s224
      %s226 = smul.u32 64, %s18
      %p228 = scmp.eq.s32.totalorder %s19, 0
      // Predicated region
      $region33: #{faster_rcnn_forward.11} parent=31 // pred_check
        %p229 = pneg %p228
      $region34: #{faster_rcnn_forward.11} parent=31 // pred_check_branch
        %231 = sbr.rel (%p229) target = $region36
      $region35: #{faster_rcnn_forward.11} parent=31 // pred_region
        %vm232 = vcmask 261120
        %233 = vst.msk [vmem:[#allocation2] sm:$0xff] %vm232, 0.0
        %234 = vst.msk [vmem:[#allocation2 + $0x8] sm:$0xff] %vm232, 0.0
        %235 = vst.msk [vmem:[#allocation2 + $0x10] sm:$0xff] %vm232, 0.0
        %236 = vst.msk [vmem:[#allocation2 + $0x18] sm:$0xff] %vm232, 0.0
        %237 = vst.msk [vmem:[#allocation2 + $0x20] sm:$0xff] %vm232, 0.0
        %238 = vst.msk [vmem:[#allocation2 + $0x28] sm:$0xff] %vm232, 0.0
        %239 = vst.msk [vmem:[#allocation2 + $0x30] sm:$0xff] %vm232, 0.0
        %240 = vst.msk [vmem:[#allocation2 + $0x38] sm:$0xff] %vm232, 0.0
        %241 = vst.msk [vmem:[#allocation2 + $0x40] sm:$0xff] %vm232, 0.0
        %242 = vst.msk [vmem:[#allocation2 + $0x48] sm:$0xff] %vm232, 0.0
        %243 = vst.msk [vmem:[#allocation2 + $0x50] sm:$0xff] %vm232, 0.0
        %244 = vst.msk [vmem:[#allocation2 + $0x58] sm:$0xff] %vm232, 0.0
        %245 = vst.msk [vmem:[#allocation2 + $0x60] sm:$0xff] %vm232, 0.0
        %246 = vst.msk [vmem:[#allocation2 + $0x68] sm:$0xff] %vm232, 0.0
        %247 = vst.msk [vmem:[#allocation2 + $0x70] sm:$0xff] %vm232, 0.0
        %248 = vst.msk [vmem:[#allocation2 + $0x78] sm:$0xff] %vm232, 0.0
        %249 = vst.msk [vmem:[#allocation2 + $0x80] sm:$0xff] %vm232, 0.0
        %250 = vst.msk [vmem:[#allocation2 + $0x88] sm:$0xff] %vm232, 0.0
        %251 = vst.msk [vmem:[#allocation2 + $0x90] sm:$0xff] %vm232, 0.0
        %252 = vst.msk [vmem:[#allocation2 + $0x98] sm:$0xff] %vm232, 0.0
        %253 = vst.msk [vmem:[#allocation2 + $0xa0] sm:$0xff] %vm232, 0.0
        %254 = vst.msk [vmem:[#allocation2 + $0xa8] sm:$0xff] %vm232, 0.0
        %255 = vst.msk [vmem:[#allocation2 + $0xb0] sm:$0xff] %vm232, 0.0
        %256 = vst.msk [vmem:[#allocation2 + $0xb8] sm:$0xff] %vm232, 0.0
        %257 = vst.msk [vmem:[#allocation2 + $0xc0] sm:$0xff] %vm232, 0.0
        %258 = vst.msk [vmem:[#allocation2 + $0xc8] sm:$0xff] %vm232, 0.0
        %259 = vst.msk [vmem:[#allocation2 + $0xd0] sm:$0xff] %vm232, 0.0
        %260 = vst.msk [vmem:[#allocation2 + $0xd8] sm:$0xff] %vm232, 0.0
        %261 = vst.msk [vmem:[#allocation2 + $0xe0] sm:$0xff] %vm232, 0.0
        %262 = vst.msk [vmem:[#allocation2 + $0xe8] sm:$0xff] %vm232, 0.0
        %263 = vst.msk [vmem:[#allocation2 + $0xf0] sm:$0xff] %vm232, 0.0
        %264 = vst.msk [vmem:[#allocation2 + $0xf8] sm:$0xff] %vm232, 0.0
        %265 = vst.msk [vmem:[#allocation2 + $0x100] sm:$0xff] %vm232, 0.0
        %266 = vst.msk [vmem:[#allocation2 + $0x108] sm:$0xff] %vm232, 0.0
        %267 = vst.msk [vmem:[#allocation2 + $0x110] sm:$0xff] %vm232, 0.0
        %268 = vst.msk [vmem:[#allocation2 + $0x118] sm:$0xff] %vm232, 0.0
        %269 = vst.msk [vmem:[#allocation2 + $0x120] sm:$0xff] %vm232, 0.0
        %270 = vst.msk [vmem:[#allocation2 + $0x128] sm:$0xff] %vm232, 0.0
        %271 = vst.msk [vmem:[#allocation2 + $0x130] sm:$0xff] %vm232, 0.0
        %272 = vst.msk [vmem:[#allocation2 + $0x138] sm:$0xff] %vm232, 0.0
        %273 = vst.msk [vmem:[#allocation2 + $0x140] sm:$0xff] %vm232, 0.0
        %274 = vst.msk [vmem:[#allocation2 + $0x148] sm:$0xff] %vm232, 0.0
        %275 = vst.msk [vmem:[#allocation2 + $0x150] sm:$0xff] %vm232, 0.0
        %276 = vst.msk [vmem:[#allocation2 + $0x158] sm:$0xff] %vm232, 0.0
        %277 = vst.msk [vmem:[#allocation2 + $0x160] sm:$0xff] %vm232, 0.0
        %278 = vst.msk [vmem:[#allocation2 + $0x168] sm:$0xff] %vm232, 0.0
        %279 = vst.msk [vmem:[#allocation2 + $0x170] sm:$0xff] %vm232, 0.0
        %280 = vst.msk [vmem:[#allocation2 + $0x178] sm:$0xff] %vm232, 0.0
        %281 = vst.msk [vmem:[#allocation2 + $0x180] sm:$0xff] %vm232, 0.0
        %282 = vst.msk [vmem:[#allocation2 + $0x188] sm:$0xff] %vm232, 0.0
        %283 = vst.msk [vmem:[#allocation2 + $0x190] sm:$0xff] %vm232, 0.0
        %284 = vst.msk [vmem:[#allocation2 + $0x198] sm:$0xff] %vm232, 0.0
        %285 = vst.msk [vmem:[#allocation2 + $0x1a0] sm:$0xff] %vm232, 0.0
        %286 = vst.msk [vmem:[#allocation2 + $0x1a8] sm:$0xff] %vm232, 0.0
        %287 = vst.msk [vmem:[#allocation2 + $0x1b0] sm:$0xff] %vm232, 0.0
        %288 = vst.msk [vmem:[#allocation2 + $0x1b8] sm:$0xff] %vm232, 0.0
        %289 = vst.msk [vmem:[#allocation2 + $0x1c0] sm:$0xff] %vm232, 0.0
        %290 = vst.msk [vmem:[#allocation2 + $0x1c8] sm:$0xff] %vm232, 0.0
        %291 = vst.msk [vmem:[#allocation2 + $0x1d0] sm:$0xff] %vm232, 0.0
        %292 = vst.msk [vmem:[#allocation2 + $0x1d8] sm:$0xff] %vm232, 0.0
        %293 = vst.msk [vmem:[#allocation2 + $0x1e0] sm:$0xff] %vm232, 0.0
        %294 = vst.msk [vmem:[#allocation2 + $0x1e8] sm:$0xff] %vm232, 0.0
        %295 = vst.msk [vmem:[#allocation2 + $0x1f0] sm:$0xff] %vm232, 0.0
        %296 = vst.msk [vmem:[#allocation2 + $0x1f8] sm:$0xff] %vm232, 0.0
      $region36: #{faster_rcnn_forward.11} parent=31 // pred_fallthru
        _
      %v297 = vld [vmem:[#allocation2] sm:$0xff]
      %v298 = vld [vmem:[#allocation2 + $0x8] sm:$0xff]
      %v299 = vld [vmem:[#allocation2 + $0x10] sm:$0xff]
      %v300 = vld [vmem:[#allocation2 + $0x18] sm:$0xff]
      %v301 = vld [vmem:[#allocation2 + $0x20] sm:$0xff]
      %v302 = vld [vmem:[#allocation2 + $0x28] sm:$0xff]
      %v303 = vld [vmem:[#allocation2 + $0x30] sm:$0xff]
      %v304 = vld [vmem:[#allocation2 + $0x38] sm:$0xff]
      %v305 = vld [vmem:[#allocation2 + $0x40] sm:$0xff]
      %v306 = vld [vmem:[#allocation2 + $0x48] sm:$0xff]
      %v307 = vld [vmem:[#allocation2 + $0x50] sm:$0xff]
      %v308 = vld [vmem:[#allocation2 + $0x58] sm:$0xff]
      %v309 = vld [vmem:[#allocation2 + $0x60] sm:$0xff]
      %v310 = vld [vmem:[#allocation2 + $0x68] sm:$0xff]
      %v311 = vld [vmem:[#allocation2 + $0x70] sm:$0xff]
      %v312 = vld [vmem:[#allocation2 + $0x78] sm:$0xff]
      %v313 = vld [vmem:[#allocation2 + $0x80] sm:$0xff]
      %v314 = vld [vmem:[#allocation2 + $0x88] sm:$0xff]
      %v315 = vld [vmem:[#allocation2 + $0x90] sm:$0xff]
      %v316 = vld [vmem:[#allocation2 + $0x98] sm:$0xff]
      %v317 = vld [vmem:[#allocation2 + $0xa0] sm:$0xff]
      %v318 = vld [vmem:[#allocation2 + $0xa8] sm:$0xff]
      %v319 = vld [vmem:[#allocation2 + $0xb0] sm:$0xff]
      %v320 = vld [vmem:[#allocation2 + $0xb8] sm:$0xff]
      %v321 = vld [vmem:[#allocation2 + $0xc0] sm:$0xff]
      %v322 = vld [vmem:[#allocation2 + $0xc8] sm:$0xff]
      %v323 = vld [vmem:[#allocation2 + $0xd0] sm:$0xff]
      %v324 = vld [vmem:[#allocation2 + $0xd8] sm:$0xff]
      %v325 = vld [vmem:[#allocation2 + $0xe0] sm:$0xff]
      %v326 = vld [vmem:[#allocation2 + $0xe8] sm:$0xff]
      %v327 = vld [vmem:[#allocation2 + $0xf0] sm:$0xff]
      %v328 = vld [vmem:[#allocation2 + $0xf8] sm:$0xff]
      %v329 = vld [vmem:[#allocation2 + $0x100] sm:$0xff]
      %v330 = vld [vmem:[#allocation2 + $0x108] sm:$0xff]
      %v331 = vld [vmem:[#allocation2 + $0x110] sm:$0xff]
      %v332 = vld [vmem:[#allocation2 + $0x118] sm:$0xff]
      %v333 = vld [vmem:[#allocation2 + $0x120] sm:$0xff]
      %v334 = vld [vmem:[#allocation2 + $0x128] sm:$0xff]
      %v335 = vld [vmem:[#allocation2 + $0x130] sm:$0xff]
      %v336 = vld [vmem:[#allocation2 + $0x138] sm:$0xff]
      %v337 = vld [vmem:[#allocation2 + $0x140] sm:$0xff]
      %v338 = vld [vmem:[#allocation2 + $0x148] sm:$0xff]
      %v339 = vld [vmem:[#allocation2 + $0x150] sm:$0xff]
      %v340 = vld [vmem:[#allocation2 + $0x158] sm:$0xff]
      %v341 = vld [vmem:[#allocation2 + $0x160] sm:$0xff]
      %v342 = vld [vmem:[#allocation2 + $0x168] sm:$0xff]
      %v343 = vld [vmem:[#allocation2 + $0x170] sm:$0xff]
      %v344 = vld [vmem:[#allocation2 + $0x178] sm:$0xff]
      %v345 = vld [vmem:[#allocation2 + $0x180] sm:$0xff]
      %v346 = vld [vmem:[#allocation2 + $0x188] sm:$0xff]
      %v347 = vld [vmem:[#allocation2 + $0x190] sm:$0xff]
      %v348 = vld [vmem:[#allocation2 + $0x198] sm:$0xff]
      %v349 = vld [vmem:[#allocation2 + $0x1a0] sm:$0xff]
      %v350 = vld [vmem:[#allocation2 + $0x1a8] sm:$0xff]
      %v351 = vld [vmem:[#allocation2 + $0x1b0] sm:$0xff]
      %v352 = vld [vmem:[#allocation2 + $0x1b8] sm:$0xff]
      %v353 = vld [vmem:[#allocation2 + $0x1c0] sm:$0xff]
      %v354 = vld [vmem:[#allocation2 + $0x1c8] sm:$0xff]
      %v355 = vld [vmem:[#allocation2 + $0x1d0] sm:$0xff]
      %v356 = vld [vmem:[#allocation2 + $0x1d8] sm:$0xff]
      %v357 = vld [vmem:[#allocation2 + $0x1e0] sm:$0xff]
      %v358 = vld [vmem:[#allocation2 + $0x1e8] sm:$0xff]
      %v359 = vld [vmem:[#allocation2 + $0x1f0] sm:$0xff]
      %v360 = vld [vmem:[#allocation2 + $0x1f8] sm:$0xff]
      %v361 = vld [vmem:[%s212] sm:$0xff]
      %v362 = vld [vmem:[%s212 + $0x8] sm:$0xff]
      %v363 = vld [vmem:[%s212 + $0x10] sm:$0xff]
      %v364 = vld [vmem:[%s212 + $0x18] sm:$0xff]
      %v365 = vld [vmem:[%s212 + $0x20] sm:$0xff]
      %v366 = vld [vmem:[%s212 + $0x28] sm:$0xff]
      %v367 = vld [vmem:[%s212 + $0x30] sm:$0xff]
      %v368 = vld [vmem:[%s212 + $0x38] sm:$0xff]
      %v369 = vld [vmem:[%s212 + $0x40] sm:$0xff]
      %v370 = vld [vmem:[%s212 + $0x48] sm:$0xff]
      %v371 = vld [vmem:[%s212 + $0x50] sm:$0xff]
      %v372 = vld [vmem:[%s212 + $0x58] sm:$0xff]
      %v373 = vld [vmem:[%s212 + $0x60] sm:$0xff]
      %v374 = vld [vmem:[%s212 + $0x68] sm:$0xff]
      %v375 = vld [vmem:[%s212 + $0x70] sm:$0xff]
      %v376 = vld [vmem:[%s212 + $0x78] sm:$0xff]
      %v377 = vld [vmem:[%s212 + $0x80] sm:$0xff]
      %v378 = vld [vmem:[%s212 + $0x88] sm:$0xff]
      %v379 = vld [vmem:[%s212 + $0x90] sm:$0xff]
      %v380 = vld [vmem:[%s212 + $0x98] sm:$0xff]
      %v381 = vld [vmem:[%s212 + $0xa0] sm:$0xff]
      %v382 = vld [vmem:[%s212 + $0xa8] sm:$0xff]
      %v383 = vld [vmem:[%s212 + $0xb0] sm:$0xff]
      %v384 = vld [vmem:[%s212 + $0xb8] sm:$0xff]
      %v385 = vld [vmem:[%s212 + $0xc0] sm:$0xff]
      %v386 = vld [vmem:[%s212 + $0xc8] sm:$0xff]
      %v387 = vld [vmem:[%s212 + $0xd0] sm:$0xff]
      %v388 = vld [vmem:[%s212 + $0xd8] sm:$0xff]
      %v389 = vld [vmem:[%s212 + $0xe0] sm:$0xff]
      %v390 = vld [vmem:[%s212 + $0xe8] sm:$0xff]
      %v391 = vld [vmem:[%s212 + $0xf0] sm:$0xff]
      %v392 = vld [vmem:[%s212 + $0xf8] sm:$0xff]
      %v393 = vld [vmem:[%s212 + $0x100] sm:$0xff]
      %v394 = vld [vmem:[%s212 + $0x108] sm:$0xff]
      %v395 = vld [vmem:[%s212 + $0x110] sm:$0xff]
      %v396 = vld [vmem:[%s212 + $0x118] sm:$0xff]
      %v397 = vld [vmem:[%s212 + $0x120] sm:$0xff]
      %v398 = vld [vmem:[%s212 + $0x128] sm:$0xff]
      %v399 = vld [vmem:[%s212 + $0x130] sm:$0xff]
      %v400 = vld [vmem:[%s212 + $0x138] sm:$0xff]
      %v401 = vld [vmem:[%s212 + $0x140] sm:$0xff]
      %v402 = vld [vmem:[%s212 + $0x148] sm:$0xff]
      %v403 = vld [vmem:[%s212 + $0x150] sm:$0xff]
      %v404 = vld [vmem:[%s212 + $0x158] sm:$0xff]
      %v405 = vld [vmem:[%s212 + $0x160] sm:$0xff]
      %v406 = vld [vmem:[%s212 + $0x168] sm:$0xff]
      %v407 = vld [vmem:[%s212 + $0x170] sm:$0xff]
      %v408 = vld [vmem:[%s212 + $0x178] sm:$0xff]
      %v409 = vld [vmem:[%s212 + $0x180] sm:$0xff]
      %v410 = vld [vmem:[%s212 + $0x188] sm:$0xff]
      %v411 = vld [vmem:[%s212 + $0x190] sm:$0xff]
      %v412 = vld [vmem:[%s212 + $0x198] sm:$0xff]
      %v413 = vld [vmem:[%s212 + $0x1a0] sm:$0xff]
      %v414 = vld [vmem:[%s212 + $0x1a8] sm:$0xff]
      %v415 = vld [vmem:[%s212 + $0x1b0] sm:$0xff]
      %v416 = vld [vmem:[%s212 + $0x1b8] sm:$0xff]
      %v417 = vld [vmem:[%s212 + $0x1c0] sm:$0xff]
      %v418 = vld [vmem:[%s212 + $0x1c8] sm:$0xff]
      %v419 = vld [vmem:[%s212 + $0x1d0] sm:$0xff]
      %v420 = vld [vmem:[%s212 + $0x1d8] sm:$0xff]
      %v421 = vld [vmem:[%s212 + $0x1e0] sm:$0xff]
      %v422 = vld [vmem:[%s212 + $0x1e8] sm:$0xff]
      %v423 = vld [vmem:[%s212 + $0x1f0] sm:$0xff]
      %v424 = vld [vmem:[%s212 + $0x1f8] sm:$0xff]
      %v425 = vld [vmem:[%s219] sm:$0xf]
      %v426 = vld [vmem:[%s219 + $0x4] sm:$0xf]
      %v427 = vld [vmem:[%s219 + $0x8] sm:$0xf]
      %v428 = vld [vmem:[%s219 + $0xc] sm:$0xf]
      %v429 = vld [vmem:[%s219 + $0x10] sm:$0xf]
      %v430 = vld [vmem:[%s219 + $0x14] sm:$0xf]
      %v431 = vld [vmem:[%s219 + $0x18] sm:$0xf]
      %v432 = vld [vmem:[%s219 + $0x1c] sm:$0xf]
      %v433 = vld [vmem:[%s219 + $0x20] sm:$0xf]
      %v434 = vld [vmem:[%s219 + $0x24] sm:$0xf]
      %v435 = vld [vmem:[%s219 + $0x28] sm:$0xf]
      %v436 = vld [vmem:[%s219 + $0x2c] sm:$0xf]
      %v437 = vld [vmem:[%s219 + $0x30] sm:$0xf]
      %v438 = vld [vmem:[%s219 + $0x34] sm:$0xf]
      %v439 = vld [vmem:[%s219 + $0x38] sm:$0xf]
      %v440 = vld [vmem:[%s219 + $0x3c] sm:$0xf]
      %v441 = vld [vmem:[%s219 + $0x40] sm:$0xf]
      %v442 = vld [vmem:[%s219 + $0x44] sm:$0xf]
      %v507 = vunpack.c.l.b16 %v361
      %v508 = vunpack.c.h.b16 %v361
      %v509 = vunpack.c.l.b16 %v362
      %v510 = vunpack.c.h.b16 %v362
      %v511 = vunpack.c.l.b16 %v363
      %v512 = vunpack.c.h.b16 %v363
      %v513 = vunpack.c.l.b16 %v364
      %v514 = vunpack.c.h.b16 %v364
      %v515 = vunpack.c.l.b16 %v365
      %v516 = vunpack.c.h.b16 %v365
      %v517 = vunpack.c.l.b16 %v366
      %v518 = vunpack.c.h.b16 %v366
      %v519 = vunpack.c.l.b16 %v367
      %v520 = vunpack.c.h.b16 %v367
      %v521 = vunpack.c.l.b16 %v368
      %v522 = vunpack.c.h.b16 %v368
      %v523 = vunpack.c.l.b16 %v369
      %v524 = vunpack.c.h.b16 %v369
      %v525 = vunpack.c.l.b16 %v370
      %v526 = vunpack.c.h.b16 %v370
      %v527 = vunpack.c.l.b16 %v371
      %v528 = vunpack.c.h.b16 %v371
      %v529 = vunpack.c.l.b16 %v372
      %v530 = vunpack.c.h.b16 %v372
      %v531 = vunpack.c.l.b16 %v373
      %v532 = vunpack.c.h.b16 %v373
      %v533 = vunpack.c.l.b16 %v374
      %v534 = vunpack.c.h.b16 %v374
      %v535 = vunpack.c.l.b16 %v375
      %v536 = vunpack.c.h.b16 %v375
      %v537 = vunpack.c.l.b16 %v376
      %v538 = vunpack.c.h.b16 %v376
      %v539 = vunpack.c.l.b16 %v377
      %v540 = vunpack.c.h.b16 %v377
      %v541 = vunpack.c.l.b16 %v378
      %v542 = vunpack.c.h.b16 %v378
      %v543 = vunpack.c.l.b16 %v379
      %v544 = vunpack.c.h.b16 %v379
      %v545 = vunpack.c.l.b16 %v380
      %v546 = vunpack.c.h.b16 %v380
      %v547 = vunpack.c.l.b16 %v381
      %v548 = vunpack.c.h.b16 %v381
      %v549 = vunpack.c.l.b16 %v382
      %v550 = vunpack.c.h.b16 %v382
      %v551 = vunpack.c.l.b16 %v383
      %v552 = vunpack.c.h.b16 %v383
      %v553 = vunpack.c.l.b16 %v384
      %v554 = vunpack.c.h.b16 %v384
      %v555 = vunpack.c.l.b16 %v385
      %v556 = vunpack.c.h.b16 %v385
      %v557 = vunpack.c.l.b16 %v386
      %v558 = vunpack.c.h.b16 %v386
      %v559 = vunpack.c.l.b16 %v387
      %v560 = vunpack.c.h.b16 %v387
      %v561 = vunpack.c.l.b16 %v388
      %v562 = vunpack.c.h.b16 %v388
      %v563 = vunpack.c.l.b16 %v389
      %v564 = vunpack.c.h.b16 %v389
      %v565 = vunpack.c.l.b16 %v390
      %v566 = vunpack.c.h.b16 %v390
      %v567 = vunpack.c.l.b16 %v391
      %v568 = vunpack.c.h.b16 %v391
      %v569 = vunpack.c.l.b16 %v392
      %v570 = vunpack.c.h.b16 %v392
      %v571 = vunpack.c.l.b16 %v393
      %v572 = vunpack.c.h.b16 %v393
      %v573 = vunpack.c.l.b16 %v394
      %v574 = vunpack.c.h.b16 %v394
      %v575 = vunpack.c.l.b16 %v395
      %v576 = vunpack.c.h.b16 %v395
      %v577 = vunpack.c.l.b16 %v396
      %v578 = vunpack.c.h.b16 %v396
      %v579 = vunpack.c.l.b16 %v397
      %v580 = vunpack.c.h.b16 %v397
      %v581 = vunpack.c.l.b16 %v398
      %v582 = vunpack.c.h.b16 %v398
      %v583 = vunpack.c.l.b16 %v399
      %v584 = vunpack.c.h.b16 %v399
      %v585 = vunpack.c.l.b16 %v400
      %v586 = vunpack.c.h.b16 %v400
      %v587 = vunpack.c.l.b16 %v401
      %v588 = vunpack.c.h.b16 %v401
      %v589 = vunpack.c.l.b16 %v402
      %v590 = vunpack.c.h.b16 %v402
      %v591 = vunpack.c.l.b16 %v403
      %v592 = vunpack.c.h.b16 %v403
      %v593 = vunpack.c.l.b16 %v404
      %v594 = vunpack.c.h.b16 %v404
      %v595 = vunpack.c.l.b16 %v405
      %v596 = vunpack.c.h.b16 %v405
      %v597 = vunpack.c.l.b16 %v406
      %v598 = vunpack.c.h.b16 %v406
      %v599 = vunpack.c.l.b16 %v407
      %v600 = vunpack.c.h.b16 %v407
      %v601 = vunpack.c.l.b16 %v408
      %v602 = vunpack.c.h.b16 %v408
      %v603 = vunpack.c.l.b16 %v409
      %v604 = vunpack.c.h.b16 %v409
      %v605 = vunpack.c.l.b16 %v410
      %v606 = vunpack.c.h.b16 %v410
      %v607 = vunpack.c.l.b16 %v411
      %v608 = vunpack.c.h.b16 %v411
      %v609 = vunpack.c.l.b16 %v412
      %v610 = vunpack.c.h.b16 %v412
      %v611 = vunpack.c.l.b16 %v413
      %v612 = vunpack.c.h.b16 %v413
      %v613 = vunpack.c.l.b16 %v414
      %v614 = vunpack.c.h.b16 %v414
      %v615 = vunpack.c.l.b16 %v415
      %v616 = vunpack.c.h.b16 %v415
      %v617 = vunpack.c.l.b16 %v416
      %v618 = vunpack.c.h.b16 %v416
      %v619 = vunpack.c.l.b16 %v417
      %v620 = vunpack.c.h.b16 %v417
      %v621 = vunpack.c.l.b16 %v418
      %v622 = vunpack.c.h.b16 %v418
      %v623 = vunpack.c.l.b16 %v419
      %v624 = vunpack.c.h.b16 %v419
      %v625 = vunpack.c.l.b16 %v420
      %v626 = vunpack.c.h.b16 %v420
      %v627 = vunpack.c.l.b16 %v421
      %v628 = vunpack.c.h.b16 %v421
      %v629 = vunpack.c.l.b16 %v422
      %v630 = vunpack.c.h.b16 %v422
      %v631 = vunpack.c.l.b16 %v423
      %v632 = vunpack.c.h.b16 %v423
      %v633 = vunpack.c.l.b16 %v424
      %v634 = vunpack.c.h.b16 %v424
      %v635 = vpack.c.b16 %v509, %v507
      %v636 = vpack.c.b16 %v510, %v508
      %v637 = vpack.c.b16 %v513, %v511
      %v638 = vpack.c.b16 %v514, %v512
      %v639 = vpack.c.b16 %v517, %v515
      %v640 = vpack.c.b16 %v518, %v516
      %v641 = vpack.c.b16 %v521, %v519
      %v642 = vpack.c.b16 %v522, %v520
      %v643 = vpack.c.b16 %v525, %v523
      %v644 = vpack.c.b16 %v526, %v524
      %v645 = vpack.c.b16 %v529, %v527
      %v646 = vpack.c.b16 %v530, %v528
      %v647 = vpack.c.b16 %v533, %v531
      %v648 = vpack.c.b16 %v534, %v532
      %v649 = vpack.c.b16 %v537, %v535
      %v650 = vpack.c.b16 %v538, %v536
      %v651 = vpack.c.b16 %v541, %v539
      %v652 = vpack.c.b16 %v542, %v540
      %v653 = vpack.c.b16 %v545, %v543
      %v654 = vpack.c.b16 %v546, %v544
      %v655 = vpack.c.b16 %v549, %v547
      %v656 = vpack.c.b16 %v550, %v548
      %v657 = vpack.c.b16 %v553, %v551
      %v658 = vpack.c.b16 %v554, %v552
      %v659 = vpack.c.b16 %v557, %v555
      %v660 = vpack.c.b16 %v558, %v556
      %v661 = vpack.c.b16 %v561, %v559
      %v662 = vpack.c.b16 %v562, %v560
      %v663 = vpack.c.b16 %v565, %v563
      %v664 = vpack.c.b16 %v566, %v564
      %v665 = vpack.c.b16 %v569, %v567
      %v666 = vpack.c.b16 %v570, %v568
      %v667 = vpack.c.b16 %v573, %v571
      %v668 = vpack.c.b16 %v574, %v572
      %v669 = vpack.c.b16 %v577, %v575
      %v670 = vpack.c.b16 %v578, %v576
      %v671 = vpack.c.b16 %v581, %v579
      %v672 = vpack.c.b16 %v582, %v580
      %v673 = vpack.c.b16 %v585, %v583
      %v674 = vpack.c.b16 %v586, %v584
      %v675 = vpack.c.b16 %v589, %v587
      %v676 = vpack.c.b16 %v590, %v588
      %v677 = vpack.c.b16 %v593, %v591
      %v678 = vpack.c.b16 %v594, %v592
      %v679 = vpack.c.b16 %v597, %v595
      %v680 = vpack.c.b16 %v598, %v596
      %v681 = vpack.c.b16 %v601, %v599
      %v682 = vpack.c.b16 %v602, %v600
      %v683 = vpack.c.b16 %v605, %v603
      %v684 = vpack.c.b16 %v606, %v604
      %v685 = vpack.c.b16 %v609, %v607
      %v686 = vpack.c.b16 %v610, %v608
      %v687 = vpack.c.b16 %v613, %v611
      %v688 = vpack.c.b16 %v614, %v612
      %v689 = vpack.c.b16 %v617, %v615
      %v690 = vpack.c.b16 %v618, %v616
      %v691 = vpack.c.b16 %v621, %v619
      %v692 = vpack.c.b16 %v622, %v620
      %v693 = vpack.c.b16 %v625, %v623
      %v694 = vpack.c.b16 %v626, %v624
      %v695 = vpack.c.b16 %v629, %v627
      %v696 = vpack.c.b16 %v630, %v628
      %v697 = vpack.c.b16 %v633, %v631
      %v698 = vpack.c.b16 %v634, %v632
      %v749 = vunpack.c.l.b16 %v425
      %v750 = vunpack.c.l.b16 %v426
      %v751 = vunpack.c.l.b16 %v427
      %v752 = vunpack.c.l.b16 %v428
      %v753 = vunpack.c.l.b16 %v429
      %v754 = vunpack.c.l.b16 %v430
      %v755 = vunpack.c.l.b16 %v431
      %v756 = vunpack.c.l.b16 %v432
      %v757 = vunpack.c.l.b16 %v433
      %v758 = vunpack.c.l.b16 %v434
      %v759 = vunpack.c.l.b16 %v435
      %v760 = vunpack.c.l.b16 %v436
      %v761 = vunpack.c.l.b16 %v437
      %v762 = vunpack.c.l.b16 %v438
      %v763 = vunpack.c.l.b16 %v439
      %v764 = vunpack.c.l.b16 %v440
      %v765 = vunpack.c.l.b16 %v441
      %v766 = vunpack.c.l.b16 %v442
      %v767 = vpack.c.b16 %v750, %v749
      %v768 = vpack.c.b16 %v752, %v751
      %v769 = vpack.c.b16 %v754, %v753
      %v770 = vpack.c.b16 %v756, %v755
      %v771 = vpack.c.b16 %v758, %v757
      %v772 = vpack.c.b16 %v760, %v759
      %v773 = vpack.c.b16 %v762, %v761
      %v774 = vpack.c.b16 %v764, %v763
      %v775 = vpack.c.b16 %v766, %v765
      %vm785 = vcmask 130048
      %v787 = vsel %vm785, %v636, 0
      %v790 = vsel %vm785, %v638, 0
      %v793 = vsel %vm785, %v640, 0
      %v796 = vsel %vm785, %v642, 0
      %v799 = vsel %vm785, %v644, 0
      %v802 = vsel %vm785, %v646, 0
      %v805 = vsel %vm785, %v648, 0
      %v808 = vsel %vm785, %v650, 0
      %v811 = vsel %vm785, %v652, 0
      %v814 = vsel %vm785, %v654, 0
      %v817 = vsel %vm785, %v656, 0
      %v820 = vsel %vm785, %v658, 0
      %v823 = vsel %vm785, %v660, 0
      %v826 = vsel %vm785, %v662, 0
      %v829 = vsel %vm785, %v664, 0
      %v832 = vsel %vm785, %v666, 0
      %v835 = vsel %vm785, %v668, 0
      %v838 = vsel %vm785, %v670, 0
      %v841 = vsel %vm785, %v672, 0
      %v844 = vsel %vm785, %v674, 0
      %v847 = vsel %vm785, %v676, 0
      %v850 = vsel %vm785, %v678, 0
      %v853 = vsel %vm785, %v680, 0
      %v856 = vsel %vm785, %v682, 0
      %v859 = vsel %vm785, %v684, 0
      %v862 = vsel %vm785, %v686, 0
      %v865 = vsel %vm785, %v688, 0
      %v868 = vsel %vm785, %v690, 0
      %v871 = vsel %vm785, %v692, 0
      %v874 = vsel %vm785, %v694, 0
      %v877 = vsel %vm785, %v696, 0
      %v880 = vsel %vm785, %v698, 0
      %882 = vmatpush.bf16.msra.mxu0 %v774
      %883 = vmatpush.bf16.msra.mxu0 %v773
      %884 = vmatpush.bf16.msra.mxu0 %v772
      %885 = vmatpush.bf16.msra.mxu0 %v771
      %886 = vmatpush.bf16.msra.mxu0 %v770
      %887 = vmatpush.bf16.msra.mxu0 %v769
      %888 = vmatpush.bf16.msra.mxu0 %v768
      %889 = vmatpush.bf16.msra.mxu0 %v767
      %890 = vmatmul.bf16.gmra.mxu0 %v635
      %v891 = vpop.f32.mrf.mxu0
      %v892 = vadd.f32 0.0, %v891
      %v893 = vpop.f32.mrf.mxu0
      %v894 = vadd.f32 0.0, %v893
      %895 = vmatmul.bf16.gmra.mxu0 %v637
      %v896 = vpop.f32.mrf.mxu0
      %v897 = vadd.f32 0.0, %v896
      %v898 = vpop.f32.mrf.mxu0
      %v899 = vadd.f32 0.0, %v898
      %900 = vmatmul.bf16.gmra.mxu0 %v639
      %v901 = vpop.f32.mrf.mxu0
      %v902 = vadd.f32 0.0, %v901
      %v903 = vpop.f32.mrf.mxu0
      %v904 = vadd.f32 0.0, %v903
      %905 = vmatmul.bf16.gmra.mxu0 %v641
      %v906 = vpop.f32.mrf.mxu0
      %v907 = vadd.f32 0.0, %v906
      %v908 = vpop.f32.mrf.mxu0
      %v909 = vadd.f32 0.0, %v908
      %910 = vmatmul.bf16.gmra.mxu0 %v643
      %v911 = vpop.f32.mrf.mxu0
      %v912 = vadd.f32 0.0, %v911
      %v913 = vpop.f32.mrf.mxu0
      %v914 = vadd.f32 0.0, %v913
      %915 = vmatmul.bf16.gmra.mxu0 %v645
      %v916 = vpop.f32.mrf.mxu0
      %v917 = vadd.f32 0.0, %v916
      %v918 = vpop.f32.mrf.mxu0
      %v919 = vadd.f32 0.0, %v918
      %920 = vmatmul.bf16.gmra.mxu0 %v647
      %v921 = vpop.f32.mrf.mxu0
      %v922 = vadd.f32 0.0, %v921
      %v923 = vpop.f32.mrf.mxu0
      %v924 = vadd.f32 0.0, %v923
      %925 = vmatmul.bf16.gmra.mxu0 %v649
      %v926 = vpop.f32.mrf.mxu0
      %v927 = vadd.f32 0.0, %v926
      %v928 = vpop.f32.mrf.mxu0
      %v929 = vadd.f32 0.0, %v928
      %930 = vmatmul.bf16.gmra.mxu0 %v651
      %v931 = vpop.f32.mrf.mxu0
      %v932 = vadd.f32 0.0, %v931
      %v933 = vpop.f32.mrf.mxu0
      %v934 = vadd.f32 0.0, %v933
      %935 = vmatmul.bf16.gmra.mxu0 %v653
      %v936 = vpop.f32.mrf.mxu0
      %v937 = vadd.f32 0.0, %v936
      %v938 = vpop.f32.mrf.mxu0
      %v939 = vadd.f32 0.0, %v938
      %940 = vmatmul.bf16.gmra.mxu0 %v655
      %v941 = vpop.f32.mrf.mxu0
      %v942 = vadd.f32 0.0, %v941
      %v943 = vpop.f32.mrf.mxu0
      %v944 = vadd.f32 0.0, %v943
      %945 = vmatmul.bf16.gmra.mxu0 %v657
      %v946 = vpop.f32.mrf.mxu0
      %v947 = vadd.f32 0.0, %v946
      %v948 = vpop.f32.mrf.mxu0
      %v949 = vadd.f32 0.0, %v948
      %950 = vmatmul.bf16.gmra.mxu0 %v659
      %v951 = vpop.f32.mrf.mxu0
      %v952 = vadd.f32 0.0, %v951
      %v953 = vpop.f32.mrf.mxu0
      %v954 = vadd.f32 0.0, %v953
      %955 = vmatmul.bf16.gmra.mxu0 %v661
      %v956 = vpop.f32.mrf.mxu0
      %v957 = vadd.f32 0.0, %v956
      %v958 = vpop.f32.mrf.mxu0
      %v959 = vadd.f32 0.0, %v958
      %960 = vmatmul.bf16.gmra.mxu0 %v663
      %v961 = vpop.f32.mrf.mxu0
      %v962 = vadd.f32 0.0, %v961
      %v963 = vpop.f32.mrf.mxu0
      %v964 = vadd.f32 0.0, %v963
      %965 = vmatmul.bf16.gmra.mxu0 %v665
      %v966 = vpop.f32.mrf.mxu0
      %v967 = vadd.f32 0.0, %v966
      %v968 = vpop.f32.mrf.mxu0
      %v969 = vadd.f32 0.0, %v968
      %970 = vmatmul.bf16.gmra.mxu0 %v667
      %v971 = vpop.f32.mrf.mxu0
      %v972 = vadd.f32 0.0, %v971
      %v973 = vpop.f32.mrf.mxu0
      %v974 = vadd.f32 0.0, %v973
      %975 = vmatmul.bf16.gmra.mxu0 %v669
      %v976 = vpop.f32.mrf.mxu0
      %v977 = vadd.f32 0.0, %v976
      %v978 = vpop.f32.mrf.mxu0
      %v979 = vadd.f32 0.0, %v978
      %980 = vmatmul.bf16.gmra.mxu0 %v671
      %v981 = vpop.f32.mrf.mxu0
      %v982 = vadd.f32 0.0, %v981
      %v983 = vpop.f32.mrf.mxu0
      %v984 = vadd.f32 0.0, %v983
      %985 = vmatmul.bf16.gmra.mxu0 %v673
      %v986 = vpop.f32.mrf.mxu0
      %v987 = vadd.f32 0.0, %v986
      %v988 = vpop.f32.mrf.mxu0
      %v989 = vadd.f32 0.0, %v988
      %990 = vmatmul.bf16.gmra.mxu0 %v675
      %v991 = vpop.f32.mrf.mxu0
      %v992 = vadd.f32 0.0, %v991
      %v993 = vpop.f32.mrf.mxu0
      %v994 = vadd.f32 0.0, %v993
      %995 = vmatmul.bf16.gmra.mxu0 %v677
      %v996 = vpop.f32.mrf.mxu0
      %v997 = vadd.f32 0.0, %v996
      %v998 = vpop.f32.mrf.mxu0
      %v999 = vadd.f32 0.0, %v998
      %1000 = vmatmul.bf16.gmra.mxu0 %v679
      %v1001 = vpop.f32.mrf.mxu0
      %v1002 = vadd.f32 0.0, %v1001
      %v1003 = vpop.f32.mrf.mxu0
      %v1004 = vadd.f32 0.0, %v1003
      %1005 = vmatmul.bf16.gmra.mxu0 %v681
      %v1006 = vpop.f32.mrf.mxu0
      %v1007 = vadd.f32 0.0, %v1006
      %v1008 = vpop.f32.mrf.mxu0
      %v1009 = vadd.f32 0.0, %v1008
      %1010 = vmatmul.bf16.gmra.mxu0 %v683
      %v1011 = vpop.f32.mrf.mxu0
      %v1012 = vadd.f32 0.0, %v1011
      %v1013 = vpop.f32.mrf.mxu0
      %v1014 = vadd.f32 0.0, %v1013
      %1015 = vmatmul.bf16.gmra.mxu0 %v685
      %v1016 = vpop.f32.mrf.mxu0
      %v1017 = vadd.f32 0.0, %v1016
      %v1018 = vpop.f32.mrf.mxu0
      %v1019 = vadd.f32 0.0, %v1018
      %1020 = vmatmul.bf16.gmra.mxu0 %v687
      %v1021 = vpop.f32.mrf.mxu0
      %v1022 = vadd.f32 0.0, %v1021
      %v1023 = vpop.f32.mrf.mxu0
      %v1024 = vadd.f32 0.0, %v1023
      %1025 = vmatmul.bf16.gmra.mxu0 %v689
      %v1026 = vpop.f32.mrf.mxu0
      %v1027 = vadd.f32 0.0, %v1026
      %v1028 = vpop.f32.mrf.mxu0
      %v1029 = vadd.f32 0.0, %v1028
      %1030 = vmatmul.bf16.gmra.mxu0 %v691
      %v1031 = vpop.f32.mrf.mxu0
      %v1032 = vadd.f32 0.0, %v1031
      %v1033 = vpop.f32.mrf.mxu0
      %v1034 = vadd.f32 0.0, %v1033
      %1035 = vmatmul.bf16.gmra.mxu0 %v693
      %v1036 = vpop.f32.mrf.mxu0
      %v1037 = vadd.f32 0.0, %v1036
      %v1038 = vpop.f32.mrf.mxu0
      %v1039 = vadd.f32 0.0, %v1038
      %1040 = vmatmul.bf16.gmra.mxu0 %v695
      %v1041 = vpop.f32.mrf.mxu0
      %v1042 = vadd.f32 0.0, %v1041
      %v1043 = vpop.f32.mrf.mxu0
      %v1044 = vadd.f32 0.0, %v1043
      %1045 = vmatmul.bf16.gmra.mxu0 %v697
      %v1046 = vpop.f32.mrf.mxu0
      %v1047 = vadd.f32 0.0, %v1046
      %v1048 = vpop.f32.mrf.mxu0
      %v1049 = vadd.f32 0.0, %v1048
      %1050 = vdwg.mxu0
      %1051 = vmatpush.bf16.msra.mxu0 0
      %1052 = vmatpush.bf16.msra.mxu0 0
      %1053 = vmatpush.bf16.msra.mxu0 0
      %1054 = vmatpush.bf16.msra.mxu0 0
      %1055 = vmatpush.bf16.msra.mxu0 0
      %1056 = vmatpush.bf16.msra.mxu0 0
      %1057 = vmatpush.bf16.msra.mxu0 0
      %1058 = vmatpush.bf16.msra.mxu0 %v775
      %1059 = vmatmul.bf16.gmra.mxu0 %v787
      %v1060 = vpop.f32.mrf.mxu0
      %v1061 = vadd.f32 %v892, %v1060
      %v1062 = vpop.f32.mrf.mxu0
      %v1063 = vadd.f32 %v894, %v1062
      %1064 = vmatmul.bf16.gmra.mxu0 %v790
      %v1065 = vpop.f32.mrf.mxu0
      %v1066 = vadd.f32 %v897, %v1065
      %v1067 = vpop.f32.mrf.mxu0
      %v1068 = vadd.f32 %v899, %v1067
      %1069 = vmatmul.bf16.gmra.mxu0 %v793
      %v1070 = vpop.f32.mrf.mxu0
      %v1071 = vadd.f32 %v902, %v1070
      %v1072 = vpop.f32.mrf.mxu0
      %v1073 = vadd.f32 %v904, %v1072
      %1074 = vmatmul.bf16.gmra.mxu0 %v796
      %v1075 = vpop.f32.mrf.mxu0
      %v1076 = vadd.f32 %v907, %v1075
      %v1077 = vpop.f32.mrf.mxu0
      %v1078 = vadd.f32 %v909, %v1077
      %1079 = vmatmul.bf16.gmra.mxu0 %v799
      %v1080 = vpop.f32.mrf.mxu0
      %v1081 = vadd.f32 %v912, %v1080
      %v1082 = vpop.f32.mrf.mxu0
      %v1083 = vadd.f32 %v914, %v1082
      %1084 = vmatmul.bf16.gmra.mxu0 %v802
      %v1085 = vpop.f32.mrf.mxu0
      %v1086 = vadd.f32 %v917, %v1085
      %v1087 = vpop.f32.mrf.mxu0
      %v1088 = vadd.f32 %v919, %v1087
      %1089 = vmatmul.bf16.gmra.mxu0 %v805
      %v1090 = vpop.f32.mrf.mxu0
      %v1091 = vadd.f32 %v922, %v1090
      %v1092 = vpop.f32.mrf.mxu0
      %v1093 = vadd.f32 %v924, %v1092
      %1094 = vmatmul.bf16.gmra.mxu0 %v808
      %v1095 = vpop.f32.mrf.mxu0
      %v1096 = vadd.f32 %v927, %v1095
      %v1097 = vpop.f32.mrf.mxu0
      %v1098 = vadd.f32 %v929, %v1097
      %1099 = vmatmul.bf16.gmra.mxu0 %v811
      %v1100 = vpop.f32.mrf.mxu0
      %v1101 = vadd.f32 %v932, %v1100
      %v1102 = vpop.f32.mrf.mxu0
      %v1103 = vadd.f32 %v934, %v1102
      %1104 = vmatmul.bf16.gmra.mxu0 %v814
      %v1105 = vpop.f32.mrf.mxu0
      %v1106 = vadd.f32 %v937, %v1105
      %v1107 = vpop.f32.mrf.mxu0
      %v1108 = vadd.f32 %v939, %v1107
      %1109 = vmatmul.bf16.gmra.mxu0 %v817
      %v1110 = vpop.f32.mrf.mxu0
      %v1111 = vadd.f32 %v942, %v1110
      %v1112 = vpop.f32.mrf.mxu0
      %v1113 = vadd.f32 %v944, %v1112
      %1114 = vmatmul.bf16.gmra.mxu0 %v820
      %v1115 = vpop.f32.mrf.mxu0
      %v1116 = vadd.f32 %v947, %v1115
      %v1117 = vpop.f32.mrf.mxu0
      %v1118 = vadd.f32 %v949, %v1117
      %1119 = vmatmul.bf16.gmra.mxu0 %v823
      %v1120 = vpop.f32.mrf.mxu0
      %v1121 = vadd.f32 %v952, %v1120
      %v1122 = vpop.f32.mrf.mxu0
      %v1123 = vadd.f32 %v954, %v1122
      %1124 = vmatmul.bf16.gmra.mxu0 %v826
      %v1125 = vpop.f32.mrf.mxu0
      %v1126 = vadd.f32 %v957, %v1125
      %v1127 = vpop.f32.mrf.mxu0
      %v1128 = vadd.f32 %v959, %v1127
      %1129 = vmatmul.bf16.gmra.mxu0 %v829
      %v1130 = vpop.f32.mrf.mxu0
      %v1131 = vadd.f32 %v962, %v1130
      %v1132 = vpop.f32.mrf.mxu0
      %v1133 = vadd.f32 %v964, %v1132
      %1134 = vmatmul.bf16.gmra.mxu0 %v832
      %v1135 = vpop.f32.mrf.mxu0
      %v1136 = vadd.f32 %v967, %v1135
      %v1137 = vpop.f32.mrf.mxu0
      %v1138 = vadd.f32 %v969, %v1137
      %1139 = vmatmul.bf16.gmra.mxu0 %v835
      %v1140 = vpop.f32.mrf.mxu0
      %v1141 = vadd.f32 %v972, %v1140
      %v1142 = vpop.f32.mrf.mxu0
      %v1143 = vadd.f32 %v974, %v1142
      %1144 = vmatmul.bf16.gmra.mxu0 %v838
      %v1145 = vpop.f32.mrf.mxu0
      %v1146 = vadd.f32 %v977, %v1145
      %v1147 = vpop.f32.mrf.mxu0
      %v1148 = vadd.f32 %v979, %v1147
      %1149 = vmatmul.bf16.gmra.mxu0 %v841
      %v1150 = vpop.f32.mrf.mxu0
      %v1151 = vadd.f32 %v982, %v1150
      %v1152 = vpop.f32.mrf.mxu0
      %v1153 = vadd.f32 %v984, %v1152
      %1154 = vmatmul.bf16.gmra.mxu0 %v844
      %v1155 = vpop.f32.mrf.mxu0
      %v1156 = vadd.f32 %v987, %v1155
      %v1157 = vpop.f32.mrf.mxu0
      %v1158 = vadd.f32 %v989, %v1157
      %1159 = vmatmul.bf16.gmra.mxu0 %v847
      %v1160 = vpop.f32.mrf.mxu0
      %v1161 = vadd.f32 %v992, %v1160
      %v1162 = vpop.f32.mrf.mxu0
      %v1163 = vadd.f32 %v994, %v1162
      %1164 = vmatmul.bf16.gmra.mxu0 %v850
      %v1165 = vpop.f32.mrf.mxu0
      %v1166 = vadd.f32 %v997, %v1165
      %v1167 = vpop.f32.mrf.mxu0
      %v1168 = vadd.f32 %v999, %v1167
      %1169 = vmatmul.bf16.gmra.mxu0 %v853
      %v1170 = vpop.f32.mrf.mxu0
      %v1171 = vadd.f32 %v1002, %v1170
      %v1172 = vpop.f32.mrf.mxu0
      %v1173 = vadd.f32 %v1004, %v1172
      %1174 = vmatmul.bf16.gmra.mxu0 %v856
      %v1175 = vpop.f32.mrf.mxu0
      %v1176 = vadd.f32 %v1007, %v1175
      %v1177 = vpop.f32.mrf.mxu0
      %v1178 = vadd.f32 %v1009, %v1177
      %1179 = vmatmul.bf16.gmra.mxu0 %v859
      %v1180 = vpop.f32.mrf.mxu0
      %v1181 = vadd.f32 %v1012, %v1180
      %v1182 = vpop.f32.mrf.mxu0
      %v1183 = vadd.f32 %v1014, %v1182
      %1184 = vmatmul.bf16.gmra.mxu0 %v862
      %v1185 = vpop.f32.mrf.mxu0
      %v1186 = vadd.f32 %v1017, %v1185
      %v1187 = vpop.f32.mrf.mxu0
      %v1188 = vadd.f32 %v1019, %v1187
      %1189 = vmatmul.bf16.gmra.mxu0 %v865
      %v1190 = vpop.f32.mrf.mxu0
      %v1191 = vadd.f32 %v1022, %v1190
      %v1192 = vpop.f32.mrf.mxu0
      %v1193 = vadd.f32 %v1024, %v1192
      %1194 = vmatmul.bf16.gmra.mxu0 %v868
      %v1195 = vpop.f32.mrf.mxu0
      %v1196 = vadd.f32 %v1027, %v1195
      %v1197 = vpop.f32.mrf.mxu0
      %v1198 = vadd.f32 %v1029, %v1197
      %1199 = vmatmul.bf16.gmra.mxu0 %v871
      %v1200 = vpop.f32.mrf.mxu0
      %v1201 = vadd.f32 %v1032, %v1200
      %v1202 = vpop.f32.mrf.mxu0
      %v1203 = vadd.f32 %v1034, %v1202
      %1204 = vmatmul.bf16.gmra.mxu0 %v874
      %v1205 = vpop.f32.mrf.mxu0
      %v1206 = vadd.f32 %v1037, %v1205
      %v1207 = vpop.f32.mrf.mxu0
      %v1208 = vadd.f32 %v1039, %v1207
      %1209 = vmatmul.bf16.gmra.mxu0 %v877
      %v1210 = vpop.f32.mrf.mxu0
      %v1211 = vadd.f32 %v1042, %v1210
      %v1212 = vpop.f32.mrf.mxu0
      %v1213 = vadd.f32 %v1044, %v1212
      %1214 = vmatmul.bf16.gmra.mxu0 %v880
      %v1215 = vpop.f32.mrf.mxu0
      %v1216 = vadd.f32 %v1047, %v1215
      %v1217 = vpop.f32.mrf.mxu0
      %v1218 = vadd.f32 %v1049, %v1217
      %1219 = vdwg.mxu0
      %v1220 = vadd.f32 %v297, %v1061
      %v1221 = vadd.f32 %v298, %v1063
      %v1222 = vadd.f32 %v299, %v1066
      %v1223 = vadd.f32 %v300, %v1068
      %v1224 = vadd.f32 %v301, %v1071
      %v1225 = vadd.f32 %v302, %v1073
      %v1226 = vadd.f32 %v303, %v1076
      %v1227 = vadd.f32 %v304, %v1078
      %v1228 = vadd.f32 %v305, %v1081
      %v1229 = vadd.f32 %v306, %v1083
      %v1230 = vadd.f32 %v307, %v1086
      %v1231 = vadd.f32 %v308, %v1088
      %v1232 = vadd.f32 %v309, %v1091
      %v1233 = vadd.f32 %v310, %v1093
      %v1234 = vadd.f32 %v311, %v1096
      %v1235 = vadd.f32 %v312, %v1098
      %v1236 = vadd.f32 %v313, %v1101
      %v1237 = vadd.f32 %v314, %v1103
      %v1238 = vadd.f32 %v315, %v1106
      %v1239 = vadd.f32 %v316, %v1108
      %v1240 = vadd.f32 %v317, %v1111
      %v1241 = vadd.f32 %v318, %v1113
      %v1242 = vadd.f32 %v319, %v1116
      %v1243 = vadd.f32 %v320, %v1118
      %v1244 = vadd.f32 %v321, %v1121
      %v1245 = vadd.f32 %v322, %v1123
      %v1246 = vadd.f32 %v323, %v1126
      %v1247 = vadd.f32 %v324, %v1128
      %v1248 = vadd.f32 %v325, %v1131
      %v1249 = vadd.f32 %v326, %v1133
      %v1250 = vadd.f32 %v327, %v1136
      %v1251 = vadd.f32 %v328, %v1138
      %v1252 = vadd.f32 %v329, %v1141
      %v1253 = vadd.f32 %v330, %v1143
      %v1254 = vadd.f32 %v331, %v1146
      %v1255 = vadd.f32 %v332, %v1148
      %v1256 = vadd.f32 %v333, %v1151
      %v1257 = vadd.f32 %v334, %v1153
      %v1258 = vadd.f32 %v335, %v1156
      %v1259 = vadd.f32 %v336, %v1158
      %v1260 = vadd.f32 %v337, %v1161
      %v1261 = vadd.f32 %v338, %v1163
      %v1262 = vadd.f32 %v339, %v1166
      %v1263 = vadd.f32 %v340, %v1168
      %v1264 = vadd.f32 %v341, %v1171
      %v1265 = vadd.f32 %v342, %v1173
      %v1266 = vadd.f32 %v343, %v1176
      %v1267 = vadd.f32 %v344, %v1178
      %v1268 = vadd.f32 %v345, %v1181
      %v1269 = vadd.f32 %v346, %v1183
      %v1270 = vadd.f32 %v347, %v1186
      %v1271 = vadd.f32 %v348, %v1188
      %v1272 = vadd.f32 %v349, %v1191
      %v1273 = vadd.f32 %v350, %v1193
      %v1274 = vadd.f32 %v351, %v1196
      %v1275 = vadd.f32 %v352, %v1198
      %v1276 = vadd.f32 %v353, %v1201
      %v1277 = vadd.f32 %v354, %v1203
      %v1278 = vadd.f32 %v355, %v1206
      %v1279 = vadd.f32 %v356, %v1208
      %v1280 = vadd.f32 %v357, %v1211
      %v1281 = vadd.f32 %v358, %v1213
      %v1282 = vadd.f32 %v359, %v1216
      %v1283 = vadd.f32 %v360, %v1218
      %vm1284 = vcmask 261120
      %1285 = vst.msk [vmem:[#allocation2] sm:$0xff] %vm1284, %v1220
      %1286 = vst.msk [vmem:[#allocation2 + $0x8] sm:$0xff] %vm1284, %v1221
      %1287 = vst.msk [vmem:[#allocation2 + $0x10] sm:$0xff] %vm1284, %v1222
      %1288 = vst.msk [vmem:[#allocation2 + $0x18] sm:$0xff] %vm1284, %v1223
      %1289 = vst.msk [vmem:[#allocation2 + $0x20] sm:$0xff] %vm1284, %v1224
      %1290 = vst.msk [vmem:[#allocation2 + $0x28] sm:$0xff] %vm1284, %v1225
      %1291 = vst.msk [vmem:[#allocation2 + $0x30] sm:$0xff] %vm1284, %v1226
      %1292 = vst.msk [vmem:[#allocation2 + $0x38] sm:$0xff] %vm1284, %v1227
      %1293 = vst.msk [vmem:[#allocation2 + $0x40] sm:$0xff] %vm1284, %v1228
      %1294 = vst.msk [vmem:[#allocation2 + $0x48] sm:$0xff] %vm1284, %v1229
      %1295 = vst.msk [vmem:[#allocation2 + $0x50] sm:$0xff] %vm1284, %v1230
      %1296 = vst.msk [vmem:[#allocation2 + $0x58] sm:$0xff] %vm1284, %v1231
      %1297 = vst.msk [vmem:[#allocation2 + $0x60] sm:$0xff] %vm1284, %v1232
      %1298 = vst.msk [vmem:[#allocation2 + $0x68] sm:$0xff] %vm1284, %v1233
      %1299 = vst.msk [vmem:[#allocation2 + $0x70] sm:$0xff] %vm1284, %v1234
      %1300 = vst.msk [vmem:[#allocation2 + $0x78] sm:$0xff] %vm1284, %v1235
      %1301 = vst.msk [vmem:[#allocation2 + $0x80] sm:$0xff] %vm1284, %v1236
      %1302 = vst.msk [vmem:[#allocation2 + $0x88] sm:$0xff] %vm1284, %v1237
      %1303 = vst.msk [vmem:[#allocation2 + $0x90] sm:$0xff] %vm1284, %v1238
      %1304 = vst.msk [vmem:[#allocation2 + $0x98] sm:$0xff] %vm1284, %v1239
      %1305 = vst.msk [vmem:[#allocation2 + $0xa0] sm:$0xff] %vm1284, %v1240
      %1306 = vst.msk [vmem:[#allocation2 + $0xa8] sm:$0xff] %vm1284, %v1241
      %1307 = vst.msk [vmem:[#allocation2 + $0xb0] sm:$0xff] %vm1284, %v1242
      %1308 = vst.msk [vmem:[#allocation2 + $0xb8] sm:$0xff] %vm1284, %v1243
      %1309 = vst.msk [vmem:[#allocation2 + $0xc0] sm:$0xff] %vm1284, %v1244
      %1310 = vst.msk [vmem:[#allocation2 + $0xc8] sm:$0xff] %vm1284, %v1245
      %1311 = vst.msk [vmem:[#allocation2 + $0xd0] sm:$0xff] %vm1284, %v1246
      %1312 = vst.msk [vmem:[#allocation2 + $0xd8] sm:$0xff] %vm1284, %v1247
      %1313 = vst.msk [vmem:[#allocation2 + $0xe0] sm:$0xff] %vm1284, %v1248
      %1314 = vst.msk [vmem:[#allocation2 + $0xe8] sm:$0xff] %vm1284, %v1249
      %1315 = vst.msk [vmem:[#allocation2 + $0xf0] sm:$0xff] %vm1284, %v1250
      %1316 = vst.msk [vmem:[#allocation2 + $0xf8] sm:$0xff] %vm1284, %v1251
      %1317 = vst.msk [vmem:[#allocation2 + $0x100] sm:$0xff] %vm1284, %v1252
      %1318 = vst.msk [vmem:[#allocation2 + $0x108] sm:$0xff] %vm1284, %v1253
      %1319 = vst.msk [vmem:[#allocation2 + $0x110] sm:$0xff] %vm1284, %v1254
      %1320 = vst.msk [vmem:[#allocation2 + $0x118] sm:$0xff] %vm1284, %v1255
      %1321 = vst.msk [vmem:[#allocation2 + $0x120] sm:$0xff] %vm1284, %v1256
      %1322 = vst.msk [vmem:[#allocation2 + $0x128] sm:$0xff] %vm1284, %v1257
      %1323 = vst.msk [vmem:[#allocation2 + $0x130] sm:$0xff] %vm1284, %v1258
      %1324 = vst.msk [vmem:[#allocation2 + $0x138] sm:$0xff] %vm1284, %v1259
      %1325 = vst.msk [vmem:[#allocation2 + $0x140] sm:$0xff] %vm1284, %v1260
      %1326 = vst.msk [vmem:[#allocation2 + $0x148] sm:$0xff] %vm1284, %v1261
      %1327 = vst.msk [vmem:[#allocation2 + $0x150] sm:$0xff] %vm1284, %v1262
      %1328 = vst.msk [vmem:[#allocation2 + $0x158] sm:$0xff] %vm1284, %v1263
      %1329 = vst.msk [vmem:[#allocation2 + $0x160] sm:$0xff] %vm1284, %v1264
      %1330 = vst.msk [vmem:[#allocation2 + $0x168] sm:$0xff] %vm1284, %v1265
      %1331 = vst.msk [vmem:[#allocation2 + $0x170] sm:$0xff] %vm1284, %v1266
      %1332 = vst.msk [vmem:[#allocation2 + $0x178] sm:$0xff] %vm1284, %v1267
      %1333 = vst.msk [vmem:[#allocation2 + $0x180] sm:$0xff] %vm1284, %v1268
      %1334 = vst.msk [vmem:[#allocation2 + $0x188] sm:$0xff] %vm1284, %v1269
      %1335 = vst.msk [vmem:[#allocation2 + $0x190] sm:$0xff] %vm1284, %v1270
      %1336 = vst.msk [vmem:[#allocation2 + $0x198] sm:$0xff] %vm1284, %v1271
      %1337 = vst.msk [vmem:[#allocation2 + $0x1a0] sm:$0xff] %vm1284, %v1272
      %1338 = vst.msk [vmem:[#allocation2 + $0x1a8] sm:$0xff] %vm1284, %v1273
      %1339 = vst.msk [vmem:[#allocation2 + $0x1b0] sm:$0xff] %vm1284, %v1274
      %1340 = vst.msk [vmem:[#allocation2 + $0x1b8] sm:$0xff] %vm1284, %v1275
      %1341 = vst.msk [vmem:[#allocation2 + $0x1c0] sm:$0xff] %vm1284, %v1276
      %1342 = vst.msk [vmem:[#allocation2 + $0x1c8] sm:$0xff] %vm1284, %v1277
      %1343 = vst.msk [vmem:[#allocation2 + $0x1d0] sm:$0xff] %vm1284, %v1278
      %1344 = vst.msk [vmem:[#allocation2 + $0x1d8] sm:$0xff] %vm1284, %v1279
      %1345 = vst.msk [vmem:[#allocation2 + $0x1e0] sm:$0xff] %vm1284, %v1280
      %1346 = vst.msk [vmem:[#allocation2 + $0x1e8] sm:$0xff] %vm1284, %v1281
      %1347 = vst.msk [vmem:[#allocation2 + $0x1f0] sm:$0xff] %vm1284, %v1282
      %1348 = vst.msk [vmem:[#allocation2 + $0x1f8] sm:$0xff] %vm1284, %v1283
      // Predicated region
      $region37: #{faster_rcnn_forward.11} parent=31 // pred_check
        %p1349 = pneg %p228
      $region38: #{faster_rcnn_forward.11} parent=31 // pred_check_branch
        %1351 = sbr.rel (%p1349) target = $region40
      $region39: #{faster_rcnn_forward.11} parent=31 // pred_region
        %v1352 = vld [vmem:[#allocation2] sm:$0xff]
        %v1353 = vld [vmem:[#allocation2 + $0x8] sm:$0xff]
        %v1354 = vld [vmem:[#allocation2 + $0x10] sm:$0xff]
        %v1355 = vld [vmem:[#allocation2 + $0x18] sm:$0xff]
        %v1356 = vld [vmem:[#allocation2 + $0x20] sm:$0xff]
        %v1357 = vld [vmem:[#allocation2 + $0x28] sm:$0xff]
        %v1358 = vld [vmem:[#allocation2 + $0x30] sm:$0xff]
        %v1359 = vld [vmem:[#allocation2 + $0x38] sm:$0xff]
        %v1360 = vld [vmem:[#allocation2 + $0x40] sm:$0xff]
        %v1361 = vld [vmem:[#allocation2 + $0x48] sm:$0xff]
        %v1362 = vld [vmem:[#allocation2 + $0x50] sm:$0xff]
        %v1363 = vld [vmem:[#allocation2 + $0x58] sm:$0xff]
        %v1364 = vld [vmem:[#allocation2 + $0x60] sm:$0xff]
        %v1365 = vld [vmem:[#allocation2 + $0x68] sm:$0xff]
        %v1366 = vld [vmem:[#allocation2 + $0x70] sm:$0xff]
        %v1367 = vld [vmem:[#allocation2 + $0x78] sm:$0xff]
        %v1368 = vld [vmem:[#allocation2 + $0x80] sm:$0xff]
        %v1369 = vld [vmem:[#allocation2 + $0x88] sm:$0xff]
        %v1370 = vld [vmem:[#allocation2 + $0x90] sm:$0xff]
        %v1371 = vld [vmem:[#allocation2 + $0x98] sm:$0xff]
        %v1372 = vld [vmem:[#allocation2 + $0xa0] sm:$0xff]
        %v1373 = vld [vmem:[#allocation2 + $0xa8] sm:$0xff]
        %v1374 = vld [vmem:[#allocation2 + $0xb0] sm:$0xff]
        %v1375 = vld [vmem:[#allocation2 + $0xb8] sm:$0xff]
        %v1376 = vld [vmem:[#allocation2 + $0xc0] sm:$0xff]
        %v1377 = vld [vmem:[#allocation2 + $0xc8] sm:$0xff]
        %v1378 = vld [vmem:[#allocation2 + $0xd0] sm:$0xff]
        %v1379 = vld [vmem:[#allocation2 + $0xd8] sm:$0xff]
        %v1380 = vld [vmem:[#allocation2 + $0xe0] sm:$0xff]
        %v1381 = vld [vmem:[#allocation2 + $0xe8] sm:$0xff]
        %v1382 = vld [vmem:[#allocation2 + $0xf0] sm:$0xff]
        %v1383 = vld [vmem:[#allocation2 + $0xf8] sm:$0xff]
        %v1384 = vld [vmem:[#allocation2 + $0x100] sm:$0xff]
        %v1385 = vld [vmem:[#allocation2 + $0x108] sm:$0xff]
        %v1386 = vld [vmem:[#allocation2 + $0x110] sm:$0xff]
        %v1387 = vld [vmem:[#allocation2 + $0x118] sm:$0xff]
        %v1388 = vld [vmem:[#allocation2 + $0x120] sm:$0xff]
        %v1389 = vld [vmem:[#allocation2 + $0x128] sm:$0xff]
        %v1390 = vld [vmem:[#allocation2 + $0x130] sm:$0xff]
        %v1391 = vld [vmem:[#allocation2 + $0x138] sm:$0xff]
        %v1392 = vld [vmem:[#allocation2 + $0x140] sm:$0xff]
        %v1393 = vld [vmem:[#allocation2 + $0x148] sm:$0xff]
        %v1394 = vld [vmem:[#allocation2 + $0x150] sm:$0xff]
        %v1395 = vld [vmem:[#allocation2 + $0x158] sm:$0xff]
        %v1396 = vld [vmem:[#allocation2 + $0x160] sm:$0xff]
        %v1397 = vld [vmem:[#allocation2 + $0x168] sm:$0xff]
        %v1398 = vld [vmem:[#allocation2 + $0x170] sm:$0xff]
        %v1399 = vld [vmem:[#allocation2 + $0x178] sm:$0xff]
        %v1400 = vld [vmem:[#allocation2 + $0x180] sm:$0xff]
        %v1401 = vld [vmem:[#allocation2 + $0x188] sm:$0xff]
        %v1402 = vld [vmem:[#allocation2 + $0x190] sm:$0xff]
        %v1403 = vld [vmem:[#allocation2 + $0x198] sm:$0xff]
        %v1404 = vld [vmem:[#allocation2 + $0x1a0] sm:$0xff]
        %v1405 = vld [vmem:[#allocation2 + $0x1a8] sm:$0xff]
        %v1406 = vld [vmem:[#allocation2 + $0x1b0] sm:$0xff]
        %v1407 = vld [vmem:[#allocation2 + $0x1b8] sm:$0xff]
        %v1408 = vld [vmem:[#allocation2 + $0x1c0] sm:$0xff]
        %v1409 = vld [vmem:[#allocation2 + $0x1c8] sm:$0xff]
        %v1410 = vld [vmem:[#allocation2 + $0x1d0] sm:$0xff]
        %v1411 = vld [vmem:[#allocation2 + $0x1d8] sm:$0xff]
        %v1412 = vld [vmem:[#allocation2 + $0x1e0] sm:$0xff]
        %v1413 = vld [vmem:[#allocation2 + $0x1e8] sm:$0xff]
        %v1414 = vld [vmem:[#allocation2 + $0x1f0] sm:$0xff]
        %v1415 = vld [vmem:[#allocation2 + $0x1f8] sm:$0xff]
        %v1416 = vld [vmem:[%s2] sm:$0x1]
        %v1418 = vperm.slane %v1416, 0
        %v1420 = vadd.f32 %v1352, %v1418
        %v1421 = vadd.f32 %v1353, %v1418
        %v1422 = vadd.f32 %v1354, %v1418
        %v1423 = vadd.f32 %v1355, %v1418
        %v1424 = vadd.f32 %v1356, %v1418
        %v1425 = vadd.f32 %v1357, %v1418
        %v1426 = vadd.f32 %v1358, %v1418
        %v1427 = vadd.f32 %v1359, %v1418
        %v1428 = vadd.f32 %v1360, %v1418
        %v1429 = vadd.f32 %v1361, %v1418
        %v1430 = vadd.f32 %v1362, %v1418
        %v1431 = vadd.f32 %v1363, %v1418
        %v1432 = vadd.f32 %v1364, %v1418
        %v1433 = vadd.f32 %v1365, %v1418
        %v1434 = vadd.f32 %v1366, %v1418
        %v1435 = vadd.f32 %v1367, %v1418
        %v1436 = vadd.f32 %v1368, %v1418
        %v1437 = vadd.f32 %v1369, %v1418
        %v1438 = vadd.f32 %v1370, %v1418
        %v1439 = vadd.f32 %v1371, %v1418
        %v1440 = vadd.f32 %v1372, %v1418
        %v1441 = vadd.f32 %v1373, %v1418
        %v1442 = vadd.f32 %v1374, %v1418
        %v1443 = vadd.f32 %v1375, %v1418
        %v1444 = vadd.f32 %v1376, %v1418
        %v1445 = vadd.f32 %v1377, %v1418
        %v1446 = vadd.f32 %v1378, %v1418
        %v1447 = vadd.f32 %v1379, %v1418
        %v1448 = vadd.f32 %v1380, %v1418
        %v1449 = vadd.f32 %v1381, %v1418
        %v1450 = vadd.f32 %v1382, %v1418
        %v1451 = vadd.f32 %v1383, %v1418
        %v1452 = vadd.f32 %v1384, %v1418
        %v1453 = vadd.f32 %v1385, %v1418
        %v1454 = vadd.f32 %v1386, %v1418
        %v1455 = vadd.f32 %v1387, %v1418
        %v1456 = vadd.f32 %v1388, %v1418
        %v1457 = vadd.f32 %v1389, %v1418
        %v1458 = vadd.f32 %v1390, %v1418
        %v1459 = vadd.f32 %v1391, %v1418
        %v1460 = vadd.f32 %v1392, %v1418
        %v1461 = vadd.f32 %v1393, %v1418
        %v1462 = vadd.f32 %v1394, %v1418
        %v1463 = vadd.f32 %v1395, %v1418
        %v1464 = vadd.f32 %v1396, %v1418
        %v1465 = vadd.f32 %v1397, %v1418
        %v1466 = vadd.f32 %v1398, %v1418
        %v1467 = vadd.f32 %v1399, %v1418
        %v1468 = vadd.f32 %v1400, %v1418
        %v1469 = vadd.f32 %v1401, %v1418
        %v1470 = vadd.f32 %v1402, %v1418
        %v1471 = vadd.f32 %v1403, %v1418
        %v1472 = vadd.f32 %v1404, %v1418
        %v1473 = vadd.f32 %v1405, %v1418
        %v1474 = vadd.f32 %v1406, %v1418
        %v1475 = vadd.f32 %v1407, %v1418
        %v1476 = vadd.f32 %v1408, %v1418
        %v1477 = vadd.f32 %v1409, %v1418
        %v1478 = vadd.f32 %v1410, %v1418
        %v1479 = vadd.f32 %v1411, %v1418
        %v1480 = vadd.f32 %v1412, %v1418
        %v1481 = vadd.f32 %v1413, %v1418
        %v1482 = vadd.f32 %v1414, %v1418
        %v1483 = vadd.f32 %v1415, %v1418
        %v1484 = vmax.f32 %v1420, 0.0
        %v1485 = vmax.f32 %v1421, 0.0
        %v1486 = vmax.f32 %v1422, 0.0
        %v1487 = vmax.f32 %v1423, 0.0
        %v1488 = vmax.f32 %v1424, 0.0
        %v1489 = vmax.f32 %v1425, 0.0
        %v1490 = vmax.f32 %v1426, 0.0
        %v1491 = vmax.f32 %v1427, 0.0
        %v1492 = vmax.f32 %v1428, 0.0
        %v1493 = vmax.f32 %v1429, 0.0
        %v1494 = vmax.f32 %v1430, 0.0
        %v1495 = vmax.f32 %v1431, 0.0
        %v1496 = vmax.f32 %v1432, 0.0
        %v1497 = vmax.f32 %v1433, 0.0
        %v1498 = vmax.f32 %v1434, 0.0
        %v1499 = vmax.f32 %v1435, 0.0
        %v1500 = vmax.f32 %v1436, 0.0
        %v1501 = vmax.f32 %v1437, 0.0
        %v1502 = vmax.f32 %v1438, 0.0
        %v1503 = vmax.f32 %v1439, 0.0
        %v1504 = vmax.f32 %v1440, 0.0
        %v1505 = vmax.f32 %v1441, 0.0
        %v1506 = vmax.f32 %v1442, 0.0
        %v1507 = vmax.f32 %v1443, 0.0
        %v1508 = vmax.f32 %v1444, 0.0
        %v1509 = vmax.f32 %v1445, 0.0
        %v1510 = vmax.f32 %v1446, 0.0
        %v1511 = vmax.f32 %v1447, 0.0
        %v1512 = vmax.f32 %v1448, 0.0
        %v1513 = vmax.f32 %v1449, 0.0
        %v1514 = vmax.f32 %v1450, 0.0
        %v1515 = vmax.f32 %v1451, 0.0
        %v1516 = vmax.f32 %v1452, 0.0
        %v1517 = vmax.f32 %v1453, 0.0
        %v1518 = vmax.f32 %v1454, 0.0
        %v1519 = vmax.f32 %v1455, 0.0
        %v1520 = vmax.f32 %v1456, 0.0
        %v1521 = vmax.f32 %v1457, 0.0
        %v1522 = vmax.f32 %v1458, 0.0
        %v1523 = vmax.f32 %v1459, 0.0
        %v1524 = vmax.f32 %v1460, 0.0
        %v1525 = vmax.f32 %v1461, 0.0
        %v1526 = vmax.f32 %v1462, 0.0
        %v1527 = vmax.f32 %v1463, 0.0
        %v1528 = vmax.f32 %v1464, 0.0
        %v1529 = vmax.f32 %v1465, 0.0
        %v1530 = vmax.f32 %v1466, 0.0
        %v1531 = vmax.f32 %v1467, 0.0
        %v1532 = vmax.f32 %v1468, 0.0
        %v1533 = vmax.f32 %v1469, 0.0
        %v1534 = vmax.f32 %v1470, 0.0
        %v1535 = vmax.f32 %v1471, 0.0
        %v1536 = vmax.f32 %v1472, 0.0
        %v1537 = vmax.f32 %v1473, 0.0
        %v1538 = vmax.f32 %v1474, 0.0
        %v1539 = vmax.f32 %v1475, 0.0
        %v1540 = vmax.f32 %v1476, 0.0
        %v1541 = vmax.f32 %v1477, 0.0
        %v1542 = vmax.f32 %v1478, 0.0
        %v1543 = vmax.f32 %v1479, 0.0
        %v1544 = vmax.f32 %v1480, 0.0
        %v1545 = vmax.f32 %v1481, 0.0
        %v1546 = vmax.f32 %v1482, 0.0
        %v1547 = vmax.f32 %v1483, 0.0
        %v1548 = vpack.c.bf16 %v1484, %v1484
        %v1549 = vpack.c.bf16 %v1485, %v1485
        %v1550 = vpack.c.bf16 %v1486, %v1486
        %v1551 = vpack.c.bf16 %v1487, %v1487
        %v1552 = vpack.c.bf16 %v1488, %v1488
        %v1553 = vpack.c.bf16 %v1489, %v1489
        %v1554 = vpack.c.bf16 %v1490, %v1490
        %v1555 = vpack.c.bf16 %v1491, %v1491
        %v1556 = vpack.c.bf16 %v1492, %v1492
        %v1557 = vpack.c.bf16 %v1493, %v1493
        %v1558 = vpack.c.bf16 %v1494, %v1494
        %v1559 = vpack.c.bf16 %v1495, %v1495
        %v1560 = vpack.c.bf16 %v1496, %v1496
        %v1561 = vpack.c.bf16 %v1497, %v1497
        %v1562 = vpack.c.bf16 %v1498, %v1498
        %v1563 = vpack.c.bf16 %v1499, %v1499
        %v1564 = vpack.c.bf16 %v1500, %v1500
        %v1565 = vpack.c.bf16 %v1501, %v1501
        %v1566 = vpack.c.bf16 %v1502, %v1502
        %v1567 = vpack.c.bf16 %v1503, %v1503
        %v1568 = vpack.c.bf16 %v1504, %v1504
        %v1569 = vpack.c.bf16 %v1505, %v1505
        %v1570 = vpack.c.bf16 %v1506, %v1506
        %v1571 = vpack.c.bf16 %v1507, %v1507
        %v1572 = vpack.c.bf16 %v1508, %v1508
        %v1573 = vpack.c.bf16 %v1509, %v1509
        %v1574 = vpack.c.bf16 %v1510, %v1510
        %v1575 = vpack.c.bf16 %v1511, %v1511
        %v1576 = vpack.c.bf16 %v1512, %v1512
        %v1577 = vpack.c.bf16 %v1513, %v1513
        %v1578 = vpack.c.bf16 %v1514, %v1514
        %v1579 = vpack.c.bf16 %v1515, %v1515
        %v1580 = vpack.c.bf16 %v1516, %v1516
        %v1581 = vpack.c.bf16 %v1517, %v1517
        %v1582 = vpack.c.bf16 %v1518, %v1518
        %v1583 = vpack.c.bf16 %v1519, %v1519
        %v1584 = vpack.c.bf16 %v1520, %v1520
        %v1585 = vpack.c.bf16 %v1521, %v1521
        %v1586 = vpack.c.bf16 %v1522, %v1522
        %v1587 = vpack.c.bf16 %v1523, %v1523
        %v1588 = vpack.c.bf16 %v1524, %v1524
        %v1589 = vpack.c.bf16 %v1525, %v1525
        %v1590 = vpack.c.bf16 %v1526, %v1526
        %v1591 = vpack.c.bf16 %v1527, %v1527
        %v1592 = vpack.c.bf16 %v1528, %v1528
        %v1593 = vpack.c.bf16 %v1529, %v1529
        %v1594 = vpack.c.bf16 %v1530, %v1530
        %v1595 = vpack.c.bf16 %v1531, %v1531
        %v1596 = vpack.c.bf16 %v1532, %v1532
        %v1597 = vpack.c.bf16 %v1533, %v1533
        %v1598 = vpack.c.bf16 %v1534, %v1534
        %v1599 = vpack.c.bf16 %v1535, %v1535
        %v1600 = vpack.c.bf16 %v1536, %v1536
        %v1601 = vpack.c.bf16 %v1537, %v1537
        %v1602 = vpack.c.bf16 %v1538, %v1538
        %v1603 = vpack.c.bf16 %v1539, %v1539
        %v1604 = vpack.c.bf16 %v1540, %v1540
        %v1605 = vpack.c.bf16 %v1541, %v1541
        %v1606 = vpack.c.bf16 %v1542, %v1542
        %v1607 = vpack.c.bf16 %v1543, %v1543
        %v1608 = vpack.c.bf16 %v1544, %v1544
        %v1609 = vpack.c.bf16 %v1545, %v1545
        %v1610 = vpack.c.bf16 %v1546, %v1546
        %v1611 = vpack.c.bf16 %v1547, %v1547
        %vm1612 = vcmask 257024
        %1613 = vst.msk [vmem:[%s225] sm:$0xf] %vm1612, %v1548
        %1614 = vst.msk [vmem:[%s225 + $0x4] sm:$0xf] %vm1612, %v1549
        %1615 = vst.msk [vmem:[%s225 + $0x8] sm:$0xf] %vm1612, %v1550
        %1616 = vst.msk [vmem:[%s225 + $0xc] sm:$0xf] %vm1612, %v1551
        %1617 = vst.msk [vmem:[%s225 + $0x10] sm:$0xf] %vm1612, %v1552
        %1618 = vst.msk [vmem:[%s225 + $0x14] sm:$0xf] %vm1612, %v1553
        %1619 = vst.msk [vmem:[%s225 + $0x18] sm:$0xf] %vm1612, %v1554
        %1620 = vst.msk [vmem:[%s225 + $0x1c] sm:$0xf] %vm1612, %v1555
        %1621 = vst.msk [vmem:[%s225 + $0x20] sm:$0xf] %vm1612, %v1556
        %1622 = vst.msk [vmem:[%s225 + $0x24] sm:$0xf] %vm1612, %v1557
        %1623 = vst.msk [vmem:[%s225 + $0x28] sm:$0xf] %vm1612, %v1558
        %1624 = vst.msk [vmem:[%s225 + $0x2c] sm:$0xf] %vm1612, %v1559
        %1625 = vst.msk [vmem:[%s225 + $0x30] sm:$0xf] %vm1612, %v1560
        %1626 = vst.msk [vmem:[%s225 + $0x34] sm:$0xf] %vm1612, %v1561
        %1627 = vst.msk [vmem:[%s225 + $0x38] sm:$0xf] %vm1612, %v1562
        %1628 = vst.msk [vmem:[%s225 + $0x3c] sm:$0xf] %vm1612, %v1563
        %1629 = vst.msk [vmem:[%s225 + $0x40] sm:$0xf] %vm1612, %v1564
        %1630 = vst.msk [vmem:[%s225 + $0x44] sm:$0xf] %vm1612, %v1565
        %1631 = vst.msk [vmem:[%s225 + $0x48] sm:$0xf] %vm1612, %v1566
        %1632 = vst.msk [vmem:[%s225 + $0x4c] sm:$0xf] %vm1612, %v1567
        %1633 = vst.msk [vmem:[%s225 + $0x50] sm:$0xf] %vm1612, %v1568
        %1634 = vst.msk [vmem:[%s225 + $0x54] sm:$0xf] %vm1612, %v1569
        %1635 = vst.msk [vmem:[%s225 + $0x58] sm:$0xf] %vm1612, %v1570
        %1636 = vst.msk [vmem:[%s225 + $0x5c] sm:$0xf] %vm1612, %v1571
        %1637 = vst.msk [vmem:[%s225 + $0x60] sm:$0xf] %vm1612, %v1572
        %1638 = vst.msk [vmem:[%s225 + $0x64] sm:$0xf] %vm1612, %v1573
        %1639 = vst.msk [vmem:[%s225 + $0x68] sm:$0xf] %vm1612, %v1574
        %1640 = vst.msk [vmem:[%s225 + $0x6c] sm:$0xf] %vm1612, %v1575
        %1641 = vst.msk [vmem:[%s225 + $0x70] sm:$0xf] %vm1612, %v1576
        %1642 = vst.msk [vmem:[%s225 + $0x74] sm:$0xf] %vm1612, %v1577
        %1643 = vst.msk [vmem:[%s225 + $0x78] sm:$0xf] %vm1612, %v1578
        %1644 = vst.msk [vmem:[%s225 + $0x7c] sm:$0xf] %vm1612, %v1579
        %1645 = vst.msk [vmem:[%s225 + $0x80] sm:$0xf] %vm1612, %v1580
        %1646 = vst.msk [vmem:[%s225 + $0x84] sm:$0xf] %vm1612, %v1581
        %1647 = vst.msk [vmem:[%s225 + $0x88] sm:$0xf] %vm1612, %v1582
        %1648 = vst.msk [vmem:[%s225 + $0x8c] sm:$0xf] %vm1612, %v1583
        %1649 = vst.msk [vmem:[%s225 + $0x90] sm:$0xf] %vm1612, %v1584
        %1650 = vst.msk [vmem:[%s225 + $0x94] sm:$0xf] %vm1612, %v1585
        %1651 = vst.msk [vmem:[%s225 + $0x98] sm:$0xf] %vm1612, %v1586
        %1652 = vst.msk [vmem:[%s225 + $0x9c] sm:$0xf] %vm1612, %v1587
        %1653 = vst.msk [vmem:[%s225 + $0xa0] sm:$0xf] %vm1612, %v1588
        %1654 = vst.msk [vmem:[%s225 + $0xa4] sm:$0xf] %vm1612, %v1589
        %1655 = vst.msk [vmem:[%s225 + $0xa8] sm:$0xf] %vm1612, %v1590
        %1656 = vst.msk [vmem:[%s225 + $0xac] sm:$0xf] %vm1612, %v1591
        %1657 = vst.msk [vmem:[%s225 + $0xb0] sm:$0xf] %vm1612, %v1592
        %1658 = vst.msk [vmem:[%s225 + $0xb4] sm:$0xf] %vm1612, %v1593
        %1659 = vst.msk [vmem:[%s225 + $0xb8] sm:$0xf] %vm1612, %v1594
        %1660 = vst.msk [vmem:[%s225 + $0xbc] sm:$0xf] %vm1612, %v1595
        %1661 = vst.msk [vmem:[%s225 + $0xc0] sm:$0xf] %vm1612, %v1596
        %1662 = vst.msk [vmem:[%s225 + $0xc4] sm:$0xf] %vm1612, %v1597
        %1663 = vst.msk [vmem:[%s225 + $0xc8] sm:$0xf] %vm1612, %v1598
        %1664 = vst.msk [vmem:[%s225 + $0xcc] sm:$0xf] %vm1612, %v1599
        %1665 = vst.msk [vmem:[%s225 + $0xd0] sm:$0xf] %vm1612, %v1600
        %1666 = vst.msk [vmem:[%s225 + $0xd4] sm:$0xf] %vm1612, %v1601
        %1667 = vst.msk [vmem:[%s225 + $0xd8] sm:$0xf] %vm1612, %v1602
        %1668 = vst.msk [vmem:[%s225 + $0xdc] sm:$0xf] %vm1612, %v1603
        %1669 = vst.msk [vmem:[%s225 + $0xe0] sm:$0xf] %vm1612, %v1604
        %1670 = vst.msk [vmem:[%s225 + $0xe4] sm:$0xf] %vm1612, %v1605
        %1671 = vst.msk [vmem:[%s225 + $0xe8] sm:$0xf] %vm1612, %v1606
        %1672 = vst.msk [vmem:[%s225 + $0xec] sm:$0xf] %vm1612, %v1607
        %1673 = vst.msk [vmem:[%s225 + $0xf0] sm:$0xf] %vm1612, %v1608
        %1674 = vst.msk [vmem:[%s225 + $0xf4] sm:$0xf] %vm1612, %v1609
        %1675 = vst.msk [vmem:[%s225 + $0xf8] sm:$0xf] %vm1612, %v1610
        %1676 = vst.msk [vmem:[%s225 + $0xfc] sm:$0xf] %vm1612, %v1611
      $region40: #{faster_rcnn_forward.11} parent=31 // pred_fallthru
        _
      %s1677 = smul.u32 64, %s18
      %p1678 = scmp.lt.s32.totalorder %s1677, 127
      %s1679 = scalar_select %p1678, %s1677, 127
      %s1680 = smul.addr %s1679, 4
      %s1681 = scalar_lea.vmem %s3, %s1680
      // Predicated region
      $region41: #{faster_rcnn_forward.11} parent=31 // pred_check
        %p1682 = pneg %p119
      $region42: #{faster_rcnn_forward.11} parent=31 // pred_check_branch
        %1684 = sbr.rel (%p1682) target = $region44
      $region43: #{faster_rcnn_forward.11} parent=31 // pred_region
        %s1685 = smul.u32 64, %s18
      $region44: #{faster_rcnn_forward.11} parent=31 // pred_fallthru
        _
    $region32: #{faster_rcnn_forward.11} parent=5 // pred_fallthru
      _
    %p1686 = scmp.le.s32.totalorder 2, %s9
    // Predicated region
    $region45: #{faster_rcnn_forward.11} parent=5 // pred_check
      %p1687 = pneg %p1686
    $region46: #{faster_rcnn_forward.11} parent=5 // pred_check_branch
      %1689 = sbr.rel (%p1687) target = $region48
    $region47: #{faster_rcnn_forward.11} parent=5 // pred_region
      %s1690 = ssub.s32 %s9, 2
      // Predicated region
      $region49: #{faster_rcnn_forward.11} parent=47 // pred_check
        %p1691 = pneg %p125
      $region50: #{faster_rcnn_forward.11} parent=47 // pred_check_branch
        %1693 = sbr.rel (%p1691) target = $region52
      $region51: #{faster_rcnn_forward.11} parent=47 // pred_region
        %s1694 = smul.u32 64, %s20
        %p1695 = scmp.lt.s32.totalorder %s1694, 127
        %s1696 = scalar_select %p1695, %s1694, 127
        %s1697 = smul.addr %s1696, 4
        %s1698 = scalar_lea.vmem %s3, %s1697
      $region52: #{faster_rcnn_forward.11} parent=47 // pred_fallthru
        _
    $region48: #{faster_rcnn_forward.11} parent=5 // pred_fallthru
      _
  $region6: #{faster_rcnn_forward.11} parent=0 // loop_footer
    %s13 = sadd.s32 1, %s9
  $region7: #{faster_rcnn_forward.11} parent=0 // loop_footer_branch
    %8 = sbr.rel target = $region3
  $region8: #{faster_rcnn_forward.11} parent=0 // loop_exit
    _

// kernel: faster_rcnn_forward.12
$region0: #{faster_rcnn_forward.12}
  #allocation0 [shape = 'u32[]', space=smem, size = 0x4, offset = 0x4, fixed_abs, tag = 'smem constant byte address 0x4 - core index']
  #allocation1 [shape = 'u32[72,128]{1,0:T(1,128)}', space=vmem, size = 0x9000, scoped, tag = 'internal scratch']
  #allocation2 [shape = 'f32[256,32]{1,0:T(8,128)}', space=vmem, size = 0x20000, scoped, tag = 'scratch operand']
  %s0 = inlined_call_operand.vmem [shape: bf16[256,288], index: 0, kind: input, shape index: {}]
  %s1 = inlined_call_operand.vmem [shape: bf16[288,32], index: 1, kind: input, shape index: {}]
  %s2 = inlined_call_operand.vmem [shape: f32[1,32], index: 2, kind: input, shape index: {}]
  %s3 = inlined_call_operand.vmem [shape: bf16[256,32], index: 3, kind: output, shape index: {}]
  %s4 = sld [smem:[#allocation0]]
  $region30: #{faster_rcnn_forward.12} parent=0
    _
  %s6 = ssub.s32 1, %s4
  %s7 = scalar_select 0, %s6, %s4
  // Predicated region
  $region2: #{faster_rcnn_forward.12} parent=0 // pred_check
    _
  $region3: #{faster_rcnn_forward.12} parent=0 // pred_check_branch
    %9 = sbr.rel (0) target = $region5
  $region4: #{faster_rcnn_forward.12} parent=0 // pred_region
    _
  $region5: #{faster_rcnn_forward.12} parent=0 // pred_fallthru
    _
  // Predicated region
  $region6: #{faster_rcnn_forward.12} parent=0 // pred_check
    _
  $region7: #{faster_rcnn_forward.12} parent=0 // pred_check_branch
    %11 = sbr.rel (0) target = $region9
  $region8: #{faster_rcnn_forward.12} parent=0 // pred_region
    _
  $region9: #{faster_rcnn_forward.12} parent=0 // pred_fallthru
    _
  // Predicated region
  $region10: #{faster_rcnn_forward.12} parent=0 // pred_check
    _
  $region11: #{faster_rcnn_forward.12} parent=0 // pred_check_branch
    %13 = sbr.rel (0) target = $region13
  $region12: #{faster_rcnn_forward.12} parent=0 // pred_region
    _
  $region13: #{faster_rcnn_forward.12} parent=0 // pred_fallthru
    _
  %p15 = scmp.eq.s32.totalorder 0, 0
  // Predicated region
  $region14: #{faster_rcnn_forward.12} parent=0 // pred_check
    %p16 = pneg %p15
  $region15: #{faster_rcnn_forward.12} parent=0 // pred_check_branch
    %18 = sbr.rel (%p16) target = $region17
  $region16: #{faster_rcnn_forward.12} parent=0 // pred_region
    %vm19 = vcmask 261120
    %20 = vst.msk [vmem:[#allocation2] sm:$0xff] %vm19, 0.0
    %21 = vst.msk [vmem:[#allocation2 + $0x8] sm:$0xff] %vm19, 0.0
    %22 = vst.msk [vmem:[#allocation2 + $0x10] sm:$0xff] %vm19, 0.0
    %23 = vst.msk [vmem:[#allocation2 + $0x18] sm:$0xff] %vm19, 0.0
    %24 = vst.msk [vmem:[#allocation2 + $0x20] sm:$0xff] %vm19, 0.0
    %25 = vst.msk [vmem:[#allocation2 + $0x28] sm:$0xff] %vm19, 0.0
    %26 = vst.msk [vmem:[#allocation2 + $0x30] sm:$0xff] %vm19, 0.0
    %27 = vst.msk [vmem:[#allocation2 + $0x38] sm:$0xff] %vm19, 0.0
    %28 = vst.msk [vmem:[#allocation2 + $0x40] sm:$0xff] %vm19, 0.0
    %29 = vst.msk [vmem:[#allocation2 + $0x48] sm:$0xff] %vm19, 0.0
    %30 = vst.msk [vmem:[#allocation2 + $0x50] sm:$0xff] %vm19, 0.0
    %31 = vst.msk [vmem:[#allocation2 + $0x58] sm:$0xff] %vm19, 0.0
    %32 = vst.msk [vmem:[#allocation2 + $0x60] sm:$0xff] %vm19, 0.0
    %33 = vst.msk [vmem:[#allocation2 + $0x68] sm:$0xff] %vm19, 0.0
    %34 = vst.msk [vmem:[#allocation2 + $0x70] sm:$0xff] %vm19, 0.0
    %35 = vst.msk [vmem:[#allocation2 + $0x78] sm:$0xff] %vm19, 0.0
    %36 = vst.msk [vmem:[#allocation2 + $0x80] sm:$0xff] %vm19, 0.0
    %37 = vst.msk [vmem:[#allocation2 + $0x88] sm:$0xff] %vm19, 0.0
    %38 = vst.msk [vmem:[#allocation2 + $0x90] sm:$0xff] %vm19, 0.0
    %39 = vst.msk [vmem:[#allocation2 + $0x98] sm:$0xff] %vm19, 0.0
    %40 = vst.msk [vmem:[#allocation2 + $0xa0] sm:$0xff] %vm19, 0.0
    %41 = vst.msk [vmem:[#allocation2 + $0xa8] sm:$0xff] %vm19, 0.0
    %42 = vst.msk [vmem:[#allocation2 + $0xb0] sm:$0xff] %vm19, 0.0
    %43 = vst.msk [vmem:[#allocation2 + $0xb8] sm:$0xff] %vm19, 0.0
    %44 = vst.msk [vmem:[#allocation2 + $0xc0] sm:$0xff] %vm19, 0.0
    %45 = vst.msk [vmem:[#allocation2 + $0xc8] sm:$0xff] %vm19, 0.0
    %46 = vst.msk [vmem:[#allocation2 + $0xd0] sm:$0xff] %vm19, 0.0
    %47 = vst.msk [vmem:[#allocation2 + $0xd8] sm:$0xff] %vm19, 0.0
    %48 = vst.msk [vmem:[#allocation2 + $0xe0] sm:$0xff] %vm19, 0.0
    %49 = vst.msk [vmem:[#allocation2 + $0xe8] sm:$0xff] %vm19, 0.0
    %50 = vst.msk [vmem:[#allocation2 + $0xf0] sm:$0xff] %vm19, 0.0
    %51 = vst.msk [vmem:[#allocation2 + $0xf8] sm:$0xff] %vm19, 0.0
  $region17: #{faster_rcnn_forward.12} parent=0 // pred_fallthru
    _
  %v52 = vld [vmem:[#allocation2] sm:$0xff]
  %v53 = vld [vmem:[#allocation2 + $0x8] sm:$0xff]
  %v54 = vld [vmem:[#allocation2 + $0x10] sm:$0xff]
  %v55 = vld [vmem:[#allocation2 + $0x18] sm:$0xff]
  %v56 = vld [vmem:[#allocation2 + $0x20] sm:$0xff]
  %v57 = vld [vmem:[#allocation2 + $0x28] sm:$0xff]
  %v58 = vld [vmem:[#allocation2 + $0x30] sm:$0xff]
  %v59 = vld [vmem:[#allocation2 + $0x38] sm:$0xff]
  %v60 = vld [vmem:[#allocation2 + $0x40] sm:$0xff]
  %v61 = vld [vmem:[#allocation2 + $0x48] sm:$0xff]
  %v62 = vld [vmem:[#allocation2 + $0x50] sm:$0xff]
  %v63 = vld [vmem:[#allocation2 + $0x58] sm:$0xff]
  %v64 = vld [vmem:[#allocation2 + $0x60] sm:$0xff]
  %v65 = vld [vmem:[#allocation2 + $0x68] sm:$0xff]
  %v66 = vld [vmem:[#allocation2 + $0x70] sm:$0xff]
  %v67 = vld [vmem:[#allocation2 + $0x78] sm:$0xff]
  %v68 = vld [vmem:[#allocation2 + $0x80] sm:$0xff]
  %v69 = vld [vmem:[#allocation2 + $0x88] sm:$0xff]
  %v70 = vld [vmem:[#allocation2 + $0x90] sm:$0xff]
  %v71 = vld [vmem:[#allocation2 + $0x98] sm:$0xff]
  %v72 = vld [vmem:[#allocation2 + $0xa0] sm:$0xff]
  %v73 = vld [vmem:[#allocation2 + $0xa8] sm:$0xff]
  %v74 = vld [vmem:[#allocation2 + $0xb0] sm:$0xff]
  %v75 = vld [vmem:[#allocation2 + $0xb8] sm:$0xff]
  %v76 = vld [vmem:[#allocation2 + $0xc0] sm:$0xff]
  %v77 = vld [vmem:[#allocation2 + $0xc8] sm:$0xff]
  %v78 = vld [vmem:[#allocation2 + $0xd0] sm:$0xff]
  %v79 = vld [vmem:[#allocation2 + $0xd8] sm:$0xff]
  %v80 = vld [vmem:[#allocation2 + $0xe0] sm:$0xff]
  %v81 = vld [vmem:[#allocation2 + $0xe8] sm:$0xff]
  %v82 = vld [vmem:[#allocation2 + $0xf0] sm:$0xff]
  %v83 = vld [vmem:[#allocation2 + $0xf8] sm:$0xff]
  %v84 = vld [vmem:[%s0] sm:$0xff]
  %v85 = vld [vmem:[%s0 + $0x8] sm:$0xf]
  %v86 = vld [vmem:[%s0 + $0xc] sm:$0xff]
  %v87 = vld [vmem:[%s0 + $0x14] sm:$0xf]
  %v88 = vld [vmem:[%s0 + $0x18] sm:$0xff]
  %v89 = vld [vmem:[%s0 + $0x20] sm:$0xf]
  %v90 = vld [vmem:[%s0 + $0x24] sm:$0xff]
  %v91 = vld [vmem:[%s0 + $0x2c] sm:$0xf]
  %v92 = vld [vmem:[%s0 + $0x30] sm:$0xff]
  %v93 = vld [vmem:[%s0 + $0x38] sm:$0xf]
  %v94 = vld [vmem:[%s0 + $0x3c] sm:$0xff]
  %v95 = vld [vmem:[%s0 + $0x44] sm:$0xf]
  %v96 = vld [vmem:[%s0 + $0x48] sm:$0xff]
  %v97 = vld [vmem:[%s0 + $0x50] sm:$0xf]
  %v98 = vld [vmem:[%s0 + $0x54] sm:$0xff]
  %v99 = vld [vmem:[%s0 + $0x5c] sm:$0xf]
  %v100 = vld [vmem:[%s0 + $0x60] sm:$0xff]
  %v101 = vld [vmem:[%s0 + $0x68] sm:$0xf]
  %v102 = vld [vmem:[%s0 + $0x6c] sm:$0xff]
  %v103 = vld [vmem:[%s0 + $0x74] sm:$0xf]
  %v104 = vld [vmem:[%s0 + $0x78] sm:$0xff]
  %v105 = vld [vmem:[%s0 + $0x80] sm:$0xf]
  %v106 = vld [vmem:[%s0 + $0x84] sm:$0xff]
  %v107 = vld [vmem:[%s0 + $0x8c] sm:$0xf]
  %v108 = vld [vmem:[%s0 + $0x90] sm:$0xff]
  %v109 = vld [vmem:[%s0 + $0x98] sm:$0xf]
  %v110 = vld [vmem:[%s0 + $0x9c] sm:$0xff]
  %v111 = vld [vmem:[%s0 + $0xa4] sm:$0xf]
  %v112 = vld [vmem:[%s0 + $0xa8] sm:$0xff]
  %v113 = vld [vmem:[%s0 + $0xb0] sm:$0xf]
  %v114 = vld [vmem:[%s0 + $0xb4] sm:$0xff]
  %v115 = vld [vmem:[%s0 + $0xbc] sm:$0xf]
  %v116 = vld [vmem:[%s0 + $0xc0] sm:$0xff]
  %v117 = vld [vmem:[%s0 + $0xc8] sm:$0xf]
  %v118 = vld [vmem:[%s0 + $0xcc] sm:$0xff]
  %v119 = vld [vmem:[%s0 + $0xd4] sm:$0xf]
  %v120 = vld [vmem:[%s0 + $0xd8] sm:$0xff]
  %v121 = vld [vmem:[%s0 + $0xe0] sm:$0xf]
  %v122 = vld [vmem:[%s0 + $0xe4] sm:$0xff]
  %v123 = vld [vmem:[%s0 + $0xec] sm:$0xf]
  %v124 = vld [vmem:[%s0 + $0xf0] sm:$0xff]
  %v125 = vld [vmem:[%s0 + $0xf8] sm:$0xf]
  %v126 = vld [vmem:[%s0 + $0xfc] sm:$0xff]
  %v127 = vld [vmem:[%s0 + $0x104] sm:$0xf]
  %v128 = vld [vmem:[%s0 + $0x108] sm:$0xff]
  %v129 = vld [vmem:[%s0 + $0x110] sm:$0xf]
  %v130 = vld [vmem:[%s0 + $0x114] sm:$0xff]
  %v131 = vld [vmem:[%s0 + $0x11c] sm:$0xf]
  %v132 = vld [vmem:[%s0 + $0x120] sm:$0xff]
  %v133 = vld [vmem:[%s0 + $0x128] sm:$0xf]
  %v134 = vld [vmem:[%s0 + $0x12c] sm:$0xff]
  %v135 = vld [vmem:[%s0 + $0x134] sm:$0xf]
  %v136 = vld [vmem:[%s0 + $0x138] sm:$0xff]
  %v137 = vld [vmem:[%s0 + $0x140] sm:$0xf]
  %v138 = vld [vmem:[%s0 + $0x144] sm:$0xff]
  %v139 = vld [vmem:[%s0 + $0x14c] sm:$0xf]
  %v140 = vld [vmem:[%s0 + $0x150] sm:$0xff]
  %v141 = vld [vmem:[%s0 + $0x158] sm:$0xf]
  %v142 = vld [vmem:[%s0 + $0x15c] sm:$0xff]
  %v143 = vld [vmem:[%s0 + $0x164] sm:$0xf]
  %v144 = vld [vmem:[%s0 + $0x168] sm:$0xff]
  %v145 = vld [vmem:[%s0 + $0x170] sm:$0xf]
  %v146 = vld [vmem:[%s0 + $0x174] sm:$0xff]
  %v147 = vld [vmem:[%s0 + $0x17c] sm:$0xf]
  %v148 = vld [vmem:[%s1] sm:$0xf]
  %v149 = vld [vmem:[%s1 + $0x4] sm:$0xf]
  %v150 = vld [vmem:[%s1 + $0x8] sm:$0xf]
  %v151 = vld [vmem:[%s1 + $0xc] sm:$0xf]
  %v152 = vld [vmem:[%s1 + $0x10] sm:$0xf]
  %v153 = vld [vmem:[%s1 + $0x14] sm:$0xf]
  %v154 = vld [vmem:[%s1 + $0x18] sm:$0xf]
  %v155 = vld [vmem:[%s1 + $0x1c] sm:$0xf]
  %v156 = vld [vmem:[%s1 + $0x20] sm:$0xf]
  %v157 = vld [vmem:[%s1 + $0x24] sm:$0xf]
  %v158 = vld [vmem:[%s1 + $0x28] sm:$0xf]
  %v159 = vld [vmem:[%s1 + $0x2c] sm:$0xf]
  %v160 = vld [vmem:[%s1 + $0x30] sm:$0xf]
  %v161 = vld [vmem:[%s1 + $0x34] sm:$0xf]
  %v162 = vld [vmem:[%s1 + $0x38] sm:$0xf]
  %v163 = vld [vmem:[%s1 + $0x3c] sm:$0xf]
  %v164 = vld [vmem:[%s1 + $0x40] sm:$0xf]
  %v165 = vld [vmem:[%s1 + $0x44] sm:$0xf]
  %v166 = vld [vmem:[%s1 + $0x48] sm:$0xf]
  %v167 = vld [vmem:[%s1 + $0x4c] sm:$0xf]
  %v168 = vld [vmem:[%s1 + $0x50] sm:$0xf]
  %v169 = vld [vmem:[%s1 + $0x54] sm:$0xf]
  %v170 = vld [vmem:[%s1 + $0x58] sm:$0xf]
  %v171 = vld [vmem:[%s1 + $0x5c] sm:$0xf]
  %v172 = vld [vmem:[%s1 + $0x60] sm:$0xf]
  %v173 = vld [vmem:[%s1 + $0x64] sm:$0xf]
  %v174 = vld [vmem:[%s1 + $0x68] sm:$0xf]
  %v175 = vld [vmem:[%s1 + $0x6c] sm:$0xf]
  %v176 = vld [vmem:[%s1 + $0x70] sm:$0xf]
  %v177 = vld [vmem:[%s1 + $0x74] sm:$0xf]
  %v178 = vld [vmem:[%s1 + $0x78] sm:$0xf]
  %v179 = vld [vmem:[%s1 + $0x7c] sm:$0xf]
  %v180 = vld [vmem:[%s1 + $0x80] sm:$0xf]
  %v181 = vld [vmem:[%s1 + $0x84] sm:$0xf]
  %v182 = vld [vmem:[%s1 + $0x88] sm:$0xf]
  %v183 = vld [vmem:[%s1 + $0x8c] sm:$0xf]
  %v248 = vunpack.c.l.b16 %v84
  %v249 = vunpack.c.h.b16 %v84
  %v250 = vunpack.c.l.b16 %v85
  %v251 = vunpack.c.l.b16 %v86
  %v252 = vunpack.c.h.b16 %v86
  %v253 = vunpack.c.l.b16 %v87
  %v254 = vunpack.c.l.b16 %v88
  %v255 = vunpack.c.h.b16 %v88
  %v256 = vunpack.c.l.b16 %v89
  %v257 = vunpack.c.l.b16 %v90
  %v258 = vunpack.c.h.b16 %v90
  %v259 = vunpack.c.l.b16 %v91
  %v260 = vunpack.c.l.b16 %v92
  %v261 = vunpack.c.h.b16 %v92
  %v262 = vunpack.c.l.b16 %v93
  %v263 = vunpack.c.l.b16 %v94
  %v264 = vunpack.c.h.b16 %v94
  %v265 = vunpack.c.l.b16 %v95
  %v266 = vunpack.c.l.b16 %v96
  %v267 = vunpack.c.h.b16 %v96
  %v268 = vunpack.c.l.b16 %v97
  %v269 = vunpack.c.l.b16 %v98
  %v270 = vunpack.c.h.b16 %v98
  %v271 = vunpack.c.l.b16 %v99
  %v272 = vunpack.c.l.b16 %v100
  %v273 = vunpack.c.h.b16 %v100
  %v274 = vunpack.c.l.b16 %v101
  %v275 = vunpack.c.l.b16 %v102
  %v276 = vunpack.c.h.b16 %v102
  %v277 = vunpack.c.l.b16 %v103
  %v278 = vunpack.c.l.b16 %v104
  %v279 = vunpack.c.h.b16 %v104
  %v280 = vunpack.c.l.b16 %v105
  %v281 = vunpack.c.l.b16 %v106
  %v282 = vunpack.c.h.b16 %v106
  %v283 = vunpack.c.l.b16 %v107
  %v284 = vunpack.c.l.b16 %v108
  %v285 = vunpack.c.h.b16 %v108
  %v286 = vunpack.c.l.b16 %v109
  %v287 = vunpack.c.l.b16 %v110
  %v288 = vunpack.c.h.b16 %v110
  %v289 = vunpack.c.l.b16 %v111
  %v290 = vunpack.c.l.b16 %v112
  %v291 = vunpack.c.h.b16 %v112
  %v292 = vunpack.c.l.b16 %v113
  %v293 = vunpack.c.l.b16 %v114
  %v294 = vunpack.c.h.b16 %v114
  %v295 = vunpack.c.l.b16 %v115
  %v296 = vunpack.c.l.b16 %v116
  %v297 = vunpack.c.h.b16 %v116
  %v298 = vunpack.c.l.b16 %v117
  %v299 = vunpack.c.l.b16 %v118
  %v300 = vunpack.c.h.b16 %v118
  %v301 = vunpack.c.l.b16 %v119
  %v302 = vunpack.c.l.b16 %v120
  %v303 = vunpack.c.h.b16 %v120
  %v304 = vunpack.c.l.b16 %v121
  %v305 = vunpack.c.l.b16 %v122
  %v306 = vunpack.c.h.b16 %v122
  %v307 = vunpack.c.l.b16 %v123
  %v308 = vunpack.c.l.b16 %v124
  %v309 = vunpack.c.h.b16 %v124
  %v310 = vunpack.c.l.b16 %v125
  %v311 = vunpack.c.l.b16 %v126
  %v312 = vunpack.c.h.b16 %v126
  %v313 = vunpack.c.l.b16 %v127
  %v314 = vunpack.c.l.b16 %v128
  %v315 = vunpack.c.h.b16 %v128
  %v316 = vunpack.c.l.b16 %v129
  %v317 = vunpack.c.l.b16 %v130
  %v318 = vunpack.c.h.b16 %v130
  %v319 = vunpack.c.l.b16 %v131
  %v320 = vunpack.c.l.b16 %v132
  %v321 = vunpack.c.h.b16 %v132
  %v322 = vunpack.c.l.b16 %v133
  %v323 = vunpack.c.l.b16 %v134
  %v324 = vunpack.c.h.b16 %v134
  %v325 = vunpack.c.l.b16 %v135
  %v326 = vunpack.c.l.b16 %v136
  %v327 = vunpack.c.h.b16 %v136
  %v328 = vunpack.c.l.b16 %v137
  %v329 = vunpack.c.l.b16 %v138
  %v330 = vunpack.c.h.b16 %v138
  %v331 = vunpack.c.l.b16 %v139
  %v332 = vunpack.c.l.b16 %v140
  %v333 = vunpack.c.h.b16 %v140
  %v334 = vunpack.c.l.b16 %v141
  %v335 = vunpack.c.l.b16 %v142
  %v336 = vunpack.c.h.b16 %v142
  %v337 = vunpack.c.l.b16 %v143
  %v338 = vunpack.c.l.b16 %v144
  %v339 = vunpack.c.h.b16 %v144
  %v340 = vunpack.c.l.b16 %v145
  %v341 = vunpack.c.l.b16 %v146
  %v342 = vunpack.c.h.b16 %v146
  %v343 = vunpack.c.l.b16 %v147
  %v344 = vpack.c.b16 %v251, %v248
  %v345 = vpack.c.b16 %v252, %v249
  %v346 = vpack.c.b16 %v253, %v250
  %v347 = vpack.c.b16 %v257, %v254
  %v348 = vpack.c.b16 %v258, %v255
  %v349 = vpack.c.b16 %v259, %v256
  %v350 = vpack.c.b16 %v263, %v260
  %v351 = vpack.c.b16 %v264, %v261
  %v352 = vpack.c.b16 %v265, %v262
  %v353 = vpack.c.b16 %v269, %v266
  %v354 = vpack.c.b16 %v270, %v267
  %v355 = vpack.c.b16 %v271, %v268
  %v356 = vpack.c.b16 %v275, %v272
  %v357 = vpack.c.b16 %v276, %v273
  %v358 = vpack.c.b16 %v277, %v274
  %v359 = vpack.c.b16 %v281, %v278
  %v360 = vpack.c.b16 %v282, %v279
  %v361 = vpack.c.b16 %v283, %v280
  %v362 = vpack.c.b16 %v287, %v284
  %v363 = vpack.c.b16 %v288, %v285
  %v364 = vpack.c.b16 %v289, %v286
  %v365 = vpack.c.b16 %v293, %v290
  %v366 = vpack.c.b16 %v294, %v291
  %v367 = vpack.c.b16 %v295, %v292
  %v368 = vpack.c.b16 %v299, %v296
  %v369 = vpack.c.b16 %v300, %v297
  %v370 = vpack.c.b16 %v301, %v298
  %v371 = vpack.c.b16 %v305, %v302
  %v372 = vpack.c.b16 %v306, %v303
  %v373 = vpack.c.b16 %v307, %v304
  %v374 = vpack.c.b16 %v311, %v308
  %v375 = vpack.c.b16 %v312, %v309
  %v376 = vpack.c.b16 %v313, %v310
  %v377 = vpack.c.b16 %v317, %v314
  %v378 = vpack.c.b16 %v318, %v315
  %v379 = vpack.c.b16 %v319, %v316
  %v380 = vpack.c.b16 %v323, %v320
  %v381 = vpack.c.b16 %v324, %v321
  %v382 = vpack.c.b16 %v325, %v322
  %v383 = vpack.c.b16 %v329, %v326
  %v384 = vpack.c.b16 %v330, %v327
  %v385 = vpack.c.b16 %v331, %v328
  %v386 = vpack.c.b16 %v335, %v332
  %v387 = vpack.c.b16 %v336, %v333
  %v388 = vpack.c.b16 %v337, %v334
  %v389 = vpack.c.b16 %v341, %v338
  %v390 = vpack.c.b16 %v342, %v339
  %v391 = vpack.c.b16 %v343, %v340
  %v460 = vunpack.c.l.b16 %v148
  %v461 = vunpack.c.l.b16 %v149
  %v462 = vunpack.c.l.b16 %v150
  %v463 = vunpack.c.l.b16 %v151
  %v464 = vunpack.c.l.b16 %v152
  %v465 = vunpack.c.l.b16 %v153
  %v466 = vunpack.c.l.b16 %v154
  %v467 = vunpack.c.l.b16 %v155
  %v468 = vunpack.c.l.b16 %v156
  %v469 = vunpack.c.l.b16 %v157
  %v470 = vunpack.c.l.b16 %v158
  %v471 = vunpack.c.l.b16 %v159
  %v472 = vunpack.c.l.b16 %v160
  %v473 = vunpack.c.l.b16 %v161
  %v474 = vunpack.c.l.b16 %v162
  %v475 = vunpack.c.l.b16 %v163
  %v476 = vunpack.c.l.b16 %v164
  %v477 = vunpack.c.l.b16 %v165
  %v478 = vunpack.c.l.b16 %v166
  %v479 = vunpack.c.l.b16 %v167
  %v480 = vunpack.c.l.b16 %v168
  %v481 = vunpack.c.l.b16 %v169
  %v482 = vunpack.c.l.b16 %v170
  %v483 = vunpack.c.l.b16 %v171
  %v484 = vunpack.c.l.b16 %v172
  %v485 = vunpack.c.l.b16 %v173
  %v486 = vunpack.c.l.b16 %v174
  %v487 = vunpack.c.l.b16 %v175
  %v488 = vunpack.c.l.b16 %v176
  %v489 = vunpack.c.l.b16 %v177
  %v490 = vunpack.c.l.b16 %v178
  %v491 = vunpack.c.l.b16 %v179
  %v492 = vunpack.c.l.b16 %v180
  %v493 = vunpack.c.l.b16 %v181
  %v494 = vunpack.c.l.b16 %v182
  %v495 = vunpack.c.l.b16 %v183
  %v496 = vpack.c.b16 %v461, %v460
  %v497 = vpack.c.b16 %v463, %v462
  %v498 = vpack.c.b16 %v465, %v464
  %v499 = vpack.c.b16 %v467, %v466
  %v500 = vpack.c.b16 %v469, %v468
  %v501 = vpack.c.b16 %v471, %v470
  %v502 = vpack.c.b16 %v473, %v472
  %v503 = vpack.c.b16 %v475, %v474
  %v504 = vpack.c.b16 %v477, %v476
  %v505 = vpack.c.b16 %v479, %v478
  %v506 = vpack.c.b16 %v481, %v480
  %v507 = vpack.c.b16 %v483, %v482
  %v508 = vpack.c.b16 %v485, %v484
  %v509 = vpack.c.b16 %v487, %v486
  %v510 = vpack.c.b16 %v489, %v488
  %v511 = vpack.c.b16 %v491, %v490
  %v512 = vpack.c.b16 %v493, %v492
  %v513 = vpack.c.b16 %v495, %v494
  %vm532 = vcmask 261120
  %v534 = vsel %vm532, %v346, 0
  %v537 = vsel %vm532, %v349, 0
  %v540 = vsel %vm532, %v352, 0
  %v543 = vsel %vm532, %v355, 0
  %v546 = vsel %vm532, %v358, 0
  %v549 = vsel %vm532, %v361, 0
  %v552 = vsel %vm532, %v364, 0
  %v555 = vsel %vm532, %v367, 0
  %v558 = vsel %vm532, %v370, 0
  %v561 = vsel %vm532, %v373, 0
  %v564 = vsel %vm532, %v376, 0
  %v567 = vsel %vm532, %v379, 0
  %v570 = vsel %vm532, %v382, 0
  %v573 = vsel %vm532, %v385, 0
  %v576 = vsel %vm532, %v388, 0
  %v579 = vsel %vm532, %v391, 0
  %581 = vmatpush.bf16.msra.mxu0 %v503
  %582 = vmatpush.bf16.msra.mxu0 %v502
  %583 = vmatpush.bf16.msra.mxu0 %v501
  %584 = vmatpush.bf16.msra.mxu0 %v500
  %585 = vmatpush.bf16.msra.mxu0 %v499
  %586 = vmatpush.bf16.msra.mxu0 %v498
  %587 = vmatpush.bf16.msra.mxu0 %v497
  %588 = vmatpush.bf16.msra.mxu0 %v496
  %589 = vmatmul.bf16.gmra.mxu0 %v344
  %v590 = vpop.f32.mrf.mxu0
  %v591 = vadd.f32 0.0, %v590
  %v592 = vpop.f32.mrf.mxu0
  %v593 = vadd.f32 0.0, %v592
  %594 = vmatmul.bf16.gmra.mxu0 %v347
  %v595 = vpop.f32.mrf.mxu0
  %v596 = vadd.f32 0.0, %v595
  %v597 = vpop.f32.mrf.mxu0
  %v598 = vadd.f32 0.0, %v597
  %599 = vmatmul.bf16.gmra.mxu0 %v350
  %v600 = vpop.f32.mrf.mxu0
  %v601 = vadd.f32 0.0, %v600
  %v602 = vpop.f32.mrf.mxu0
  %v603 = vadd.f32 0.0, %v602
  %604 = vmatmul.bf16.gmra.mxu0 %v353
  %v605 = vpop.f32.mrf.mxu0
  %v606 = vadd.f32 0.0, %v605
  %v607 = vpop.f32.mrf.mxu0
  %v608 = vadd.f32 0.0, %v607
  %609 = vmatmul.bf16.gmra.mxu0 %v356
  %v610 = vpop.f32.mrf.mxu0
  %v611 = vadd.f32 0.0, %v610
  %v612 = vpop.f32.mrf.mxu0
  %v613 = vadd.f32 0.0, %v612
  %614 = vmatmul.bf16.gmra.mxu0 %v359
  %v615 = vpop.f32.mrf.mxu0
  %v616 = vadd.f32 0.0, %v615
  %v617 = vpop.f32.mrf.mxu0
  %v618 = vadd.f32 0.0, %v617
  %619 = vmatmul.bf16.gmra.mxu0 %v362
  %v620 = vpop.f32.mrf.mxu0
  %v621 = vadd.f32 0.0, %v620
  %v622 = vpop.f32.mrf.mxu0
  %v623 = vadd.f32 0.0, %v622
  %624 = vmatmul.bf16.gmra.mxu0 %v365
  %v625 = vpop.f32.mrf.mxu0
  %v626 = vadd.f32 0.0, %v625
  %v627 = vpop.f32.mrf.mxu0
  %v628 = vadd.f32 0.0, %v627
  %629 = vmatmul.bf16.gmra.mxu0 %v368
  %v630 = vpop.f32.mrf.mxu0
  %v631 = vadd.f32 0.0, %v630
  %v632 = vpop.f32.mrf.mxu0
  %v633 = vadd.f32 0.0, %v632
  %634 = vmatmul.bf16.gmra.mxu0 %v371
  %v635 = vpop.f32.mrf.mxu0
  %v636 = vadd.f32 0.0, %v635
  %v637 = vpop.f32.mrf.mxu0
  %v638 = vadd.f32 0.0, %v637
  %639 = vmatmul.bf16.gmra.mxu0 %v374
  %v640 = vpop.f32.mrf.mxu0
  %v641 = vadd.f32 0.0, %v640
  %v642 = vpop.f32.mrf.mxu0
  %v643 = vadd.f32 0.0, %v642
  %644 = vmatmul.bf16.gmra.mxu0 %v377
  %v645 = vpop.f32.mrf.mxu0
  %v646 = vadd.f32 0.0, %v645
  %v647 = vpop.f32.mrf.mxu0
  %v648 = vadd.f32 0.0, %v647
  %649 = vmatmul.bf16.gmra.mxu0 %v380
  %v650 = vpop.f32.mrf.mxu0
  %v651 = vadd.f32 0.0, %v650
  %v652 = vpop.f32.mrf.mxu0
  %v653 = vadd.f32 0.0, %v652
  %654 = vmatmul.bf16.gmra.mxu0 %v383
  %v655 = vpop.f32.mrf.mxu0
  %v656 = vadd.f32 0.0, %v655
  %v657 = vpop.f32.mrf.mxu0
  %v658 = vadd.f32 0.0, %v657
  %659 = vmatmul.bf16.gmra.mxu0 %v386
  %v660 = vpop.f32.mrf.mxu0
  %v661 = vadd.f32 0.0, %v660
  %v662 = vpop.f32.mrf.mxu0
  %v663 = vadd.f32 0.0, %v662
  %664 = vmatmul.bf16.gmra.mxu0 %v389
  %v665 = vpop.f32.mrf.mxu0
  %v666 = vadd.f32 0.0, %v665
  %v667 = vpop.f32.mrf.mxu0
  %v668 = vadd.f32 0.0, %v667
  %669 = vdwg.mxu0
  %670 = vmatpush.bf16.msra.mxu0 %v511
  %671 = vmatpush.bf16.msra.mxu0 %v510
  %672 = vmatpush.bf16.msra.mxu0 %v509
  %673 = vmatpush.bf16.msra.mxu0 %v508
  %674 = vmatpush.bf16.msra.mxu0 %v507
  %675 = vmatpush.bf16.msra.mxu0 %v506
  %676 = vmatpush.bf16.msra.mxu0 %v505
  %677 = vmatpush.bf16.msra.mxu0 %v504
  %678 = vmatmul.bf16.gmra.mxu0 %v345
  %v679 = vpop.f32.mrf.mxu0
  %v680 = vadd.f32 %v591, %v679
  %v681 = vpop.f32.mrf.mxu0
  %v682 = vadd.f32 %v593, %v681
  %683 = vmatmul.bf16.gmra.mxu0 %v348
  %v684 = vpop.f32.mrf.mxu0
  %v685 = vadd.f32 %v596, %v684
  %v686 = vpop.f32.mrf.mxu0
  %v687 = vadd.f32 %v598, %v686
  %688 = vmatmul.bf16.gmra.mxu0 %v351
  %v689 = vpop.f32.mrf.mxu0
  %v690 = vadd.f32 %v601, %v689
  %v691 = vpop.f32.mrf.mxu0
  %v692 = vadd.f32 %v603, %v691
  %693 = vmatmul.bf16.gmra.mxu0 %v354
  %v694 = vpop.f32.mrf.mxu0
  %v695 = vadd.f32 %v606, %v694
  %v696 = vpop.f32.mrf.mxu0
  %v697 = vadd.f32 %v608, %v696
  %698 = vmatmul.bf16.gmra.mxu0 %v357
  %v699 = vpop.f32.mrf.mxu0
  %v700 = vadd.f32 %v611, %v699
  %v701 = vpop.f32.mrf.mxu0
  %v702 = vadd.f32 %v613, %v701
  %703 = vmatmul.bf16.gmra.mxu0 %v360
  %v704 = vpop.f32.mrf.mxu0
  %v705 = vadd.f32 %v616, %v704
  %v706 = vpop.f32.mrf.mxu0
  %v707 = vadd.f32 %v618, %v706
  %708 = vmatmul.bf16.gmra.mxu0 %v363
  %v709 = vpop.f32.mrf.mxu0
  %v710 = vadd.f32 %v621, %v709
  %v711 = vpop.f32.mrf.mxu0
  %v712 = vadd.f32 %v623, %v711
  %713 = vmatmul.bf16.gmra.mxu0 %v366
  %v714 = vpop.f32.mrf.mxu0
  %v715 = vadd.f32 %v626, %v714
  %v716 = vpop.f32.mrf.mxu0
  %v717 = vadd.f32 %v628, %v716
  %718 = vmatmul.bf16.gmra.mxu0 %v369
  %v719 = vpop.f32.mrf.mxu0
  %v720 = vadd.f32 %v631, %v719
  %v721 = vpop.f32.mrf.mxu0
  %v722 = vadd.f32 %v633, %v721
  %723 = vmatmul.bf16.gmra.mxu0 %v372
  %v724 = vpop.f32.mrf.mxu0
  %v725 = vadd.f32 %v636, %v724
  %v726 = vpop.f32.mrf.mxu0
  %v727 = vadd.f32 %v638, %v726
  %728 = vmatmul.bf16.gmra.mxu0 %v375
  %v729 = vpop.f32.mrf.mxu0
  %v730 = vadd.f32 %v641, %v729
  %v731 = vpop.f32.mrf.mxu0
  %v732 = vadd.f32 %v643, %v731
  %733 = vmatmul.bf16.gmra.mxu0 %v378
  %v734 = vpop.f32.mrf.mxu0
  %v735 = vadd.f32 %v646, %v734
  %v736 = vpop.f32.mrf.mxu0
  %v737 = vadd.f32 %v648, %v736
  %738 = vmatmul.bf16.gmra.mxu0 %v381
  %v739 = vpop.f32.mrf.mxu0
  %v740 = vadd.f32 %v651, %v739
  %v741 = vpop.f32.mrf.mxu0
  %v742 = vadd.f32 %v653, %v741
  %743 = vmatmul.bf16.gmra.mxu0 %v384
  %v744 = vpop.f32.mrf.mxu0
  %v745 = vadd.f32 %v656, %v744
  %v746 = vpop.f32.mrf.mxu0
  %v747 = vadd.f32 %v658, %v746
  %748 = vmatmul.bf16.gmra.mxu0 %v387
  %v749 = vpop.f32.mrf.mxu0
  %v750 = vadd.f32 %v661, %v749
  %v751 = vpop.f32.mrf.mxu0
  %v752 = vadd.f32 %v663, %v751
  %753 = vmatmul.bf16.gmra.mxu0 %v390
  %v754 = vpop.f32.mrf.mxu0
  %v755 = vadd.f32 %v666, %v754
  %v756 = vpop.f32.mrf.mxu0
  %v757 = vadd.f32 %v668, %v756
  %758 = vdwg.mxu0
  %759 = vmatpush.bf16.msra.mxu0 0
  %760 = vmatpush.bf16.msra.mxu0 0
  %761 = vmatpush.bf16.msra.mxu0 0
  %762 = vmatpush.bf16.msra.mxu0 0
  %763 = vmatpush.bf16.msra.mxu0 0
  %764 = vmatpush.bf16.msra.mxu0 0
  %765 = vmatpush.bf16.msra.mxu0 %v513
  %766 = vmatpush.bf16.msra.mxu0 %v512
  %767 = vmatmul.bf16.gmra.mxu0 %v534
  %v768 = vpop.f32.mrf.mxu0
  %v769 = vadd.f32 %v680, %v768
  %v770 = vpop.f32.mrf.mxu0
  %v771 = vadd.f32 %v682, %v770
  %772 = vmatmul.bf16.gmra.mxu0 %v537
  %v773 = vpop.f32.mrf.mxu0
  %v774 = vadd.f32 %v685, %v773
  %v775 = vpop.f32.mrf.mxu0
  %v776 = vadd.f32 %v687, %v775
  %777 = vmatmul.bf16.gmra.mxu0 %v540
  %v778 = vpop.f32.mrf.mxu0
  %v779 = vadd.f32 %v690, %v778
  %v780 = vpop.f32.mrf.mxu0
  %v781 = vadd.f32 %v692, %v780
  %782 = vmatmul.bf16.gmra.mxu0 %v543
  %v783 = vpop.f32.mrf.mxu0
  %v784 = vadd.f32 %v695, %v783
  %v785 = vpop.f32.mrf.mxu0
  %v786 = vadd.f32 %v697, %v785
  %787 = vmatmul.bf16.gmra.mxu0 %v546
  %v788 = vpop.f32.mrf.mxu0
  %v789 = vadd.f32 %v700, %v788
  %v790 = vpop.f32.mrf.mxu0
  %v791 = vadd.f32 %v702, %v790
  %792 = vmatmul.bf16.gmra.mxu0 %v549
  %v793 = vpop.f32.mrf.mxu0
  %v794 = vadd.f32 %v705, %v793
  %v795 = vpop.f32.mrf.mxu0
  %v796 = vadd.f32 %v707, %v795
  %797 = vmatmul.bf16.gmra.mxu0 %v552
  %v798 = vpop.f32.mrf.mxu0
  %v799 = vadd.f32 %v710, %v798
  %v800 = vpop.f32.mrf.mxu0
  %v801 = vadd.f32 %v712, %v800
  %802 = vmatmul.bf16.gmra.mxu0 %v555
  %v803 = vpop.f32.mrf.mxu0
  %v804 = vadd.f32 %v715, %v803
  %v805 = vpop.f32.mrf.mxu0
  %v806 = vadd.f32 %v717, %v805
  %807 = vmatmul.bf16.gmra.mxu0 %v558
  %v808 = vpop.f32.mrf.mxu0
  %v809 = vadd.f32 %v720, %v808
  %v810 = vpop.f32.mrf.mxu0
  %v811 = vadd.f32 %v722, %v810
  %812 = vmatmul.bf16.gmra.mxu0 %v561
  %v813 = vpop.f32.mrf.mxu0
  %v814 = vadd.f32 %v725, %v813
  %v815 = vpop.f32.mrf.mxu0
  %v816 = vadd.f32 %v727, %v815
  %817 = vmatmul.bf16.gmra.mxu0 %v564
  %v818 = vpop.f32.mrf.mxu0
  %v819 = vadd.f32 %v730, %v818
  %v820 = vpop.f32.mrf.mxu0
  %v821 = vadd.f32 %v732, %v820
  %822 = vmatmul.bf16.gmra.mxu0 %v567
  %v823 = vpop.f32.mrf.mxu0
  %v824 = vadd.f32 %v735, %v823
  %v825 = vpop.f32.mrf.mxu0
  %v826 = vadd.f32 %v737, %v825
  %827 = vmatmul.bf16.gmra.mxu0 %v570
  %v828 = vpop.f32.mrf.mxu0
  %v829 = vadd.f32 %v740, %v828
  %v830 = vpop.f32.mrf.mxu0
  %v831 = vadd.f32 %v742, %v830
  %832 = vmatmul.bf16.gmra.mxu0 %v573
  %v833 = vpop.f32.mrf.mxu0
  %v834 = vadd.f32 %v745, %v833
  %v835 = vpop.f32.mrf.mxu0
  %v836 = vadd.f32 %v747, %v835
  %837 = vmatmul.bf16.gmra.mxu0 %v576
  %v838 = vpop.f32.mrf.mxu0
  %v839 = vadd.f32 %v750, %v838
  %v840 = vpop.f32.mrf.mxu0
  %v841 = vadd.f32 %v752, %v840
  %842 = vmatmul.bf16.gmra.mxu0 %v579
  %v843 = vpop.f32.mrf.mxu0
  %v844 = vadd.f32 %v755, %v843
  %v845 = vpop.f32.mrf.mxu0
  %v846 = vadd.f32 %v757, %v845
  %847 = vdwg.mxu0
  %v848 = vadd.f32 %v52, %v769
  %v849 = vadd.f32 %v53, %v771
  %v850 = vadd.f32 %v54, %v774
  %v851 = vadd.f32 %v55, %v776
  %v852 = vadd.f32 %v56, %v779
  %v853 = vadd.f32 %v57, %v781
  %v854 = vadd.f32 %v58, %v784
  %v855 = vadd.f32 %v59, %v786
  %v856 = vadd.f32 %v60, %v789
  %v857 = vadd.f32 %v61, %v791
  %v858 = vadd.f32 %v62, %v794
  %v859 = vadd.f32 %v63, %v796
  %v860 = vadd.f32 %v64, %v799
  %v861 = vadd.f32 %v65, %v801
  %v862 = vadd.f32 %v66, %v804
  %v863 = vadd.f32 %v67, %v806
  %v864 = vadd.f32 %v68, %v809
  %v865 = vadd.f32 %v69, %v811
  %v866 = vadd.f32 %v70, %v814
  %v867 = vadd.f32 %v71, %v816
  %v868 = vadd.f32 %v72, %v819
  %v869 = vadd.f32 %v73, %v821
  %v870 = vadd.f32 %v74, %v824
  %v871 = vadd.f32 %v75, %v826
  %v872 = vadd.f32 %v76, %v829
  %v873 = vadd.f32 %v77, %v831
  %v874 = vadd.f32 %v78, %v834
  %v875 = vadd.f32 %v79, %v836
  %v876 = vadd.f32 %v80, %v839
  %v877 = vadd.f32 %v81, %v841
  %v878 = vadd.f32 %v82, %v844
  %v879 = vadd.f32 %v83, %v846
  %880 = vst.msk [vmem:[#allocation2] sm:$0xff] %vm532, %v848
  %881 = vst.msk [vmem:[#allocation2 + $0x8] sm:$0xff] %vm532, %v849
  %882 = vst.msk [vmem:[#allocation2 + $0x10] sm:$0xff] %vm532, %v850
  %883 = vst.msk [vmem:[#allocation2 + $0x18] sm:$0xff] %vm532, %v851
  %884 = vst.msk [vmem:[#allocation2 + $0x20] sm:$0xff] %vm532, %v852
  %885 = vst.msk [vmem:[#allocation2 + $0x28] sm:$0xff] %vm532, %v853
  %886 = vst.msk [vmem:[#allocation2 + $0x30] sm:$0xff] %vm532, %v854
  %887 = vst.msk [vmem:[#allocation2 + $0x38] sm:$0xff] %vm532, %v855
  %888 = vst.msk [vmem:[#allocation2 + $0x40] sm:$0xff] %vm532, %v856
  %889 = vst.msk [vmem:[#allocation2 + $0x48] sm:$0xff] %vm532, %v857
  %890 = vst.msk [vmem:[#allocation2 + $0x50] sm:$0xff] %vm532, %v858
  %891 = vst.msk [vmem:[#allocation2 + $0x58] sm:$0xff] %vm532, %v859
  %892 = vst.msk [vmem:[#allocation2 + $0x60] sm:$0xff] %vm532, %v860
  %893 = vst.msk [vmem:[#allocation2 + $0x68] sm:$0xff] %vm532, %v861
  %894 = vst.msk [vmem:[#allocation2 + $0x70] sm:$0xff] %vm532, %v862
  %895 = vst.msk [vmem:[#allocation2 + $0x78] sm:$0xff] %vm532, %v863
  %896 = vst.msk [vmem:[#allocation2 + $0x80] sm:$0xff] %vm532, %v864
  %897 = vst.msk [vmem:[#allocation2 + $0x88] sm:$0xff] %vm532, %v865
  %898 = vst.msk [vmem:[#allocation2 + $0x90] sm:$0xff] %vm532, %v866
  %899 = vst.msk [vmem:[#allocation2 + $0x98] sm:$0xff] %vm532, %v867
  %900 = vst.msk [vmem:[#allocation2 + $0xa0] sm:$0xff] %vm532, %v868
  %901 = vst.msk [vmem:[#allocation2 + $0xa8] sm:$0xff] %vm532, %v869
  %902 = vst.msk [vmem:[#allocation2 + $0xb0] sm:$0xff] %vm532, %v870
  %903 = vst.msk [vmem:[#allocation2 + $0xb8] sm:$0xff] %vm532, %v871
  %904 = vst.msk [vmem:[#allocation2 + $0xc0] sm:$0xff] %vm532, %v872
  %905 = vst.msk [vmem:[#allocation2 + $0xc8] sm:$0xff] %vm532, %v873
  %906 = vst.msk [vmem:[#allocation2 + $0xd0] sm:$0xff] %vm532, %v874
  %907 = vst.msk [vmem:[#allocation2 + $0xd8] sm:$0xff] %vm532, %v875
  %908 = vst.msk [vmem:[#allocation2 + $0xe0] sm:$0xff] %vm532, %v876
  %909 = vst.msk [vmem:[#allocation2 + $0xe8] sm:$0xff] %vm532, %v877
  %910 = vst.msk [vmem:[#allocation2 + $0xf0] sm:$0xff] %vm532, %v878
  %911 = vst.msk [vmem:[#allocation2 + $0xf8] sm:$0xff] %vm532, %v879
  // Predicated region
  $region18: #{faster_rcnn_forward.12} parent=0 // pred_check
    %p912 = pneg %p15
  $region19: #{faster_rcnn_forward.12} parent=0 // pred_check_branch
    %914 = sbr.rel (%p912) target = $region21
  $region20: #{faster_rcnn_forward.12} parent=0 // pred_region
    %v915 = vld [vmem:[#allocation2] sm:$0xff]
    %v916 = vld [vmem:[#allocation2 + $0x8] sm:$0xff]
    %v917 = vld [vmem:[#allocation2 + $0x10] sm:$0xff]
    %v918 = vld [vmem:[#allocation2 + $0x18] sm:$0xff]
    %v919 = vld [vmem:[#allocation2 + $0x20] sm:$0xff]
    %v920 = vld [vmem:[#allocation2 + $0x28] sm:$0xff]
    %v921 = vld [vmem:[#allocation2 + $0x30] sm:$0xff]
    %v922 = vld [vmem:[#allocation2 + $0x38] sm:$0xff]
    %v923 = vld [vmem:[#allocation2 + $0x40] sm:$0xff]
    %v924 = vld [vmem:[#allocation2 + $0x48] sm:$0xff]
    %v925 = vld [vmem:[#allocation2 + $0x50] sm:$0xff]
    %v926 = vld [vmem:[#allocation2 + $0x58] sm:$0xff]
    %v927 = vld [vmem:[#allocation2 + $0x60] sm:$0xff]
    %v928 = vld [vmem:[#allocation2 + $0x68] sm:$0xff]
    %v929 = vld [vmem:[#allocation2 + $0x70] sm:$0xff]
    %v930 = vld [vmem:[#allocation2 + $0x78] sm:$0xff]
    %v931 = vld [vmem:[#allocation2 + $0x80] sm:$0xff]
    %v932 = vld [vmem:[#allocation2 + $0x88] sm:$0xff]
    %v933 = vld [vmem:[#allocation2 + $0x90] sm:$0xff]
    %v934 = vld [vmem:[#allocation2 + $0x98] sm:$0xff]
    %v935 = vld [vmem:[#allocation2 + $0xa0] sm:$0xff]
    %v936 = vld [vmem:[#allocation2 + $0xa8] sm:$0xff]
    %v937 = vld [vmem:[#allocation2 + $0xb0] sm:$0xff]
    %v938 = vld [vmem:[#allocation2 + $0xb8] sm:$0xff]
    %v939 = vld [vmem:[#allocation2 + $0xc0] sm:$0xff]
    %v940 = vld [vmem:[#allocation2 + $0xc8] sm:$0xff]
    %v941 = vld [vmem:[#allocation2 + $0xd0] sm:$0xff]
    %v942 = vld [vmem:[#allocation2 + $0xd8] sm:$0xff]
    %v943 = vld [vmem:[#allocation2 + $0xe0] sm:$0xff]
    %v944 = vld [vmem:[#allocation2 + $0xe8] sm:$0xff]
    %v945 = vld [vmem:[#allocation2 + $0xf0] sm:$0xff]
    %v946 = vld [vmem:[#allocation2 + $0xf8] sm:$0xff]
    %v947 = vld [vmem:[%s2] sm:$0x1]
    %v949 = vperm.slane %v947, 0
    %v951 = vadd.f32 %v915, %v949
    %v952 = vadd.f32 %v916, %v949
    %v953 = vadd.f32 %v917, %v949
    %v954 = vadd.f32 %v918, %v949
    %v955 = vadd.f32 %v919, %v949
    %v956 = vadd.f32 %v920, %v949
    %v957 = vadd.f32 %v921, %v949
    %v958 = vadd.f32 %v922, %v949
    %v959 = vadd.f32 %v923, %v949
    %v960 = vadd.f32 %v924, %v949
    %v961 = vadd.f32 %v925, %v949
    %v962 = vadd.f32 %v926, %v949
    %v963 = vadd.f32 %v927, %v949
    %v964 = vadd.f32 %v928, %v949
    %v965 = vadd.f32 %v929, %v949
    %v966 = vadd.f32 %v930, %v949
    %v967 = vadd.f32 %v931, %v949
    %v968 = vadd.f32 %v932, %v949
    %v969 = vadd.f32 %v933, %v949
    %v970 = vadd.f32 %v934, %v949
    %v971 = vadd.f32 %v935, %v949
    %v972 = vadd.f32 %v936, %v949
    %v973 = vadd.f32 %v937, %v949
    %v974 = vadd.f32 %v938, %v949
    %v975 = vadd.f32 %v939, %v949
    %v976 = vadd.f32 %v940, %v949
    %v977 = vadd.f32 %v941, %v949
    %v978 = vadd.f32 %v942, %v949
    %v979 = vadd.f32 %v943, %v949
    %v980 = vadd.f32 %v944, %v949
    %v981 = vadd.f32 %v945, %v949
    %v982 = vadd.f32 %v946, %v949
    %v983 = vmax.f32 %v951, 0.0
    %v984 = vmax.f32 %v952, 0.0
    %v985 = vmax.f32 %v953, 0.0
    %v986 = vmax.f32 %v954, 0.0
    %v987 = vmax.f32 %v955, 0.0
    %v988 = vmax.f32 %v956, 0.0
    %v989 = vmax.f32 %v957, 0.0
    %v990 = vmax.f32 %v958, 0.0
    %v991 = vmax.f32 %v959, 0.0
    %v992 = vmax.f32 %v960, 0.0
    %v993 = vmax.f32 %v961, 0.0
    %v994 = vmax.f32 %v962, 0.0
    %v995 = vmax.f32 %v963, 0.0
    %v996 = vmax.f32 %v964, 0.0
    %v997 = vmax.f32 %v965, 0.0
    %v998 = vmax.f32 %v966, 0.0
    %v999 = vmax.f32 %v967, 0.0
    %v1000 = vmax.f32 %v968, 0.0
    %v1001 = vmax.f32 %v969, 0.0
    %v1002 = vmax.f32 %v970, 0.0
    %v1003 = vmax.f32 %v971, 0.0
    %v1004 = vmax.f32 %v972, 0.0
    %v1005 = vmax.f32 %v973, 0.0
    %v1006 = vmax.f32 %v974, 0.0
    %v1007 = vmax.f32 %v975, 0.0
    %v1008 = vmax.f32 %v976, 0.0
    %v1009 = vmax.f32 %v977, 0.0
    %v1010 = vmax.f32 %v978, 0.0
    %v1011 = vmax.f32 %v979, 0.0
    %v1012 = vmax.f32 %v980, 0.0
    %v1013 = vmax.f32 %v981, 0.0
    %v1014 = vmax.f32 %v982, 0.0
    %v1015 = vpack.c.bf16 %v983, %v983
    %v1016 = vpack.c.bf16 %v984, %v984
    %v1017 = vpack.c.bf16 %v985, %v985
    %v1018 = vpack.c.bf16 %v986, %v986
    %v1019 = vpack.c.bf16 %v987, %v987
    %v1020 = vpack.c.bf16 %v988, %v988
    %v1021 = vpack.c.bf16 %v989, %v989
    %v1022 = vpack.c.bf16 %v990, %v990
    %v1023 = vpack.c.bf16 %v991, %v991
    %v1024 = vpack.c.bf16 %v992, %v992
    %v1025 = vpack.c.bf16 %v993, %v993
    %v1026 = vpack.c.bf16 %v994, %v994
    %v1027 = vpack.c.bf16 %v995, %v995
    %v1028 = vpack.c.bf16 %v996, %v996
    %v1029 = vpack.c.bf16 %v997, %v997
    %v1030 = vpack.c.bf16 %v998, %v998
    %v1031 = vpack.c.bf16 %v999, %v999
    %v1032 = vpack.c.bf16 %v1000, %v1000
    %v1033 = vpack.c.bf16 %v1001, %v1001
    %v1034 = vpack.c.bf16 %v1002, %v1002
    %v1035 = vpack.c.bf16 %v1003, %v1003
    %v1036 = vpack.c.bf16 %v1004, %v1004
    %v1037 = vpack.c.bf16 %v1005, %v1005
    %v1038 = vpack.c.bf16 %v1006, %v1006
    %v1039 = vpack.c.bf16 %v1007, %v1007
    %v1040 = vpack.c.bf16 %v1008, %v1008
    %v1041 = vpack.c.bf16 %v1009, %v1009
    %v1042 = vpack.c.bf16 %v1010, %v1010
    %v1043 = vpack.c.bf16 %v1011, %v1011
    %v1044 = vpack.c.bf16 %v1012, %v1012
    %v1045 = vpack.c.bf16 %v1013, %v1013
    %v1046 = vpack.c.bf16 %v1014, %v1014
    %vm1047 = vcmask 257024
    %1048 = vst.msk [vmem:[%s3] sm:$0xf] %vm1047, %v1015
    %1049 = vst.msk [vmem:[%s3 + $0x4] sm:$0xf] %vm1047, %v1016
    %1050 = vst.msk [vmem:[%s3 + $0x8] sm:$0xf] %vm1047, %v1017
    %1051 = vst.msk [vmem:[%s3 + $0xc] sm:$0xf] %vm1047, %v1018
    %1052 = vst.msk [vmem:[%s3 + $0x10] sm:$0xf] %vm1047, %v1019
    %1053 = vst.msk [vmem:[%s3 + $0x14] sm:$0xf] %vm1047, %v1020
    %1054 = vst.msk [vmem:[%s3 + $0x18] sm:$0xf] %vm1047, %v1021
    %1055 = vst.msk [vmem:[%s3 + $0x1c] sm:$0xf] %vm1047, %v1022
    %1056 = vst.msk [vmem:[%s3 + $0x20] sm:$0xf] %vm1047, %v1023
    %1057 = vst.msk [vmem:[%s3 + $0x24] sm:$0xf] %vm1047, %v1024
    %1058 = vst.msk [vmem:[%s3 + $0x28] sm:$0xf] %vm1047, %v1025
    %1059 = vst.msk [vmem:[%s3 + $0x2c] sm:$0xf] %vm1047, %v1026
    %1060 = vst.msk [vmem:[%s3 + $0x30] sm:$0xf] %vm1047, %v1027
    %1061 = vst.msk [vmem:[%s3 + $0x34] sm:$0xf] %vm1047, %v1028
    %1062 = vst.msk [vmem:[%s3 + $0x38] sm:$0xf] %vm1047, %v1029
    %1063 = vst.msk [vmem:[%s3 + $0x3c] sm:$0xf] %vm1047, %v1030
    %1064 = vst.msk [vmem:[%s3 + $0x40] sm:$0xf] %vm1047, %v1031
    %1065 = vst.msk [vmem:[%s3 + $0x44] sm:$0xf] %vm1047, %v1032
    %1066 = vst.msk [vmem:[%s3 + $0x48] sm:$0xf] %vm1047, %v1033
    %1067 = vst.msk [vmem:[%s3 + $0x4c] sm:$0xf] %vm1047, %v1034
    %1068 = vst.msk [vmem:[%s3 + $0x50] sm:$0xf] %vm1047, %v1035
    %1069 = vst.msk [vmem:[%s3 + $0x54] sm:$0xf] %vm1047, %v1036
    %1070 = vst.msk [vmem:[%s3 + $0x58] sm:$0xf] %vm1047, %v1037
    %1071 = vst.msk [vmem:[%s3 + $0x5c] sm:$0xf] %vm1047, %v1038
    %1072 = vst.msk [vmem:[%s3 + $0x60] sm:$0xf] %vm1047, %v1039
    %1073 = vst.msk [vmem:[%s3 + $0x64] sm:$0xf] %vm1047, %v1040
    %1074 = vst.msk [vmem:[%s3 + $0x68] sm:$0xf] %vm1047, %v1041
    %1075 = vst.msk [vmem:[%s3 + $0x6c] sm:$0xf] %vm1047, %v1042
    %1076 = vst.msk [vmem:[%s3 + $0x70] sm:$0xf] %vm1047, %v1043
    %1077 = vst.msk [vmem:[%s3 + $0x74] sm:$0xf] %vm1047, %v1044
    %1078 = vst.msk [vmem:[%s3 + $0x78] sm:$0xf] %vm1047, %v1045
    %1079 = vst.msk [vmem:[%s3 + $0x7c] sm:$0xf] %vm1047, %v1046
  $region21: #{faster_rcnn_forward.12} parent=0 // pred_fallthru
    _
  // Predicated region
  $region22: #{faster_rcnn_forward.12} parent=0 // pred_check
    _
  $region23: #{faster_rcnn_forward.12} parent=0 // pred_check_branch
    %1081 = sbr.rel (0) target = $region25
  $region24: #{faster_rcnn_forward.12} parent=0 // pred_region
    _
  $region25: #{faster_rcnn_forward.12} parent=0 // pred_fallthru
    _
  // Predicated region
  $region26: #{faster_rcnn_forward.12} parent=0 // pred_check
    _
  $region27: #{faster_rcnn_forward.12} parent=0 // pred_check_branch
    %1083 = sbr.rel (0) target = $region29
  $region28: #{faster_rcnn_forward.12} parent=0 // pred_region
    _
  $region29: #{faster_rcnn_forward.12} parent=0 // pred_fallthru
    _

// kernel: faster_rcnn_forward.13
$region0: #{faster_rcnn_forward.13}
  #allocation0 [shape = 'u32[]', space=smem, size = 0x4, offset = 0x4, fixed_abs, tag = 'smem constant byte address 0x4 - core index']
  #allocation1 [shape = 'u32[72,128]{1,0:T(1,128)}', space=vmem, size = 0x9000, scoped, tag = 'internal scratch']
  #allocation2 [shape = 'f32[64,64]{1,0:T(8,128)}', space=vmem, size = 0x8000, scoped, tag = 'scratch operand']
  %s0 = inlined_call_operand.vmem [shape: bf16[64,288], index: 0, kind: input, shape index: {}]
  %s1 = inlined_call_operand.vmem [shape: bf16[288,64], index: 1, kind: input, shape index: {}]
  %s2 = inlined_call_operand.vmem [shape: f32[1,64], index: 2, kind: input, shape index: {}]
  %s3 = inlined_call_operand.vmem [shape: bf16[64,64], index: 3, kind: output, shape index: {}]
  %s4 = sld [smem:[#allocation0]]
  $region30: #{faster_rcnn_forward.13} parent=0
    _
  %s6 = ssub.s32 1, %s4
  %s7 = scalar_select 0, %s6, %s4
  // Predicated region
  $region2: #{faster_rcnn_forward.13} parent=0 // pred_check
    _
  $region3: #{faster_rcnn_forward.13} parent=0 // pred_check_branch
    %9 = sbr.rel (0) target = $region5
  $region4: #{faster_rcnn_forward.13} parent=0 // pred_region
    _
  $region5: #{faster_rcnn_forward.13} parent=0 // pred_fallthru
    _
  // Predicated region
  $region6: #{faster_rcnn_forward.13} parent=0 // pred_check
    _
  $region7: #{faster_rcnn_forward.13} parent=0 // pred_check_branch
    %11 = sbr.rel (0) target = $region9
  $region8: #{faster_rcnn_forward.13} parent=0 // pred_region
    _
  $region9: #{faster_rcnn_forward.13} parent=0 // pred_fallthru
    _
  // Predicated region
  $region10: #{faster_rcnn_forward.13} parent=0 // pred_check
    _
  $region11: #{faster_rcnn_forward.13} parent=0 // pred_check_branch
    %13 = sbr.rel (0) target = $region13
  $region12: #{faster_rcnn_forward.13} parent=0 // pred_region
    _
  $region13: #{faster_rcnn_forward.13} parent=0 // pred_fallthru
    _
  %p15 = scmp.eq.s32.totalorder 0, 0
  // Predicated region
  $region14: #{faster_rcnn_forward.13} parent=0 // pred_check
    %p16 = pneg %p15
  $region15: #{faster_rcnn_forward.13} parent=0 // pred_check_branch
    %18 = sbr.rel (%p16) target = $region17
  $region16: #{faster_rcnn_forward.13} parent=0 // pred_region
    %vm19 = vcmask 523264
    %20 = vst.msk [vmem:[#allocation2] sm:$0xff] %vm19, 0.0
    %21 = vst.msk [vmem:[#allocation2 + $0x8] sm:$0xff] %vm19, 0.0
    %22 = vst.msk [vmem:[#allocation2 + $0x10] sm:$0xff] %vm19, 0.0
    %23 = vst.msk [vmem:[#allocation2 + $0x18] sm:$0xff] %vm19, 0.0
    %24 = vst.msk [vmem:[#allocation2 + $0x20] sm:$0xff] %vm19, 0.0
    %25 = vst.msk [vmem:[#allocation2 + $0x28] sm:$0xff] %vm19, 0.0
    %26 = vst.msk [vmem:[#allocation2 + $0x30] sm:$0xff] %vm19, 0.0
    %27 = vst.msk [vmem:[#allocation2 + $0x38] sm:$0xff] %vm19, 0.0
  $region17: #{faster_rcnn_forward.13} parent=0 // pred_fallthru
    _
  %v28 = vld [vmem:[#allocation2] sm:$0xff]
  %v29 = vld [vmem:[#allocation2 + $0x8] sm:$0xff]
  %v30 = vld [vmem:[#allocation2 + $0x10] sm:$0xff]
  %v31 = vld [vmem:[#allocation2 + $0x18] sm:$0xff]
  %v32 = vld [vmem:[#allocation2 + $0x20] sm:$0xff]
  %v33 = vld [vmem:[#allocation2 + $0x28] sm:$0xff]
  %v34 = vld [vmem:[#allocation2 + $0x30] sm:$0xff]
  %v35 = vld [vmem:[#allocation2 + $0x38] sm:$0xff]
  %v36 = vld [vmem:[%s0] sm:$0xff]
  %v37 = vld [vmem:[%s0 + $0x8] sm:$0xf]
  %v38 = vld [vmem:[%s0 + $0xc] sm:$0xff]
  %v39 = vld [vmem:[%s0 + $0x14] sm:$0xf]
  %v40 = vld [vmem:[%s0 + $0x18] sm:$0xff]
  %v41 = vld [vmem:[%s0 + $0x20] sm:$0xf]
  %v42 = vld [vmem:[%s0 + $0x24] sm:$0xff]
  %v43 = vld [vmem:[%s0 + $0x2c] sm:$0xf]
  %v44 = vld [vmem:[%s0 + $0x30] sm:$0xff]
  %v45 = vld [vmem:[%s0 + $0x38] sm:$0xf]
  %v46 = vld [vmem:[%s0 + $0x3c] sm:$0xff]
  %v47 = vld [vmem:[%s0 + $0x44] sm:$0xf]
  %v48 = vld [vmem:[%s0 + $0x48] sm:$0xff]
  %v49 = vld [vmem:[%s0 + $0x50] sm:$0xf]
  %v50 = vld [vmem:[%s0 + $0x54] sm:$0xff]
  %v51 = vld [vmem:[%s0 + $0x5c] sm:$0xf]
  %v52 = vld [vmem:[%s1] sm:$0xf]
  %v53 = vld [vmem:[%s1 + $0x4] sm:$0xf]
  %v54 = vld [vmem:[%s1 + $0x8] sm:$0xf]
  %v55 = vld [vmem:[%s1 + $0xc] sm:$0xf]
  %v56 = vld [vmem:[%s1 + $0x10] sm:$0xf]
  %v57 = vld [vmem:[%s1 + $0x14] sm:$0xf]
  %v58 = vld [vmem:[%s1 + $0x18] sm:$0xf]
  %v59 = vld [vmem:[%s1 + $0x1c] sm:$0xf]
  %v60 = vld [vmem:[%s1 + $0x20] sm:$0xf]
  %v61 = vld [vmem:[%s1 + $0x24] sm:$0xf]
  %v62 = vld [vmem:[%s1 + $0x28] sm:$0xf]
  %v63 = vld [vmem:[%s1 + $0x2c] sm:$0xf]
  %v64 = vld [vmem:[%s1 + $0x30] sm:$0xf]
  %v65 = vld [vmem:[%s1 + $0x34] sm:$0xf]
  %v66 = vld [vmem:[%s1 + $0x38] sm:$0xf]
  %v67 = vld [vmem:[%s1 + $0x3c] sm:$0xf]
  %v68 = vld [vmem:[%s1 + $0x40] sm:$0xf]
  %v69 = vld [vmem:[%s1 + $0x44] sm:$0xf]
  %v70 = vld [vmem:[%s1 + $0x48] sm:$0xf]
  %v71 = vld [vmem:[%s1 + $0x4c] sm:$0xf]
  %v72 = vld [vmem:[%s1 + $0x50] sm:$0xf]
  %v73 = vld [vmem:[%s1 + $0x54] sm:$0xf]
  %v74 = vld [vmem:[%s1 + $0x58] sm:$0xf]
  %v75 = vld [vmem:[%s1 + $0x5c] sm:$0xf]
  %v76 = vld [vmem:[%s1 + $0x60] sm:$0xf]
  %v77 = vld [vmem:[%s1 + $0x64] sm:$0xf]
  %v78 = vld [vmem:[%s1 + $0x68] sm:$0xf]
  %v79 = vld [vmem:[%s1 + $0x6c] sm:$0xf]
  %v80 = vld [vmem:[%s1 + $0x70] sm:$0xf]
  %v81 = vld [vmem:[%s1 + $0x74] sm:$0xf]
  %v82 = vld [vmem:[%s1 + $0x78] sm:$0xf]
  %v83 = vld [vmem:[%s1 + $0x7c] sm:$0xf]
  %v84 = vld [vmem:[%s1 + $0x80] sm:$0xf]
  %v85 = vld [vmem:[%s1 + $0x84] sm:$0xf]
  %v86 = vld [vmem:[%s1 + $0x88] sm:$0xf]
  %v87 = vld [vmem:[%s1 + $0x8c] sm:$0xf]
  %v104 = vunpack.c.l.b16 %v36
  %v105 = vunpack.c.h.b16 %v36
  %v106 = vunpack.c.l.b16 %v37
  %v107 = vunpack.c.l.b16 %v38
  %v108 = vunpack.c.h.b16 %v38
  %v109 = vunpack.c.l.b16 %v39
  %v110 = vunpack.c.l.b16 %v40
  %v111 = vunpack.c.h.b16 %v40
  %v112 = vunpack.c.l.b16 %v41
  %v113 = vunpack.c.l.b16 %v42
  %v114 = vunpack.c.h.b16 %v42
  %v115 = vunpack.c.l.b16 %v43
  %v116 = vunpack.c.l.b16 %v44
  %v117 = vunpack.c.h.b16 %v44
  %v118 = vunpack.c.l.b16 %v45
  %v119 = vunpack.c.l.b16 %v46
  %v120 = vunpack.c.h.b16 %v46
  %v121 = vunpack.c.l.b16 %v47
  %v122 = vunpack.c.l.b16 %v48
  %v123 = vunpack.c.h.b16 %v48
  %v124 = vunpack.c.l.b16 %v49
  %v125 = vunpack.c.l.b16 %v50
  %v126 = vunpack.c.h.b16 %v50
  %v127 = vunpack.c.l.b16 %v51
  %v128 = vpack.c.b16 %v107, %v104
  %v129 = vpack.c.b16 %v108, %v105
  %v130 = vpack.c.b16 %v109, %v106
  %v131 = vpack.c.b16 %v113, %v110
  %v132 = vpack.c.b16 %v114, %v111
  %v133 = vpack.c.b16 %v115, %v112
  %v134 = vpack.c.b16 %v119, %v116
  %v135 = vpack.c.b16 %v120, %v117
  %v136 = vpack.c.b16 %v121, %v118
  %v137 = vpack.c.b16 %v125, %v122
  %v138 = vpack.c.b16 %v126, %v123
  %v139 = vpack.c.b16 %v127, %v124
  %v184 = vunpack.c.l.b16 %v52
  %v185 = vunpack.c.l.b16 %v53
  %v186 = vunpack.c.l.b16 %v54
  %v187 = vunpack.c.l.b16 %v55
  %v188 = vunpack.c.l.b16 %v56
  %v189 = vunpack.c.l.b16 %v57
  %v190 = vunpack.c.l.b16 %v58
  %v191 = vunpack.c.l.b16 %v59
  %v192 = vunpack.c.l.b16 %v60
  %v193 = vunpack.c.l.b16 %v61
  %v194 = vunpack.c.l.b16 %v62
  %v195 = vunpack.c.l.b16 %v63
  %v196 = vunpack.c.l.b16 %v64
  %v197 = vunpack.c.l.b16 %v65
  %v198 = vunpack.c.l.b16 %v66
  %v199 = vunpack.c.l.b16 %v67
  %v200 = vunpack.c.l.b16 %v68
  %v201 = vunpack.c.l.b16 %v69
  %v202 = vunpack.c.l.b16 %v70
  %v203 = vunpack.c.l.b16 %v71
  %v204 = vunpack.c.l.b16 %v72
  %v205 = vunpack.c.l.b16 %v73
  %v206 = vunpack.c.l.b16 %v74
  %v207 = vunpack.c.l.b16 %v75
  %v208 = vunpack.c.l.b16 %v76
  %v209 = vunpack.c.l.b16 %v77
  %v210 = vunpack.c.l.b16 %v78
  %v211 = vunpack.c.l.b16 %v79
  %v212 = vunpack.c.l.b16 %v80
  %v213 = vunpack.c.l.b16 %v81
  %v214 = vunpack.c.l.b16 %v82
  %v215 = vunpack.c.l.b16 %v83
  %v216 = vunpack.c.l.b16 %v84
  %v217 = vunpack.c.l.b16 %v85
  %v218 = vunpack.c.l.b16 %v86
  %v219 = vunpack.c.l.b16 %v87
  %v220 = vpack.c.b16 %v185, %v184
  %v221 = vpack.c.b16 %v187, %v186
  %v222 = vpack.c.b16 %v189, %v188
  %v223 = vpack.c.b16 %v191, %v190
  %v224 = vpack.c.b16 %v193, %v192
  %v225 = vpack.c.b16 %v195, %v194
  %v226 = vpack.c.b16 %v197, %v196
  %v227 = vpack.c.b16 %v199, %v198
  %v228 = vpack.c.b16 %v201, %v200
  %v229 = vpack.c.b16 %v203, %v202
  %v230 = vpack.c.b16 %v205, %v204
  %v231 = vpack.c.b16 %v207, %v206
  %v232 = vpack.c.b16 %v209, %v208
  %v233 = vpack.c.b16 %v211, %v210
  %v234 = vpack.c.b16 %v213, %v212
  %v235 = vpack.c.b16 %v215, %v214
  %v236 = vpack.c.b16 %v217, %v216
  %v237 = vpack.c.b16 %v219, %v218
  %vm256 = vcmask 261120
  %v258 = vsel %vm256, %v130, 0
  %v261 = vsel %vm256, %v133, 0
  %v264 = vsel %vm256, %v136, 0
  %v267 = vsel %vm256, %v139, 0
  %269 = vmatpush.bf16.msra.mxu0 %v227
  %270 = vmatpush.bf16.msra.mxu0 %v226
  %271 = vmatpush.bf16.msra.mxu0 %v225
  %272 = vmatpush.bf16.msra.mxu0 %v224
  %273 = vmatpush.bf16.msra.mxu0 %v223
  %274 = vmatpush.bf16.msra.mxu0 %v222
  %275 = vmatpush.bf16.msra.mxu0 %v221
  %276 = vmatpush.bf16.msra.mxu0 %v220
  %277 = vmatmul.bf16.gmra.mxu0 %v128
  %v278 = vpop.f32.mrf.mxu0
  %v279 = vadd.f32 0.0, %v278
  %v280 = vpop.f32.mrf.mxu0
  %v281 = vadd.f32 0.0, %v280
  %282 = vmatmul.bf16.gmra.mxu0 %v131
  %v283 = vpop.f32.mrf.mxu0
  %v284 = vadd.f32 0.0, %v283
  %v285 = vpop.f32.mrf.mxu0
  %v286 = vadd.f32 0.0, %v285
  %287 = vmatmul.bf16.gmra.mxu0 %v134
  %v288 = vpop.f32.mrf.mxu0
  %v289 = vadd.f32 0.0, %v288
  %v290 = vpop.f32.mrf.mxu0
  %v291 = vadd.f32 0.0, %v290
  %292 = vmatmul.bf16.gmra.mxu0 %v137
  %v293 = vpop.f32.mrf.mxu0
  %v294 = vadd.f32 0.0, %v293
  %v295 = vpop.f32.mrf.mxu0
  %v296 = vadd.f32 0.0, %v295
  %297 = vdwg.mxu0
  %298 = vmatpush.bf16.msra.mxu0 %v235
  %299 = vmatpush.bf16.msra.mxu0 %v234
  %300 = vmatpush.bf16.msra.mxu0 %v233
  %301 = vmatpush.bf16.msra.mxu0 %v232
  %302 = vmatpush.bf16.msra.mxu0 %v231
  %303 = vmatpush.bf16.msra.mxu0 %v230
  %304 = vmatpush.bf16.msra.mxu0 %v229
  %305 = vmatpush.bf16.msra.mxu0 %v228
  %306 = vmatmul.bf16.gmra.mxu0 %v129
  %v307 = vpop.f32.mrf.mxu0
  %v308 = vadd.f32 %v279, %v307
  %v309 = vpop.f32.mrf.mxu0
  %v310 = vadd.f32 %v281, %v309
  %311 = vmatmul.bf16.gmra.mxu0 %v132
  %v312 = vpop.f32.mrf.mxu0
  %v313 = vadd.f32 %v284, %v312
  %v314 = vpop.f32.mrf.mxu0
  %v315 = vadd.f32 %v286, %v314
  %316 = vmatmul.bf16.gmra.mxu0 %v135
  %v317 = vpop.f32.mrf.mxu0
  %v318 = vadd.f32 %v289, %v317
  %v319 = vpop.f32.mrf.mxu0
  %v320 = vadd.f32 %v291, %v319
  %321 = vmatmul.bf16.gmra.mxu0 %v138
  %v322 = vpop.f32.mrf.mxu0
  %v323 = vadd.f32 %v294, %v322
  %v324 = vpop.f32.mrf.mxu0
  %v325 = vadd.f32 %v296, %v324
  %326 = vdwg.mxu0
  %327 = vmatpush.bf16.msra.mxu0 0
  %328 = vmatpush.bf16.msra.mxu0 0
  %329 = vmatpush.bf16.msra.mxu0 0
  %330 = vmatpush.bf16.msra.mxu0 0
  %331 = vmatpush.bf16.msra.mxu0 0
  %332 = vmatpush.bf16.msra.mxu0 0
  %333 = vmatpush.bf16.msra.mxu0 %v237
  %334 = vmatpush.bf16.msra.mxu0 %v236
  %335 = vmatmul.bf16.gmra.mxu0 %v258
  %v336 = vpop.f32.mrf.mxu0
  %v337 = vadd.f32 %v308, %v336
  %v338 = vpop.f32.mrf.mxu0
  %v339 = vadd.f32 %v310, %v338
  %340 = vmatmul.bf16.gmra.mxu0 %v261
  %v341 = vpop.f32.mrf.mxu0
  %v342 = vadd.f32 %v313, %v341
  %v343 = vpop.f32.mrf.mxu0
  %v344 = vadd.f32 %v315, %v343
  %345 = vmatmul.bf16.gmra.mxu0 %v264
  %v346 = vpop.f32.mrf.mxu0
  %v347 = vadd.f32 %v318, %v346
  %v348 = vpop.f32.mrf.mxu0
  %v349 = vadd.f32 %v320, %v348
  %350 = vmatmul.bf16.gmra.mxu0 %v267
  %v351 = vpop.f32.mrf.mxu0
  %v352 = vadd.f32 %v323, %v351
  %v353 = vpop.f32.mrf.mxu0
  %v354 = vadd.f32 %v325, %v353
  %355 = vdwg.mxu0
  %v356 = vadd.f32 %v28, %v337
  %v357 = vadd.f32 %v29, %v339
  %v358 = vadd.f32 %v30, %v342
  %v359 = vadd.f32 %v31, %v344
  %v360 = vadd.f32 %v32, %v347
  %v361 = vadd.f32 %v33, %v349
  %v362 = vadd.f32 %v34, %v352
  %v363 = vadd.f32 %v35, %v354
  %vm364 = vcmask 523264
  %365 = vst.msk [vmem:[#allocation2] sm:$0xff] %vm364, %v356
  %366 = vst.msk [vmem:[#allocation2 + $0x8] sm:$0xff] %vm364, %v357
  %367 = vst.msk [vmem:[#allocation2 + $0x10] sm:$0xff] %vm364, %v358
  %368 = vst.msk [vmem:[#allocation2 + $0x18] sm:$0xff] %vm364, %v359
  %369 = vst.msk [vmem:[#allocation2 + $0x20] sm:$0xff] %vm364, %v360
  %370 = vst.msk [vmem:[#allocation2 + $0x28] sm:$0xff] %vm364, %v361
  %371 = vst.msk [vmem:[#allocation2 + $0x30] sm:$0xff] %vm364, %v362
  %372 = vst.msk [vmem:[#allocation2 + $0x38] sm:$0xff] %vm364, %v363
  // Predicated region
  $region18: #{faster_rcnn_forward.13} parent=0 // pred_check
    %p373 = pneg %p15
  $region19: #{faster_rcnn_forward.13} parent=0 // pred_check_branch
    %375 = sbr.rel (%p373) target = $region21
  $region20: #{faster_rcnn_forward.13} parent=0 // pred_region
    %v376 = vld [vmem:[#allocation2] sm:$0xff]
    %v377 = vld [vmem:[#allocation2 + $0x8] sm:$0xff]
    %v378 = vld [vmem:[#allocation2 + $0x10] sm:$0xff]
    %v379 = vld [vmem:[#allocation2 + $0x18] sm:$0xff]
    %v380 = vld [vmem:[#allocation2 + $0x20] sm:$0xff]
    %v381 = vld [vmem:[#allocation2 + $0x28] sm:$0xff]
    %v382 = vld [vmem:[#allocation2 + $0x30] sm:$0xff]
    %v383 = vld [vmem:[#allocation2 + $0x38] sm:$0xff]
    %v384 = vld [vmem:[%s2] sm:$0x1]
    %v386 = vperm.slane %v384, 0
    %v388 = vadd.f32 %v376, %v386
    %v389 = vadd.f32 %v377, %v386
    %v390 = vadd.f32 %v378, %v386
    %v391 = vadd.f32 %v379, %v386
    %v392 = vadd.f32 %v380, %v386
    %v393 = vadd.f32 %v381, %v386
    %v394 = vadd.f32 %v382, %v386
    %v395 = vadd.f32 %v383, %v386
    %v396 = vmax.f32 %v388, 0.0
    %v397 = vmax.f32 %v389, 0.0
    %v398 = vmax.f32 %v390, 0.0
    %v399 = vmax.f32 %v391, 0.0
    %v400 = vmax.f32 %v392, 0.0
    %v401 = vmax.f32 %v393, 0.0
    %v402 = vmax.f32 %v394, 0.0
    %v403 = vmax.f32 %v395, 0.0
    %v404 = vpack.c.bf16 %v396, %v396
    %v405 = vpack.c.bf16 %v397, %v397
    %v406 = vpack.c.bf16 %v398, %v398
    %v407 = vpack.c.bf16 %v399, %v399
    %v408 = vpack.c.bf16 %v400, %v400
    %v409 = vpack.c.bf16 %v401, %v401
    %v410 = vpack.c.bf16 %v402, %v402
    %v411 = vpack.c.bf16 %v403, %v403
    %vm412 = vcmask 519168
    %413 = vst.msk [vmem:[%s3] sm:$0xf] %vm412, %v404
    %414 = vst.msk [vmem:[%s3 + $0x4] sm:$0xf] %vm412, %v405
    %415 = vst.msk [vmem:[%s3 + $0x8] sm:$0xf] %vm412, %v406
    %416 = vst.msk [vmem:[%s3 + $0xc] sm:$0xf] %vm412, %v407
    %417 = vst.msk [vmem:[%s3 + $0x10] sm:$0xf] %vm412, %v408
    %418 = vst.msk [vmem:[%s3 + $0x14] sm:$0xf] %vm412, %v409
    %419 = vst.msk [vmem:[%s3 + $0x18] sm:$0xf] %vm412, %v410
    %420 = vst.msk [vmem:[%s3 + $0x1c] sm:$0xf] %vm412, %v411
  $region21: #{faster_rcnn_forward.13} parent=0 // pred_fallthru
    _
  // Predicated region
  $region22: #{faster_rcnn_forward.13} parent=0 // pred_check
    _
  $region23: #{faster_rcnn_forward.13} parent=0 // pred_check_branch
    %422 = sbr.rel (0) target = $region25
  $region24: #{faster_rcnn_forward.13} parent=0 // pred_region
    _
  $region25: #{faster_rcnn_forward.13} parent=0 // pred_fallthru
    _
  // Predicated region
  $region26: #{faster_rcnn_forward.13} parent=0 // pred_check
    _
  $region27: #{faster_rcnn_forward.13} parent=0 // pred_check_branch
    %424 = sbr.rel (0) target = $region29
  $region28: #{faster_rcnn_forward.13} parent=0 // pred_region
    _
  $region29: #{faster_rcnn_forward.13} parent=0 // pred_fallthru
    _

// kernel: faster_rcnn_forward.16
$region0: #{faster_rcnn_forward.16}
  #allocation0 [shape = 'u32[]', space=smem, size = 0x4, offset = 0x4, fixed_abs, tag = 'smem constant byte address 0x4 - core index']
  #allocation1 [shape = 'u32[72,128]{1,0:T(1,128)}', space=vmem, size = 0x9000, scoped, tag = 'internal scratch']
  #allocation2 [shape = 'f32[16,54]{1,0:T(8,128)}', space=vmem, size = 0x2000, scoped, tag = 'scratch operand']
  %s0 = inlined_call_operand.vmem [shape: bf16[16,64], index: 0, kind: input, shape index: {}]
  %s1 = inlined_call_operand.vmem [shape: bf16[64,54], index: 1, kind: input, shape index: {}]
  %s2 = inlined_call_operand.vmem [shape: f32[1,54], index: 2, kind: input, shape index: {}]
  %s3 = inlined_call_operand.vmem [shape: f32[16,54], index: 3, kind: output, shape index: {}]
  %s4 = sld [smem:[#allocation0]]
  $region30: #{faster_rcnn_forward.16} parent=0
    _
  %s6 = ssub.s32 1, %s4
  %s7 = scalar_select 0, %s6, %s4
  // Predicated region
  $region2: #{faster_rcnn_forward.16} parent=0 // pred_check
    _
  $region3: #{faster_rcnn_forward.16} parent=0 // pred_check_branch
    %9 = sbr.rel (0) target = $region5
  $region4: #{faster_rcnn_forward.16} parent=0 // pred_region
    _
  $region5: #{faster_rcnn_forward.16} parent=0 // pred_fallthru
    _
  // Predicated region
  $region6: #{faster_rcnn_forward.16} parent=0 // pred_check
    _
  $region7: #{faster_rcnn_forward.16} parent=0 // pred_check_branch
    %11 = sbr.rel (0) target = $region9
  $region8: #{faster_rcnn_forward.16} parent=0 // pred_region
    _
  $region9: #{faster_rcnn_forward.16} parent=0 // pred_fallthru
    _
  // Predicated region
  $region10: #{faster_rcnn_forward.16} parent=0 // pred_check
    _
  $region11: #{faster_rcnn_forward.16} parent=0 // pred_check_branch
    %13 = sbr.rel (0) target = $region13
  $region12: #{faster_rcnn_forward.16} parent=0 // pred_region
    _
  $region13: #{faster_rcnn_forward.16} parent=0 // pred_fallthru
    _
  %p15 = scmp.eq.s32.totalorder 0, 0
  // Predicated region
  $region14: #{faster_rcnn_forward.16} parent=0 // pred_check
    %p16 = pneg %p15
  $region15: #{faster_rcnn_forward.16} parent=0 // pred_check_branch
    %18 = sbr.rel (%p16) target = $region17
  $region16: #{faster_rcnn_forward.16} parent=0 // pred_region
    %vm19 = vcmask 441344
    %20 = vst.msk [vmem:[#allocation2] sm:$0xff] %vm19, 0.0
    %21 = vst.msk [vmem:[#allocation2 + $0x8] sm:$0xff] %vm19, 0.0
  $region17: #{faster_rcnn_forward.16} parent=0 // pred_fallthru
    _
  %v22 = vld [vmem:[#allocation2] sm:$0xff]
  %v23 = vld [vmem:[#allocation2 + $0x8] sm:$0xff]
  %v24 = vld [vmem:[%s0] sm:$0xf]
  %v25 = vld [vmem:[%s0 + $0x4] sm:$0xf]
  %v26 = vld [vmem:[%s1] sm:$0xf]
  %v27 = vld [vmem:[%s1 + $0x4] sm:$0xf]
  %v28 = vld [vmem:[%s1 + $0x8] sm:$0xf]
  %v29 = vld [vmem:[%s1 + $0xc] sm:$0xf]
  %v30 = vld [vmem:[%s1 + $0x10] sm:$0xf]
  %v31 = vld [vmem:[%s1 + $0x14] sm:$0xf]
  %v32 = vld [vmem:[%s1 + $0x18] sm:$0xf]
  %v33 = vld [vmem:[%s1 + $0x1c] sm:$0xf]
  %v36 = vunpack.c.l.b16 %v24
  %v37 = vunpack.c.l.b16 %v25
  %v38 = vpack.c.b16 %v37, %v36
  %v47 = vunpack.c.l.b16 %v26
  %v48 = vunpack.c.l.b16 %v27
  %v49 = vunpack.c.l.b16 %v28
  %v50 = vunpack.c.l.b16 %v29
  %v51 = vunpack.c.l.b16 %v30
  %v52 = vunpack.c.l.b16 %v31
  %v53 = vunpack.c.l.b16 %v32
  %v54 = vunpack.c.l.b16 %v33
  %v55 = vpack.c.b16 %v48, %v47
  %v56 = vpack.c.b16 %v50, %v49
  %v57 = vpack.c.b16 %v52, %v51
  %v58 = vpack.c.b16 %v54, %v53
  %vm63 = vcmask 523264
  %v65 = vsel %vm63, %v38, 0
  %67 = vmatpush.bf16.msra.mxu0 0
  %68 = vmatpush.bf16.msra.mxu0 0
  %69 = vmatpush.bf16.msra.mxu0 0
  %70 = vmatpush.bf16.msra.mxu0 0
  %71 = vmatpush.bf16.msra.mxu0 %v58
  %72 = vmatpush.bf16.msra.mxu0 %v57
  %73 = vmatpush.bf16.msra.mxu0 %v56
  %74 = vmatpush.bf16.msra.mxu0 %v55
  %75 = vmatmul.bf16.gmra.mxu0 %v65
  %v76 = vpop.f32.mrf.mxu0
  %v77 = vadd.f32 0.0, %v76
  %v78 = vpop.f32.mrf.mxu0
  %v79 = vadd.f32 0.0, %v78
  %80 = vdwg.mxu0
  %v81 = vadd.f32 %v22, %v77
  %v82 = vadd.f32 %v23, %v79
  %vm83 = vcmask 441344
  %84 = vst.msk [vmem:[#allocation2] sm:$0xff] %vm83, %v81
  %85 = vst.msk [vmem:[#allocation2 + $0x8] sm:$0xff] %vm83, %v82
  // Predicated region
  $region18: #{faster_rcnn_forward.16} parent=0 // pred_check
    %p86 = pneg %p15
  $region19: #{faster_rcnn_forward.16} parent=0 // pred_check_branch
    %88 = sbr.rel (%p86) target = $region21
  $region20: #{faster_rcnn_forward.16} parent=0 // pred_region
    %v89 = vld [vmem:[#allocation2] sm:$0xff]
    %v90 = vld [vmem:[#allocation2 + $0x8] sm:$0xff]
    %v91 = vld [vmem:[%s2] sm:$0x1]
    %v93 = vperm.slane %v91, 0
    %v95 = vadd.f32 %v89, %v93
    %v96 = vadd.f32 %v90, %v93
    %97 = vst.msk [vmem:[%s3] sm:$0xff] %vm83, %v95
    %98 = vst.msk [vmem:[%s3 + $0x8] sm:$0xff] %vm83, %v96
  $region21: #{faster_rcnn_forward.16} parent=0 // pred_fallthru
    _
  // Predicated region
  $region22: #{faster_rcnn_forward.16} parent=0 // pred_check
    _
  $region23: #{faster_rcnn_forward.16} parent=0 // pred_check_branch
    %100 = sbr.rel (0) target = $region25
  $region24: #{faster_rcnn_forward.16} parent=0 // pred_region
    _
  $region25: #{faster_rcnn_forward.16} parent=0 // pred_fallthru
    _
  // Predicated region
  $region26: #{faster_rcnn_forward.16} parent=0 // pred_check
    _
  $region27: #{faster_rcnn_forward.16} parent=0 // pred_check_branch
    %102 = sbr.rel (0) target = $region29
  $region28: #{faster_rcnn_forward.16} parent=0 // pred_region
    _
  $region29: #{faster_rcnn_forward.16} parent=0 // pred_fallthru
    _

// kernel: faster_rcnn_forward.14
$region0: #{faster_rcnn_forward.14}
  #allocation0 [shape = 'u32[]', space=smem, size = 0x4, offset = 0x4, fixed_abs, tag = 'smem constant byte address 0x4 - core index']
  #allocation1 [shape = 'u32[72,128]{1,0:T(1,128)}', space=vmem, size = 0x9000, scoped, tag = 'internal scratch']
  #allocation2 [shape = 'f32[16,64]{1,0:T(8,128)}', space=vmem, size = 0x2000, scoped, tag = 'scratch operand']
  %s0 = inlined_call_operand.vmem [shape: bf16[16,576], index: 0, kind: input, shape index: {}]
  %s1 = inlined_call_operand.vmem [shape: bf16[576,64], index: 1, kind: input, shape index: {}]
  %s2 = inlined_call_operand.vmem [shape: f32[1,64], index: 2, kind: input, shape index: {}]
  %s3 = inlined_call_operand.vmem [shape: bf16[16,64], index: 3, kind: output, shape index: {}]
  %s4 = sld [smem:[#allocation0]]
  $region30: #{faster_rcnn_forward.14} parent=0
    _
  %s6 = ssub.s32 1, %s4
  %s7 = scalar_select 0, %s6, %s4
  // Predicated region
  $region2: #{faster_rcnn_forward.14} parent=0 // pred_check
    _
  $region3: #{faster_rcnn_forward.14} parent=0 // pred_check_branch
    %9 = sbr.rel (0) target = $region5
  $region4: #{faster_rcnn_forward.14} parent=0 // pred_region
    _
  $region5: #{faster_rcnn_forward.14} parent=0 // pred_fallthru
    _
  // Predicated region
  $region6: #{faster_rcnn_forward.14} parent=0 // pred_check
    _
  $region7: #{faster_rcnn_forward.14} parent=0 // pred_check_branch
    %11 = sbr.rel (0) target = $region9
  $region8: #{faster_rcnn_forward.14} parent=0 // pred_region
    _
  $region9: #{faster_rcnn_forward.14} parent=0 // pred_fallthru
    _
  // Predicated region
  $region10: #{faster_rcnn_forward.14} parent=0 // pred_check
    _
  $region11: #{faster_rcnn_forward.14} parent=0 // pred_check_branch
    %13 = sbr.rel (0) target = $region13
  $region12: #{faster_rcnn_forward.14} parent=0 // pred_region
    _
  $region13: #{faster_rcnn_forward.14} parent=0 // pred_fallthru
    _
  %p15 = scmp.eq.s32.totalorder 0, 0
  // Predicated region
  $region14: #{faster_rcnn_forward.14} parent=0 // pred_check
    %p16 = pneg %p15
  $region15: #{faster_rcnn_forward.14} parent=0 // pred_check_branch
    %18 = sbr.rel (%p16) target = $region17
  $region16: #{faster_rcnn_forward.14} parent=0 // pred_region
    %vm19 = vcmask 523264
    %20 = vst.msk [vmem:[#allocation2] sm:$0xff] %vm19, 0.0
    %21 = vst.msk [vmem:[#allocation2 + $0x8] sm:$0xff] %vm19, 0.0
  $region17: #{faster_rcnn_forward.14} parent=0 // pred_fallthru
    _
  %v22 = vld [vmem:[#allocation2] sm:$0xff]
  %v23 = vld [vmem:[#allocation2 + $0x8] sm:$0xff]
  %v24 = vld [vmem:[%s0] sm:$0xff]
  %v25 = vld [vmem:[%s0 + $0x8] sm:$0xff]
  %v26 = vld [vmem:[%s0 + $0x10] sm:$0xf]
  %v27 = vld [vmem:[%s0 + $0x14] sm:$0xff]
  %v28 = vld [vmem:[%s0 + $0x1c] sm:$0xff]
  %v29 = vld [vmem:[%s0 + $0x24] sm:$0xf]
  %v30 = vld [vmem:[%s1] sm:$0xf]
  %v31 = vld [vmem:[%s1 + $0x4] sm:$0xf]
  %v32 = vld [vmem:[%s1 + $0x8] sm:$0xf]
  %v33 = vld [vmem:[%s1 + $0xc] sm:$0xf]
  %v34 = vld [vmem:[%s1 + $0x10] sm:$0xf]
  %v35 = vld [vmem:[%s1 + $0x14] sm:$0xf]
  %v36 = vld [vmem:[%s1 + $0x18] sm:$0xf]
  %v37 = vld [vmem:[%s1 + $0x1c] sm:$0xf]
  %v38 = vld [vmem:[%s1 + $0x20] sm:$0xf]
  %v39 = vld [vmem:[%s1 + $0x24] sm:$0xf]
  %v40 = vld [vmem:[%s1 + $0x28] sm:$0xf]
  %v41 = vld [vmem:[%s1 + $0x2c] sm:$0xf]
  %v42 = vld [vmem:[%s1 + $0x30] sm:$0xf]
  %v43 = vld [vmem:[%s1 + $0x34] sm:$0xf]
  %v44 = vld [vmem:[%s1 + $0x38] sm:$0xf]
  %v45 = vld [vmem:[%s1 + $0x3c] sm:$0xf]
  %v46 = vld [vmem:[%s1 + $0x40] sm:$0xf]
  %v47 = vld [vmem:[%s1 + $0x44] sm:$0xf]
  %v48 = vld [vmem:[%s1 + $0x48] sm:$0xf]
  %v49 = vld [vmem:[%s1 + $0x4c] sm:$0xf]
  %v50 = vld [vmem:[%s1 + $0x50] sm:$0xf]
  %v51 = vld [vmem:[%s1 + $0x54] sm:$0xf]
  %v52 = vld [vmem:[%s1 + $0x58] sm:$0xf]
  %v53 = vld [vmem:[%s1 + $0x5c] sm:$0xf]
  %v54 = vld [vmem:[%s1 + $0x60] sm:$0xf]
  %v55 = vld [vmem:[%s1 + $0x64] sm:$0xf]
  %v56 = vld [vmem:[%s1 + $0x68] sm:$0xf]
  %v57 = vld [vmem:[%s1 + $0x6c] sm:$0xf]
  %v58 = vld [vmem:[%s1 + $0x70] sm:$0xf]
  %v59 = vld [vmem:[%s1 + $0x74] sm:$0xf]
  %v60 = vld [vmem:[%s1 + $0x78] sm:$0xf]
  %v61 = vld [vmem:[%s1 + $0x7c] sm:$0xf]
  %v62 = vld [vmem:[%s1 + $0x80] sm:$0xf]
  %v63 = vld [vmem:[%s1 + $0x84] sm:$0xf]
  %v64 = vld [vmem:[%s1 + $0x88] sm:$0xf]
  %v65 = vld [vmem:[%s1 + $0x8c] sm:$0xf]
  %v66 = vld [vmem:[%s1 + $0x90] sm:$0xf]
  %v67 = vld [vmem:[%s1 + $0x94] sm:$0xf]
  %v68 = vld [vmem:[%s1 + $0x98] sm:$0xf]
  %v69 = vld [vmem:[%s1 + $0x9c] sm:$0xf]
  %v70 = vld [vmem:[%s1 + $0xa0] sm:$0xf]
  %v71 = vld [vmem:[%s1 + $0xa4] sm:$0xf]
  %v72 = vld [vmem:[%s1 + $0xa8] sm:$0xf]
  %v73 = vld [vmem:[%s1 + $0xac] sm:$0xf]
  %v74 = vld [vmem:[%s1 + $0xb0] sm:$0xf]
  %v75 = vld [vmem:[%s1 + $0xb4] sm:$0xf]
  %v76 = vld [vmem:[%s1 + $0xb8] sm:$0xf]
  %v77 = vld [vmem:[%s1 + $0xbc] sm:$0xf]
  %v78 = vld [vmem:[%s1 + $0xc0] sm:$0xf]
  %v79 = vld [vmem:[%s1 + $0xc4] sm:$0xf]
  %v80 = vld [vmem:[%s1 + $0xc8] sm:$0xf]
  %v81 = vld [vmem:[%s1 + $0xcc] sm:$0xf]
  %v82 = vld [vmem:[%s1 + $0xd0] sm:$0xf]
  %v83 = vld [vmem:[%s1 + $0xd4] sm:$0xf]
  %v84 = vld [vmem:[%s1 + $0xd8] sm:$0xf]
  %v85 = vld [vmem:[%s1 + $0xdc] sm:$0xf]
  %v86 = vld [vmem:[%s1 + $0xe0] sm:$0xf]
  %v87 = vld [vmem:[%s1 + $0xe4] sm:$0xf]
  %v88 = vld [vmem:[%s1 + $0xe8] sm:$0xf]
  %v89 = vld [vmem:[%s1 + $0xec] sm:$0xf]
  %v90 = vld [vmem:[%s1 + $0xf0] sm:$0xf]
  %v91 = vld [vmem:[%s1 + $0xf4] sm:$0xf]
  %v92 = vld [vmem:[%s1 + $0xf8] sm:$0xf]
  %v93 = vld [vmem:[%s1 + $0xfc] sm:$0xf]
  %v94 = vld [vmem:[%s1 + $0x100] sm:$0xf]
  %v95 = vld [vmem:[%s1 + $0x104] sm:$0xf]
  %v96 = vld [vmem:[%s1 + $0x108] sm:$0xf]
  %v97 = vld [vmem:[%s1 + $0x10c] sm:$0xf]
  %v98 = vld [vmem:[%s1 + $0x110] sm:$0xf]
  %v99 = vld [vmem:[%s1 + $0x114] sm:$0xf]
  %v100 = vld [vmem:[%s1 + $0x118] sm:$0xf]
  %v101 = vld [vmem:[%s1 + $0x11c] sm:$0xf]
  %v108 = vunpack.c.l.b16 %v24
  %v109 = vunpack.c.h.b16 %v24
  %v110 = vunpack.c.l.b16 %v25
  %v111 = vunpack.c.h.b16 %v25
  %v112 = vunpack.c.l.b16 %v26
  %v113 = vunpack.c.l.b16 %v27
  %v114 = vunpack.c.h.b16 %v27
  %v115 = vunpack.c.l.b16 %v28
  %v116 = vunpack.c.h.b16 %v28
  %v117 = vunpack.c.l.b16 %v29
  %v118 = vpack.c.b16 %v113, %v108
  %v119 = vpack.c.b16 %v114, %v109
  %v120 = vpack.c.b16 %v115, %v110
  %v121 = vpack.c.b16 %v116, %v111
  %v122 = vpack.c.b16 %v117, %v112
  %v199 = vunpack.c.l.b16 %v30
  %v200 = vunpack.c.l.b16 %v31
  %v201 = vunpack.c.l.b16 %v32
  %v202 = vunpack.c.l.b16 %v33
  %v203 = vunpack.c.l.b16 %v34
  %v204 = vunpack.c.l.b16 %v35
  %v205 = vunpack.c.l.b16 %v36
  %v206 = vunpack.c.l.b16 %v37
  %v207 = vunpack.c.l.b16 %v38
  %v208 = vunpack.c.l.b16 %v39
  %v209 = vunpack.c.l.b16 %v40
  %v210 = vunpack.c.l.b16 %v41
  %v211 = vunpack.c.l.b16 %v42
  %v212 = vunpack.c.l.b16 %v43
  %v213 = vunpack.c.l.b16 %v44
  %v214 = vunpack.c.l.b16 %v45
  %v215 = vunpack.c.l.b16 %v46
  %v216 = vunpack.c.l.b16 %v47
  %v217 = vunpack.c.l.b16 %v48
  %v218 = vunpack.c.l.b16 %v49
  %v219 = vunpack.c.l.b16 %v50
  %v220 = vunpack.c.l.b16 %v51
  %v221 = vunpack.c.l.b16 %v52
  %v222 = vunpack.c.l.b16 %v53
  %v223 = vunpack.c.l.b16 %v54
  %v224 = vunpack.c.l.b16 %v55
  %v225 = vunpack.c.l.b16 %v56
  %v226 = vunpack.c.l.b16 %v57
  %v227 = vunpack.c.l.b16 %v58
  %v228 = vunpack.c.l.b16 %v59
  %v229 = vunpack.c.l.b16 %v60
  %v230 = vunpack.c.l.b16 %v61
  %v231 = vunpack.c.l.b16 %v62
  %v232 = vunpack.c.l.b16 %v63
  %v233 = vunpack.c.l.b16 %v64
  %v234 = vunpack.c.l.b16 %v65
  %v235 = vunpack.c.l.b16 %v66
  %v236 = vunpack.c.l.b16 %v67
  %v237 = vunpack.c.l.b16 %v68
  %v238 = vunpack.c.l.b16 %v69
  %v239 = vunpack.c.l.b16 %v70
  %v240 = vunpack.c.l.b16 %v71
  %v241 = vunpack.c.l.b16 %v72
  %v242 = vunpack.c.l.b16 %v73
  %v243 = vunpack.c.l.b16 %v74
  %v244 = vunpack.c.l.b16 %v75
  %v245 = vunpack.c.l.b16 %v76
  %v246 = vunpack.c.l.b16 %v77
  %v247 = vunpack.c.l.b16 %v78
  %v248 = vunpack.c.l.b16 %v79
  %v249 = vunpack.c.l.b16 %v80
  %v250 = vunpack.c.l.b16 %v81
  %v251 = vunpack.c.l.b16 %v82
  %v252 = vunpack.c.l.b16 %v83
  %v253 = vunpack.c.l.b16 %v84
  %v254 = vunpack.c.l.b16 %v85
  %v255 = vunpack.c.l.b16 %v86
  %v256 = vunpack.c.l.b16 %v87
  %v257 = vunpack.c.l.b16 %v88
  %v258 = vunpack.c.l.b16 %v89
  %v259 = vunpack.c.l.b16 %v90
  %v260 = vunpack.c.l.b16 %v91
  %v261 = vunpack.c.l.b16 %v92
  %v262 = vunpack.c.l.b16 %v93
  %v263 = vunpack.c.l.b16 %v94
  %v264 = vunpack.c.l.b16 %v95
  %v265 = vunpack.c.l.b16 %v96
  %v266 = vunpack.c.l.b16 %v97
  %v267 = vunpack.c.l.b16 %v98
  %v268 = vunpack.c.l.b16 %v99
  %v269 = vunpack.c.l.b16 %v100
  %v270 = vunpack.c.l.b16 %v101
  %v271 = vpack.c.b16 %v200, %v199
  %v272 = vpack.c.b16 %v202, %v201
  %v273 = vpack.c.b16 %v204, %v203
  %v274 = vpack.c.b16 %v206, %v205
  %v275 = vpack.c.b16 %v208, %v207
  %v276 = vpack.c.b16 %v210, %v209
  %v277 = vpack.c.b16 %v212, %v211
  %v278 = vpack.c.b16 %v214, %v213
  %v279 = vpack.c.b16 %v216, %v215
  %v280 = vpack.c.b16 %v218, %v217
  %v281 = vpack.c.b16 %v220, %v219
  %v282 = vpack.c.b16 %v222, %v221
  %v283 = vpack.c.b16 %v224, %v223
  %v284 = vpack.c.b16 %v226, %v225
  %v285 = vpack.c.b16 %v228, %v227
  %v286 = vpack.c.b16 %v230, %v229
  %v287 = vpack.c.b16 %v232, %v231
  %v288 = vpack.c.b16 %v234, %v233
  %v289 = vpack.c.b16 %v236, %v235
  %v290 = vpack.c.b16 %v238, %v237
  %v291 = vpack.c.b16 %v240, %v239
  %v292 = vpack.c.b16 %v242, %v241
  %v293 = vpack.c.b16 %v244, %v243
  %v294 = vpack.c.b16 %v246, %v245
  %v295 = vpack.c.b16 %v248, %v247
  %v296 = vpack.c.b16 %v250, %v249
  %v297 = vpack.c.b16 %v252, %v251
  %v298 = vpack.c.b16 %v254, %v253
  %v299 = vpack.c.b16 %v256, %v255
  %v300 = vpack.c.b16 %v258, %v257
  %v301 = vpack.c.b16 %v260, %v259
  %v302 = vpack.c.b16 %v262, %v261
  %v303 = vpack.c.b16 %v264, %v263
  %v304 = vpack.c.b16 %v266, %v265
  %v305 = vpack.c.b16 %v268, %v267
  %v306 = vpack.c.b16 %v270, %v269
  %vm343 = vcmask 523264
  %v345 = vsel %vm343, %v122, 0
  %347 = vmatpush.bf16.msra.mxu0 %v278
  %348 = vmatpush.bf16.msra.mxu0 %v277
  %349 = vmatpush.bf16.msra.mxu0 %v276
  %350 = vmatpush.bf16.msra.mxu0 %v275
  %351 = vmatpush.bf16.msra.mxu0 %v274
  %352 = vmatpush.bf16.msra.mxu0 %v273
  %353 = vmatpush.bf16.msra.mxu0 %v272
  %354 = vmatpush.bf16.msra.mxu0 %v271
  %355 = vmatmul.bf16.gmra.mxu0 %v118
  %v356 = vpop.f32.mrf.mxu0
  %v357 = vadd.f32 0.0, %v356
  %v358 = vpop.f32.mrf.mxu0
  %v359 = vadd.f32 0.0, %v358
  %360 = vdwg.mxu0
  %361 = vmatpush.bf16.msra.mxu0 %v286
  %362 = vmatpush.bf16.msra.mxu0 %v285
  %363 = vmatpush.bf16.msra.mxu0 %v284
  %364 = vmatpush.bf16.msra.mxu0 %v283
  %365 = vmatpush.bf16.msra.mxu0 %v282
  %366 = vmatpush.bf16.msra.mxu0 %v281
  %367 = vmatpush.bf16.msra.mxu0 %v280
  %368 = vmatpush.bf16.msra.mxu0 %v279
  %369 = vmatmul.bf16.gmra.mxu0 %v119
  %v370 = vpop.f32.mrf.mxu0
  %v371 = vadd.f32 %v357, %v370
  %v372 = vpop.f32.mrf.mxu0
  %v373 = vadd.f32 %v359, %v372
  %374 = vdwg.mxu0
  %375 = vmatpush.bf16.msra.mxu0 %v294
  %376 = vmatpush.bf16.msra.mxu0 %v293
  %377 = vmatpush.bf16.msra.mxu0 %v292
  %378 = vmatpush.bf16.msra.mxu0 %v291
  %379 = vmatpush.bf16.msra.mxu0 %v290
  %380 = vmatpush.bf16.msra.mxu0 %v289
  %381 = vmatpush.bf16.msra.mxu0 %v288
  %382 = vmatpush.bf16.msra.mxu0 %v287
  %383 = vmatmul.bf16.gmra.mxu0 %v120
  %v384 = vpop.f32.mrf.mxu0
  %v385 = vadd.f32 %v371, %v384
  %v386 = vpop.f32.mrf.mxu0
  %v387 = vadd.f32 %v373, %v386
  %388 = vdwg.mxu0
  %389 = vmatpush.bf16.msra.mxu0 %v302
  %390 = vmatpush.bf16.msra.mxu0 %v301
  %391 = vmatpush.bf16.msra.mxu0 %v300
  %392 = vmatpush.bf16.msra.mxu0 %v299
  %393 = vmatpush.bf16.msra.mxu0 %v298
  %394 = vmatpush.bf16.msra.mxu0 %v297
  %395 = vmatpush.bf16.msra.mxu0 %v296
  %396 = vmatpush.bf16.msra.mxu0 %v295
  %397 = vmatmul.bf16.gmra.mxu0 %v121
  %v398 = vpop.f32.mrf.mxu0
  %v399 = vadd.f32 %v385, %v398
  %v400 = vpop.f32.mrf.mxu0
  %v401 = vadd.f32 %v387, %v400
  %402 = vdwg.mxu0
  %403 = vmatpush.bf16.msra.mxu0 0
  %404 = vmatpush.bf16.msra.mxu0 0
  %405 = vmatpush.bf16.msra.mxu0 0
  %406 = vmatpush.bf16.msra.mxu0 0
  %407 = vmatpush.bf16.msra.mxu0 %v306
  %408 = vmatpush.bf16.msra.mxu0 %v305
  %409 = vmatpush.bf16.msra.mxu0 %v304
  %410 = vmatpush.bf16.msra.mxu0 %v303
  %411 = vmatmul.bf16.gmra.mxu0 %v345
  %v412 = vpop.f32.mrf.mxu0
  %v413 = vadd.f32 %v399, %v412
  %v414 = vpop.f32.mrf.mxu0
  %v415 = vadd.f32 %v401, %v414
  %416 = vdwg.mxu0
  %v417 = vadd.f32 %v22, %v413
  %v418 = vadd.f32 %v23, %v415
  %419 = vst.msk [vmem:[#allocation2] sm:$0xff] %vm343, %v417
  %420 = vst.msk [vmem:[#allocation2 + $0x8] sm:$0xff] %vm343, %v418
  // Predicated region
  $region18: #{faster_rcnn_forward.14} parent=0 // pred_check
    %p421 = pneg %p15
  $region19: #{faster_rcnn_forward.14} parent=0 // pred_check_branch
    %423 = sbr.rel (%p421) target = $region21
  $region20: #{faster_rcnn_forward.14} parent=0 // pred_region
    %v424 = vld [vmem:[#allocation2] sm:$0xff]
    %v425 = vld [vmem:[#allocation2 + $0x8] sm:$0xff]
    %v426 = vld [vmem:[%s2] sm:$0x1]
    %v428 = vperm.slane %v426, 0
    %v430 = vadd.f32 %v424, %v428
    %v431 = vadd.f32 %v425, %v428
    %v432 = vmax.f32 %v430, 0.0
    %v433 = vmax.f32 %v431, 0.0
    %v434 = vpack.c.bf16 %v432, %v432
    %v435 = vpack.c.bf16 %v433, %v433
    %vm436 = vcmask 519168
    %437 = vst.msk [vmem:[%s3] sm:$0xf] %vm436, %v434
    %438 = vst.msk [vmem:[%s3 + $0x4] sm:$0xf] %vm436, %v435
  $region21: #{faster_rcnn_forward.14} parent=0 // pred_fallthru
    _
  // Predicated region
  $region22: #{faster_rcnn_forward.14} parent=0 // pred_check
    _
  $region23: #{faster_rcnn_forward.14} parent=0 // pred_check_branch
    %440 = sbr.rel (0) target = $region25
  $region24: #{faster_rcnn_forward.14} parent=0 // pred_region
    _
  $region25: #{faster_rcnn_forward.14} parent=0 // pred_fallthru
    _
  // Predicated region
  $region26: #{faster_rcnn_forward.14} parent=0 // pred_check
    _
  $region27: #{faster_rcnn_forward.14} parent=0 // pred_check_branch
    %442 = sbr.rel (0) target = $region29
  $region28: #{faster_rcnn_forward.14} parent=0 // pred_region
    _
  $region29: #{faster_rcnn_forward.14} parent=0 // pred_fallthru
    _

// kernel: custom-call
$region0: #{custom-call}
  %s0 = inlined_call_operand.vmem [shape: pred[64], index: 0, kind: output, shape index: {}]

// kernel: faster_rcnn_forward.18
$region0: #{faster_rcnn_forward.18}
  #allocation0 [shape = 'u32[]', space=smem, size = 0x4, offset = 0x4, fixed_abs, tag = 'smem constant byte address 0x4 - core index']
  #allocation1 [shape = 'u32[72,128]{1,0:T(1,128)}', space=vmem, size = 0x9000, scoped, tag = 'internal scratch']
  #allocation2 [shape = 'f32[16,256]{1,0:T(8,128)}', space=vmem, size = 0x4000, scoped, tag = 'scratch operand']
  %s0 = inlined_call_operand.vmem [shape: bf16[16,256], index: 0, kind: input, shape index: {}]
  %s1 = inlined_call_operand.vmem [shape: bf16[256,256], index: 1, kind: input, shape index: {}]
  %s2 = inlined_call_operand.vmem [shape: f32[1,256], index: 2, kind: input, shape index: {}]
  %s3 = inlined_call_operand.vmem [shape: bf16[16,256], index: 3, kind: output, shape index: {}]
  %s4 = sld [smem:[#allocation0]]
  $region30: #{faster_rcnn_forward.18} parent=0
    _
  %s6 = ssub.s32 1, %s4
  %s7 = scalar_select 0, %s6, %s4
  // Predicated region
  $region2: #{faster_rcnn_forward.18} parent=0 // pred_check
    _
  $region3: #{faster_rcnn_forward.18} parent=0 // pred_check_branch
    %9 = sbr.rel (0) target = $region5
  $region4: #{faster_rcnn_forward.18} parent=0 // pred_region
    _
  $region5: #{faster_rcnn_forward.18} parent=0 // pred_fallthru
    _
  // Predicated region
  $region6: #{faster_rcnn_forward.18} parent=0 // pred_check
    _
  $region7: #{faster_rcnn_forward.18} parent=0 // pred_check_branch
    %11 = sbr.rel (0) target = $region9
  $region8: #{faster_rcnn_forward.18} parent=0 // pred_region
    _
  $region9: #{faster_rcnn_forward.18} parent=0 // pred_fallthru
    _
  // Predicated region
  $region10: #{faster_rcnn_forward.18} parent=0 // pred_check
    _
  $region11: #{faster_rcnn_forward.18} parent=0 // pred_check_branch
    %13 = sbr.rel (0) target = $region13
  $region12: #{faster_rcnn_forward.18} parent=0 // pred_region
    _
  $region13: #{faster_rcnn_forward.18} parent=0 // pred_fallthru
    _
  %p14 = scmp.eq.s32.totalorder 0, 0
  // Predicated region
  $region14: #{faster_rcnn_forward.18} parent=0 // pred_check
    %p15 = pneg %p14
  $region15: #{faster_rcnn_forward.18} parent=0 // pred_check_branch
    %17 = sbr.rel (%p15) target = $region17
  $region16: #{faster_rcnn_forward.18} parent=0 // pred_region
    %18 = vst [vmem:[#allocation2] sm:$0xff] 0.0
    %19 = vst [vmem:[#allocation2 + $0x8] sm:$0xff] 0.0
    %20 = vst [vmem:[#allocation2 + $0x10] sm:$0xff] 0.0
    %21 = vst [vmem:[#allocation2 + $0x18] sm:$0xff] 0.0
  $region17: #{faster_rcnn_forward.18} parent=0 // pred_fallthru
    _
  %v22 = vld [vmem:[#allocation2] sm:$0xff]
  %v23 = vld [vmem:[#allocation2 + $0x8] sm:$0xff]
  %v24 = vld [vmem:[#allocation2 + $0x10] sm:$0xff]
  %v25 = vld [vmem:[#allocation2 + $0x18] sm:$0xff]
  %v26 = vld [vmem:[%s0] sm:$0xff]
  %v27 = vld [vmem:[%s0 + $0x8] sm:$0xff]
  %v28 = vld [vmem:[%s1] sm:$0xff]
  %v29 = vld [vmem:[%s1 + $0x8] sm:$0xff]
  %v30 = vld [vmem:[%s1 + $0x10] sm:$0xff]
  %v31 = vld [vmem:[%s1 + $0x18] sm:$0xff]
  %v32 = vld [vmem:[%s1 + $0x20] sm:$0xff]
  %v33 = vld [vmem:[%s1 + $0x28] sm:$0xff]
  %v34 = vld [vmem:[%s1 + $0x30] sm:$0xff]
  %v35 = vld [vmem:[%s1 + $0x38] sm:$0xff]
  %v36 = vld [vmem:[%s1 + $0x40] sm:$0xff]
  %v37 = vld [vmem:[%s1 + $0x48] sm:$0xff]
  %v38 = vld [vmem:[%s1 + $0x50] sm:$0xff]
  %v39 = vld [vmem:[%s1 + $0x58] sm:$0xff]
  %v40 = vld [vmem:[%s1 + $0x60] sm:$0xff]
  %v41 = vld [vmem:[%s1 + $0x68] sm:$0xff]
  %v42 = vld [vmem:[%s1 + $0x70] sm:$0xff]
  %v43 = vld [vmem:[%s1 + $0x78] sm:$0xff]
  %v44 = vld [vmem:[%s1 + $0x80] sm:$0xff]
  %v45 = vld [vmem:[%s1 + $0x88] sm:$0xff]
  %v46 = vld [vmem:[%s1 + $0x90] sm:$0xff]
  %v47 = vld [vmem:[%s1 + $0x98] sm:$0xff]
  %v48 = vld [vmem:[%s1 + $0xa0] sm:$0xff]
  %v49 = vld [vmem:[%s1 + $0xa8] sm:$0xff]
  %v50 = vld [vmem:[%s1 + $0xb0] sm:$0xff]
  %v51 = vld [vmem:[%s1 + $0xb8] sm:$0xff]
  %v52 = vld [vmem:[%s1 + $0xc0] sm:$0xff]
  %v53 = vld [vmem:[%s1 + $0xc8] sm:$0xff]
  %v54 = vld [vmem:[%s1 + $0xd0] sm:$0xff]
  %v55 = vld [vmem:[%s1 + $0xd8] sm:$0xff]
  %v56 = vld [vmem:[%s1 + $0xe0] sm:$0xff]
  %v57 = vld [vmem:[%s1 + $0xe8] sm:$0xff]
  %v58 = vld [vmem:[%s1 + $0xf0] sm:$0xff]
  %v59 = vld [vmem:[%s1 + $0xf8] sm:$0xff]
  %v62 = vunpack.c.l.b16 %v26
  %v63 = vunpack.c.h.b16 %v26
  %v64 = vunpack.c.l.b16 %v27
  %v65 = vunpack.c.h.b16 %v27
  %v66 = vpack.c.b16 %v64, %v62
  %v67 = vpack.c.b16 %v65, %v63
  %v102 = vunpack.c.l.b16 %v28
  %v103 = vunpack.c.h.b16 %v28
  %v104 = vunpack.c.l.b16 %v29
  %v105 = vunpack.c.h.b16 %v29
  %v106 = vunpack.c.l.b16 %v30
  %v107 = vunpack.c.h.b16 %v30
  %v108 = vunpack.c.l.b16 %v31
  %v109 = vunpack.c.h.b16 %v31
  %v110 = vunpack.c.l.b16 %v32
  %v111 = vunpack.c.h.b16 %v32
  %v112 = vunpack.c.l.b16 %v33
  %v113 = vunpack.c.h.b16 %v33
  %v114 = vunpack.c.l.b16 %v34
  %v115 = vunpack.c.h.b16 %v34
  %v116 = vunpack.c.l.b16 %v35
  %v117 = vunpack.c.h.b16 %v35
  %v118 = vunpack.c.l.b16 %v36
  %v119 = vunpack.c.h.b16 %v36
  %v120 = vunpack.c.l.b16 %v37
  %v121 = vunpack.c.h.b16 %v37
  %v122 = vunpack.c.l.b16 %v38
  %v123 = vunpack.c.h.b16 %v38
  %v124 = vunpack.c.l.b16 %v39
  %v125 = vunpack.c.h.b16 %v39
  %v126 = vunpack.c.l.b16 %v40
  %v127 = vunpack.c.h.b16 %v40
  %v128 = vunpack.c.l.b16 %v41
  %v129 = vunpack.c.h.b16 %v41
  %v130 = vunpack.c.l.b16 %v42
  %v131 = vunpack.c.h.b16 %v42
  %v132 = vunpack.c.l.b16 %v43
  %v133 = vunpack.c.h.b16 %v43
  %v134 = vunpack.c.l.b16 %v44
  %v135 = vunpack.c.h.b16 %v44
  %v136 = vunpack.c.l.b16 %v45
  %v137 = vunpack.c.h.b16 %v45
  %v138 = vunpack.c.l.b16 %v46
  %v139 = vunpack.c.h.b16 %v46
  %v140 = vunpack.c.l.b16 %v47
  %v141 = vunpack.c.h.b16 %v47
  %v142 = vunpack.c.l.b16 %v48
  %v143 = vunpack.c.h.b16 %v48
  %v144 = vunpack.c.l.b16 %v49
  %v145 = vunpack.c.h.b16 %v49
  %v146 = vunpack.c.l.b16 %v50
  %v147 = vunpack.c.h.b16 %v50
  %v148 = vunpack.c.l.b16 %v51
  %v149 = vunpack.c.h.b16 %v51
  %v150 = vunpack.c.l.b16 %v52
  %v151 = vunpack.c.h.b16 %v52
  %v152 = vunpack.c.l.b16 %v53
  %v153 = vunpack.c.h.b16 %v53
  %v154 = vunpack.c.l.b16 %v54
  %v155 = vunpack.c.h.b16 %v54
  %v156 = vunpack.c.l.b16 %v55
  %v157 = vunpack.c.h.b16 %v55
  %v158 = vunpack.c.l.b16 %v56
  %v159 = vunpack.c.h.b16 %v56
  %v160 = vunpack.c.l.b16 %v57
  %v161 = vunpack.c.h.b16 %v57
  %v162 = vunpack.c.l.b16 %v58
  %v163 = vunpack.c.h.b16 %v58
  %v164 = vunpack.c.l.b16 %v59
  %v165 = vunpack.c.h.b16 %v59
  %v166 = vpack.c.b16 %v104, %v102
  %v167 = vpack.c.b16 %v105, %v103
  %v168 = vpack.c.b16 %v108, %v106
  %v169 = vpack.c.b16 %v109, %v107
  %v170 = vpack.c.b16 %v112, %v110
  %v171 = vpack.c.b16 %v113, %v111
  %v172 = vpack.c.b16 %v116, %v114
  %v173 = vpack.c.b16 %v117, %v115
  %v174 = vpack.c.b16 %v120, %v118
  %v175 = vpack.c.b16 %v121, %v119
  %v176 = vpack.c.b16 %v124, %v122
  %v177 = vpack.c.b16 %v125, %v123
  %v178 = vpack.c.b16 %v128, %v126
  %v179 = vpack.c.b16 %v129, %v127
  %v180 = vpack.c.b16 %v132, %v130
  %v181 = vpack.c.b16 %v133, %v131
  %v182 = vpack.c.b16 %v136, %v134
  %v183 = vpack.c.b16 %v137, %v135
  %v184 = vpack.c.b16 %v140, %v138
  %v185 = vpack.c.b16 %v141, %v139
  %v186 = vpack.c.b16 %v144, %v142
  %v187 = vpack.c.b16 %v145, %v143
  %v188 = vpack.c.b16 %v148, %v146
  %v189 = vpack.c.b16 %v149, %v147
  %v190 = vpack.c.b16 %v152, %v150
  %v191 = vpack.c.b16 %v153, %v151
  %v192 = vpack.c.b16 %v156, %v154
  %v193 = vpack.c.b16 %v157, %v155
  %v194 = vpack.c.b16 %v160, %v158
  %v195 = vpack.c.b16 %v161, %v159
  %v196 = vpack.c.b16 %v164, %v162
  %v197 = vpack.c.b16 %v165, %v163
  %230 = vmatpush.bf16.msra.mxu0 %v180
  %231 = vmatpush.bf16.msra.mxu0 %v178
  %232 = vmatpush.bf16.msra.mxu0 %v176
  %233 = vmatpush.bf16.msra.mxu0 %v174
  %234 = vmatpush.bf16.msra.mxu0 %v172
  %235 = vmatpush.bf16.msra.mxu0 %v170
  %236 = vmatpush.bf16.msra.mxu0 %v168
  %237 = vmatpush.bf16.msra.mxu0 %v166
  %238 = vmatmul.bf16.gmra.mxu0 %v66
  %v239 = vpop.f32.mrf.mxu0
  %v240 = vadd.f32 0.0, %v239
  %v241 = vpop.f32.mrf.mxu0
  %v242 = vadd.f32 0.0, %v241
  %243 = vdwg.mxu0
  %244 = vmatpush.bf16.msra.mxu0 %v196
  %245 = vmatpush.bf16.msra.mxu0 %v194
  %246 = vmatpush.bf16.msra.mxu0 %v192
  %247 = vmatpush.bf16.msra.mxu0 %v190
  %248 = vmatpush.bf16.msra.mxu0 %v188
  %249 = vmatpush.bf16.msra.mxu0 %v186
  %250 = vmatpush.bf16.msra.mxu0 %v184
  %251 = vmatpush.bf16.msra.mxu0 %v182
  %252 = vmatmul.bf16.gmra.mxu0 %v67
  %v253 = vpop.f32.mrf.mxu0
  %v254 = vadd.f32 %v240, %v253
  %v255 = vpop.f32.mrf.mxu0
  %v256 = vadd.f32 %v242, %v255
  %257 = vdwg.mxu0
  %258 = vmatpush.bf16.msra.mxu0 %v181
  %259 = vmatpush.bf16.msra.mxu0 %v179
  %260 = vmatpush.bf16.msra.mxu0 %v177
  %261 = vmatpush.bf16.msra.mxu0 %v175
  %262 = vmatpush.bf16.msra.mxu0 %v173
  %263 = vmatpush.bf16.msra.mxu0 %v171
  %264 = vmatpush.bf16.msra.mxu0 %v169
  %265 = vmatpush.bf16.msra.mxu0 %v167
  %266 = vmatmul.bf16.gmra.mxu0 %v66
  %v267 = vpop.f32.mrf.mxu0
  %v268 = vadd.f32 0.0, %v267
  %v269 = vpop.f32.mrf.mxu0
  %v270 = vadd.f32 0.0, %v269
  %271 = vdwg.mxu0
  %272 = vmatpush.bf16.msra.mxu0 %v197
  %273 = vmatpush.bf16.msra.mxu0 %v195
  %274 = vmatpush.bf16.msra.mxu0 %v193
  %275 = vmatpush.bf16.msra.mxu0 %v191
  %276 = vmatpush.bf16.msra.mxu0 %v189
  %277 = vmatpush.bf16.msra.mxu0 %v187
  %278 = vmatpush.bf16.msra.mxu0 %v185
  %279 = vmatpush.bf16.msra.mxu0 %v183
  %280 = vmatmul.bf16.gmra.mxu0 %v67
  %v281 = vpop.f32.mrf.mxu0
  %v282 = vadd.f32 %v268, %v281
  %v283 = vpop.f32.mrf.mxu0
  %v284 = vadd.f32 %v270, %v283
  %285 = vdwg.mxu0
  %v286 = vadd.f32 %v22, %v254
  %v287 = vadd.f32 %v23, %v282
  %v288 = vadd.f32 %v24, %v256
  %v289 = vadd.f32 %v25, %v284
  %290 = vst [vmem:[#allocation2] sm:$0xff] %v286
  %291 = vst [vmem:[#allocation2 + $0x8] sm:$0xff] %v287
  %292 = vst [vmem:[#allocation2 + $0x10] sm:$0xff] %v288
  %293 = vst [vmem:[#allocation2 + $0x18] sm:$0xff] %v289
  // Predicated region
  $region18: #{faster_rcnn_forward.18} parent=0 // pred_check
    %p294 = pneg %p14
  $region19: #{faster_rcnn_forward.18} parent=0 // pred_check_branch
    %296 = sbr.rel (%p294) target = $region21
  $region20: #{faster_rcnn_forward.18} parent=0 // pred_region
    %v297 = vld [vmem:[#allocation2] sm:$0xff]
    %v298 = vld [vmem:[#allocation2 + $0x8] sm:$0xff]
    %v299 = vld [vmem:[#allocation2 + $0x10] sm:$0xff]
    %v300 = vld [vmem:[#allocation2 + $0x18] sm:$0xff]
    %v301 = vld [vmem:[%s2] sm:$0x3]
    %v303 = vperm.slane %v301, 0
    %v304 = vperm.slane %v301, 1
    %v307 = vadd.f32 %v297, %v303
    %v308 = vadd.f32 %v298, %v304
    %v309 = vadd.f32 %v299, %v303
    %v310 = vadd.f32 %v300, %v304
    %v311 = vmax.f32 %v307, 0.0
    %v312 = vmax.f32 %v308, 0.0
    %v313 = vmax.f32 %v309, 0.0
    %v314 = vmax.f32 %v310, 0.0
    %v315 = vpack.c.bf16 %v312, %v311
    %v316 = vpack.c.bf16 %v314, %v313
    %317 = vst [vmem:[%s3] sm:$0xff] %v315
    %318 = vst [vmem:[%s3 + $0x8] sm:$0xff] %v316
  $region21: #{faster_rcnn_forward.18} parent=0 // pred_fallthru
    _
  // Predicated region
  $region22: #{faster_rcnn_forward.18} parent=0 // pred_check
    _
  $region23: #{faster_rcnn_forward.18} parent=0 // pred_check_branch
    %320 = sbr.rel (0) target = $region25
  $region24: #{faster_rcnn_forward.18} parent=0 // pred_region
    _
  $region25: #{faster_rcnn_forward.18} parent=0 // pred_fallthru
    _
  // Predicated region
  $region26: #{faster_rcnn_forward.18} parent=0 // pred_check
    _
  $region27: #{faster_rcnn_forward.18} parent=0 // pred_check_branch
    %322 = sbr.rel (0) target = $region29
  $region28: #{faster_rcnn_forward.18} parent=0 // pred_region
    _
  $region29: #{faster_rcnn_forward.18} parent=0 // pred_fallthru
    _

// kernel: faster_rcnn_forward.19
$region0: #{faster_rcnn_forward.19}
  #allocation0 [shape = 'u32[]', space=smem, size = 0x4, offset = 0x4, fixed_abs, tag = 'smem constant byte address 0x4 - core index']
  #allocation1 [shape = 'u32[72,128]{1,0:T(1,128)}', space=vmem, size = 0x9000, scoped, tag = 'internal scratch']
  #allocation2 [shape = 'f32[16,20]{1,0:T(8,128)}', space=vmem, size = 0x2000, scoped, tag = 'scratch operand']
  %s0 = inlined_call_operand.vmem [shape: bf16[16,256], index: 0, kind: input, shape index: {}]
  %s1 = inlined_call_operand.vmem [shape: bf16[256,20], index: 1, kind: input, shape index: {}]
  %s2 = inlined_call_operand.vmem [shape: f32[1,20], index: 2, kind: input, shape index: {}]
  %s3 = inlined_call_operand.vmem [shape: f32[16,20], index: 3, kind: output, shape index: {}]
  %s4 = sld [smem:[#allocation0]]
  $region30: #{faster_rcnn_forward.19} parent=0
    _
  %s6 = ssub.s32 1, %s4
  %s7 = scalar_select 0, %s6, %s4
  // Predicated region
  $region2: #{faster_rcnn_forward.19} parent=0 // pred_check
    _
  $region3: #{faster_rcnn_forward.19} parent=0 // pred_check_branch
    %9 = sbr.rel (0) target = $region5
  $region4: #{faster_rcnn_forward.19} parent=0 // pred_region
    _
  $region5: #{faster_rcnn_forward.19} parent=0 // pred_fallthru
    _
  // Predicated region
  $region6: #{faster_rcnn_forward.19} parent=0 // pred_check
    _
  $region7: #{faster_rcnn_forward.19} parent=0 // pred_check_branch
    %11 = sbr.rel (0) target = $region9
  $region8: #{faster_rcnn_forward.19} parent=0 // pred_region
    _
  $region9: #{faster_rcnn_forward.19} parent=0 // pred_fallthru
    _
  // Predicated region
  $region10: #{faster_rcnn_forward.19} parent=0 // pred_check
    _
  $region11: #{faster_rcnn_forward.19} parent=0 // pred_check_branch
    %13 = sbr.rel (0) target = $region13
  $region12: #{faster_rcnn_forward.19} parent=0 // pred_region
    _
  $region13: #{faster_rcnn_forward.19} parent=0 // pred_fallthru
    _
  %p14 = scmp.eq.s32.totalorder 0, 0
  // Predicated region
  $region14: #{faster_rcnn_forward.19} parent=0 // pred_check
    %p15 = pneg %p14
  $region15: #{faster_rcnn_forward.19} parent=0 // pred_check_branch
    %17 = sbr.rel (%p15) target = $region17
  $region16: #{faster_rcnn_forward.19} parent=0 // pred_region
    %vm18 = vcmask 162816
    %19 = vst.msk [vmem:[#allocation2] sm:$0xff] %vm18, 0.0
    %20 = vst.msk [vmem:[#allocation2 + $0x8] sm:$0xff] %vm18, 0.0
  $region17: #{faster_rcnn_forward.19} parent=0 // pred_fallthru
    _
  %v21 = vld [vmem:[#allocation2] sm:$0xff]
  %v22 = vld [vmem:[#allocation2 + $0x8] sm:$0xff]
  %v23 = vld [vmem:[%s0] sm:$0xff]
  %v24 = vld [vmem:[%s0 + $0x8] sm:$0xff]
  %v25 = vld [vmem:[%s1] sm:$0xf]
  %v26 = vld [vmem:[%s1 + $0x4] sm:$0xf]
  %v27 = vld [vmem:[%s1 + $0x8] sm:$0xf]
  %v28 = vld [vmem:[%s1 + $0xc] sm:$0xf]
  %v29 = vld [vmem:[%s1 + $0x10] sm:$0xf]
  %v30 = vld [vmem:[%s1 + $0x14] sm:$0xf]
  %v31 = vld [vmem:[%s1 + $0x18] sm:$0xf]
  %v32 = vld [vmem:[%s1 + $0x1c] sm:$0xf]
  %v33 = vld [vmem:[%s1 + $0x20] sm:$0xf]
  %v34 = vld [vmem:[%s1 + $0x24] sm:$0xf]
  %v35 = vld [vmem:[%s1 + $0x28] sm:$0xf]
  %v36 = vld [vmem:[%s1 + $0x2c] sm:$0xf]
  %v37 = vld [vmem:[%s1 + $0x30] sm:$0xf]
  %v38 = vld [vmem:[%s1 + $0x34] sm:$0xf]
  %v39 = vld [vmem:[%s1 + $0x38] sm:$0xf]
  %v40 = vld [vmem:[%s1 + $0x3c] sm:$0xf]
  %v41 = vld [vmem:[%s1 + $0x40] sm:$0xf]
  %v42 = vld [vmem:[%s1 + $0x44] sm:$0xf]
  %v43 = vld [vmem:[%s1 + $0x48] sm:$0xf]
  %v44 = vld [vmem:[%s1 + $0x4c] sm:$0xf]
  %v45 = vld [vmem:[%s1 + $0x50] sm:$0xf]
  %v46 = vld [vmem:[%s1 + $0x54] sm:$0xf]
  %v47 = vld [vmem:[%s1 + $0x58] sm:$0xf]
  %v48 = vld [vmem:[%s1 + $0x5c] sm:$0xf]
  %v49 = vld [vmem:[%s1 + $0x60] sm:$0xf]
  %v50 = vld [vmem:[%s1 + $0x64] sm:$0xf]
  %v51 = vld [vmem:[%s1 + $0x68] sm:$0xf]
  %v52 = vld [vmem:[%s1 + $0x6c] sm:$0xf]
  %v53 = vld [vmem:[%s1 + $0x70] sm:$0xf]
  %v54 = vld [vmem:[%s1 + $0x74] sm:$0xf]
  %v55 = vld [vmem:[%s1 + $0x78] sm:$0xf]
  %v56 = vld [vmem:[%s1 + $0x7c] sm:$0xf]
  %v59 = vunpack.c.l.b16 %v23
  %v60 = vunpack.c.h.b16 %v23
  %v61 = vunpack.c.l.b16 %v24
  %v62 = vunpack.c.h.b16 %v24
  %v63 = vpack.c.b16 %v61, %v59
  %v64 = vpack.c.b16 %v62, %v60
  %v99 = vunpack.c.l.b16 %v25
  %v100 = vunpack.c.l.b16 %v26
  %v101 = vunpack.c.l.b16 %v27
  %v102 = vunpack.c.l.b16 %v28
  %v103 = vunpack.c.l.b16 %v29
  %v104 = vunpack.c.l.b16 %v30
  %v105 = vunpack.c.l.b16 %v31
  %v106 = vunpack.c.l.b16 %v32
  %v107 = vunpack.c.l.b16 %v33
  %v108 = vunpack.c.l.b16 %v34
  %v109 = vunpack.c.l.b16 %v35
  %v110 = vunpack.c.l.b16 %v36
  %v111 = vunpack.c.l.b16 %v37
  %v112 = vunpack.c.l.b16 %v38
  %v113 = vunpack.c.l.b16 %v39
  %v114 = vunpack.c.l.b16 %v40
  %v115 = vunpack.c.l.b16 %v41
  %v116 = vunpack.c.l.b16 %v42
  %v117 = vunpack.c.l.b16 %v43
  %v118 = vunpack.c.l.b16 %v44
  %v119 = vunpack.c.l.b16 %v45
  %v120 = vunpack.c.l.b16 %v46
  %v121 = vunpack.c.l.b16 %v47
  %v122 = vunpack.c.l.b16 %v48
  %v123 = vunpack.c.l.b16 %v49
  %v124 = vunpack.c.l.b16 %v50
  %v125 = vunpack.c.l.b16 %v51
  %v126 = vunpack.c.l.b16 %v52
  %v127 = vunpack.c.l.b16 %v53
  %v128 = vunpack.c.l.b16 %v54
  %v129 = vunpack.c.l.b16 %v55
  %v130 = vunpack.c.l.b16 %v56
  %v131 = vpack.c.b16 %v100, %v99
  %v132 = vpack.c.b16 %v102, %v101
  %v133 = vpack.c.b16 %v104, %v103
  %v134 = vpack.c.b16 %v106, %v105
  %v135 = vpack.c.b16 %v108, %v107
  %v136 = vpack.c.b16 %v110, %v109
  %v137 = vpack.c.b16 %v112, %v111
  %v138 = vpack.c.b16 %v114, %v113
  %v139 = vpack.c.b16 %v116, %v115
  %v140 = vpack.c.b16 %v118, %v117
  %v141 = vpack.c.b16 %v120, %v119
  %v142 = vpack.c.b16 %v122, %v121
  %v143 = vpack.c.b16 %v124, %v123
  %v144 = vpack.c.b16 %v126, %v125
  %v145 = vpack.c.b16 %v128, %v127
  %v146 = vpack.c.b16 %v130, %v129
  %163 = vmatpush.bf16.msra.mxu0 %v138
  %164 = vmatpush.bf16.msra.mxu0 %v137
  %165 = vmatpush.bf16.msra.mxu0 %v136
  %166 = vmatpush.bf16.msra.mxu0 %v135
  %167 = vmatpush.bf16.msra.mxu0 %v134
  %168 = vmatpush.bf16.msra.mxu0 %v133
  %169 = vmatpush.bf16.msra.mxu0 %v132
  %170 = vmatpush.bf16.msra.mxu0 %v131
  %171 = vmatmul.bf16.gmra.mxu0 %v63
  %v172 = vpop.f32.mrf.mxu0
  %v173 = vadd.f32 0.0, %v172
  %v174 = vpop.f32.mrf.mxu0
  %v175 = vadd.f32 0.0, %v174
  %176 = vdwg.mxu0
  %177 = vmatpush.bf16.msra.mxu0 %v146
  %178 = vmatpush.bf16.msra.mxu0 %v145
  %179 = vmatpush.bf16.msra.mxu0 %v144
  %180 = vmatpush.bf16.msra.mxu0 %v143
  %181 = vmatpush.bf16.msra.mxu0 %v142
  %182 = vmatpush.bf16.msra.mxu0 %v141
  %183 = vmatpush.bf16.msra.mxu0 %v140
  %184 = vmatpush.bf16.msra.mxu0 %v139
  %185 = vmatmul.bf16.gmra.mxu0 %v64
  %v186 = vpop.f32.mrf.mxu0
  %v187 = vadd.f32 %v173, %v186
  %v188 = vpop.f32.mrf.mxu0
  %v189 = vadd.f32 %v175, %v188
  %190 = vdwg.mxu0
  %v191 = vadd.f32 %v21, %v187
  %v192 = vadd.f32 %v22, %v189
  %vm193 = vcmask 162816
  %194 = vst.msk [vmem:[#allocation2] sm:$0xff] %vm193, %v191
  %195 = vst.msk [vmem:[#allocation2 + $0x8] sm:$0xff] %vm193, %v192
  // Predicated region
  $region18: #{faster_rcnn_forward.19} parent=0 // pred_check
    %p196 = pneg %p14
  $region19: #{faster_rcnn_forward.19} parent=0 // pred_check_branch
    %198 = sbr.rel (%p196) target = $region21
  $region20: #{faster_rcnn_forward.19} parent=0 // pred_region
    %v199 = vld [vmem:[#allocation2] sm:$0xff]
    %v200 = vld [vmem:[#allocation2 + $0x8] sm:$0xff]
    %v201 = vld [vmem:[%s2] sm:$0x1]
    %v203 = vperm.slane %v201, 0
    %v205 = vadd.f32 %v199, %v203
    %v206 = vadd.f32 %v200, %v203
    %207 = vst.msk [vmem:[%s3] sm:$0xff] %vm193, %v205
    %208 = vst.msk [vmem:[%s3 + $0x8] sm:$0xff] %vm193, %v206
  $region21: #{faster_rcnn_forward.19} parent=0 // pred_fallthru
    _
  // Predicated region
  $region22: #{faster_rcnn_forward.19} parent=0 // pred_check
    _
  $region23: #{faster_rcnn_forward.19} parent=0 // pred_check_branch
    %210 = sbr.rel (0) target = $region25
  $region24: #{faster_rcnn_forward.19} parent=0 // pred_region
    _
  $region25: #{faster_rcnn_forward.19} parent=0 // pred_fallthru
    _
  // Predicated region
  $region26: #{faster_rcnn_forward.19} parent=0 // pred_check
    _
  $region27: #{faster_rcnn_forward.19} parent=0 // pred_check_branch
    %212 = sbr.rel (0) target = $region29
  $region28: #{faster_rcnn_forward.19} parent=0 // pred_region
    _
  $region29: #{faster_rcnn_forward.19} parent=0 // pred_fallthru
    _

// kernel: faster_rcnn_forward.17
$region0: #{faster_rcnn_forward.17}
  #allocation0 [shape = 'u32[]', space=smem, size = 0x4, offset = 0x4, fixed_abs, tag = 'smem constant byte address 0x4 - core index']
  #allocation1 [shape = 'u32[72,128]{1,0:T(1,128)}', space=vmem, size = 0x9000, scoped, tag = 'internal scratch']
  #allocation2 [shape = 'f32[16,256]{1,0:T(8,128)}', space=vmem, size = 0x4000, scoped, tag = 'scratch operand']
  %s0 = inlined_call_operand.vmem [shape: bf16[16,3328], index: 0, kind: input, shape index: {}]
  %s1 = inlined_call_operand.vmem [shape: bf16[3328,256], index: 1, kind: input, shape index: {}]
  %s2 = inlined_call_operand.vmem [shape: f32[1,256], index: 2, kind: input, shape index: {}]
  %s3 = inlined_call_operand.vmem [shape: bf16[16,256], index: 3, kind: output, shape index: {}]
  %s4 = sld [smem:[#allocation0]]
  $region79: #{faster_rcnn_forward.17} parent=0
    _
  %s6 = ssub.s32 1, %s4
  %s7 = scalar_select 0, %s6, %s4
  $region1: #{faster_rcnn_forward.17} parent=0
    #allocation3 [shape = 'u8[106496]{0}', space=vmem, size = 0x1a000, scoped, tag = 'input window, operand 0']
    loop: start=0, step=1, limit=4
    $region2: #{faster_rcnn_forward.17} parent=1 // loop_pre_header
      _
    $region3: #{faster_rcnn_forward.17} parent=1 // loop_header
      %s9 = sphi 0, %s13
      %p10 = scmp.ge.s32.totalorder %s9, 4
      %s16 = sphi 0, %s28
      %s17 = sphi 0, %s24
      %s18 = sphi 0, %s16
      %s19 = sphi 0, %s17
      %s20 = sphi 0, %s18
      %s21 = sphi 0, %s19
      %s33 = sphi 0, %s35
      %s36 = sphi 0, %s33
      %s37 = sphi 0, %s36
      %s53 = sphi 0, %s37
      %s59 = sphi 0, %s61
      %s62 = sphi 0, %s59
      %s63 = sphi 0, %s62
      %s79 = sphi 0, %s63
      %s83 = sphi 0, %s83
      %s85 = sphi 0, %s83
      %s86 = sphi 0, %s85
      %s100 = sphi 0, %s86
      %s106 = sphi 0, %s108
      %s109 = sphi 0, %s106
      %s110 = sphi 0, %s109
      %s126 = sphi 0, %s110
    $region4: #{faster_rcnn_forward.17} parent=1 // loop_header_branch
      %12 = sbr.rel (%p10) target = $region8
    $region5: #{faster_rcnn_forward.17} parent=1 // loop_body
      %s14 = ssub.s32 %s9, 1
      %s15 = ssub.s32 %s9, 2
      %s22 = sadd.s32 1, %s17
      %p23 = scmp.ge.s32.totalorder %s22, 2
      %s24 = scalar_select %p23, 0, %s22
      %s25 = sadd.s32 1, %s16
      %s26 = scalar_select %p23, %s25, %s16
      %p27 = scmp.ge.s32.totalorder %s26, 1
      %s28 = scalar_select %p27, 0, %s26
      %s29 = ssub.s32 %s16, %s28
      %s30 = ssub.s32 %s17, %s24
      %s31 = sor.u32 %s29, %s30
      %p32 = scmp.eq.s32.totalorder %s31, 0
      %s34 = sadd.s32 %s33, 1
      %s35 = scalar_select %p32, %s33, %s34
      %p38 = pneg %p32
      %p39 = scmp.eq.s32.totalorder %s9, 1
      %p40 = por %p38, %p39
      %p41 = scmp.ne.s32.totalorder %s33, %s36
      %p42 = scmp.eq.s32.totalorder %s9, 0
      %p43 = por %p41, %p42
      %p44 = scmp.ne.s32.totalorder %s33, %s36
      %p45 = scmp.eq.s32.totalorder %s14, 1
      %p46 = por %p44, %p45
      %p47 = scmp.ne.s32.totalorder %s36, %s37
      %p48 = scmp.eq.s32.totalorder %s14, 0
      %p49 = por %p47, %p48
      %p50 = scmp.ne.s32.totalorder %s36, %s37
      %p51 = scmp.eq.s32.totalorder %s15, 1
      %p52 = por %p50, %p51
      %p54 = scmp.ne.s32.totalorder %s37, %s53
      %p55 = scmp.eq.s32.totalorder %s15, 0
      %p56 = por %p54, %p55
      %s57 = ssub.s32 %s17, %s24
      %p58 = scmp.eq.s32.totalorder %s57, 0
      %s60 = sadd.s32 %s59, 1
      %s61 = scalar_select %p58, %s59, %s60
      %p64 = pneg %p58
      %p65 = scmp.eq.s32.totalorder %s9, 1
      %p66 = por %p64, %p65
      %p67 = scmp.ne.s32.totalorder %s59, %s62
      %p68 = scmp.eq.s32.totalorder %s9, 0
      %p69 = por %p67, %p68
      %p70 = scmp.ne.s32.totalorder %s59, %s62
      %p71 = scmp.eq.s32.totalorder %s14, 1
      %p72 = por %p70, %p71
      %p73 = scmp.ne.s32.totalorder %s62, %s63
      %p74 = scmp.eq.s32.totalorder %s14, 0
      %p75 = por %p73, %p74
      %p76 = scmp.ne.s32.totalorder %s62, %s63
      %p77 = scmp.eq.s32.totalorder %s15, 1
      %p78 = por %p76, %p77
      %p80 = scmp.ne.s32.totalorder %s63, %s79
      %p81 = scmp.eq.s32.totalorder %s15, 0
      %p82 = por %p80, %p81
      %s84 = sadd.s32 %s83, 1
      %p87 = scmp.eq.s32.totalorder %s9, 1
      %p88 = scmp.ne.s32.totalorder %s83, %s85
      %p89 = scmp.eq.s32.totalorder %s9, 0
      %p90 = por %p88, %p89
      %p91 = scmp.ne.s32.totalorder %s83, %s85
      %p92 = scmp.eq.s32.totalorder %s14, 1
      %p93 = por %p91, %p92
      %p94 = scmp.ne.s32.totalorder %s85, %s86
      %p95 = scmp.eq.s32.totalorder %s14, 0
      %p96 = por %p94, %p95
      %p97 = scmp.ne.s32.totalorder %s85, %s86
      %p98 = scmp.eq.s32.totalorder %s15, 1
      %p99 = por %p97, %p98
      %p101 = scmp.ne.s32.totalorder %s86, %s100
      %p102 = scmp.eq.s32.totalorder %s15, 0
      %p103 = por %p101, %p102
      %s104 = ssub.s32 %s16, %s28
      %p105 = scmp.eq.s32.totalorder %s104, 0
      %s107 = sadd.s32 %s106, 1
      %s108 = scalar_select %p105, %s106, %s107
      %p111 = pneg %p105
      %p112 = scmp.eq.s32.totalorder %s9, 1
      %p113 = por %p111, %p112
      %p114 = scmp.ne.s32.totalorder %s106, %s109
      %p115 = scmp.eq.s32.totalorder %s9, 0
      %p116 = por %p114, %p115
      %p117 = scmp.ne.s32.totalorder %s106, %s109
      %p118 = scmp.eq.s32.totalorder %s14, 1
      %p119 = por %p117, %p118
      %p120 = scmp.ne.s32.totalorder %s109, %s110
      %p121 = scmp.eq.s32.totalorder %s14, 0
      %p122 = por %p120, %p121
      %p123 = scmp.ne.s32.totalorder %s109, %s110
      %p124 = scmp.eq.s32.totalorder %s15, 1
      %p125 = por %p123, %p124
      %p127 = scmp.ne.s32.totalorder %s110, %s126
      %p128 = scmp.eq.s32.totalorder %s15, 0
      %p129 = por %p127, %p128
      %p130 = scmp.le.s32.totalorder 1, %s9
      %p131 = scmp.lt.s32.totalorder %s9, 3
      %p132 = pnand %p130, %p131
      %p133 = pneg %p132
      // Predicated region
      $region9: #{faster_rcnn_forward.17} parent=5 // pred_check
        _
      $region10: #{faster_rcnn_forward.17} parent=5 // pred_check_branch
        %135 = sbr.rel (%p132) target = $region12
      $region11: #{faster_rcnn_forward.17} parent=5 // pred_region
        %s136 = ssub.s32 %s9, 1
        // Predicated region
        $region13: #{faster_rcnn_forward.17} parent=11 // pred_check
          %p137 = pneg %p96
        $region14: #{faster_rcnn_forward.17} parent=11 // pred_check_branch
          %139 = sbr.rel (%p137) target = $region16
        $region15: #{faster_rcnn_forward.17} parent=11 // pred_region
          _
        $region16: #{faster_rcnn_forward.17} parent=11 // pred_fallthru
          _
      $region12: #{faster_rcnn_forward.17} parent=5 // pred_fallthru
        _
      %p140 = scmp.lt.s32.totalorder %s9, 2
      // Predicated region
      $region17: #{faster_rcnn_forward.17} parent=5 // pred_check
        %p141 = pneg %p140
      $region18: #{faster_rcnn_forward.17} parent=5 // pred_check_branch
        %143 = sbr.rel (%p141) target = $region20
      $region19: #{faster_rcnn_forward.17} parent=5 // pred_region
        // Predicated region
        $region21: #{faster_rcnn_forward.17} parent=19 // pred_check
          %p144 = pneg %p43
        $region22: #{faster_rcnn_forward.17} parent=19 // pred_check_branch
          %146 = sbr.rel (%p144) target = $region24
        $region23: #{faster_rcnn_forward.17} parent=19 // pred_region
          %s147 = sand.u32 %s33, 1
          %s148 = sand.u32 %s33, 1
          %s149 = smul.addr %s148, 104
          %s150 = scalar_lea.vmem [#allocation3], %s149
          %s151 = smul.u32 2, %s16
          %s152 = smul.u32 13, %s17
          %s153 = smul.addr %s151, 26
          %s154 = sadd.s32 %s152, %s153
          %s155 = smul.addr %s154, 4
          %s156 = scalar_lea.vmem %s0, %s155
          // Predicated region
          $region25: #{faster_rcnn_forward.17} parent=23 // pred_check
            _
          $region26: #{faster_rcnn_forward.17} parent=23 // pred_check_branch
            %158 = sbr.rel (0) target = $region28
          $region27: #{faster_rcnn_forward.17} parent=23 // pred_region
            // Predicated region
            $region29: #{faster_rcnn_forward.17} parent=27 // pred_check
              _
            $region30: #{faster_rcnn_forward.17} parent=27 // pred_check_branch
              %160 = sbr.rel (0) target = $region32
            $region31: #{faster_rcnn_forward.17} parent=27 // pred_region
              %s161 = scalar_lea.vmem %s156, 48
              %s162 = scalar_lea.vmem %s150, 48 [#allocation3]
              loop: start=0, step=1, limit=1
              $region33: #{faster_rcnn_forward.17} parent=31 // loop_pre_header
                _
              $region34: #{faster_rcnn_forward.17} parent=31 // loop_header
                %s164 = sphi 0, %s168
                %p165 = scmp.ge.s32.totalorder %s164, 1
                %s169 = sphi %s156, %s156
                %s170 = sphi %s150, %s150
              $region35: #{faster_rcnn_forward.17} parent=31 // loop_header_branch
                %167 = sbr.rel (%p165) target = $region39
              $region36: #{faster_rcnn_forward.17} parent=31 // loop_body
                %v171 = vld [vmem:[%s169] sm:$0xff]
                %172 = vst [vmem:[%s170] sm:$0xff] %v171
                %v173 = vld [vmem:[%s169 + $0x8] sm:$0xff]
                %174 = vst [vmem:[%s170 + $0x8] sm:$0xff] %v173
                %v175 = vld [vmem:[%s169 + $0x10] sm:$0xff]
                %176 = vst [vmem:[%s170 + $0x10] sm:$0xff] %v175
                %v177 = vld [vmem:[%s169 + $0x18] sm:$0xff]
                %178 = vst [vmem:[%s170 + $0x18] sm:$0xff] %v177
                %v179 = vld [vmem:[%s169 + $0x20] sm:$0xff]
                %180 = vst [vmem:[%s170 + $0x20] sm:$0xff] %v179
                %v181 = vld [vmem:[%s169 + $0x28] sm:$0xff]
                %182 = vst [vmem:[%s170 + $0x28] sm:$0xff] %v181
                %v183 = vld [vmem:[%s169 + $0x68] sm:$0xff]
                %184 = vst [vmem:[%s170 + $0x34] sm:$0xff] %v183
                %v185 = vld [vmem:[%s169 + $0x70] sm:$0xff]
                %186 = vst [vmem:[%s170 + $0x3c] sm:$0xff] %v185
                %v187 = vld [vmem:[%s169 + $0x78] sm:$0xff]
                %188 = vst [vmem:[%s170 + $0x44] sm:$0xff] %v187
                %v189 = vld [vmem:[%s169 + $0x80] sm:$0xff]
                %190 = vst [vmem:[%s170 + $0x4c] sm:$0xff] %v189
                %v191 = vld [vmem:[%s169 + $0x88] sm:$0xff]
                %192 = vst [vmem:[%s170 + $0x54] sm:$0xff] %v191
                %v193 = vld [vmem:[%s169 + $0x90] sm:$0xff]
                %194 = vst [vmem:[%s170 + $0x5c] sm:$0xff] %v193
              $region37: #{faster_rcnn_forward.17} parent=31 // loop_footer
                %s168 = sadd.s32 1, %s164
              $region38: #{faster_rcnn_forward.17} parent=31 // loop_footer_branch
                %163 = sbr.rel target = $region34
              $region39: #{faster_rcnn_forward.17} parent=31 // loop_exit
                _
              %s196 = ssub.s32 16, 1
              loop: start=0, step=1, limit=1
              $region40: #{faster_rcnn_forward.17} parent=31 // loop_pre_header
                _
              $region41: #{faster_rcnn_forward.17} parent=31 // loop_header
                %s198 = sphi 0, %s202
                %p199 = scmp.ge.s32.totalorder %s198, 1
                %s203 = sphi %s161, %s161
                %s204 = sphi %s162, %s162
              $region42: #{faster_rcnn_forward.17} parent=31 // loop_header_branch
                %201 = sbr.rel (%p199) target = $region46
              $region43: #{faster_rcnn_forward.17} parent=31 // loop_body
                %v205 = vld [vmem:[%s203] sm:%s196]
                %206 = vst [vmem:[%s204] sm:%s196] %v205
                %v207 = vld [vmem:[%s203 + $0x68] sm:%s196]
                %208 = vst [vmem:[%s204 + $0x34] sm:%s196] %v207
              $region44: #{faster_rcnn_forward.17} parent=31 // loop_footer
                %s202 = sadd.s32 1, %s198
              $region45: #{faster_rcnn_forward.17} parent=31 // loop_footer_branch
                %197 = sbr.rel target = $region41
              $region46: #{faster_rcnn_forward.17} parent=31 // loop_exit
                _
            $region32: #{faster_rcnn_forward.17} parent=27 // pred_fallthru
              _
          $region28: #{faster_rcnn_forward.17} parent=23 // pred_fallthru
            _
          %209 = vnop
        $region24: #{faster_rcnn_forward.17} parent=19 // pred_fallthru
          _
        // Predicated region
        $region47: #{faster_rcnn_forward.17} parent=19 // pred_check
          %p210 = pneg %p69
        $region48: #{faster_rcnn_forward.17} parent=19 // pred_check_branch
          %212 = sbr.rel (%p210) target = $region50
        $region49: #{faster_rcnn_forward.17} parent=19 // pred_region
          %s213 = smul.u32 208, %s17
          %p214 = scmp.lt.s32.totalorder %s213, 415
          %s215 = scalar_select %p214, %s213, 415
          %s216 = smul.addr %s215, 2
          %s217 = smul.addr %s216, 4
          %s218 = scalar_lea.vmem %s1, %s217
          %s219 = smul.u32 208, %s17
        $region50: #{faster_rcnn_forward.17} parent=19 // pred_fallthru
          _
      $region20: #{faster_rcnn_forward.17} parent=5 // pred_fallthru
        _
      %p220 = scmp.le.s32.totalorder 1, %s9
      %p221 = scmp.lt.s32.totalorder %s9, 3
      %p222 = pnand %p220, %p221
      %p223 = pneg %p222
      // Predicated region
      $region51: #{faster_rcnn_forward.17} parent=5 // pred_check
        _
      $region52: #{faster_rcnn_forward.17} parent=5 // pred_check_branch
        %225 = sbr.rel (%p222) target = $region54
      $region53: #{faster_rcnn_forward.17} parent=5 // pred_region
        %s226 = ssub.s32 %s9, 1
        %s227 = sand.u32 %s36, 1
        %s228 = sand.u32 %s36, 1
        %s229 = smul.addr %s228, 104
        %s230 = scalar_lea.vmem [#allocation3], %s229
        // Predicated region
        $region55: #{faster_rcnn_forward.17} parent=53 // pred_check
          %p231 = pneg %p49
        $region56: #{faster_rcnn_forward.17} parent=53 // pred_check_branch
          %233 = sbr.rel (%p231) target = $region58
        $region57: #{faster_rcnn_forward.17} parent=53 // pred_region
          _
        $region58: #{faster_rcnn_forward.17} parent=53 // pred_fallthru
          _
        %s234 = sand.u32 %s36, 1
        %s235 = sand.u32 %s36, 1
        %s236 = smul.addr %s235, 104
        %s237 = scalar_lea.vmem [#allocation3], %s236
        %p238 = pneg %p49
        %p239 = pneg %p46
        %s240 = smul.u32 208, %s19
        %p241 = scmp.lt.s32.totalorder %s240, 415
        %s242 = scalar_select %p241, %s240, 415
        %s243 = smul.addr %s242, 2
        %s244 = smul.addr %s243, 4
        %s245 = scalar_lea.vmem %s1, %s244
        %p246 = pneg %p75
        %p247 = pneg %p72
        %p248 = pneg %p96
        %p249 = pneg %p93
        %p250 = pneg %p122
        %p251 = pneg %p119
        %s252 = smul.u32 2, %s18
        %p253 = scmp.lt.s32.totalorder %s252, 1
        %s254 = scalar_select %p253, %s252, 1
        %s255 = smul.addr %s254, 2
        %s256 = smul.addr %s255, 4
        %s257 = scalar_lea.vmem %s3, %s256
        %s258 = smul.u32 2, %s18
        %s259 = smul.u32 13, %s19
        %s260 = smul.u32 208, %s19
        %p261 = scmp.lt.s32.totalorder %s260, 415
        %s262 = scalar_select %p261, %s260, 415
        %s263 = smul.addr %s262, 2
        %s264 = smul.addr %s263, 4
        %s265 = scalar_lea.vmem %s1, %s264
        %s266 = smul.u32 208, %s19
        %s267 = smul.u32 2, %s18
        %p268 = scmp.lt.s32.totalorder %s267, 1
        %s269 = scalar_select %p268, %s267, 1
        %s270 = smul.addr %s269, 2
        %s271 = smul.addr %s270, 4
        %s272 = scalar_lea.vmem %s3, %s271
        %s273 = smul.u32 2, %s18
        %p274 = scmp.eq.s32.totalorder %s19, 0
        // Predicated region
        $region59: #{faster_rcnn_forward.17} parent=53 // pred_check
          %p275 = pneg %p274
        $region60: #{faster_rcnn_forward.17} parent=53 // pred_check_branch
          %277 = sbr.rel (%p275) target = $region62
        $region61: #{faster_rcnn_forward.17} parent=53 // pred_region
          %278 = vst [vmem:[#allocation2] sm:$0xff] 0.0
          %279 = vst [vmem:[#allocation2 + $0x8] sm:$0xff] 0.0
          %280 = vst [vmem:[#allocation2 + $0x10] sm:$0xff] 0.0
          %281 = vst [vmem:[#allocation2 + $0x18] sm:$0xff] 0.0
        $region62: #{faster_rcnn_forward.17} parent=53 // pred_fallthru
          _
        %v282 = vld [vmem:[#allocation2] sm:$0xff]
        %v283 = vld [vmem:[#allocation2 + $0x8] sm:$0xff]
        %v284 = vld [vmem:[#allocation2 + $0x10] sm:$0xff]
        %v285 = vld [vmem:[#allocation2 + $0x18] sm:$0xff]
        %v286 = vld [vmem:[%s230] sm:$0xff]
        %v287 = vld [vmem:[%s230 + $0x8] sm:$0xff]
        %v288 = vld [vmem:[%s230 + $0x10] sm:$0xff]
        %v289 = vld [vmem:[%s230 + $0x18] sm:$0xff]
        %v290 = vld [vmem:[%s230 + $0x20] sm:$0xff]
        %v291 = vld [vmem:[%s230 + $0x28] sm:$0xff]
        %v292 = vld [vmem:[%s230 + $0x30] sm:$0xf]
        %v293 = vld [vmem:[%s230 + $0x34] sm:$0xff]
        %v294 = vld [vmem:[%s230 + $0x3c] sm:$0xff]
        %v295 = vld [vmem:[%s230 + $0x44] sm:$0xff]
        %v296 = vld [vmem:[%s230 + $0x4c] sm:$0xff]
        %v297 = vld [vmem:[%s230 + $0x54] sm:$0xff]
        %v298 = vld [vmem:[%s230 + $0x5c] sm:$0xff]
        %v299 = vld [vmem:[%s230 + $0x64] sm:$0xf]
        %v300 = vld [vmem:[%s265] sm:$0xff]
        %v301 = vld [vmem:[%s265 + $0x8] sm:$0xff]
        %v302 = vld [vmem:[%s265 + $0x10] sm:$0xff]
        %v303 = vld [vmem:[%s265 + $0x18] sm:$0xff]
        %v304 = vld [vmem:[%s265 + $0x20] sm:$0xff]
        %v305 = vld [vmem:[%s265 + $0x28] sm:$0xff]
        %v306 = vld [vmem:[%s265 + $0x30] sm:$0xff]
        %v307 = vld [vmem:[%s265 + $0x38] sm:$0xff]
        %v308 = vld [vmem:[%s265 + $0x40] sm:$0xff]
        %v309 = vld [vmem:[%s265 + $0x48] sm:$0xff]
        %v310 = vld [vmem:[%s265 + $0x50] sm:$0xff]
        %v311 = vld [vmem:[%s265 + $0x58] sm:$0xff]
        %v312 = vld [vmem:[%s265 + $0x60] sm:$0xff]
        %v313 = vld [vmem:[%s265 + $0x68] sm:$0xff]
        %v314 = vld [vmem:[%s265 + $0x70] sm:$0xff]
        %v315 = vld [vmem:[%s265 + $0x78] sm:$0xff]
        %v316 = vld [vmem:[%s265 + $0x80] sm:$0xff]
        %v317 = vld [vmem:[%s265 + $0x88] sm:$0xff]
        %v318 = vld [vmem:[%s265 + $0x90] sm:$0xff]
        %v319 = vld [vmem:[%s265 + $0x98] sm:$0xff]
        %v320 = vld [vmem:[%s265 + $0xa0] sm:$0xff]
        %v321 = vld [vmem:[%s265 + $0xa8] sm:$0xff]
        %v322 = vld [vmem:[%s265 + $0xb0] sm:$0xff]
        %v323 = vld [vmem:[%s265 + $0xb8] sm:$0xff]
        %v324 = vld [vmem:[%s265 + $0xc0] sm:$0xff]
        %v325 = vld [vmem:[%s265 + $0xc8] sm:$0xff]
        %v326 = vld [vmem:[%s265 + $0xd0] sm:$0xff]
        %v327 = vld [vmem:[%s265 + $0xd8] sm:$0xff]
        %v328 = vld [vmem:[%s265 + $0xe0] sm:$0xff]
        %v329 = vld [vmem:[%s265 + $0xe8] sm:$0xff]
        %v330 = vld [vmem:[%s265 + $0xf0] sm:$0xff]
        %v331 = vld [vmem:[%s265 + $0xf8] sm:$0xff]
        %v332 = vld [vmem:[%s265 + $0x100] sm:$0xff]
        %v333 = vld [vmem:[%s265 + $0x108] sm:$0xff]
        %v334 = vld [vmem:[%s265 + $0x110] sm:$0xff]
        %v335 = vld [vmem:[%s265 + $0x118] sm:$0xff]
        %v336 = vld [vmem:[%s265 + $0x120] sm:$0xff]
        %v337 = vld [vmem:[%s265 + $0x128] sm:$0xff]
        %v338 = vld [vmem:[%s265 + $0x130] sm:$0xff]
        %v339 = vld [vmem:[%s265 + $0x138] sm:$0xff]
        %v340 = vld [vmem:[%s265 + $0x140] sm:$0xff]
        %v341 = vld [vmem:[%s265 + $0x148] sm:$0xff]
        %v342 = vld [vmem:[%s265 + $0x150] sm:$0xff]
        %v343 = vld [vmem:[%s265 + $0x158] sm:$0xff]
        %v344 = vld [vmem:[%s265 + $0x160] sm:$0xff]
        %v345 = vld [vmem:[%s265 + $0x168] sm:$0xff]
        %v346 = vld [vmem:[%s265 + $0x170] sm:$0xff]
        %v347 = vld [vmem:[%s265 + $0x178] sm:$0xff]
        %v348 = vld [vmem:[%s265 + $0x180] sm:$0xff]
        %v349 = vld [vmem:[%s265 + $0x188] sm:$0xff]
        %v350 = vld [vmem:[%s265 + $0x190] sm:$0xff]
        %v351 = vld [vmem:[%s265 + $0x198] sm:$0xff]
        %v352 = vld [vmem:[%s265 + $0x1a0] sm:$0xff]
        %v353 = vld [vmem:[%s265 + $0x1a8] sm:$0xff]
        %v354 = vld [vmem:[%s265 + $0x1b0] sm:$0xff]
        %v355 = vld [vmem:[%s265 + $0x1b8] sm:$0xff]
        %v356 = vld [vmem:[%s265 + $0x1c0] sm:$0xff]
        %v357 = vld [vmem:[%s265 + $0x1c8] sm:$0xff]
        %v358 = vld [vmem:[%s265 + $0x1d0] sm:$0xff]
        %v359 = vld [vmem:[%s265 + $0x1d8] sm:$0xff]
        %v360 = vld [vmem:[%s265 + $0x1e0] sm:$0xff]
        %v361 = vld [vmem:[%s265 + $0x1e8] sm:$0xff]
        %v362 = vld [vmem:[%s265 + $0x1f0] sm:$0xff]
        %v363 = vld [vmem:[%s265 + $0x1f8] sm:$0xff]
        %v364 = vld [vmem:[%s265 + $0x200] sm:$0xff]
        %v365 = vld [vmem:[%s265 + $0x208] sm:$0xff]
        %v366 = vld [vmem:[%s265 + $0x210] sm:$0xff]
        %v367 = vld [vmem:[%s265 + $0x218] sm:$0xff]
        %v368 = vld [vmem:[%s265 + $0x220] sm:$0xff]
        %v369 = vld [vmem:[%s265 + $0x228] sm:$0xff]
        %v370 = vld [vmem:[%s265 + $0x230] sm:$0xff]
        %v371 = vld [vmem:[%s265 + $0x238] sm:$0xff]
        %v372 = vld [vmem:[%s265 + $0x240] sm:$0xff]
        %v373 = vld [vmem:[%s265 + $0x248] sm:$0xff]
        %v374 = vld [vmem:[%s265 + $0x250] sm:$0xff]
        %v375 = vld [vmem:[%s265 + $0x258] sm:$0xff]
        %v376 = vld [vmem:[%s265 + $0x260] sm:$0xff]
        %v377 = vld [vmem:[%s265 + $0x268] sm:$0xff]
        %v378 = vld [vmem:[%s265 + $0x270] sm:$0xff]
        %v379 = vld [vmem:[%s265 + $0x278] sm:$0xff]
        %v380 = vld [vmem:[%s265 + $0x280] sm:$0xff]
        %v381 = vld [vmem:[%s265 + $0x288] sm:$0xff]
        %v382 = vld [vmem:[%s265 + $0x290] sm:$0xff]
        %v383 = vld [vmem:[%s265 + $0x298] sm:$0xff]
        %v384 = vld [vmem:[%s265 + $0x2a0] sm:$0xff]
        %v385 = vld [vmem:[%s265 + $0x2a8] sm:$0xff]
        %v386 = vld [vmem:[%s265 + $0x2b0] sm:$0xff]
        %v387 = vld [vmem:[%s265 + $0x2b8] sm:$0xff]
        %v388 = vld [vmem:[%s265 + $0x2c0] sm:$0xff]
        %v389 = vld [vmem:[%s265 + $0x2c8] sm:$0xff]
        %v390 = vld [vmem:[%s265 + $0x2d0] sm:$0xff]
        %v391 = vld [vmem:[%s265 + $0x2d8] sm:$0xff]
        %v392 = vld [vmem:[%s265 + $0x2e0] sm:$0xff]
        %v393 = vld [vmem:[%s265 + $0x2e8] sm:$0xff]
        %v394 = vld [vmem:[%s265 + $0x2f0] sm:$0xff]
        %v395 = vld [vmem:[%s265 + $0x2f8] sm:$0xff]
        %v396 = vld [vmem:[%s265 + $0x300] sm:$0xff]
        %v397 = vld [vmem:[%s265 + $0x308] sm:$0xff]
        %v398 = vld [vmem:[%s265 + $0x310] sm:$0xff]
        %v399 = vld [vmem:[%s265 + $0x318] sm:$0xff]
        %v400 = vld [vmem:[%s265 + $0x320] sm:$0xff]
        %v401 = vld [vmem:[%s265 + $0x328] sm:$0xff]
        %v402 = vld [vmem:[%s265 + $0x330] sm:$0xff]
        %v403 = vld [vmem:[%s265 + $0x338] sm:$0xff]
        %v404 = vld [vmem:[%s265 + $0x340] sm:$0xff]
        %v405 = vld [vmem:[%s265 + $0x348] sm:$0xff]
        %v406 = vld [vmem:[%s265 + $0x350] sm:$0xff]
        %v407 = vld [vmem:[%s265 + $0x358] sm:$0xff]
        %v408 = vld [vmem:[%s265 + $0x360] sm:$0xff]
        %v409 = vld [vmem:[%s265 + $0x368] sm:$0xff]
        %v410 = vld [vmem:[%s265 + $0x370] sm:$0xff]
        %v411 = vld [vmem:[%s265 + $0x378] sm:$0xff]
        %v412 = vld [vmem:[%s265 + $0x380] sm:$0xff]
        %v413 = vld [vmem:[%s265 + $0x388] sm:$0xff]
        %v414 = vld [vmem:[%s265 + $0x390] sm:$0xff]
        %v415 = vld [vmem:[%s265 + $0x398] sm:$0xff]
        %v416 = vld [vmem:[%s265 + $0x3a0] sm:$0xff]
        %v417 = vld [vmem:[%s265 + $0x3a8] sm:$0xff]
        %v418 = vld [vmem:[%s265 + $0x3b0] sm:$0xff]
        %v419 = vld [vmem:[%s265 + $0x3b8] sm:$0xff]
        %v420 = vld [vmem:[%s265 + $0x3c0] sm:$0xff]
        %v421 = vld [vmem:[%s265 + $0x3c8] sm:$0xff]
        %v422 = vld [vmem:[%s265 + $0x3d0] sm:$0xff]
        %v423 = vld [vmem:[%s265 + $0x3d8] sm:$0xff]
        %v424 = vld [vmem:[%s265 + $0x3e0] sm:$0xff]
        %v425 = vld [vmem:[%s265 + $0x3e8] sm:$0xff]
        %v426 = vld [vmem:[%s265 + $0x3f0] sm:$0xff]
        %v427 = vld [vmem:[%s265 + $0x3f8] sm:$0xff]
        %v428 = vld [vmem:[%s265 + $0x400] sm:$0xff]
        %v429 = vld [vmem:[%s265 + $0x408] sm:$0xff]
        %v430 = vld [vmem:[%s265 + $0x410] sm:$0xff]
        %v431 = vld [vmem:[%s265 + $0x418] sm:$0xff]
        %v432 = vld [vmem:[%s265 + $0x420] sm:$0xff]
        %v433 = vld [vmem:[%s265 + $0x428] sm:$0xff]
        %v434 = vld [vmem:[%s265 + $0x430] sm:$0xff]
        %v435 = vld [vmem:[%s265 + $0x438] sm:$0xff]
        %v436 = vld [vmem:[%s265 + $0x440] sm:$0xff]
        %v437 = vld [vmem:[%s265 + $0x448] sm:$0xff]
        %v438 = vld [vmem:[%s265 + $0x450] sm:$0xff]
        %v439 = vld [vmem:[%s265 + $0x458] sm:$0xff]
        %v440 = vld [vmem:[%s265 + $0x460] sm:$0xff]
        %v441 = vld [vmem:[%s265 + $0x468] sm:$0xff]
        %v442 = vld [vmem:[%s265 + $0x470] sm:$0xff]
        %v443 = vld [vmem:[%s265 + $0x478] sm:$0xff]
        %v444 = vld [vmem:[%s265 + $0x480] sm:$0xff]
        %v445 = vld [vmem:[%s265 + $0x488] sm:$0xff]
        %v446 = vld [vmem:[%s265 + $0x490] sm:$0xff]
        %v447 = vld [vmem:[%s265 + $0x498] sm:$0xff]
        %v448 = vld [vmem:[%s265 + $0x4a0] sm:$0xff]
        %v449 = vld [vmem:[%s265 + $0x4a8] sm:$0xff]
        %v450 = vld [vmem:[%s265 + $0x4b0] sm:$0xff]
        %v451 = vld [vmem:[%s265 + $0x4b8] sm:$0xff]
        %v452 = vld [vmem:[%s265 + $0x4c0] sm:$0xff]
        %v453 = vld [vmem:[%s265 + $0x4c8] sm:$0xff]
        %v454 = vld [vmem:[%s265 + $0x4d0] sm:$0xff]
        %v455 = vld [vmem:[%s265 + $0x4d8] sm:$0xff]
        %v456 = vld [vmem:[%s265 + $0x4e0] sm:$0xff]
        %v457 = vld [vmem:[%s265 + $0x4e8] sm:$0xff]
        %v458 = vld [vmem:[%s265 + $0x4f0] sm:$0xff]
        %v459 = vld [vmem:[%s265 + $0x4f8] sm:$0xff]
        %v460 = vld [vmem:[%s265 + $0x500] sm:$0xff]
        %v461 = vld [vmem:[%s265 + $0x508] sm:$0xff]
        %v462 = vld [vmem:[%s265 + $0x510] sm:$0xff]
        %v463 = vld [vmem:[%s265 + $0x518] sm:$0xff]
        %v464 = vld [vmem:[%s265 + $0x520] sm:$0xff]
        %v465 = vld [vmem:[%s265 + $0x528] sm:$0xff]
        %v466 = vld [vmem:[%s265 + $0x530] sm:$0xff]
        %v467 = vld [vmem:[%s265 + $0x538] sm:$0xff]
        %v468 = vld [vmem:[%s265 + $0x540] sm:$0xff]
        %v469 = vld [vmem:[%s265 + $0x548] sm:$0xff]
        %v470 = vld [vmem:[%s265 + $0x550] sm:$0xff]
        %v471 = vld [vmem:[%s265 + $0x558] sm:$0xff]
        %v472 = vld [vmem:[%s265 + $0x560] sm:$0xff]
        %v473 = vld [vmem:[%s265 + $0x568] sm:$0xff]
        %v474 = vld [vmem:[%s265 + $0x570] sm:$0xff]
        %v475 = vld [vmem:[%s265 + $0x578] sm:$0xff]
        %v476 = vld [vmem:[%s265 + $0x580] sm:$0xff]
        %v477 = vld [vmem:[%s265 + $0x588] sm:$0xff]
        %v478 = vld [vmem:[%s265 + $0x590] sm:$0xff]
        %v479 = vld [vmem:[%s265 + $0x598] sm:$0xff]
        %v480 = vld [vmem:[%s265 + $0x5a0] sm:$0xff]
        %v481 = vld [vmem:[%s265 + $0x5a8] sm:$0xff]
        %v482 = vld [vmem:[%s265 + $0x5b0] sm:$0xff]
        %v483 = vld [vmem:[%s265 + $0x5b8] sm:$0xff]
        %v484 = vld [vmem:[%s265 + $0x5c0] sm:$0xff]
        %v485 = vld [vmem:[%s265 + $0x5c8] sm:$0xff]
        %v486 = vld [vmem:[%s265 + $0x5d0] sm:$0xff]
        %v487 = vld [vmem:[%s265 + $0x5d8] sm:$0xff]
        %v488 = vld [vmem:[%s265 + $0x5e0] sm:$0xff]
        %v489 = vld [vmem:[%s265 + $0x5e8] sm:$0xff]
        %v490 = vld [vmem:[%s265 + $0x5f0] sm:$0xff]
        %v491 = vld [vmem:[%s265 + $0x5f8] sm:$0xff]
        %v492 = vld [vmem:[%s265 + $0x600] sm:$0xff]
        %v493 = vld [vmem:[%s265 + $0x608] sm:$0xff]
        %v494 = vld [vmem:[%s265 + $0x610] sm:$0xff]
        %v495 = vld [vmem:[%s265 + $0x618] sm:$0xff]
        %v496 = vld [vmem:[%s265 + $0x620] sm:$0xff]
        %v497 = vld [vmem:[%s265 + $0x628] sm:$0xff]
        %v498 = vld [vmem:[%s265 + $0x630] sm:$0xff]
        %v499 = vld [vmem:[%s265 + $0x638] sm:$0xff]
        %v500 = vld [vmem:[%s265 + $0x640] sm:$0xff]
        %v501 = vld [vmem:[%s265 + $0x648] sm:$0xff]
        %v502 = vld [vmem:[%s265 + $0x650] sm:$0xff]
        %v503 = vld [vmem:[%s265 + $0x658] sm:$0xff]
        %v504 = vld [vmem:[%s265 + $0x660] sm:$0xff]
        %v505 = vld [vmem:[%s265 + $0x668] sm:$0xff]
        %v506 = vld [vmem:[%s265 + $0x670] sm:$0xff]
        %v507 = vld [vmem:[%s265 + $0x678] sm:$0xff]
        %v522 = vunpack.c.l.b16 %v286
        %v523 = vunpack.c.h.b16 %v286
        %v524 = vunpack.c.l.b16 %v287
        %v525 = vunpack.c.h.b16 %v287
        %v526 = vunpack.c.l.b16 %v288
        %v527 = vunpack.c.h.b16 %v288
        %v528 = vunpack.c.l.b16 %v289
        %v529 = vunpack.c.h.b16 %v289
        %v530 = vunpack.c.l.b16 %v290
        %v531 = vunpack.c.h.b16 %v290
        %v532 = vunpack.c.l.b16 %v291
        %v533 = vunpack.c.h.b16 %v291
        %v534 = vunpack.c.l.b16 %v292
        %v535 = vunpack.c.l.b16 %v293
        %v536 = vunpack.c.h.b16 %v293
        %v537 = vunpack.c.l.b16 %v294
        %v538 = vunpack.c.h.b16 %v294
        %v539 = vunpack.c.l.b16 %v295
        %v540 = vunpack.c.h.b16 %v295
        %v541 = vunpack.c.l.b16 %v296
        %v542 = vunpack.c.h.b16 %v296
        %v543 = vunpack.c.l.b16 %v297
        %v544 = vunpack.c.h.b16 %v297
        %v545 = vunpack.c.l.b16 %v298
        %v546 = vunpack.c.h.b16 %v298
        %v547 = vunpack.c.l.b16 %v299
        %v548 = vpack.c.b16 %v535, %v522
        %v549 = vpack.c.b16 %v536, %v523
        %v550 = vpack.c.b16 %v537, %v524
        %v551 = vpack.c.b16 %v538, %v525
        %v552 = vpack.c.b16 %v539, %v526
        %v553 = vpack.c.b16 %v540, %v527
        %v554 = vpack.c.b16 %v541, %v528
        %v555 = vpack.c.b16 %v542, %v529
        %v556 = vpack.c.b16 %v543, %v530
        %v557 = vpack.c.b16 %v544, %v531
        %v558 = vpack.c.b16 %v545, %v532
        %v559 = vpack.c.b16 %v546, %v533
        %v560 = vpack.c.b16 %v547, %v534
        %v782 = vunpack.c.l.b16 %v300
        %v783 = vunpack.c.h.b16 %v300
        %v784 = vunpack.c.l.b16 %v301
        %v785 = vunpack.c.h.b16 %v301
        %v786 = vunpack.c.l.b16 %v302
        %v787 = vunpack.c.h.b16 %v302
        %v788 = vunpack.c.l.b16 %v303
        %v789 = vunpack.c.h.b16 %v303
        %v790 = vunpack.c.l.b16 %v304
        %v791 = vunpack.c.h.b16 %v304
        %v792 = vunpack.c.l.b16 %v305
        %v793 = vunpack.c.h.b16 %v305
        %v794 = vunpack.c.l.b16 %v306
        %v795 = vunpack.c.h.b16 %v306
        %v796 = vunpack.c.l.b16 %v307
        %v797 = vunpack.c.h.b16 %v307
        %v798 = vunpack.c.l.b16 %v308
        %v799 = vunpack.c.h.b16 %v308
        %v800 = vunpack.c.l.b16 %v309
        %v801 = vunpack.c.h.b16 %v309
        %v802 = vunpack.c.l.b16 %v310
        %v803 = vunpack.c.h.b16 %v310
        %v804 = vunpack.c.l.b16 %v311
        %v805 = vunpack.c.h.b16 %v311
        %v806 = vunpack.c.l.b16 %v312
        %v807 = vunpack.c.h.b16 %v312
        %v808 = vunpack.c.l.b16 %v313
        %v809 = vunpack.c.h.b16 %v313
        %v810 = vunpack.c.l.b16 %v314
        %v811 = vunpack.c.h.b16 %v314
        %v812 = vunpack.c.l.b16 %v315
        %v813 = vunpack.c.h.b16 %v315
        %v814 = vunpack.c.l.b16 %v316
        %v815 = vunpack.c.h.b16 %v316
        %v816 = vunpack.c.l.b16 %v317
        %v817 = vunpack.c.h.b16 %v317
        %v818 = vunpack.c.l.b16 %v318
        %v819 = vunpack.c.h.b16 %v318
        %v820 = vunpack.c.l.b16 %v319
        %v821 = vunpack.c.h.b16 %v319
        %v822 = vunpack.c.l.b16 %v320
        %v823 = vunpack.c.h.b16 %v320
        %v824 = vunpack.c.l.b16 %v321
        %v825 = vunpack.c.h.b16 %v321
        %v826 = vunpack.c.l.b16 %v322
        %v827 = vunpack.c.h.b16 %v322
        %v828 = vunpack.c.l.b16 %v323
        %v829 = vunpack.c.h.b16 %v323
        %v830 = vunpack.c.l.b16 %v324
        %v831 = vunpack.c.h.b16 %v324
        %v832 = vunpack.c.l.b16 %v325
        %v833 = vunpack.c.h.b16 %v325
        %v834 = vunpack.c.l.b16 %v326
        %v835 = vunpack.c.h.b16 %v326
        %v836 = vunpack.c.l.b16 %v327
        %v837 = vunpack.c.h.b16 %v327
        %v838 = vunpack.c.l.b16 %v328
        %v839 = vunpack.c.h.b16 %v328
        %v840 = vunpack.c.l.b16 %v329
        %v841 = vunpack.c.h.b16 %v329
        %v842 = vunpack.c.l.b16 %v330
        %v843 = vunpack.c.h.b16 %v330
        %v844 = vunpack.c.l.b16 %v331
        %v845 = vunpack.c.h.b16 %v331
        %v846 = vunpack.c.l.b16 %v332
        %v847 = vunpack.c.h.b16 %v332
        %v848 = vunpack.c.l.b16 %v333
        %v849 = vunpack.c.h.b16 %v333
        %v850 = vunpack.c.l.b16 %v334
        %v851 = vunpack.c.h.b16 %v334
        %v852 = vunpack.c.l.b16 %v335
        %v853 = vunpack.c.h.b16 %v335
        %v854 = vunpack.c.l.b16 %v336
        %v855 = vunpack.c.h.b16 %v336
        %v856 = vunpack.c.l.b16 %v337
        %v857 = vunpack.c.h.b16 %v337
        %v858 = vunpack.c.l.b16 %v338
        %v859 = vunpack.c.h.b16 %v338
        %v860 = vunpack.c.l.b16 %v339
        %v861 = vunpack.c.h.b16 %v339
        %v862 = vunpack.c.l.b16 %v340
        %v863 = vunpack.c.h.b16 %v340
        %v864 = vunpack.c.l.b16 %v341
        %v865 = vunpack.c.h.b16 %v341
        %v866 = vunpack.c.l.b16 %v342
        %v867 = vunpack.c.h.b16 %v342
        %v868 = vunpack.c.l.b16 %v343
        %v869 = vunpack.c.h.b16 %v343
        %v870 = vunpack.c.l.b16 %v344
        %v871 = vunpack.c.h.b16 %v344
        %v872 = vunpack.c.l.b16 %v345
        %v873 = vunpack.c.h.b16 %v345
        %v874 = vunpack.c.l.b16 %v346
        %v875 = vunpack.c.h.b16 %v346
        %v876 = vunpack.c.l.b16 %v347
        %v877 = vunpack.c.h.b16 %v347
        %v878 = vunpack.c.l.b16 %v348
        %v879 = vunpack.c.h.b16 %v348
        %v880 = vunpack.c.l.b16 %v349
        %v881 = vunpack.c.h.b16 %v349
        %v882 = vunpack.c.l.b16 %v350
        %v883 = vunpack.c.h.b16 %v350
        %v884 = vunpack.c.l.b16 %v351
        %v885 = vunpack.c.h.b16 %v351
        %v886 = vunpack.c.l.b16 %v352
        %v887 = vunpack.c.h.b16 %v352
        %v888 = vunpack.c.l.b16 %v353
        %v889 = vunpack.c.h.b16 %v353
        %v890 = vunpack.c.l.b16 %v354
        %v891 = vunpack.c.h.b16 %v354
        %v892 = vunpack.c.l.b16 %v355
        %v893 = vunpack.c.h.b16 %v355
        %v894 = vunpack.c.l.b16 %v356
        %v895 = vunpack.c.h.b16 %v356
        %v896 = vunpack.c.l.b16 %v357
        %v897 = vunpack.c.h.b16 %v357
        %v898 = vunpack.c.l.b16 %v358
        %v899 = vunpack.c.h.b16 %v358
        %v900 = vunpack.c.l.b16 %v359
        %v901 = vunpack.c.h.b16 %v359
        %v902 = vunpack.c.l.b16 %v360
        %v903 = vunpack.c.h.b16 %v360
        %v904 = vunpack.c.l.b16 %v361
        %v905 = vunpack.c.h.b16 %v361
        %v906 = vunpack.c.l.b16 %v362
        %v907 = vunpack.c.h.b16 %v362
        %v908 = vunpack.c.l.b16 %v363
        %v909 = vunpack.c.h.b16 %v363
        %v910 = vunpack.c.l.b16 %v364
        %v911 = vunpack.c.h.b16 %v364
        %v912 = vunpack.c.l.b16 %v365
        %v913 = vunpack.c.h.b16 %v365
        %v914 = vunpack.c.l.b16 %v366
        %v915 = vunpack.c.h.b16 %v366
        %v916 = vunpack.c.l.b16 %v367
        %v917 = vunpack.c.h.b16 %v367
        %v918 = vunpack.c.l.b16 %v368
        %v919 = vunpack.c.h.b16 %v368
        %v920 = vunpack.c.l.b16 %v369
        %v921 = vunpack.c.h.b16 %v369
        %v922 = vunpack.c.l.b16 %v370
        %v923 = vunpack.c.h.b16 %v370
        %v924 = vunpack.c.l.b16 %v371
        %v925 = vunpack.c.h.b16 %v371
        %v926 = vunpack.c.l.b16 %v372
        %v927 = vunpack.c.h.b16 %v372
        %v928 = vunpack.c.l.b16 %v373
        %v929 = vunpack.c.h.b16 %v373
        %v930 = vunpack.c.l.b16 %v374
        %v931 = vunpack.c.h.b16 %v374
        %v932 = vunpack.c.l.b16 %v375
        %v933 = vunpack.c.h.b16 %v375
        %v934 = vunpack.c.l.b16 %v376
        %v935 = vunpack.c.h.b16 %v376
        %v936 = vunpack.c.l.b16 %v377
        %v937 = vunpack.c.h.b16 %v377
        %v938 = vunpack.c.l.b16 %v378
        %v939 = vunpack.c.h.b16 %v378
        %v940 = vunpack.c.l.b16 %v379
        %v941 = vunpack.c.h.b16 %v379
        %v942 = vunpack.c.l.b16 %v380
        %v943 = vunpack.c.h.b16 %v380
        %v944 = vunpack.c.l.b16 %v381
        %v945 = vunpack.c.h.b16 %v381
        %v946 = vunpack.c.l.b16 %v382
        %v947 = vunpack.c.h.b16 %v382
        %v948 = vunpack.c.l.b16 %v383
        %v949 = vunpack.c.h.b16 %v383
        %v950 = vunpack.c.l.b16 %v384
        %v951 = vunpack.c.h.b16 %v384
        %v952 = vunpack.c.l.b16 %v385
        %v953 = vunpack.c.h.b16 %v385
        %v954 = vunpack.c.l.b16 %v386
        %v955 = vunpack.c.h.b16 %v386
        %v956 = vunpack.c.l.b16 %v387
        %v957 = vunpack.c.h.b16 %v387
        %v958 = vunpack.c.l.b16 %v388
        %v959 = vunpack.c.h.b16 %v388
        %v960 = vunpack.c.l.b16 %v389
        %v961 = vunpack.c.h.b16 %v389
        %v962 = vunpack.c.l.b16 %v390
        %v963 = vunpack.c.h.b16 %v390
        %v964 = vunpack.c.l.b16 %v391
        %v965 = vunpack.c.h.b16 %v391
        %v966 = vunpack.c.l.b16 %v392
        %v967 = vunpack.c.h.b16 %v392
        %v968 = vunpack.c.l.b16 %v393
        %v969 = vunpack.c.h.b16 %v393
        %v970 = vunpack.c.l.b16 %v394
        %v971 = vunpack.c.h.b16 %v394
        %v972 = vunpack.c.l.b16 %v395
        %v973 = vunpack.c.h.b16 %v395
        %v974 = vunpack.c.l.b16 %v396
        %v975 = vunpack.c.h.b16 %v396
        %v976 = vunpack.c.l.b16 %v397
        %v977 = vunpack.c.h.b16 %v397
        %v978 = vunpack.c.l.b16 %v398
        %v979 = vunpack.c.h.b16 %v398
        %v980 = vunpack.c.l.b16 %v399
        %v981 = vunpack.c.h.b16 %v399
        %v982 = vunpack.c.l.b16 %v400
        %v983 = vunpack.c.h.b16 %v400
        %v984 = vunpack.c.l.b16 %v401
        %v985 = vunpack.c.h.b16 %v401
        %v986 = vunpack.c.l.b16 %v402
        %v987 = vunpack.c.h.b16 %v402
        %v988 = vunpack.c.l.b16 %v403
        %v989 = vunpack.c.h.b16 %v403
        %v990 = vunpack.c.l.b16 %v404
        %v991 = vunpack.c.h.b16 %v404
        %v992 = vunpack.c.l.b16 %v405
        %v993 = vunpack.c.h.b16 %v405
        %v994 = vunpack.c.l.b16 %v406
        %v995 = vunpack.c.h.b16 %v406
        %v996 = vunpack.c.l.b16 %v407
        %v997 = vunpack.c.h.b16 %v407
        %v998 = vunpack.c.l.b16 %v408
        %v999 = vunpack.c.h.b16 %v408
        %v1000 = vunpack.c.l.b16 %v409
        %v1001 = vunpack.c.h.b16 %v409
        %v1002 = vunpack.c.l.b16 %v410
        %v1003 = vunpack.c.h.b16 %v410
        %v1004 = vunpack.c.l.b16 %v411
        %v1005 = vunpack.c.h.b16 %v411
        %v1006 = vunpack.c.l.b16 %v412
        %v1007 = vunpack.c.h.b16 %v412
        %v1008 = vunpack.c.l.b16 %v413
        %v1009 = vunpack.c.h.b16 %v413
        %v1010 = vunpack.c.l.b16 %v414
        %v1011 = vunpack.c.h.b16 %v414
        %v1012 = vunpack.c.l.b16 %v415
        %v1013 = vunpack.c.h.b16 %v415
        %v1014 = vunpack.c.l.b16 %v416
        %v1015 = vunpack.c.h.b16 %v416
        %v1016 = vunpack.c.l.b16 %v417
        %v1017 = vunpack.c.h.b16 %v417
        %v1018 = vunpack.c.l.b16 %v418
        %v1019 = vunpack.c.h.b16 %v418
        %v1020 = vunpack.c.l.b16 %v419
        %v1021 = vunpack.c.h.b16 %v419
        %v1022 = vunpack.c.l.b16 %v420
        %v1023 = vunpack.c.h.b16 %v420
        %v1024 = vunpack.c.l.b16 %v421
        %v1025 = vunpack.c.h.b16 %v421
        %v1026 = vunpack.c.l.b16 %v422
        %v1027 = vunpack.c.h.b16 %v422
        %v1028 = vunpack.c.l.b16 %v423
        %v1029 = vunpack.c.h.b16 %v423
        %v1030 = vunpack.c.l.b16 %v424
        %v1031 = vunpack.c.h.b16 %v424
        %v1032 = vunpack.c.l.b16 %v425
        %v1033 = vunpack.c.h.b16 %v425
        %v1034 = vunpack.c.l.b16 %v426
        %v1035 = vunpack.c.h.b16 %v426
        %v1036 = vunpack.c.l.b16 %v427
        %v1037 = vunpack.c.h.b16 %v427
        %v1038 = vunpack.c.l.b16 %v428
        %v1039 = vunpack.c.h.b16 %v428
        %v1040 = vunpack.c.l.b16 %v429
        %v1041 = vunpack.c.h.b16 %v429
        %v1042 = vunpack.c.l.b16 %v430
        %v1043 = vunpack.c.h.b16 %v430
        %v1044 = vunpack.c.l.b16 %v431
        %v1045 = vunpack.c.h.b16 %v431
        %v1046 = vunpack.c.l.b16 %v432
        %v1047 = vunpack.c.h.b16 %v432
        %v1048 = vunpack.c.l.b16 %v433
        %v1049 = vunpack.c.h.b16 %v433
        %v1050 = vunpack.c.l.b16 %v434
        %v1051 = vunpack.c.h.b16 %v434
        %v1052 = vunpack.c.l.b16 %v435
        %v1053 = vunpack.c.h.b16 %v435
        %v1054 = vunpack.c.l.b16 %v436
        %v1055 = vunpack.c.h.b16 %v436
        %v1056 = vunpack.c.l.b16 %v437
        %v1057 = vunpack.c.h.b16 %v437
        %v1058 = vunpack.c.l.b16 %v438
        %v1059 = vunpack.c.h.b16 %v438
        %v1060 = vunpack.c.l.b16 %v439
        %v1061 = vunpack.c.h.b16 %v439
        %v1062 = vunpack.c.l.b16 %v440
        %v1063 = vunpack.c.h.b16 %v440
        %v1064 = vunpack.c.l.b16 %v441
        %v1065 = vunpack.c.h.b16 %v441
        %v1066 = vunpack.c.l.b16 %v442
        %v1067 = vunpack.c.h.b16 %v442
        %v1068 = vunpack.c.l.b16 %v443
        %v1069 = vunpack.c.h.b16 %v443
        %v1070 = vunpack.c.l.b16 %v444
        %v1071 = vunpack.c.h.b16 %v444
        %v1072 = vunpack.c.l.b16 %v445
        %v1073 = vunpack.c.h.b16 %v445
        %v1074 = vunpack.c.l.b16 %v446
        %v1075 = vunpack.c.h.b16 %v446
        %v1076 = vunpack.c.l.b16 %v447
        %v1077 = vunpack.c.h.b16 %v447
        %v1078 = vunpack.c.l.b16 %v448
        %v1079 = vunpack.c.h.b16 %v448
        %v1080 = vunpack.c.l.b16 %v449
        %v1081 = vunpack.c.h.b16 %v449
        %v1082 = vunpack.c.l.b16 %v450
        %v1083 = vunpack.c.h.b16 %v450
        %v1084 = vunpack.c.l.b16 %v451
        %v1085 = vunpack.c.h.b16 %v451
        %v1086 = vunpack.c.l.b16 %v452
        %v1087 = vunpack.c.h.b16 %v452
        %v1088 = vunpack.c.l.b16 %v453
        %v1089 = vunpack.c.h.b16 %v453
        %v1090 = vunpack.c.l.b16 %v454
        %v1091 = vunpack.c.h.b16 %v454
        %v1092 = vunpack.c.l.b16 %v455
        %v1093 = vunpack.c.h.b16 %v455
        %v1094 = vunpack.c.l.b16 %v456
        %v1095 = vunpack.c.h.b16 %v456
        %v1096 = vunpack.c.l.b16 %v457
        %v1097 = vunpack.c.h.b16 %v457
        %v1098 = vunpack.c.l.b16 %v458
        %v1099 = vunpack.c.h.b16 %v458
        %v1100 = vunpack.c.l.b16 %v459
        %v1101 = vunpack.c.h.b16 %v459
        %v1102 = vunpack.c.l.b16 %v460
        %v1103 = vunpack.c.h.b16 %v460
        %v1104 = vunpack.c.l.b16 %v461
        %v1105 = vunpack.c.h.b16 %v461
        %v1106 = vunpack.c.l.b16 %v462
        %v1107 = vunpack.c.h.b16 %v462
        %v1108 = vunpack.c.l.b16 %v463
        %v1109 = vunpack.c.h.b16 %v463
        %v1110 = vunpack.c.l.b16 %v464
        %v1111 = vunpack.c.h.b16 %v464
        %v1112 = vunpack.c.l.b16 %v465
        %v1113 = vunpack.c.h.b16 %v465
        %v1114 = vunpack.c.l.b16 %v466
        %v1115 = vunpack.c.h.b16 %v466
        %v1116 = vunpack.c.l.b16 %v467
        %v1117 = vunpack.c.h.b16 %v467
        %v1118 = vunpack.c.l.b16 %v468
        %v1119 = vunpack.c.h.b16 %v468
        %v1120 = vunpack.c.l.b16 %v469
        %v1121 = vunpack.c.h.b16 %v469
        %v1122 = vunpack.c.l.b16 %v470
        %v1123 = vunpack.c.h.b16 %v470
        %v1124 = vunpack.c.l.b16 %v471
        %v1125 = vunpack.c.h.b16 %v471
        %v1126 = vunpack.c.l.b16 %v472
        %v1127 = vunpack.c.h.b16 %v472
        %v1128 = vunpack.c.l.b16 %v473
        %v1129 = vunpack.c.h.b16 %v473
        %v1130 = vunpack.c.l.b16 %v474
        %v1131 = vunpack.c.h.b16 %v474
        %v1132 = vunpack.c.l.b16 %v475
        %v1133 = vunpack.c.h.b16 %v475
        %v1134 = vunpack.c.l.b16 %v476
        %v1135 = vunpack.c.h.b16 %v476
        %v1136 = vunpack.c.l.b16 %v477
        %v1137 = vunpack.c.h.b16 %v477
        %v1138 = vunpack.c.l.b16 %v478
        %v1139 = vunpack.c.h.b16 %v478
        %v1140 = vunpack.c.l.b16 %v479
        %v1141 = vunpack.c.h.b16 %v479
        %v1142 = vunpack.c.l.b16 %v480
        %v1143 = vunpack.c.h.b16 %v480
        %v1144 = vunpack.c.l.b16 %v481
        %v1145 = vunpack.c.h.b16 %v481
        %v1146 = vunpack.c.l.b16 %v482
        %v1147 = vunpack.c.h.b16 %v482
        %v1148 = vunpack.c.l.b16 %v483
        %v1149 = vunpack.c.h.b16 %v483
        %v1150 = vunpack.c.l.b16 %v484
        %v1151 = vunpack.c.h.b16 %v484
        %v1152 = vunpack.c.l.b16 %v485
        %v1153 = vunpack.c.h.b16 %v485
        %v1154 = vunpack.c.l.b16 %v486
        %v1155 = vunpack.c.h.b16 %v486
        %v1156 = vunpack.c.l.b16 %v487
        %v1157 = vunpack.c.h.b16 %v487
        %v1158 = vunpack.c.l.b16 %v488
        %v1159 = vunpack.c.h.b16 %v488
        %v1160 = vunpack.c.l.b16 %v489
        %v1161 = vunpack.c.h.b16 %v489
        %v1162 = vunpack.c.l.b16 %v490
        %v1163 = vunpack.c.h.b16 %v490
        %v1164 = vunpack.c.l.b16 %v491
        %v1165 = vunpack.c.h.b16 %v491
        %v1166 = vunpack.c.l.b16 %v492
        %v1167 = vunpack.c.h.b16 %v492
        %v1168 = vunpack.c.l.b16 %v493
        %v1169 = vunpack.c.h.b16 %v493
        %v1170 = vunpack.c.l.b16 %v494
        %v1171 = vunpack.c.h.b16 %v494
        %v1172 = vunpack.c.l.b16 %v495
        %v1173 = vunpack.c.h.b16 %v495
        %v1174 = vunpack.c.l.b16 %v496
        %v1175 = vunpack.c.h.b16 %v496
        %v1176 = vunpack.c.l.b16 %v497
        %v1177 = vunpack.c.h.b16 %v497
        %v1178 = vunpack.c.l.b16 %v498
        %v1179 = vunpack.c.h.b16 %v498
        %v1180 = vunpack.c.l.b16 %v499
        %v1181 = vunpack.c.h.b16 %v499
        %v1182 = vunpack.c.l.b16 %v500
        %v1183 = vunpack.c.h.b16 %v500
        %v1184 = vunpack.c.l.b16 %v501
        %v1185 = vunpack.c.h.b16 %v501
        %v1186 = vunpack.c.l.b16 %v502
        %v1187 = vunpack.c.h.b16 %v502
        %v1188 = vunpack.c.l.b16 %v503
        %v1189 = vunpack.c.h.b16 %v503
        %v1190 = vunpack.c.l.b16 %v504
        %v1191 = vunpack.c.h.b16 %v504
        %v1192 = vunpack.c.l.b16 %v505
        %v1193 = vunpack.c.h.b16 %v505
        %v1194 = vunpack.c.l.b16 %v506
        %v1195 = vunpack.c.h.b16 %v506
        %v1196 = vunpack.c.l.b16 %v507
        %v1197 = vunpack.c.h.b16 %v507
        %v1198 = vpack.c.b16 %v784, %v782
        %v1199 = vpack.c.b16 %v785, %v783
        %v1200 = vpack.c.b16 %v788, %v786
        %v1201 = vpack.c.b16 %v789, %v787
        %v1202 = vpack.c.b16 %v792, %v790
        %v1203 = vpack.c.b16 %v793, %v791
        %v1204 = vpack.c.b16 %v796, %v794
        %v1205 = vpack.c.b16 %v797, %v795
        %v1206 = vpack.c.b16 %v800, %v798
        %v1207 = vpack.c.b16 %v801, %v799
        %v1208 = vpack.c.b16 %v804, %v802
        %v1209 = vpack.c.b16 %v805, %v803
        %v1210 = vpack.c.b16 %v808, %v806
        %v1211 = vpack.c.b16 %v809, %v807
        %v1212 = vpack.c.b16 %v812, %v810
        %v1213 = vpack.c.b16 %v813, %v811
        %v1214 = vpack.c.b16 %v816, %v814
        %v1215 = vpack.c.b16 %v817, %v815
        %v1216 = vpack.c.b16 %v820, %v818
        %v1217 = vpack.c.b16 %v821, %v819
        %v1218 = vpack.c.b16 %v824, %v822
        %v1219 = vpack.c.b16 %v825, %v823
        %v1220 = vpack.c.b16 %v828, %v826
        %v1221 = vpack.c.b16 %v829, %v827
        %v1222 = vpack.c.b16 %v832, %v830
        %v1223 = vpack.c.b16 %v833, %v831
        %v1224 = vpack.c.b16 %v836, %v834
        %v1225 = vpack.c.b16 %v837, %v835
        %v1226 = vpack.c.b16 %v840, %v838
        %v1227 = vpack.c.b16 %v841, %v839
        %v1228 = vpack.c.b16 %v844, %v842
        %v1229 = vpack.c.b16 %v845, %v843
        %v1230 = vpack.c.b16 %v848, %v846
        %v1231 = vpack.c.b16 %v849, %v847
        %v1232 = vpack.c.b16 %v852, %v850
        %v1233 = vpack.c.b16 %v853, %v851
        %v1234 = vpack.c.b16 %v856, %v854
        %v1235 = vpack.c.b16 %v857, %v855
        %v1236 = vpack.c.b16 %v860, %v858
        %v1237 = vpack.c.b16 %v861, %v859
        %v1238 = vpack.c.b16 %v864, %v862
        %v1239 = vpack.c.b16 %v865, %v863
        %v1240 = vpack.c.b16 %v868, %v866
        %v1241 = vpack.c.b16 %v869, %v867
        %v1242 = vpack.c.b16 %v872, %v870
        %v1243 = vpack.c.b16 %v873, %v871
        %v1244 = vpack.c.b16 %v876, %v874
        %v1245 = vpack.c.b16 %v877, %v875
        %v1246 = vpack.c.b16 %v880, %v878
        %v1247 = vpack.c.b16 %v881, %v879
        %v1248 = vpack.c.b16 %v884, %v882
        %v1249 = vpack.c.b16 %v885, %v883
        %v1250 = vpack.c.b16 %v888, %v886
        %v1251 = vpack.c.b16 %v889, %v887
        %v1252 = vpack.c.b16 %v892, %v890
        %v1253 = vpack.c.b16 %v893, %v891
        %v1254 = vpack.c.b16 %v896, %v894
        %v1255 = vpack.c.b16 %v897, %v895
        %v1256 = vpack.c.b16 %v900, %v898
        %v1257 = vpack.c.b16 %v901, %v899
        %v1258 = vpack.c.b16 %v904, %v902
        %v1259 = vpack.c.b16 %v905, %v903
        %v1260 = vpack.c.b16 %v908, %v906
        %v1261 = vpack.c.b16 %v909, %v907
        %v1262 = vpack.c.b16 %v912, %v910
        %v1263 = vpack.c.b16 %v913, %v911
        %v1264 = vpack.c.b16 %v916, %v914
        %v1265 = vpack.c.b16 %v917, %v915
        %v1266 = vpack.c.b16 %v920, %v918
        %v1267 = vpack.c.b16 %v921, %v919
        %v1268 = vpack.c.b16 %v924, %v922
        %v1269 = vpack.c.b16 %v925, %v923
        %v1270 = vpack.c.b16 %v928, %v926
        %v1271 = vpack.c.b16 %v929, %v927
        %v1272 = vpack.c.b16 %v932, %v930
        %v1273 = vpack.c.b16 %v933, %v931
        %v1274 = vpack.c.b16 %v936, %v934
        %v1275 = vpack.c.b16 %v937, %v935
        %v1276 = vpack.c.b16 %v940, %v938
        %v1277 = vpack.c.b16 %v941, %v939
        %v1278 = vpack.c.b16 %v944, %v942
        %v1279 = vpack.c.b16 %v945, %v943
        %v1280 = vpack.c.b16 %v948, %v946
        %v1281 = vpack.c.b16 %v949, %v947
        %v1282 = vpack.c.b16 %v952, %v950
        %v1283 = vpack.c.b16 %v953, %v951
        %v1284 = vpack.c.b16 %v956, %v954
        %v1285 = vpack.c.b16 %v957, %v955
        %v1286 = vpack.c.b16 %v960, %v958
        %v1287 = vpack.c.b16 %v961, %v959
        %v1288 = vpack.c.b16 %v964, %v962
        %v1289 = vpack.c.b16 %v965, %v963
        %v1290 = vpack.c.b16 %v968, %v966
        %v1291 = vpack.c.b16 %v969, %v967
        %v1292 = vpack.c.b16 %v972, %v970
        %v1293 = vpack.c.b16 %v973, %v971
        %v1294 = vpack.c.b16 %v976, %v974
        %v1295 = vpack.c.b16 %v977, %v975
        %v1296 = vpack.c.b16 %v980, %v978
        %v1297 = vpack.c.b16 %v981, %v979
        %v1298 = vpack.c.b16 %v984, %v982
        %v1299 = vpack.c.b16 %v985, %v983
        %v1300 = vpack.c.b16 %v988, %v986
        %v1301 = vpack.c.b16 %v989, %v987
        %v1302 = vpack.c.b16 %v992, %v990
        %v1303 = vpack.c.b16 %v993, %v991
        %v1304 = vpack.c.b16 %v996, %v994
        %v1305 = vpack.c.b16 %v997, %v995
        %v1306 = vpack.c.b16 %v1000, %v998
        %v1307 = vpack.c.b16 %v1001, %v999
        %v1308 = vpack.c.b16 %v1004, %v1002
        %v1309 = vpack.c.b16 %v1005, %v1003
        %v1310 = vpack.c.b16 %v1008, %v1006
        %v1311 = vpack.c.b16 %v1009, %v1007
        %v1312 = vpack.c.b16 %v1012, %v1010
        %v1313 = vpack.c.b16 %v1013, %v1011
        %v1314 = vpack.c.b16 %v1016, %v1014
        %v1315 = vpack.c.b16 %v1017, %v1015
        %v1316 = vpack.c.b16 %v1020, %v1018
        %v1317 = vpack.c.b16 %v1021, %v1019
        %v1318 = vpack.c.b16 %v1024, %v1022
        %v1319 = vpack.c.b16 %v1025, %v1023
        %v1320 = vpack.c.b16 %v1028, %v1026
        %v1321 = vpack.c.b16 %v1029, %v1027
        %v1322 = vpack.c.b16 %v1032, %v1030
        %v1323 = vpack.c.b16 %v1033, %v1031
        %v1324 = vpack.c.b16 %v1036, %v1034
        %v1325 = vpack.c.b16 %v1037, %v1035
        %v1326 = vpack.c.b16 %v1040, %v1038
        %v1327 = vpack.c.b16 %v1041, %v1039
        %v1328 = vpack.c.b16 %v1044, %v1042
        %v1329 = vpack.c.b16 %v1045, %v1043
        %v1330 = vpack.c.b16 %v1048, %v1046
        %v1331 = vpack.c.b16 %v1049, %v1047
        %v1332 = vpack.c.b16 %v1052, %v1050
        %v1333 = vpack.c.b16 %v1053, %v1051
        %v1334 = vpack.c.b16 %v1056, %v1054
        %v1335 = vpack.c.b16 %v1057, %v1055
        %v1336 = vpack.c.b16 %v1060, %v1058
        %v1337 = vpack.c.b16 %v1061, %v1059
        %v1338 = vpack.c.b16 %v1064, %v1062
        %v1339 = vpack.c.b16 %v1065, %v1063
        %v1340 = vpack.c.b16 %v1068, %v1066
        %v1341 = vpack.c.b16 %v1069, %v1067
        %v1342 = vpack.c.b16 %v1072, %v1070
        %v1343 = vpack.c.b16 %v1073, %v1071
        %v1344 = vpack.c.b16 %v1076, %v1074
        %v1345 = vpack.c.b16 %v1077, %v1075
        %v1346 = vpack.c.b16 %v1080, %v1078
        %v1347 = vpack.c.b16 %v1081, %v1079
        %v1348 = vpack.c.b16 %v1084, %v1082
        %v1349 = vpack.c.b16 %v1085, %v1083
        %v1350 = vpack.c.b16 %v1088, %v1086
        %v1351 = vpack.c.b16 %v1089, %v1087
        %v1352 = vpack.c.b16 %v1092, %v1090
        %v1353 = vpack.c.b16 %v1093, %v1091
        %v1354 = vpack.c.b16 %v1096, %v1094
        %v1355 = vpack.c.b16 %v1097, %v1095
        %v1356 = vpack.c.b16 %v1100, %v1098
        %v1357 = vpack.c.b16 %v1101, %v1099
        %v1358 = vpack.c.b16 %v1104, %v1102
        %v1359 = vpack.c.b16 %v1105, %v1103
        %v1360 = vpack.c.b16 %v1108, %v1106
        %v1361 = vpack.c.b16 %v1109, %v1107
        %v1362 = vpack.c.b16 %v1112, %v1110
        %v1363 = vpack.c.b16 %v1113, %v1111
        %v1364 = vpack.c.b16 %v1116, %v1114
        %v1365 = vpack.c.b16 %v1117, %v1115
        %v1366 = vpack.c.b16 %v1120, %v1118
        %v1367 = vpack.c.b16 %v1121, %v1119
        %v1368 = vpack.c.b16 %v1124, %v1122
        %v1369 = vpack.c.b16 %v1125, %v1123
        %v1370 = vpack.c.b16 %v1128, %v1126
        %v1371 = vpack.c.b16 %v1129, %v1127
        %v1372 = vpack.c.b16 %v1132, %v1130
        %v1373 = vpack.c.b16 %v1133, %v1131
        %v1374 = vpack.c.b16 %v1136, %v1134
        %v1375 = vpack.c.b16 %v1137, %v1135
        %v1376 = vpack.c.b16 %v1140, %v1138
        %v1377 = vpack.c.b16 %v1141, %v1139
        %v1378 = vpack.c.b16 %v1144, %v1142
        %v1379 = vpack.c.b16 %v1145, %v1143
        %v1380 = vpack.c.b16 %v1148, %v1146
        %v1381 = vpack.c.b16 %v1149, %v1147
        %v1382 = vpack.c.b16 %v1152, %v1150
        %v1383 = vpack.c.b16 %v1153, %v1151
        %v1384 = vpack.c.b16 %v1156, %v1154
        %v1385 = vpack.c.b16 %v1157, %v1155
        %v1386 = vpack.c.b16 %v1160, %v1158
        %v1387 = vpack.c.b16 %v1161, %v1159
        %v1388 = vpack.c.b16 %v1164, %v1162
        %v1389 = vpack.c.b16 %v1165, %v1163
        %v1390 = vpack.c.b16 %v1168, %v1166
        %v1391 = vpack.c.b16 %v1169, %v1167
        %v1392 = vpack.c.b16 %v1172, %v1170
        %v1393 = vpack.c.b16 %v1173, %v1171
        %v1394 = vpack.c.b16 %v1176, %v1174
        %v1395 = vpack.c.b16 %v1177, %v1175
        %v1396 = vpack.c.b16 %v1180, %v1178
        %v1397 = vpack.c.b16 %v1181, %v1179
        %v1398 = vpack.c.b16 %v1184, %v1182
        %v1399 = vpack.c.b16 %v1185, %v1183
        %v1400 = vpack.c.b16 %v1188, %v1186
        %v1401 = vpack.c.b16 %v1189, %v1187
        %v1402 = vpack.c.b16 %v1192, %v1190
        %v1403 = vpack.c.b16 %v1193, %v1191
        %v1404 = vpack.c.b16 %v1196, %v1194
        %v1405 = vpack.c.b16 %v1197, %v1195
        %1614 = vmatpush.bf16.msra.mxu0 %v1212
        %1615 = vmatpush.bf16.msra.mxu0 %v1210
        %1616 = vmatpush.bf16.msra.mxu0 %v1208
        %1617 = vmatpush.bf16.msra.mxu0 %v1206
        %1618 = vmatpush.bf16.msra.mxu0 %v1204
        %1619 = vmatpush.bf16.msra.mxu0 %v1202
        %1620 = vmatpush.bf16.msra.mxu0 %v1200
        %1621 = vmatpush.bf16.msra.mxu0 %v1198
        %1622 = vmatmul.bf16.gmra.mxu0 %v548
        %v1623 = vpop.f32.mrf.mxu0
        %v1624 = vadd.f32 0.0, %v1623
        %v1625 = vpop.f32.mrf.mxu0
        %v1626 = vadd.f32 0.0, %v1625
        %1627 = vdwg.mxu0
        %1628 = vmatpush.bf16.msra.mxu0 %v1228
        %1629 = vmatpush.bf16.msra.mxu0 %v1226
        %1630 = vmatpush.bf16.msra.mxu0 %v1224
        %1631 = vmatpush.bf16.msra.mxu0 %v1222
        %1632 = vmatpush.bf16.msra.mxu0 %v1220
        %1633 = vmatpush.bf16.msra.mxu0 %v1218
        %1634 = vmatpush.bf16.msra.mxu0 %v1216
        %1635 = vmatpush.bf16.msra.mxu0 %v1214
        %1636 = vmatmul.bf16.gmra.mxu0 %v549
        %v1637 = vpop.f32.mrf.mxu0
        %v1638 = vadd.f32 %v1624, %v1637
        %v1639 = vpop.f32.mrf.mxu0
        %v1640 = vadd.f32 %v1626, %v1639
        %1641 = vdwg.mxu0
        %1642 = vmatpush.bf16.msra.mxu0 %v1244
        %1643 = vmatpush.bf16.msra.mxu0 %v1242
        %1644 = vmatpush.bf16.msra.mxu0 %v1240
        %1645 = vmatpush.bf16.msra.mxu0 %v1238
        %1646 = vmatpush.bf16.msra.mxu0 %v1236
        %1647 = vmatpush.bf16.msra.mxu0 %v1234
        %1648 = vmatpush.bf16.msra.mxu0 %v1232
        %1649 = vmatpush.bf16.msra.mxu0 %v1230
        %1650 = vmatmul.bf16.gmra.mxu0 %v550
        %v1651 = vpop.f32.mrf.mxu0
        %v1652 = vadd.f32 %v1638, %v1651
        %v1653 = vpop.f32.mrf.mxu0
        %v1654 = vadd.f32 %v1640, %v1653
        %1655 = vdwg.mxu0
        %1656 = vmatpush.bf16.msra.mxu0 %v1260
        %1657 = vmatpush.bf16.msra.mxu0 %v1258
        %1658 = vmatpush.bf16.msra.mxu0 %v1256
        %1659 = vmatpush.bf16.msra.mxu0 %v1254
        %1660 = vmatpush.bf16.msra.mxu0 %v1252
        %1661 = vmatpush.bf16.msra.mxu0 %v1250
        %1662 = vmatpush.bf16.msra.mxu0 %v1248
        %1663 = vmatpush.bf16.msra.mxu0 %v1246
        %1664 = vmatmul.bf16.gmra.mxu0 %v551
        %v1665 = vpop.f32.mrf.mxu0
        %v1666 = vadd.f32 %v1652, %v1665
        %v1667 = vpop.f32.mrf.mxu0
        %v1668 = vadd.f32 %v1654, %v1667
        %1669 = vdwg.mxu0
        %1670 = vmatpush.bf16.msra.mxu0 %v1276
        %1671 = vmatpush.bf16.msra.mxu0 %v1274
        %1672 = vmatpush.bf16.msra.mxu0 %v1272
        %1673 = vmatpush.bf16.msra.mxu0 %v1270
        %1674 = vmatpush.bf16.msra.mxu0 %v1268
        %1675 = vmatpush.bf16.msra.mxu0 %v1266
        %1676 = vmatpush.bf16.msra.mxu0 %v1264
        %1677 = vmatpush.bf16.msra.mxu0 %v1262
        %1678 = vmatmul.bf16.gmra.mxu0 %v552
        %v1679 = vpop.f32.mrf.mxu0
        %v1680 = vadd.f32 %v1666, %v1679
        %v1681 = vpop.f32.mrf.mxu0
        %v1682 = vadd.f32 %v1668, %v1681
        %1683 = vdwg.mxu0
        %1684 = vmatpush.bf16.msra.mxu0 %v1292
        %1685 = vmatpush.bf16.msra.mxu0 %v1290
        %1686 = vmatpush.bf16.msra.mxu0 %v1288
        %1687 = vmatpush.bf16.msra.mxu0 %v1286
        %1688 = vmatpush.bf16.msra.mxu0 %v1284
        %1689 = vmatpush.bf16.msra.mxu0 %v1282
        %1690 = vmatpush.bf16.msra.mxu0 %v1280
        %1691 = vmatpush.bf16.msra.mxu0 %v1278
        %1692 = vmatmul.bf16.gmra.mxu0 %v553
        %v1693 = vpop.f32.mrf.mxu0
        %v1694 = vadd.f32 %v1680, %v1693
        %v1695 = vpop.f32.mrf.mxu0
        %v1696 = vadd.f32 %v1682, %v1695
        %1697 = vdwg.mxu0
        %1698 = vmatpush.bf16.msra.mxu0 %v1308
        %1699 = vmatpush.bf16.msra.mxu0 %v1306
        %1700 = vmatpush.bf16.msra.mxu0 %v1304
        %1701 = vmatpush.bf16.msra.mxu0 %v1302
        %1702 = vmatpush.bf16.msra.mxu0 %v1300
        %1703 = vmatpush.bf16.msra.mxu0 %v1298
        %1704 = vmatpush.bf16.msra.mxu0 %v1296
        %1705 = vmatpush.bf16.msra.mxu0 %v1294
        %1706 = vmatmul.bf16.gmra.mxu0 %v554
        %v1707 = vpop.f32.mrf.mxu0
        %v1708 = vadd.f32 %v1694, %v1707
        %v1709 = vpop.f32.mrf.mxu0
        %v1710 = vadd.f32 %v1696, %v1709
        %1711 = vdwg.mxu0
        %1712 = vmatpush.bf16.msra.mxu0 %v1324
        %1713 = vmatpush.bf16.msra.mxu0 %v1322
        %1714 = vmatpush.bf16.msra.mxu0 %v1320
        %1715 = vmatpush.bf16.msra.mxu0 %v1318
        %1716 = vmatpush.bf16.msra.mxu0 %v1316
        %1717 = vmatpush.bf16.msra.mxu0 %v1314
        %1718 = vmatpush.bf16.msra.mxu0 %v1312
        %1719 = vmatpush.bf16.msra.mxu0 %v1310
        %1720 = vmatmul.bf16.gmra.mxu0 %v555
        %v1721 = vpop.f32.mrf.mxu0
        %v1722 = vadd.f32 %v1708, %v1721
        %v1723 = vpop.f32.mrf.mxu0
        %v1724 = vadd.f32 %v1710, %v1723
        %1725 = vdwg.mxu0
        %1726 = vmatpush.bf16.msra.mxu0 %v1340
        %1727 = vmatpush.bf16.msra.mxu0 %v1338
        %1728 = vmatpush.bf16.msra.mxu0 %v1336
        %1729 = vmatpush.bf16.msra.mxu0 %v1334
        %1730 = vmatpush.bf16.msra.mxu0 %v1332
        %1731 = vmatpush.bf16.msra.mxu0 %v1330
        %1732 = vmatpush.bf16.msra.mxu0 %v1328
        %1733 = vmatpush.bf16.msra.mxu0 %v1326
        %1734 = vmatmul.bf16.gmra.mxu0 %v556
        %v1735 = vpop.f32.mrf.mxu0
        %v1736 = vadd.f32 %v1722, %v1735
        %v1737 = vpop.f32.mrf.mxu0
        %v1738 = vadd.f32 %v1724, %v1737
        %1739 = vdwg.mxu0
        %1740 = vmatpush.bf16.msra.mxu0 %v1356
        %1741 = vmatpush.bf16.msra.mxu0 %v1354
        %1742 = vmatpush.bf16.msra.mxu0 %v1352
        %1743 = vmatpush.bf16.msra.mxu0 %v1350
        %1744 = vmatpush.bf16.msra.mxu0 %v1348
        %1745 = vmatpush.bf16.msra.mxu0 %v1346
        %1746 = vmatpush.bf16.msra.mxu0 %v1344
        %1747 = vmatpush.bf16.msra.mxu0 %v1342
        %1748 = vmatmul.bf16.gmra.mxu0 %v557
        %v1749 = vpop.f32.mrf.mxu0
        %v1750 = vadd.f32 %v1736, %v1749
        %v1751 = vpop.f32.mrf.mxu0
        %v1752 = vadd.f32 %v1738, %v1751
        %1753 = vdwg.mxu0
        %1754 = vmatpush.bf16.msra.mxu0 %v1372
        %1755 = vmatpush.bf16.msra.mxu0 %v1370
        %1756 = vmatpush.bf16.msra.mxu0 %v1368
        %1757 = vmatpush.bf16.msra.mxu0 %v1366
        %1758 = vmatpush.bf16.msra.mxu0 %v1364
        %1759 = vmatpush.bf16.msra.mxu0 %v1362
        %1760 = vmatpush.bf16.msra.mxu0 %v1360
        %1761 = vmatpush.bf16.msra.mxu0 %v1358
        %1762 = vmatmul.bf16.gmra.mxu0 %v558
        %v1763 = vpop.f32.mrf.mxu0
        %v1764 = vadd.f32 %v1750, %v1763
        %v1765 = vpop.f32.mrf.mxu0
        %v1766 = vadd.f32 %v1752, %v1765
        %1767 = vdwg.mxu0
        %1768 = vmatpush.bf16.msra.mxu0 %v1388
        %1769 = vmatpush.bf16.msra.mxu0 %v1386
        %1770 = vmatpush.bf16.msra.mxu0 %v1384
        %1771 = vmatpush.bf16.msra.mxu0 %v1382
        %1772 = vmatpush.bf16.msra.mxu0 %v1380
        %1773 = vmatpush.bf16.msra.mxu0 %v1378
        %1774 = vmatpush.bf16.msra.mxu0 %v1376
        %1775 = vmatpush.bf16.msra.mxu0 %v1374
        %1776 = vmatmul.bf16.gmra.mxu0 %v559
        %v1777 = vpop.f32.mrf.mxu0
        %v1778 = vadd.f32 %v1764, %v1777
        %v1779 = vpop.f32.mrf.mxu0
        %v1780 = vadd.f32 %v1766, %v1779
        %1781 = vdwg.mxu0
        %1782 = vmatpush.bf16.msra.mxu0 %v1404
        %1783 = vmatpush.bf16.msra.mxu0 %v1402
        %1784 = vmatpush.bf16.msra.mxu0 %v1400
        %1785 = vmatpush.bf16.msra.mxu0 %v1398
        %1786 = vmatpush.bf16.msra.mxu0 %v1396
        %1787 = vmatpush.bf16.msra.mxu0 %v1394
        %1788 = vmatpush.bf16.msra.mxu0 %v1392
        %1789 = vmatpush.bf16.msra.mxu0 %v1390
        %1790 = vmatmul.bf16.gmra.mxu0 %v560
        %v1791 = vpop.f32.mrf.mxu0
        %v1792 = vadd.f32 %v1778, %v1791
        %v1793 = vpop.f32.mrf.mxu0
        %v1794 = vadd.f32 %v1780, %v1793
        %1795 = vdwg.mxu0
        %1796 = vmatpush.bf16.msra.mxu0 %v1213
        %1797 = vmatpush.bf16.msra.mxu0 %v1211
        %1798 = vmatpush.bf16.msra.mxu0 %v1209
        %1799 = vmatpush.bf16.msra.mxu0 %v1207
        %1800 = vmatpush.bf16.msra.mxu0 %v1205
        %1801 = vmatpush.bf16.msra.mxu0 %v1203
        %1802 = vmatpush.bf16.msra.mxu0 %v1201
        %1803 = vmatpush.bf16.msra.mxu0 %v1199
        %1804 = vmatmul.bf16.gmra.mxu0 %v548
        %v1805 = vpop.f32.mrf.mxu0
        %v1806 = vadd.f32 0.0, %v1805
        %v1807 = vpop.f32.mrf.mxu0
        %v1808 = vadd.f32 0.0, %v1807
        %1809 = vdwg.mxu0
        %1810 = vmatpush.bf16.msra.mxu0 %v1229
        %1811 = vmatpush.bf16.msra.mxu0 %v1227
        %1812 = vmatpush.bf16.msra.mxu0 %v1225
        %1813 = vmatpush.bf16.msra.mxu0 %v1223
        %1814 = vmatpush.bf16.msra.mxu0 %v1221
        %1815 = vmatpush.bf16.msra.mxu0 %v1219
        %1816 = vmatpush.bf16.msra.mxu0 %v1217
        %1817 = vmatpush.bf16.msra.mxu0 %v1215
        %1818 = vmatmul.bf16.gmra.mxu0 %v549
        %v1819 = vpop.f32.mrf.mxu0
        %v1820 = vadd.f32 %v1806, %v1819
        %v1821 = vpop.f32.mrf.mxu0
        %v1822 = vadd.f32 %v1808, %v1821
        %1823 = vdwg.mxu0
        %1824 = vmatpush.bf16.msra.mxu0 %v1245
        %1825 = vmatpush.bf16.msra.mxu0 %v1243
        %1826 = vmatpush.bf16.msra.mxu0 %v1241
        %1827 = vmatpush.bf16.msra.mxu0 %v1239
        %1828 = vmatpush.bf16.msra.mxu0 %v1237
        %1829 = vmatpush.bf16.msra.mxu0 %v1235
        %1830 = vmatpush.bf16.msra.mxu0 %v1233
        %1831 = vmatpush.bf16.msra.mxu0 %v1231
        %1832 = vmatmul.bf16.gmra.mxu0 %v550
        %v1833 = vpop.f32.mrf.mxu0
        %v1834 = vadd.f32 %v1820, %v1833
        %v1835 = vpop.f32.mrf.mxu0
        %v1836 = vadd.f32 %v1822, %v1835
        %1837 = vdwg.mxu0
        %1838 = vmatpush.bf16.msra.mxu0 %v1261
        %1839 = vmatpush.bf16.msra.mxu0 %v1259
        %1840 = vmatpush.bf16.msra.mxu0 %v1257
        %1841 = vmatpush.bf16.msra.mxu0 %v1255
        %1842 = vmatpush.bf16.msra.mxu0 %v1253
        %1843 = vmatpush.bf16.msra.mxu0 %v1251
        %1844 = vmatpush.bf16.msra.mxu0 %v1249
        %1845 = vmatpush.bf16.msra.mxu0 %v1247
        %1846 = vmatmul.bf16.gmra.mxu0 %v551
        %v1847 = vpop.f32.mrf.mxu0
        %v1848 = vadd.f32 %v1834, %v1847
        %v1849 = vpop.f32.mrf.mxu0
        %v1850 = vadd.f32 %v1836, %v1849
        %1851 = vdwg.mxu0
        %1852 = vmatpush.bf16.msra.mxu0 %v1277
        %1853 = vmatpush.bf16.msra.mxu0 %v1275
        %1854 = vmatpush.bf16.msra.mxu0 %v1273
        %1855 = vmatpush.bf16.msra.mxu0 %v1271
        %1856 = vmatpush.bf16.msra.mxu0 %v1269
        %1857 = vmatpush.bf16.msra.mxu0 %v1267
        %1858 = vmatpush.bf16.msra.mxu0 %v1265
        %1859 = vmatpush.bf16.msra.mxu0 %v1263
        %1860 = vmatmul.bf16.gmra.mxu0 %v552
        %v1861 = vpop.f32.mrf.mxu0
        %v1862 = vadd.f32 %v1848, %v1861
        %v1863 = vpop.f32.mrf.mxu0
        %v1864 = vadd.f32 %v1850, %v1863
        %1865 = vdwg.mxu0
        %1866 = vmatpush.bf16.msra.mxu0 %v1293
        %1867 = vmatpush.bf16.msra.mxu0 %v1291
        %1868 = vmatpush.bf16.msra.mxu0 %v1289
        %1869 = vmatpush.bf16.msra.mxu0 %v1287
        %1870 = vmatpush.bf16.msra.mxu0 %v1285
        %1871 = vmatpush.bf16.msra.mxu0 %v1283
        %1872 = vmatpush.bf16.msra.mxu0 %v1281
        %1873 = vmatpush.bf16.msra.mxu0 %v1279
        %1874 = vmatmul.bf16.gmra.mxu0 %v553
        %v1875 = vpop.f32.mrf.mxu0
        %v1876 = vadd.f32 %v1862, %v1875
        %v1877 = vpop.f32.mrf.mxu0
        %v1878 = vadd.f32 %v1864, %v1877
        %1879 = vdwg.mxu0
        %1880 = vmatpush.bf16.msra.mxu0 %v1309
        %1881 = vmatpush.bf16.msra.mxu0 %v1307
        %1882 = vmatpush.bf16.msra.mxu0 %v1305
        %1883 = vmatpush.bf16.msra.mxu0 %v1303
        %1884 = vmatpush.bf16.msra.mxu0 %v1301
        %1885 = vmatpush.bf16.msra.mxu0 %v1299
        %1886 = vmatpush.bf16.msra.mxu0 %v1297
        %1887 = vmatpush.bf16.msra.mxu0 %v1295
        %1888 = vmatmul.bf16.gmra.mxu0 %v554
        %v1889 = vpop.f32.mrf.mxu0
        %v1890 = vadd.f32 %v1876, %v1889
        %v1891 = vpop.f32.mrf.mxu0
        %v1892 = vadd.f32 %v1878, %v1891
        %1893 = vdwg.mxu0
        %1894 = vmatpush.bf16.msra.mxu0 %v1325
        %1895 = vmatpush.bf16.msra.mxu0 %v1323
        %1896 = vmatpush.bf16.msra.mxu0 %v1321
        %1897 = vmatpush.bf16.msra.mxu0 %v1319
        %1898 = vmatpush.bf16.msra.mxu0 %v1317
        %1899 = vmatpush.bf16.msra.mxu0 %v1315
        %1900 = vmatpush.bf16.msra.mxu0 %v1313
        %1901 = vmatpush.bf16.msra.mxu0 %v1311
        %1902 = vmatmul.bf16.gmra.mxu0 %v555
        %v1903 = vpop.f32.mrf.mxu0
        %v1904 = vadd.f32 %v1890, %v1903
        %v1905 = vpop.f32.mrf.mxu0
        %v1906 = vadd.f32 %v1892, %v1905
        %1907 = vdwg.mxu0
        %1908 = vmatpush.bf16.msra.mxu0 %v1341
        %1909 = vmatpush.bf16.msra.mxu0 %v1339
        %1910 = vmatpush.bf16.msra.mxu0 %v1337
        %1911 = vmatpush.bf16.msra.mxu0 %v1335
        %1912 = vmatpush.bf16.msra.mxu0 %v1333
        %1913 = vmatpush.bf16.msra.mxu0 %v1331
        %1914 = vmatpush.bf16.msra.mxu0 %v1329
        %1915 = vmatpush.bf16.msra.mxu0 %v1327
        %1916 = vmatmul.bf16.gmra.mxu0 %v556
        %v1917 = vpop.f32.mrf.mxu0
        %v1918 = vadd.f32 %v1904, %v1917
        %v1919 = vpop.f32.mrf.mxu0
        %v1920 = vadd.f32 %v1906, %v1919
        %1921 = vdwg.mxu0
        %1922 = vmatpush.bf16.msra.mxu0 %v1357
        %1923 = vmatpush.bf16.msra.mxu0 %v1355
        %1924 = vmatpush.bf16.msra.mxu0 %v1353
        %1925 = vmatpush.bf16.msra.mxu0 %v1351
        %1926 = vmatpush.bf16.msra.mxu0 %v1349
        %1927 = vmatpush.bf16.msra.mxu0 %v1347
        %1928 = vmatpush.bf16.msra.mxu0 %v1345
        %1929 = vmatpush.bf16.msra.mxu0 %v1343
        %1930 = vmatmul.bf16.gmra.mxu0 %v557
        %v1931 = vpop.f32.mrf.mxu0
        %v1932 = vadd.f32 %v1918, %v1931
        %v1933 = vpop.f32.mrf.mxu0
        %v1934 = vadd.f32 %v1920, %v1933
        %1935 = vdwg.mxu0
        %1936 = vmatpush.bf16.msra.mxu0 %v1373
        %1937 = vmatpush.bf16.msra.mxu0 %v1371
        %1938 = vmatpush.bf16.msra.mxu0 %v1369
        %1939 = vmatpush.bf16.msra.mxu0 %v1367
        %1940 = vmatpush.bf16.msra.mxu0 %v1365
        %1941 = vmatpush.bf16.msra.mxu0 %v1363
        %1942 = vmatpush.bf16.msra.mxu0 %v1361
        %1943 = vmatpush.bf16.msra.mxu0 %v1359
        %1944 = vmatmul.bf16.gmra.mxu0 %v558
        %v1945 = vpop.f32.mrf.mxu0
        %v1946 = vadd.f32 %v1932, %v1945
        %v1947 = vpop.f32.mrf.mxu0
        %v1948 = vadd.f32 %v1934, %v1947
        %1949 = vdwg.mxu0
        %1950 = vmatpush.bf16.msra.mxu0 %v1389
        %1951 = vmatpush.bf16.msra.mxu0 %v1387
        %1952 = vmatpush.bf16.msra.mxu0 %v1385
        %1953 = vmatpush.bf16.msra.mxu0 %v1383
        %1954 = vmatpush.bf16.msra.mxu0 %v1381
        %1955 = vmatpush.bf16.msra.mxu0 %v1379
        %1956 = vmatpush.bf16.msra.mxu0 %v1377
        %1957 = vmatpush.bf16.msra.mxu0 %v1375
        %1958 = vmatmul.bf16.gmra.mxu0 %v559
        %v1959 = vpop.f32.mrf.mxu0
        %v1960 = vadd.f32 %v1946, %v1959
        %v1961 = vpop.f32.mrf.mxu0
        %v1962 = vadd.f32 %v1948, %v1961
        %1963 = vdwg.mxu0
        %1964 = vmatpush.bf16.msra.mxu0 %v1405
        %1965 = vmatpush.bf16.msra.mxu0 %v1403
        %1966 = vmatpush.bf16.msra.mxu0 %v1401
        %1967 = vmatpush.bf16.msra.mxu0 %v1399
        %1968 = vmatpush.bf16.msra.mxu0 %v1397
        %1969 = vmatpush.bf16.msra.mxu0 %v1395
        %1970 = vmatpush.bf16.msra.mxu0 %v1393
        %1971 = vmatpush.bf16.msra.mxu0 %v1391
        %1972 = vmatmul.bf16.gmra.mxu0 %v560
        %v1973 = vpop.f32.mrf.mxu0
        %v1974 = vadd.f32 %v1960, %v1973
        %v1975 = vpop.f32.mrf.mxu0
        %v1976 = vadd.f32 %v1962, %v1975
        %1977 = vdwg.mxu0
        %v1978 = vadd.f32 %v282, %v1792
        %v1979 = vadd.f32 %v283, %v1974
        %v1980 = vadd.f32 %v284, %v1794
        %v1981 = vadd.f32 %v285, %v1976
        %1982 = vst [vmem:[#allocation2] sm:$0xff] %v1978
        %1983 = vst [vmem:[#allocation2 + $0x8] sm:$0xff] %v1979
        %1984 = vst [vmem:[#allocation2 + $0x10] sm:$0xff] %v1980
        %1985 = vst [vmem:[#allocation2 + $0x18] sm:$0xff] %v1981
        %p1986 = scmp.eq.s32.totalorder %s19, 1
        // Predicated region
        $region63: #{faster_rcnn_forward.17} parent=53 // pred_check
          %p1987 = pneg %p1986
        $region64: #{faster_rcnn_forward.17} parent=53 // pred_check_branch
          %1989 = sbr.rel (%p1987) target = $region66
        $region65: #{faster_rcnn_forward.17} parent=53 // pred_region
          %v1990 = vld [vmem:[#allocation2] sm:$0xff]
          %v1991 = vld [vmem:[#allocation2 + $0x8] sm:$0xff]
          %v1992 = vld [vmem:[#allocation2 + $0x10] sm:$0xff]
          %v1993 = vld [vmem:[#allocation2 + $0x18] sm:$0xff]
          %v1994 = vld [vmem:[%s2] sm:$0x3]
          %v1996 = vperm.slane %v1994, 0
          %v1997 = vperm.slane %v1994, 1
          %v2000 = vadd.f32 %v1990, %v1996
          %v2001 = vadd.f32 %v1991, %v1997
          %v2002 = vadd.f32 %v1992, %v1996
          %v2003 = vadd.f32 %v1993, %v1997
          %v2004 = vmax.f32 %v2000, 0.0
          %v2005 = vmax.f32 %v2001, 0.0
          %v2006 = vmax.f32 %v2002, 0.0
          %v2007 = vmax.f32 %v2003, 0.0
          %v2008 = vpack.c.bf16 %v2005, %v2004
          %v2009 = vpack.c.bf16 %v2007, %v2006
          %2010 = vst [vmem:[%s272] sm:$0xff] %v2008
          %2011 = vst [vmem:[%s272 + $0x8] sm:$0xff] %v2009
        $region66: #{faster_rcnn_forward.17} parent=53 // pred_fallthru
          _
        %s2012 = smul.u32 2, %s18
        %p2013 = scmp.lt.s32.totalorder %s2012, 1
        %s2014 = scalar_select %p2013, %s2012, 1
        %s2015 = smul.addr %s2014, 2
        %s2016 = smul.addr %s2015, 4
        %s2017 = scalar_lea.vmem %s3, %s2016
        // Predicated region
        $region67: #{faster_rcnn_forward.17} parent=53 // pred_check
          %p2018 = pneg %p119
        $region68: #{faster_rcnn_forward.17} parent=53 // pred_check_branch
          %2020 = sbr.rel (%p2018) target = $region70
        $region69: #{faster_rcnn_forward.17} parent=53 // pred_region
          %s2021 = smul.u32 2, %s18
        $region70: #{faster_rcnn_forward.17} parent=53 // pred_fallthru
          _
        // Predicated region
        $region71: #{faster_rcnn_forward.17} parent=53 // pred_check
          %p2022 = pneg %p119
        $region72: #{faster_rcnn_forward.17} parent=53 // pred_check_branch
          %2024 = sbr.rel (%p2022) target = $region74
        $region73: #{faster_rcnn_forward.17} parent=53 // pred_region
          %s2025 = smul.u32 2, %s18
          %p2026 = scmp.lt.s32.totalorder %s2025, 1
          %s2027 = scalar_select %p2026, %s2025, 1
          %s2028 = smul.addr %s2027, 2
          %s2029 = smul.addr %s2028, 4
          %s2030 = scalar_lea.vmem %s3, %s2029
        $region74: #{faster_rcnn_forward.17} parent=53 // pred_fallthru
          _
      $region54: #{faster_rcnn_forward.17} parent=5 // pred_fallthru
        _
      %p2031 = scmp.le.s32.totalorder 2, %s9
      // Predicated region
      $region75: #{faster_rcnn_forward.17} parent=5 // pred_check
        %p2032 = pneg %p2031
      $region76: #{faster_rcnn_forward.17} parent=5 // pred_check_branch
        %2034 = sbr.rel (%p2032) target = $region78
      $region77: #{faster_rcnn_forward.17} parent=5 // pred_region
        %s2035 = ssub.s32 %s9, 2
      $region78: #{faster_rcnn_forward.17} parent=5 // pred_fallthru
        _
    $region6: #{faster_rcnn_forward.17} parent=1 // loop_footer
      %s13 = sadd.s32 1, %s9
    $region7: #{faster_rcnn_forward.17} parent=1 // loop_footer_branch
      %8 = sbr.rel target = $region3
    $region8: #{faster_rcnn_forward.17} parent=1 // loop_exit
      _

</llo_original>
